<compile_context>
chip_gen: v7x
topology: tpu7x:2x2x1
jax: 0.10.0
libtpu: 0.0.40
codegen_flags: <defaults>
</compile_context>

<pallas_src>
import math
from functools import lru_cache

import jax
import jax.numpy as jnp
from jax import lax
from jax.experimental import pallas as pl
from jax.experimental.pallas import tpu as pltpu

EPS = 1e-5

_VMEM_LIMIT_CACHE = None


def _vmem_limit():
    """Generation-aware scoped-VMEM limit: ~3/4 of capacity, capped at 96 MiB."""
    global _VMEM_LIMIT_CACHE
    if _VMEM_LIMIT_CACHE is None:
        try:
            cap = int(pltpu.get_tpu_info().vmem_capacity_bytes)
        except Exception:
            cap = 64 << 20
        _VMEM_LIMIT_CACHE = max(32 << 20, min((cap * 3) // 4, 96 << 20))
    return _VMEM_LIMIT_CACHE


def _pick_row_tile(P, row_bytes, budget):
    """Largest power-of-two row tile (multiple of 8) that divides P, keeps at
    least two grid steps, and fits the per-step VMEM budget.  Falls back to a
    single whole-array block (always a legal block shape)."""
    for t in (65536, 32768, 16384, 8192, 4096, 2048, 1024, 512, 256, 128, 64, 32, 16, 8):
        if t < P and P % t == 0 and t * row_bytes <= budget:
            return t
    return P


# --------------------------------------------------------------------------
# Kernel 1: fused multi-input BatchNorm (precomputed per-part scale/shift) +
# ReLU + 1x1 conv.  The "concatenated bottom" of the PyTorch code only ever
# exists as a bf16 VMEM scratch tile: each part is normalized and written into
# its channel slice, then ONE K=Ctot matmul feeds the MXU.  The kernel also
# emits the per-channel (sum, sum**2) of its own f32 accumulator so no second
# pass over y1 is needed for the next BatchNorm.
# --------------------------------------------------------------------------
@lru_cache(maxsize=None)
def _make_fused_1x1_kernel(part_channels, Cout):
    n = len(part_channels)
    offs = [0]
    for c in part_channels:
        offs.append(offs[-1] + c)

    def kernel(*refs):
        x_refs = refs[:n]
        sc_refs = refs[n:2 * n]
        sh_refs = refs[2 * n:3 * n]
        w_ref = refs[3 * n]                       # (Ctot, Cout) bf16 (pre-cast in glue)
        y_ref, stats_ref, cat_ref = refs[3 * n + 1], refs[3 * n + 2], refs[3 * n + 3]

        # Normalize each part in f32 and assemble the bf16 concatenated tile.
        for p in range(n):
            a = jnp.maximum(
                x_refs[p][...].astype(jnp.float32) * sc_refs[p][...] + sh_refs[p][...],
                0.0)
            cat_ref[:, offs[p]:offs[p + 1]] = a.astype(jnp.bfloat16)

        # Single MXU pass over the full contraction depth.
        acc = jnp.dot(cat_ref[...], w_ref[...], preferred_element_type=jnp.float32)
        y_ref[...] = acc.astype(y_ref.dtype)

        s = jnp.sum(acc, axis=0, keepdims=True)
        s2 = jnp.sum(acc * acc, axis=0, keepdims=True)
        stats_ref[...] = jnp.concatenate([s, s2], axis=0)

    return kernel


def fused_bn_relu_conv1x1(parts, scales, shifts, w_bf16):
    """parts: list of (P, C_p) slabs; scales/shifts: list of (1, C_p) f32;
    w_bf16: (Ctot, Cout) bf16.  Returns bf16 y (P, Cout) and f32 stats (2, Cout)."""
    P = parts[0].shape[0]
    part_channels = tuple(int(p.shape[1]) for p in parts)
    Ctot = int(sum(part_channels))
    Cout = int(w_bf16.shape[1])

    # Per-pixel-row bytes: double-buffered inputs + output, plus cat scratch.
    row_in = sum(c * p.dtype.itemsize for c, p in zip(part_channels, parts))
    row_bytes = 2 * (row_in + 2 * Cout) + 2 * Ctot
    TP = _pick_row_tile(P, row_bytes, _vmem_limit() // 2)
    T = P // TP
    kernel = _make_fused_1x1_kernel(part_channels, Cout)

    in_specs = [pl.BlockSpec((TP, c), lambda i: (i, 0)) for c in part_channels]
    in_specs += [pl.BlockSpec((1, c), lambda i: (0, 0)) for c in part_channels]  # scales
    in_specs += [pl.BlockSpec((1, c), lambda i: (0, 0)) for c in part_channels]  # shifts
    in_specs += [pl.BlockSpec((Ctot, Cout), lambda i: (0, 0))]                   # weights

    y, partial = pl.pallas_call(
        kernel,
        out_shape=(jax.ShapeDtypeStruct((P, Cout), jnp.bfloat16),
                   jax.ShapeDtypeStruct((T, 2, Cout), jnp.float32)),
        grid=(T,),
        in_specs=in_specs,
        out_specs=(pl.BlockSpec((TP, Cout), lambda i: (i, 0)),
                   pl.BlockSpec((None, 2, Cout), lambda i: (i, 0, 0))),
        scratch_shapes=[pltpu.VMEM((TP, Ctot), jnp.bfloat16)],
        compiler_params=pltpu.CompilerParams(
            dimension_semantics=("parallel",),
            vmem_limit_bytes=_vmem_limit()),
    )(*parts, *scales, *shifts, w_bf16)
    return y, jnp.sum(partial, axis=0)


# --------------------------------------------------------------------------
# Kernel 2: fused BatchNorm + ReLU + dilated 3x3 conv (padding == dilation).
# One grid step per batch element; the padded activation lives in a bf16 VMEM
# scratch (only the halo ring is zeroed), and the conv is computed as 9
# ref-sliced (H*W, C) @ (C, C) bf16 matmuls accumulated in f32.  Also emits
# per-channel (sum, sum**2) of its output for the next stage's BatchNorm.
# --------------------------------------------------------------------------
@lru_cache(maxsize=None)
def _make_dconv_kernel(dil, H, W, C):
    d = dil
    Hp, Wp = H + 2 * d, W + 2 * d

    def kernel(y_ref, scale_ref, shift_ref, w_ref, o_ref, stats_ref, apad_ref):
        sc = scale_ref[...].reshape(1, 1, C)
        sh = shift_ref[...].reshape(1, 1, C)
        a = jnp.maximum(y_ref[...].astype(jnp.float32) * sc + sh, 0.0)

        # Zero only the static halo ring (bf16).  Re-done every step: scratch
        # is per-core and uninitialised, so a program_id==0 gate is unsafe when
        # this "parallel" axis is split across TensorCores.
        apad_ref[0:d, :, :] = jnp.zeros((d, Wp, C), jnp.bfloat16)
        apad_ref[d + H:Hp, :, :] = jnp.zeros((d, Wp, C), jnp.bfloat16)
        apad_ref[d:d + H, 0:d, :] = jnp.zeros((H, d, C), jnp.bfloat16)
        apad_ref[d:d + H, d + W:Wp, :] = jnp.zeros((H, d, C), jnp.bfloat16)
        apad_ref[d:d + H, d:d + W, :] = a.astype(jnp.bfloat16)

        acc = jnp.zeros((H * W, C), jnp.float32)
        for ky in range(3):
            for kx in range(3):
                # Slice the scratch ref per tap (no full padded-array load).
                patch = apad_ref[ky * d:ky * d + H, kx * d:kx * d + W, :]   # (H, W, C) bf16
                acc = acc + jnp.dot(patch.reshape(H * W, C), w_ref[ky * 3 + kx],
                                    preferred_element_type=jnp.float32)
        o_ref[...] = acc.reshape(H, W, C).astype(o_ref.dtype)
        s = jnp.sum(acc, axis=0, keepdims=True)
        s2 = jnp.sum(acc * acc, axis=0, keepdims=True)
        stats_ref[...] = jnp.concatenate([s, s2], axis=0)

    return kernel


def fused_bn_relu_dconv3x3(y_nhwc, scale, shift, w9_bf16, dil):
    N, H, W, C = y_nhwc.shape
    kernel = _make_dconv_kernel(int(dil), int(H), int(W), int(C))
    out, partial = pl.pallas_call(
        kernel,
        out_shape=(jax.ShapeDtypeStruct((N, H, W, C), jnp.bfloat16),
                   jax.ShapeDtypeStruct((N, 2, C), jnp.float32)),
        grid=(N,),
        in_specs=[
            pl.BlockSpec((None, H, W, C), lambda n: (n, 0, 0, 0)),
            pl.BlockSpec((1, C), lambda n: (0, 0)),
            pl.BlockSpec((1, C), lambda n: (0, 0)),
            pl.BlockSpec((9, C, C), lambda n: (0, 0, 0)),
        ],
        out_specs=(pl.BlockSpec((None, H, W, C), lambda n: (n, 0, 0, 0)),
                   pl.BlockSpec((None, 2, C), lambda n: (n, 0, 0))),
        scratch_shapes=[pltpu.VMEM((H + 2 * dil, W + 2 * dil, C), jnp.bfloat16)],
        compiler_params=pltpu.CompilerParams(
            dimension_semantics=("parallel",),
            vmem_limit_bytes=_vmem_limit()),
    )(y_nhwc, scale.reshape(1, C), shift.reshape(1, C), w9_bf16)
    return out, jnp.sum(partial, axis=0)


# --------------------------------------------------------------------------
# Clique block forward (Pallas path)
# --------------------------------------------------------------------------
def _scale_shift(sums, count, gamma, beta):
    mean = sums[0] / count
    var = sums[1] / count - mean * mean          # biased variance (BN training mode)
    sc = gamma / jnp.sqrt(var + EPS)
    sh = beta - mean * sc
    return sc, sh


def clique_block_forward(x_nchw, params, L, loop_num, dil):
    x = jnp.transpose(x_nchw, (0, 2, 3, 1)).astype(jnp.float32)   # NCHW -> NHWC
    N, H, W, Cin = x.shape
    C = params['w_bottle'][0].shape[-1]
    P = N * H * W
    x2d = x.reshape(P, Cin)
    # Input moments: plain-JAX reduction, fused by XLA with the transpose pass.
    x_stats = jnp.stack([jnp.sum(x2d, axis=0), jnp.sum(x2d * x2d, axis=0)], axis=0)

    # Pre-cast all MXU weights to bf16 once (no per-grid-step in-kernel casts).
    w_in = {l: v.astype(jnp.bfloat16) for l, v in params['w_in'].items()}
    w_cross = {k: v.astype(jnp.bfloat16) for k, v in params['w_cross'].items()}
    w_bottle = [w.astype(jnp.bfloat16) for w in params['w_bottle']]

    def stage(parts2d, stats_cat, g, b, gb, bb, w1, wb):
        sc, sh = _scale_shift(stats_cat, P, g, b)
        # Pre-slice per-part scale/shift in glue (plain broadcasts in-kernel).
        offs, scales, shifts = 0, [], []
        for p in parts2d:
            cp = int(p.shape[1])
            scales.append(sc[offs:offs + cp].reshape(1, cp))
            shifts.append(sh[offs:offs + cp].reshape(1, cp))
            offs += cp
        y1, y1_stats = fused_bn_relu_conv1x1(parts2d, scales, shifts, w1)
        scb, shb = _scale_shift(y1_stats, P, gb, bb)
        return fused_bn_relu_dconv3x3(y1.reshape(N, H, W, C), scb, shb, wb, dil)

    blob, bstats = {}, {}
    # Stage I: forward pass
    for l in range(1, L + 1):
        parts = [x2d]
        stats_parts = [x_stats]
        w1 = w_in[l]
        for j in range(1, l):
            parts.append(blob[j].reshape(P, C))
            stats_parts.append(bstats[j])
            w1 = jnp.concatenate([w1, w_cross[(j, l)]], axis=0)
        g, b = params['fbn'][l - 1]
        gb, bb = params['fbnb'][l - 1]
        blob[l], bstats[l] = stage(parts, jnp.concatenate(stats_parts, axis=1),
                                   g, b, gb, bb, w1, w_bottle[l - 1])
    # Stage II: recurrent loops (in-place dict updates, as in the original)
    for _ in range(loop_num):
        for l in range(1, L + 1):
            others = [j for j in range(1, L + 1) if j != l]
            parts = [blob[j].reshape(P, C) for j in others]
            stats_cat = jnp.concatenate([bstats[j] for j in others], axis=1)
            w1 = jnp.concatenate([w_cross[(j, l)] for j in others], axis=0)
            g, b = params['lbn'][l - 1]
            gb, bb = params['lbnb'][l - 1]
            blob[l], bstats[l] = stage(parts, stats_cat, g, b, gb, bb,
                                       w1, w_bottle[l - 1])
    # Dict aliasing in the PyTorch code -> output is the concat of FINAL blobs.
    out = jnp.concatenate([blob[l] for l in range(1, L + 1)], axis=-1)
    return jnp.transpose(out.astype(jnp.float32), (0, 3, 1, 2))   # NHWC -> NCHW


# --------------------------------------------------------------------------
# Pure-JAX reference (for correctness checking only)
# --------------------------------------------------------------------------
def _clique_dataflow(x_nhwc, params, L, loop_num, stage_fn):
    blob = {}
    for l in range(1, L + 1):
        bottom = x_nhwc
        w1 = params['w_in'][l]
        for j in range(1, l):
            bottom = jnp.concatenate([bottom, blob[j]], axis=-1)
            w1 = jnp.concatenate([w1, params['w_cross'][(j, l)]], axis=0)
        g, b = params['fbn'][l - 1]
        gb, bb = params['fbnb'][l - 1]
        blob[l] = stage_fn(bottom, w1, g, b, gb, bb, params['w_bottle'][l - 1])
    for _ in range(loop_num):
        for l in range(1, L + 1):
            others = [j for j in range(1, L + 1) if j != l]
            bottom = jnp.concatenate([blob[j] for j in others], axis=-1)
            w1 = jnp.concatenate([params['w_cross'][(j, l)] for j in others], axis=0)
            g, b = params['lbn'][l - 1]
            gb, bb = params['lbnb'][l - 1]
            blob[l] = stage_fn(bottom, w1, g, b, gb, bb, params['w_bottle'][l - 1])
    return jnp.concatenate([blob[l] for l in range(1, L + 1)], axis=-1)


def clique_block_reference(x_nchw, params, L, loop_num, dil):
    x = jnp.transpose(x_nchw, (0, 2, 3, 1)).astype(jnp.float32)
    C = params['w_bottle'][0].shape[-1]

    def bn(a, gamma, beta):
        mean = jnp.mean(a, axis=(0, 1, 2))
        var = jnp.mean(a * a, axis=(0, 1, 2)) - mean * mean
        return (a - mean) * (gamma / jnp.sqrt(var + EPS)) + beta

    def stage(bottom, w1, g, b, gb, bb, wb):
        a = jax.nn.relu(bn(bottom, g, b))
        y1 = jnp.einsum('nhwc,cf->nhwf', a, w1, precision=lax.Precision.HIGHEST)
        a2 = jax.nn.relu(bn(y1, gb, bb))
        w_hwio = wb.reshape(3, 3, C, C)
        return lax.conv_general_dilated(
            a2, w_hwio, (1, 1), ((dil, dil), (dil, dil)),
            rhs_dilation=(dil, dil),
            dimension_numbers=('NHWC', 'HWIO', 'NHWC'),
            precision=lax.Precision.HIGHEST)

    out = _clique_dataflow(x, params, L, loop_num, stage)
    return jnp.transpose(out, (0, 3, 1, 2))


# --------------------------------------------------------------------------
# Deterministic parameter construction (shapes follow Clique_block.__init__)
# --------------------------------------------------------------------------
def init_params(key, input_channels, C, L):
    keys = iter(jax.random.split(key, 16 * (L + 1) ** 2 + 64))

    def nrm(shape, scale):
        return (scale * jax.random.normal(next(keys), shape)).astype(jnp.float32)

    def bn_pair(ch):
        g = (1.0 + 0.1 * jax.random.normal(next(keys), (ch,))).astype(jnp.float32)
        b = (0.1 * jax.random.normal(next(keys), (ch,))).astype(jnp.float32)
        return g, b

    p = {}
    # conv_param[l], l=1..L : (C, input_channels, 1, 1)  -> stored (Cin, Cout)
    p['w_in'] = {l: nrm((input_channels, C), 1.0 / math.sqrt(input_channels))
                 for l in range(1, L + 1)}
    # conv_param[i*(L+1)+j], i != j : (C, C, 1, 1) -> stored (Cin, Cout)
    p['w_cross'] = {(i, j): nrm((C, C), 1.0 / math.sqrt(C))
                    for i in range(1, L + 1) for j in range(1, L + 1) if i != j}
    # conv_param_bottle[l] : (C, C, 3, 3) -> stored (9, Cin, Cout), k = ky*3+kx
    p['w_bottle'] = [nrm((9, C, C), 1.0 / math.sqrt(9 * C)) for _ in range(L)]
    p['fbn'] = [bn_pair(input_channels + i * C) for i in range(L)]
    p['fbnb'] = [bn_pair(C) for _ in range(L)]
    p['lbn'] = [bn_pair(C * (L - 1)) for _ in range(L)]
    p['lbnb'] = [bn_pair(C) for _ in range(L)]
    return p


# TODO(synk): BatchNorm running-statistic updates (training-time side state)
# are not materialized; they do not affect the forward output in training mode.

if __name__ == "__main__":
    input_channels, channels_per_layer = 8, 8
    layer_num, loop_num, dilation = 3, 1, 2
    N, H, W = 2, 8, 8

    key = jax.random.PRNGKey(0)
    kp, kx = jax.random.split(key)
    params = init_params(kp, input_channels, channels_per_layer, layer_num)
    x = jax.random.normal(kx, (N, input_channels, H, W), dtype=jnp.float32)

    fwd = jax.jit(clique_block_forward, static_argnums=(2, 3, 4))
    out = jax.block_until_ready(fwd(x, params, layer_num, loop_num, dilation))
    assert out.shape == (N, layer_num * channels_per_layer, H, W), out.shape

    ref = jax.block_until_ready(
        clique_block_reference(x, params, layer_num, loop_num, dilation))
    err = float(jnp.max(jnp.abs(out - ref)))
    scale = float(jnp.max(jnp.abs(ref)))
    assert err <= 0.05 * scale + 1e-3, f"mismatch: max abs err {err}, scale {scale}"

    print("KERNEL_OK")
</pallas_src>

<mosaic_0001>
module attributes {stable_mosaic.version = 11 : i64} {
  func.func @kernel(%arg0: i32, %arg1: memref<64x8xf32, #tpu.memory_space<vmem>>, %arg2: memref<1x8xf32, #tpu.memory_space<vmem>>, %arg3: memref<1x8xf32, #tpu.memory_space<vmem>>, %arg4: memref<8x8xbf16, #tpu.memory_space<vmem>>, %arg5: memref<64x8xbf16, #tpu.memory_space<vmem>>, %arg6: memref<1x2x8xf32, #tpu.memory_space<vmem>>, %arg7: memref<64x8xbf16, #tpu.memory_space<vmem>>) attributes {dimension_semantics = [#tpu.dimension_semantics<parallel>], iteration_bounds = array<i64: 2>, scalar_prefetch = 0 : i64, scratch_operands = 1 : i64, tpu.core_type = #tpu.core_type<tc>, window_params = [{transform_indices = @transform_0, window_bounds = array<i64: 64, 8>}, {pipeline_mode = #tpu.pipeline_mode<synchronous>, transform_indices = @transform_1, window_bounds = array<i64: 1, 8>}, {pipeline_mode = #tpu.pipeline_mode<synchronous>, transform_indices = @transform_2, window_bounds = array<i64: 1, 8>}, {pipeline_mode = #tpu.pipeline_mode<synchronous>, transform_indices = @transform_3, window_bounds = array<i64: 8, 8>}, {transform_indices = @transform_4, window_bounds = array<i64: 64, 8>}, {transform_indices = @transform_5, window_bounds = array<i64: 1, 2, 8>}]} {
    %c0 = arith.constant 0 : index
    %c0_0 = arith.constant 0 : index
    %0 = vector.load %arg1[%c0, %c0_0] : memref<64x8xf32, #tpu.memory_space<vmem>>, vector<64x8xf32>
    %c0_1 = arith.constant 0 : index
    %c0_2 = arith.constant 0 : index
    %1 = vector.load %arg2[%c0_1, %c0_2] : memref<1x8xf32, #tpu.memory_space<vmem>>, vector<1x8xf32>
    %2 = vector.broadcast %1 : vector<1x8xf32> to vector<64x8xf32>
    %3 = arith.mulf %0, %2 : vector<64x8xf32>
    %c0_3 = arith.constant 0 : index
    %c0_4 = arith.constant 0 : index
    %4 = vector.load %arg3[%c0_3, %c0_4] : memref<1x8xf32, #tpu.memory_space<vmem>>, vector<1x8xf32>
    %5 = vector.broadcast %4 : vector<1x8xf32> to vector<64x8xf32>
    %6 = arith.addf %3, %5 : vector<64x8xf32>
    %cst = arith.constant 0.000000e+00 : f32
    %7 = vector.broadcast %cst : f32 to vector<64x8xf32>
    %8 = arith.maximumf %6, %7 : vector<64x8xf32>
    %9 = arith.truncf %8 : vector<64x8xf32> to vector<64x8xbf16>
    %c0_5 = arith.constant 0 : index
    %c0_6 = arith.constant 0 : index
    %10 = vector.load %arg7[%c0_5, %c0_6] : memref<64x8xbf16, #tpu.memory_space<vmem>>, vector<64x8xbf16>
    tpu.vector_store %arg7[%c0_5, %c0_6], %9 {strides = array<i32>} : memref<64x8xbf16, #tpu.memory_space<vmem>>, vector<64x8xbf16>,
    %c0_7 = arith.constant 0 : index
    %c0_8 = arith.constant 0 : index
    %11 = vector.load %arg7[%c0_7, %c0_8] : memref<64x8xbf16, #tpu.memory_space<vmem>>, vector<64x8xbf16>
    %c0_9 = arith.constant 0 : index
    %c0_10 = arith.constant 0 : index
    %12 = vector.load %arg4[%c0_9, %c0_10] : memref<8x8xbf16, #tpu.memory_space<vmem>>, vector<8x8xbf16>
    %cst_11 = arith.constant dense<0.000000e+00> : vector<64x8xf32>
    %13 = tpu.matmul %11, %12, %cst_11 {dimension_numbers = #tpu.dot_dimension_numbers<[1], [0], [0], [1], [0, 0, 1, 1], [], []>} : vector<64x8xbf16>, vector<8x8xbf16>, vector<64x8xf32> -> vector<64x8xf32>
    %14 = arith.truncf %13 : vector<64x8xf32> to vector<64x8xbf16>
    %c0_12 = arith.constant 0 : index
    %c0_13 = arith.constant 0 : index
    %15 = vector.load %arg5[%c0_12, %c0_13] : memref<64x8xbf16, #tpu.memory_space<vmem>>, vector<64x8xbf16>
    tpu.vector_store %arg5[%c0_12, %c0_13], %14 {strides = array<i32>} : memref<64x8xbf16, #tpu.memory_space<vmem>>, vector<64x8xbf16>,
    %cst_14 = arith.constant dense<0.000000e+00> : vector<8xf32>
    %16 = vector.multi_reduction <add>, %13, %cst_14 [0] : vector<64x8xf32> to vector<8xf32>
    %17 = vector.shape_cast %16 : vector<8xf32> to vector<1x8xf32>
    %18 = arith.mulf %13, %13 : vector<64x8xf32>
    %cst_15 = arith.constant dense<0.000000e+00> : vector<8xf32>
    %19 = vector.multi_reduction <add>, %18, %cst_15 [0] : vector<64x8xf32> to vector<8xf32>
    %20 = vector.shape_cast %19 : vector<8xf32> to vector<1x8xf32>
    %21 = tpu.concatenate %17, %20 in 0 : vector<1x8xf32>, vector<1x8xf32> -> vector<2x8xf32>
    %c0_16 = arith.constant 0 : index
    %c0_17 = arith.constant 0 : index
    %c0_18 = arith.constant 0 : index
    %22 = vector.load %arg6[%c0_16, %c0_17, %c0_18] : memref<1x2x8xf32, #tpu.memory_space<vmem>>, vector<1x2x8xf32>
    %23 = vector.shape_cast %22 : vector<1x2x8xf32> to vector<2x8xf32>
    %24 = vector.shape_cast %21 : vector<2x8xf32> to vector<1x2x8xf32>
    tpu.vector_store %arg6[%c0_16, %c0_17, %c0_18], %24 {strides = array<i32>} : memref<1x2x8xf32, #tpu.memory_space<vmem>>, vector<1x2x8xf32>,
    return
  }
  func.func @transform_0(%arg0: i32) -> (i32, i32) {
    %c0_i32 = arith.constant 0 : i32
    %c0_i32_0 = arith.constant 0 : i32
    return %arg0, %c0_i32 : i32, i32
  }
  func.func @transform_1(%arg0: i32) -> (i32, i32) {
    %c0_i32 = arith.constant 0 : i32
    %c0_i32_0 = arith.constant 0 : i32
    %c0_i32_1 = arith.constant 0 : i32
    return %c0_i32, %c0_i32_0 : i32, i32
  }
  func.func @transform_2(%arg0: i32) -> (i32, i32) {
    %c0_i32 = arith.constant 0 : i32
    %c0_i32_0 = arith.constant 0 : i32
    %c0_i32_1 = arith.constant 0 : i32
    return %c0_i32, %c0_i32_0 : i32, i32
  }
  func.func @transform_3(%arg0: i32) -> (i32, i32) {
    %c0_i32 = arith.constant 0 : i32
    %c0_i32_0 = arith.constant 0 : i32
    %c0_i32_1 = arith.constant 0 : i32
    return %c0_i32, %c0_i32_0 : i32, i32
  }
  func.func @transform_4(%arg0: i32) -> (i32, i32) {
    %c0_i32 = arith.constant 0 : i32
    %c0_i32_0 = arith.constant 0 : i32
    return %arg0, %c0_i32 : i32, i32
  }
  func.func @transform_5(%arg0: i32) -> (i32, i32, i32) {
    %c0_i32 = arith.constant 0 : i32
    %c0_i32_0 = arith.constant 0 : i32
    %c0_i32_1 = arith.constant 0 : i32
    return %arg0, %c0_i32, %c0_i32_0 : i32, i32, i32
  }
}

module attributes {stable_mosaic.version = 11 : i64} {
  func.func @kernel(%arg0: i32, %arg1: memref<1x8x8x8xbf16, #tpu.memory_space<vmem>>, %arg2: memref<1x8xf32, #tpu.memory_space<vmem>>, %arg3: memref<1x8xf32, #tpu.memory_space<vmem>>, %arg4: memref<9x8x8xbf16, #tpu.memory_space<vmem>>, %arg5: memref<1x8x8x8xbf16, #tpu.memory_space<vmem>>, %arg6: memref<1x2x8xf32, #tpu.memory_space<vmem>>, %arg7: memref<12x12x8xbf16, #tpu.memory_space<vmem>>) attributes {dimension_semantics = [#tpu.dimension_semantics<parallel>], iteration_bounds = array<i64: 2>, scalar_prefetch = 0 : i64, scratch_operands = 1 : i64, tpu.core_type = #tpu.core_type<tc>, window_params = [{transform_indices = @transform_0, window_bounds = array<i64: 1, 8, 8, 8>}, {pipeline_mode = #tpu.pipeline_mode<synchronous>, transform_indices = @transform_1, window_bounds = array<i64: 1, 8>}, {pipeline_mode = #tpu.pipeline_mode<synchronous>, transform_indices = @transform_2, window_bounds = array<i64: 1, 8>}, {pipeline_mode = #tpu.pipeline_mode<synchronous>, transform_indices = @transform_3, window_bounds = array<i64: 9, 8, 8>}, {transform_indices = @transform_4, window_bounds = array<i64: 1, 8, 8, 8>}, {transform_indices = @transform_5, window_bounds = array<i64: 1, 2, 8>}]} {
    %c0 = arith.constant 0 : index
    %c0_0 = arith.constant 0 : index
    %0 = vector.load %arg2[%c0, %c0_0] : memref<1x8xf32, #tpu.memory_space<vmem>>, vector<1x8xf32>
    %1 = vector.shape_cast %0 : vector<1x8xf32> to vector<1x1x8xf32>
    %c0_1 = arith.constant 0 : index
    %c0_2 = arith.constant 0 : index
    %2 = vector.load %arg3[%c0_1, %c0_2] : memref<1x8xf32, #tpu.memory_space<vmem>>, vector<1x8xf32>
    %3 = vector.shape_cast %2 : vector<1x8xf32> to vector<1x1x8xf32>
    %c0_3 = arith.constant 0 : index
    %c0_4 = arith.constant 0 : index
    %c0_5 = arith.constant 0 : index
    %c0_6 = arith.constant 0 : index
    %4 = vector.load %arg1[%c0_3, %c0_4, %c0_5, %c0_6] : memref<1x8x8x8xbf16, #tpu.memory_space<vmem>>, vector<1x8x8x8xbf16>
    %5 = vector.shape_cast %4 : vector<1x8x8x8xbf16> to vector<8x8x8xbf16>
    %6 = arith.extf %5 : vector<8x8x8xbf16> to vector<8x8x8xf32>
    %7 = vector.broadcast %1 : vector<1x1x8xf32> to vector<8x8x8xf32>
    %8 = arith.mulf %6, %7 : vector<8x8x8xf32>
    %9 = vector.broadcast %3 : vector<1x1x8xf32> to vector<8x8x8xf32>
    %10 = arith.addf %8, %9 : vector<8x8x8xf32>
    %cst = arith.constant 0.000000e+00 : f32
    %11 = vector.broadcast %cst : f32 to vector<8x8x8xf32>
    %12 = arith.maximumf %10, %11 : vector<8x8x8xf32>
    %cst_7 = arith.constant 0.000000e+00 : bf16
    %13 = vector.broadcast %cst_7 : bf16 to vector<2x12x8xbf16>
    %c0_8 = arith.constant 0 : index
    %c0_9 = arith.constant 0 : index
    %c0_10 = arith.constant 0 : index
    %14 = vector.load %arg7[%c0_8, %c0_9, %c0_10] : memref<12x12x8xbf16, #tpu.memory_space<vmem>>, vector<2x12x8xbf16>
    tpu.vector_store %arg7[%c0_8, %c0_9, %c0_10], %13 {strides = array<i32>} : memref<12x12x8xbf16, #tpu.memory_space<vmem>>, vector<2x12x8xbf16>,
    %cst_11 = arith.constant 0.000000e+00 : bf16
    %15 = vector.broadcast %cst_11 : bf16 to vector<2x12x8xbf16>
    %c10 = arith.constant 10 : index
    %c0_12 = arith.constant 0 : index
    %c0_13 = arith.constant 0 : index
    %16 = vector.load %arg7[%c10, %c0_12, %c0_13] : memref<12x12x8xbf16, #tpu.memory_space<vmem>>, vector<2x12x8xbf16>
    tpu.vector_store %arg7[%c10, %c0_12, %c0_13], %15 {strides = array<i32>} : memref<12x12x8xbf16, #tpu.memory_space<vmem>>, vector<2x12x8xbf16>,
    %cst_14 = arith.constant 0.000000e+00 : bf16
    %17 = vector.broadcast %cst_14 : bf16 to vector<8x2x8xbf16>
    %c2 = arith.constant 2 : index
    %c0_15 = arith.constant 0 : index
    %c0_16 = arith.constant 0 : index
    %18 = vector.load %arg7[%c2, %c0_15, %c0_16] : memref<12x12x8xbf16, #tpu.memory_space<vmem>>, vector<8x2x8xbf16>
    tpu.vector_store %arg7[%c2, %c0_15, %c0_16], %17 {strides = array<i32>} : memref<12x12x8xbf16, #tpu.memory_space<vmem>>, vector<8x2x8xbf16>,
    %cst_17 = arith.constant 0.000000e+00 : bf16
    %19 = vector.broadcast %cst_17 : bf16 to vector<8x2x8xbf16>
    %c2_18 = arith.constant 2 : index
    %c10_19 = arith.constant 10 : index
    %c0_20 = arith.constant 0 : index
    %20 = vector.load %arg7[%c2_18, %c10_19, %c0_20] : memref<12x12x8xbf16, #tpu.memory_space<vmem>>, vector<8x2x8xbf16>
    tpu.vector_store %arg7[%c2_18, %c10_19, %c0_20], %19 {strides = array<i32>} : memref<12x12x8xbf16, #tpu.memory_space<vmem>>, vector<8x2x8xbf16>,
    %21 = arith.truncf %12 : vector<8x8x8xf32> to vector<8x8x8xbf16>
    %c2_21 = arith.constant 2 : index
    %c2_22 = arith.constant 2 : index
    %c0_23 = arith.constant 0 : index
    %22 = vector.load %arg7[%c2_21, %c2_22, %c0_23] : memref<12x12x8xbf16, #tpu.memory_space<vmem>>, vector<8x8x8xbf16>
    tpu.vector_store %arg7[%c2_21, %c2_22, %c0_23], %21 {strides = array<i32>} : memref<12x12x8xbf16, #tpu.memory_space<vmem>>, vector<8x8x8xbf16>,
    %cst_24 = arith.constant 0.000000e+00 : f32
    %23 = vector.broadcast %cst_24 : f32 to vector<64x8xf32>
    %c0_25 = arith.constant 0 : index
    %c0_26 = arith.constant 0 : index
    %c0_27 = arith.constant 0 : index
    %24 = vector.load %arg7[%c0_25, %c0_26, %c0_27] : memref<12x12x8xbf16, #tpu.memory_space<vmem>>, vector<8x8x8xbf16>
    %25 = vector.shape_cast %24 : vector<8x8x8xbf16> to vector<64x8xbf16>
    %c0_28 = arith.constant 0 : index
    %c0_29 = arith.constant 0 : index
    %c0_30 = arith.constant 0 : index
    %26 = vector.load %arg4[%c0_28, %c0_29, %c0_30] : memref<9x8x8xbf16, #tpu.memory_space<vmem>>, vector<1x8x8xbf16>
    %27 = vector.shape_cast %26 : vector<1x8x8xbf16> to vector<8x8xbf16>
    %cst_31 = arith.constant dense<0.000000e+00> : vector<64x8xf32>
    %28 = tpu.matmul %25, %27, %cst_31 {dimension_numbers = #tpu.dot_dimension_numbers<[1], [0], [0], [1], [0, 0, 1, 1], [], []>} : vector<64x8xbf16>, vector<8x8xbf16>, vector<64x8xf32> -> vector<64x8xf32>
    %29 = arith.addf %23, %28 : vector<64x8xf32>
    %c0_32 = arith.constant 0 : index
    %c2_33 = arith.constant 2 : index
    %c0_34 = arith.constant 0 : index
    %30 = vector.load %arg7[%c0_32, %c2_33, %c0_34] : memref<12x12x8xbf16, #tpu.memory_space<vmem>>, vector<8x8x8xbf16>
    %31 = vector.shape_cast %30 : vector<8x8x8xbf16> to vector<64x8xbf16>
    %c1 = arith.constant 1 : index
    %c0_35 = arith.constant 0 : index
    %c0_36 = arith.constant 0 : index
    %32 = vector.load %arg4[%c1, %c0_35, %c0_36] : memref<9x8x8xbf16, #tpu.memory_space<vmem>>, vector<1x8x8xbf16>
    %33 = vector.shape_cast %32 : vector<1x8x8xbf16> to vector<8x8xbf16>
    %cst_37 = arith.constant dense<0.000000e+00> : vector<64x8xf32>
    %34 = tpu.matmul %31, %33, %cst_37 {dimension_numbers = #tpu.dot_dimension_numbers<[1], [0], [0], [1], [0, 0, 1, 1], [], []>} : vector<64x8xbf16>, vector<8x8xbf16>, vector<64x8xf32> -> vector<64x8xf32>
    %35 = arith.addf %29, %34 : vector<64x8xf32>
    %c0_38 = arith.constant 0 : index
    %c4 = arith.constant 4 : index
    %c0_39 = arith.constant 0 : index
    %36 = vector.load %arg7[%c0_38, %c4, %c0_39] : memref<12x12x8xbf16, #tpu.memory_space<vmem>>, vector<8x8x8xbf16>
    %37 = vector.shape_cast %36 : vector<8x8x8xbf16> to vector<64x8xbf16>
    %c2_40 = arith.constant 2 : index
    %c0_41 = arith.constant 0 : index
    %c0_42 = arith.constant 0 : index
    %38 = vector.load %arg4[%c2_40, %c0_41, %c0_42] : memref<9x8x8xbf16, #tpu.memory_space<vmem>>, vector<1x8x8xbf16>
    %39 = vector.shape_cast %38 : vector<1x8x8xbf16> to vector<8x8xbf16>
    %cst_43 = arith.constant dense<0.000000e+00> : vector<64x8xf32>
    %40 = tpu.matmul %37, %39, %cst_43 {dimension_numbers = #tpu.dot_dimension_numbers<[1], [0], [0], [1], [0, 0, 1, 1], [], []>} : vector<64x8xbf16>, vector<8x8xbf16>, vector<64x8xf32> -> vector<64x8xf32>
    %41 = arith.addf %35, %40 : vector<64x8xf32>
    %c2_44 = arith.constant 2 : index
    %c0_45 = arith.constant 0 : index
    %c0_46 = arith.constant 0 : index
    %42 = vector.load %arg7[%c2_44, %c0_45, %c0_46] : memref<12x12x8xbf16, #tpu.memory_space<vmem>>, vector<8x8x8xbf16>
    %43 = vector.shape_cast %42 : vector<8x8x8xbf16> to vector<64x8xbf16>
    %c3 = arith.constant 3 : index
    %c0_47 = arith.constant 0 : index
    %c0_48 = arith.constant 0 : index
    %44 = vector.load %arg4[%c3, %c0_47, %c0_48] : memref<9x8x8xbf16, #tpu.memory_space<vmem>>, vector<1x8x8xbf16>
    %45 = vector.shape_cast %44 : vector<1x8x8xbf16> to vector<8x8xbf16>
    %cst_49 = arith.constant dense<0.000000e+00> : vector<64x8xf32>
    %46 = tpu.matmul %43, %45, %cst_49 {dimension_numbers = #tpu.dot_dimension_numbers<[1], [0], [0], [1], [0, 0, 1, 1], [], []>} : vector<64x8xbf16>, vector<8x8xbf16>, vector<64x8xf32> -> vector<64x8xf32>
    %47 = arith.addf %41, %46 : vector<64x8xf32>
    %c2_50 = arith.constant 2 : index
    %c2_51 = arith.constant 2 : index
    %c0_52 = arith.constant 0 : index
    %48 = vector.load %arg7[%c2_50, %c2_51, %c0_52] : memref<12x12x8xbf16, #tpu.memory_space<vmem>>, vector<8x8x8xbf16>
    %49 = vector.shape_cast %48 : vector<8x8x8xbf16> to vector<64x8xbf16>
    %c4_53 = arith.constant 4 : index
    %c0_54 = arith.constant 0 : index
    %c0_55 = arith.constant 0 : index
    %50 = vector.load %arg4[%c4_53, %c0_54, %c0_55] : memref<9x8x8xbf16, #tpu.memory_space<vmem>>, vector<1x8x8xbf16>
    %51 = vector.shape_cast %50 : vector<1x8x8xbf16> to vector<8x8xbf16>
    %cst_56 = arith.constant dense<0.000000e+00> : vector<64x8xf32>
    %52 = tpu.matmul %49, %51, %cst_56 {dimension_numbers = #tpu.dot_dimension_numbers<[1], [0], [0], [1], [0, 0, 1, 1], [], []>} : vector<64x8xbf16>, vector<8x8xbf16>, vector<64x8xf32> -> vector<64x8xf32>
    %53 = arith.addf %47, %52 : vector<64x8xf32>
    %c2_57 = arith.constant 2 : index
    %c4_58 = arith.constant 4 : index
    %c0_59 = arith.constant 0 : index
    %54 = vector.load %arg7[%c2_57, %c4_58, %c0_59] : memref<12x12x8xbf16, #tpu.memory_space<vmem>>, vector<8x8x8xbf16>
    %55 = vector.shape_cast %54 : vector<8x8x8xbf16> to vector<64x8xbf16>
    %c5 = arith.constant 5 : index
    %c0_60 = arith.constant 0 : index
    %c0_61 = arith.constant 0 : index
    %56 = vector.load %arg4[%c5, %c0_60, %c0_61] : memref<9x8x8xbf16, #tpu.memory_space<vmem>>, vector<1x8x8xbf16>
    %57 = vector.shape_cast %56 : vector<1x8x8xbf16> to vector<8x8xbf16>
    %cst_62 = arith.constant dense<0.000000e+00> : vector<64x8xf32>
    %58 = tpu.matmul %55, %57, %cst_62 {dimension_numbers = #tpu.dot_dimension_numbers<[1], [0], [0], [1], [0, 0, 1, 1], [], []>} : vector<64x8xbf16>, vector<8x8xbf16>, vector<64x8xf32> -> vector<64x8xf32>
    %59 = arith.addf %53, %58 : vector<64x8xf32>
    %c4_63 = arith.constant 4 : index
    %c0_64 = arith.constant 0 : index
    %c0_65 = arith.constant 0 : index
    %60 = vector.load %arg7[%c4_63, %c0_64, %c0_65] : memref<12x12x8xbf16, #tpu.memory_space<vmem>>, vector<8x8x8xbf16>
    %61 = vector.shape_cast %60 : vector<8x8x8xbf16> to vector<64x8xbf16>
    %c6 = arith.constant 6 : index
    %c0_66 = arith.constant 0 : index
    %c0_67 = arith.constant 0 : index
    %62 = vector.load %arg4[%c6, %c0_66, %c0_67] : memref<9x8x8xbf16, #tpu.memory_space<vmem>>, vector<1x8x8xbf16>
    %63 = vector.shape_cast %62 : vector<1x8x8xbf16> to vector<8x8xbf16>
    %cst_68 = arith.constant dense<0.000000e+00> : vector<64x8xf32>
    %64 = tpu.matmul %61, %63, %cst_68 {dimension_numbers = #tpu.dot_dimension_numbers<[1], [0], [0], [1], [0, 0, 1, 1], [], []>} : vector<64x8xbf16>, vector<8x8xbf16>, vector<64x8xf32> -> vector<64x8xf32>
    %65 = arith.addf %59, %64 : vector<64x8xf32>
    %c4_69 = arith.constant 4 : index
    %c2_70 = arith.constant 2 : index
    %c0_71 = arith.constant 0 : index
    %66 = vector.load %arg7[%c4_69, %c2_70, %c0_71] : memref<12x12x8xbf16, #tpu.memory_space<vmem>>, vector<8x8x8xbf16>
    %67 = vector.shape_cast %66 : vector<8x8x8xbf16> to vector<64x8xbf16>
    %c7 = arith.constant 7 : index
    %c0_72 = arith.constant 0 : index
    %c0_73 = arith.constant 0 : index
    %68 = vector.load %arg4[%c7, %c0_72, %c0_73] : memref<9x8x8xbf16, #tpu.memory_space<vmem>>, vector<1x8x8xbf16>
    %69 = vector.shape_cast %68 : vector<1x8x8xbf16> to vector<8x8xbf16>
    %cst_74 = arith.constant dense<0.000000e+00> : vector<64x8xf32>
    %70 = tpu.matmul %67, %69, %cst_74 {dimension_numbers = #tpu.dot_dimension_numbers<[1], [0], [0], [1], [0, 0, 1, 1], [], []>} : vector<64x8xbf16>, vector<8x8xbf16>, vector<64x8xf32> -> vector<64x8xf32>
    %71 = arith.addf %65, %70 : vector<64x8xf32>
    %c4_75 = arith.constant 4 : index
    %c4_76 = arith.constant 4 : index
    %c0_77 = arith.constant 0 : index
    %72 = vector.load %arg7[%c4_75, %c4_76, %c0_77] : memref<12x12x8xbf16, #tpu.memory_space<vmem>>, vector<8x8x8xbf16>
    %73 = vector.shape_cast %72 : vector<8x8x8xbf16> to vector<64x8xbf16>
    %c8 = arith.constant 8 : index
    %c0_78 = arith.constant 0 : index
    %c0_79 = arith.constant 0 : index
    %74 = vector.load %arg4[%c8, %c0_78, %c0_79] : memref<9x8x8xbf16, #tpu.memory_space<vmem>>, vector<1x8x8xbf16>
    %75 = vector.shape_cast %74 : vector<1x8x8xbf16> to vector<8x8xbf16>
    %cst_80 = arith.constant dense<0.000000e+00> : vector<64x8xf32>
    %76 = tpu.matmul %73, %75, %cst_80 {dimension_numbers = #tpu.dot_dimension_numbers<[1], [0], [0], [1], [0, 0, 1, 1], [], []>} : vector<64x8xbf16>, vector<8x8xbf16>, vector<64x8xf32> -> vector<64x8xf32>
    %77 = arith.addf %71, %76 : vector<64x8xf32>
    %78 = vector.shape_cast %77 : vector<64x8xf32> to vector<8x8x8xf32>
    %79 = arith.truncf %78 : vector<8x8x8xf32> to vector<8x8x8xbf16>
    %c0_81 = arith.constant 0 : index
    %c0_82 = arith.constant 0 : index
    %c0_83 = arith.constant 0 : index
    %c0_84 = arith.constant 0 : index
    %80 = vector.load %arg5[%c0_81, %c0_82, %c0_83, %c0_84] : memref<1x8x8x8xbf16, #tpu.memory_space<vmem>>, vector<1x8x8x8xbf16>
    %81 = vector.shape_cast %80 : vector<1x8x8x8xbf16> to vector<8x8x8xbf16>
    %82 = vector.shape_cast %79 : vector<8x8x8xbf16> to vector<1x8x8x8xbf16>
    tpu.vector_store %arg5[%c0_81, %c0_82, %c0_83, %c0_84], %82 {strides = array<i32>} : memref<1x8x8x8xbf16, #tpu.memory_space<vmem>>, vector<1x8x8x8xbf16>,
    %cst_85 = arith.constant dense<0.000000e+00> : vector<8xf32>
    %83 = vector.multi_reduction <add>, %77, %cst_85 [0] : vector<64x8xf32> to vector<8xf32>
    %84 = vector.shape_cast %83 : vector<8xf32> to vector<1x8xf32>
    %85 = arith.mulf %77, %77 : vector<64x8xf32>
    %cst_86 = arith.constant dense<0.000000e+00> : vector<8xf32>
    %86 = vector.multi_reduction <add>, %85, %cst_86 [0] : vector<64x8xf32> to vector<8xf32>
    %87 = vector.shape_cast %86 : vector<8xf32> to vector<1x8xf32>
    %88 = tpu.concatenate %84, %87 in 0 : vector<1x8xf32>, vector<1x8xf32> -> vector<2x8xf32>
    %c0_87 = arith.constant 0 : index
    %c0_88 = arith.constant 0 : index
    %c0_89 = arith.constant 0 : index
    %89 = vector.load %arg6[%c0_87, %c0_88, %c0_89] : memref<1x2x8xf32, #tpu.memory_space<vmem>>, vector<1x2x8xf32>
    %90 = vector.shape_cast %89 : vector<1x2x8xf32> to vector<2x8xf32>
    %91 = vector.shape_cast %88 : vector<2x8xf32> to vector<1x2x8xf32>
    tpu.vector_store %arg6[%c0_87, %c0_88, %c0_89], %91 {strides = array<i32>} : memref<1x2x8xf32, #tpu.memory_space<vmem>>, vector<1x2x8xf32>,
    return
  }
  func.func @transform_0(%arg0: i32) -> (i32, i32, i32, i32) {
    %c0_i32 = arith.constant 0 : i32
    %c0_i32_0 = arith.constant 0 : i32
    %c0_i32_1 = arith.constant 0 : i32
    %c0_i32_2 = arith.constant 0 : i32
    return %arg0, %c0_i32, %c0_i32_0, %c0_i32_1 : i32, i32, i32, i32
  }
  func.func @transform_1(%arg0: i32) -> (i32, i32) {
    %c0_i32 = arith.constant 0 : i32
    %c0_i32_0 = arith.constant 0 : i32
    %c0_i32_1 = arith.constant 0 : i32
    return %c0_i32, %c0_i32_0 : i32, i32
  }
  func.func @transform_2(%arg0: i32) -> (i32, i32) {
    %c0_i32 = arith.constant 0 : i32
    %c0_i32_0 = arith.constant 0 : i32
    %c0_i32_1 = arith.constant 0 : i32
    return %c0_i32, %c0_i32_0 : i32, i32
  }
  func.func @transform_3(%arg0: i32) -> (i32, i32, i32) {
    %c0_i32 = arith.constant 0 : i32
    %c0_i32_0 = arith.constant 0 : i32
    %c0_i32_1 = arith.constant 0 : i32
    %c0_i32_2 = arith.constant 0 : i32
    return %c0_i32, %c0_i32_0, %c0_i32_1 : i32, i32, i32
  }
  func.func @transform_4(%arg0: i32) -> (i32, i32, i32, i32) {
    %c0_i32 = arith.constant 0 : i32
    %c0_i32_0 = arith.constant 0 : i32
    %c0_i32_1 = arith.constant 0 : i32
    %c0_i32_2 = arith.constant 0 : i32
    return %arg0, %c0_i32, %c0_i32_0, %c0_i32_1 : i32, i32, i32, i32
  }
  func.func @transform_5(%arg0: i32) -> (i32, i32, i32) {
    %c0_i32 = arith.constant 0 : i32
    %c0_i32_0 = arith.constant 0 : i32
    %c0_i32_1 = arith.constant 0 : i32
    return %arg0, %c0_i32, %c0_i32_0 : i32, i32, i32
  }
}

module attributes {stable_mosaic.version = 11 : i64} {
  func.func @kernel(%arg0: i32, %arg1: memref<64x8xf32, #tpu.memory_space<vmem>>, %arg2: memref<64x8xbf16, #tpu.memory_space<vmem>>, %arg3: memref<1x8xf32, #tpu.memory_space<vmem>>, %arg4: memref<1x8xf32, #tpu.memory_space<vmem>>, %arg5: memref<1x8xf32, #tpu.memory_space<vmem>>, %arg6: memref<1x8xf32, #tpu.memory_space<vmem>>, %arg7: memref<16x8xbf16, #tpu.memory_space<vmem>>, %arg8: memref<64x8xbf16, #tpu.memory_space<vmem>>, %arg9: memref<1x2x8xf32, #tpu.memory_space<vmem>>, %arg10: memref<64x16xbf16, #tpu.memory_space<vmem>>) attributes {dimension_semantics = [#tpu.dimension_semantics<parallel>], iteration_bounds = array<i64: 2>, scalar_prefetch = 0 : i64, scratch_operands = 1 : i64, tpu.core_type = #tpu.core_type<tc>, window_params = [{transform_indices = @transform_0, window_bounds = array<i64: 64, 8>}, {transform_indices = @transform_1, window_bounds = array<i64: 64, 8>}, {pipeline_mode = #tpu.pipeline_mode<synchronous>, transform_indices = @transform_2, window_bounds = array<i64: 1, 8>}, {pipeline_mode = #tpu.pipeline_mode<synchronous>, transform_indices = @transform_3, window_bounds = array<i64: 1, 8>}, {pipeline_mode = #tpu.pipeline_mode<synchronous>, transform_indices = @transform_4, window_bounds = array<i64: 1, 8>}, {pipeline_mode = #tpu.pipeline_mode<synchronous>, transform_indices = @transform_5, window_bounds = array<i64: 1, 8>}, {pipeline_mode = #tpu.pipeline_mode<synchronous>, transform_indices = @transform_6, window_bounds = array<i64: 16, 8>}, {transform_indices = @transform_7, window_bounds = array<i64: 64, 8>}, {transform_indices = @transform_8, window_bounds = array<i64: 1, 2, 8>}]} {
    %c0 = arith.constant 0 : index
    %c0_0 = arith.constant 0 : index
    %0 = vector.load %arg1[%c0, %c0_0] : memref<64x8xf32, #tpu.memory_space<vmem>>, vector<64x8xf32>
    %c0_1 = arith.constant 0 : index
    %c0_2 = arith.constant 0 : index
    %1 = vector.load %arg3[%c0_1, %c0_2] : memref<1x8xf32, #tpu.memory_space<vmem>>, vector<1x8xf32>
    %2 = vector.broadcast %1 : vector<1x8xf32> to vector<64x8xf32>
    %3 = arith.mulf %0, %2 : vector<64x8xf32>
    %c0_3 = arith.constant 0 : index
    %c0_4 = arith.constant 0 : index
    %4 = vector.load %arg5[%c0_3, %c0_4] : memref<1x8xf32, #tpu.memory_space<vmem>>, vector<1x8xf32>
    %5 = vector.broadcast %4 : vector<1x8xf32> to vector<64x8xf32>
    %6 = arith.addf %3, %5 : vector<64x8xf32>
    %cst = arith.constant 0.000000e+00 : f32
    %7 = vector.broadcast %cst : f32 to vector<64x8xf32>
    %8 = arith.maximumf %6, %7 : vector<64x8xf32>
    %9 = arith.truncf %8 : vector<64x8xf32> to vector<64x8xbf16>
    %c0_5 = arith.constant 0 : index
    %c0_6 = arith.constant 0 : index
    %10 = vector.load %arg10[%c0_5, %c0_6] : memref<64x16xbf16, #tpu.memory_space<vmem>>, vector<64x8xbf16>
    tpu.vector_store %arg10[%c0_5, %c0_6], %9 {strides = array<i32>} : memref<64x16xbf16, #tpu.memory_space<vmem>>, vector<64x8xbf16>,
    %c0_7 = arith.constant 0 : index
    %c0_8 = arith.constant 0 : index
    %11 = vector.load %arg2[%c0_7, %c0_8] : memref<64x8xbf16, #tpu.memory_space<vmem>>, vector<64x8xbf16>
    %12 = arith.extf %11 : vector<64x8xbf16> to vector<64x8xf32>
    %c0_9 = arith.constant 0 : index
    %c0_10 = arith.constant 0 : index
    %13 = vector.load %arg4[%c0_9, %c0_10] : memref<1x8xf32, #tpu.memory_space<vmem>>, vector<1x8xf32>
    %14 = vector.broadcast %13 : vector<1x8xf32> to vector<64x8xf32>
    %15 = arith.mulf %12, %14 : vector<64x8xf32>
    %c0_11 = arith.constant 0 : index
    %c0_12 = arith.constant 0 : index
    %16 = vector.load %arg6[%c0_11, %c0_12] : memref<1x8xf32, #tpu.memory_space<vmem>>, vector<1x8xf32>
    %17 = vector.broadcast %16 : vector<1x8xf32> to vector<64x8xf32>
    %18 = arith.addf %15, %17 : vector<64x8xf32>
    %cst_13 = arith.constant 0.000000e+00 : f32
    %19 = vector.broadcast %cst_13 : f32 to vector<64x8xf32>
    %20 = arith.maximumf %18, %19 : vector<64x8xf32>
    %21 = arith.truncf %20 : vector<64x8xf32> to vector<64x8xbf16>
    %c0_14 = arith.constant 0 : index
    %c8 = arith.constant 8 : index
    %22 = vector.load %arg10[%c0_14, %c8] : memref<64x16xbf16, #tpu.memory_space<vmem>>, vector<64x8xbf16>
    tpu.vector_store %arg10[%c0_14, %c8], %21 {strides = array<i32>} : memref<64x16xbf16, #tpu.memory_space<vmem>>, vector<64x8xbf16>,
    %c0_15 = arith.constant 0 : index
    %c0_16 = arith.constant 0 : index
    %23 = vector.load %arg10[%c0_15, %c0_16] : memref<64x16xbf16, #tpu.memory_space<vmem>>, vector<64x16xbf16>
    %c0_17 = arith.constant 0 : index
    %c0_18 = arith.constant 0 : index
    %24 = vector.load %arg7[%c0_17, %c0_18] : memref<16x8xbf16, #tpu.memory_space<vmem>>, vector<16x8xbf16>
    %cst_19 = arith.constant dense<0.000000e+00> : vector<64x8xf32>
    %25 = tpu.matmul %23, %24, %cst_19 {dimension_numbers = #tpu.dot_dimension_numbers<[1], [0], [0], [1], [0, 0, 1, 1], [], []>} : vector<64x16xbf16>, vector<16x8xbf16>, vector<64x8xf32> -> vector<64x8xf32>
    %26 = arith.truncf %25 : vector<64x8xf32> to vector<64x8xbf16>
    %c0_20 = arith.constant 0 : index
    %c0_21 = arith.constant 0 : index
    %27 = vector.load %arg8[%c0_20, %c0_21] : memref<64x8xbf16, #tpu.memory_space<vmem>>, vector<64x8xbf16>
    tpu.vector_store %arg8[%c0_20, %c0_21], %26 {strides = array<i32>} : memref<64x8xbf16, #tpu.memory_space<vmem>>, vector<64x8xbf16>,
    %cst_22 = arith.constant dense<0.000000e+00> : vector<8xf32>
    %28 = vector.multi_reduction <add>, %25, %cst_22 [0] : vector<64x8xf32> to vector<8xf32>
    %29 = vector.shape_cast %28 : vector<8xf32> to vector<1x8xf32>
    %30 = arith.mulf %25, %25 : vector<64x8xf32>
    %cst_23 = arith.constant dense<0.000000e+00> : vector<8xf32>
    %31 = vector.multi_reduction <add>, %30, %cst_23 [0] : vector<64x8xf32> to vector<8xf32>
    %32 = vector.shape_cast %31 : vector<8xf32> to vector<1x8xf32>
    %33 = tpu.concatenate %29, %32 in 0 : vector<1x8xf32>, vector<1x8xf32> -> vector<2x8xf32>
    %c0_24 = arith.constant 0 : index
    %c0_25 = arith.constant 0 : index
    %c0_26 = arith.constant 0 : index
    %34 = vector.load %arg9[%c0_24, %c0_25, %c0_26] : memref<1x2x8xf32, #tpu.memory_space<vmem>>, vector<1x2x8xf32>
    %35 = vector.shape_cast %34 : vector<1x2x8xf32> to vector<2x8xf32>
    %36 = vector.shape_cast %33 : vector<2x8xf32> to vector<1x2x8xf32>
    tpu.vector_store %arg9[%c0_24, %c0_25, %c0_26], %36 {strides = array<i32>} : memref<1x2x8xf32, #tpu.memory_space<vmem>>, vector<1x2x8xf32>,
    return
  }
  func.func @transform_0(%arg0: i32) -> (i32, i32) {
    %c0_i32 = arith.constant 0 : i32
    %c0_i32_0 = arith.constant 0 : i32
    return %arg0, %c0_i32 : i32, i32
  }
  func.func @transform_1(%arg0: i32) -> (i32, i32) {
    %c0_i32 = arith.constant 0 : i32
    %c0_i32_0 = arith.constant 0 : i32
    return %arg0, %c0_i32 : i32, i32
  }
  func.func @transform_2(%arg0: i32) -> (i32, i32) {
    %c0_i32 = arith.constant 0 : i32
    %c0_i32_0 = arith.constant 0 : i32
    %c0_i32_1 = arith.constant 0 : i32
    return %c0_i32, %c0_i32_0 : i32, i32
  }
  func.func @transform_3(%arg0: i32) -> (i32, i32) {
    %c0_i32 = arith.constant 0 : i32
    %c0_i32_0 = arith.constant 0 : i32
    %c0_i32_1 = arith.constant 0 : i32
    return %c0_i32, %c0_i32_0 : i32, i32
  }
  func.func @transform_4(%arg0: i32) -> (i32, i32) {
    %c0_i32 = arith.constant 0 : i32
    %c0_i32_0 = arith.constant 0 : i32
    %c0_i32_1 = arith.constant 0 : i32
    return %c0_i32, %c0_i32_0 : i32, i32
  }
  func.func @transform_5(%arg0: i32) -> (i32, i32) {
    %c0_i32 = arith.constant 0 : i32
    %c0_i32_0 = arith.constant 0 : i32
    %c0_i32_1 = arith.constant 0 : i32
    return %c0_i32, %c0_i32_0 : i32, i32
  }
  func.func @transform_6(%arg0: i32) -> (i32, i32) {
    %c0_i32 = arith.constant 0 : i32
    %c0_i32_0 = arith.constant 0 : i32
    %c0_i32_1 = arith.constant 0 : i32
    return %c0_i32, %c0_i32_0 : i32, i32
  }
  func.func @transform_7(%arg0: i32) -> (i32, i32) {
    %c0_i32 = arith.constant 0 : i32
    %c0_i32_0 = arith.constant 0 : i32
    return %arg0, %c0_i32 : i32, i32
  }
  func.func @transform_8(%arg0: i32) -> (i32, i32, i32) {
    %c0_i32 = arith.constant 0 : i32
    %c0_i32_0 = arith.constant 0 : i32
    %c0_i32_1 = arith.constant 0 : i32
    return %arg0, %c0_i32, %c0_i32_0 : i32, i32, i32
  }
}

module attributes {stable_mosaic.version = 11 : i64} {
  func.func @kernel(%arg0: i32, %arg1: memref<64x8xf32, #tpu.memory_space<vmem>>, %arg2: memref<64x8xbf16, #tpu.memory_space<vmem>>, %arg3: memref<64x8xbf16, #tpu.memory_space<vmem>>, %arg4: memref<1x8xf32, #tpu.memory_space<vmem>>, %arg5: memref<1x8xf32, #tpu.memory_space<vmem>>, %arg6: memref<1x8xf32, #tpu.memory_space<vmem>>, %arg7: memref<1x8xf32, #tpu.memory_space<vmem>>, %arg8: memref<1x8xf32, #tpu.memory_space<vmem>>, %arg9: memref<1x8xf32, #tpu.memory_space<vmem>>, %arg10: memref<24x8xbf16, #tpu.memory_space<vmem>>, %arg11: memref<64x8xbf16, #tpu.memory_space<vmem>>, %arg12: memref<1x2x8xf32, #tpu.memory_space<vmem>>, %arg13: memref<64x24xbf16, #tpu.memory_space<vmem>>) attributes {dimension_semantics = [#tpu.dimension_semantics<parallel>], iteration_bounds = array<i64: 2>, scalar_prefetch = 0 : i64, scratch_operands = 1 : i64, tpu.core_type = #tpu.core_type<tc>, window_params = [{transform_indices = @transform_0, window_bounds = array<i64: 64, 8>}, {transform_indices = @transform_1, window_bounds = array<i64: 64, 8>}, {transform_indices = @transform_2, window_bounds = array<i64: 64, 8>}, {pipeline_mode = #tpu.pipeline_mode<synchronous>, transform_indices = @transform_3, window_bounds = array<i64: 1, 8>}, {pipeline_mode = #tpu.pipeline_mode<synchronous>, transform_indices = @transform_4, window_bounds = array<i64: 1, 8>}, {pipeline_mode = #tpu.pipeline_mode<synchronous>, transform_indices = @transform_5, window_bounds = array<i64: 1, 8>}, {pipeline_mode = #tpu.pipeline_mode<synchronous>, transform_indices = @transform_6, window_bounds = array<i64: 1, 8>}, {pipeline_mode = #tpu.pipeline_mode<synchronous>, transform_indices = @transform_7, window_bounds = array<i64: 1, 8>}, {pipeline_mode = #tpu.pipeline_mode<synchronous>, transform_indices = @transform_8, window_bounds = array<i64: 1, 8>}, {pipeline_mode = #tpu.pipeline_mode<synchronous>, transform_indices = @transform_9, window_bounds = array<i64: 24, 8>}, {transform_indices = @transform_10, window_bounds = array<i64: 64, 8>}, {transform_indices = @transform_11, window_bounds = array<i64: 1, 2, 8>}]} {
    %c0 = arith.constant 0 : index
    %c0_0 = arith.constant 0 : index
    %0 = vector.load %arg1[%c0, %c0_0] : memref<64x8xf32, #tpu.memory_space<vmem>>, vector<64x8xf32>
    %c0_1 = arith.constant 0 : index
    %c0_2 = arith.constant 0 : index
    %1 = vector.load %arg4[%c0_1, %c0_2] : memref<1x8xf32, #tpu.memory_space<vmem>>, vector<1x8xf32>
    %2 = vector.broadcast %1 : vector<1x8xf32> to vector<64x8xf32>
    %3 = arith.mulf %0, %2 : vector<64x8xf32>
    %c0_3 = arith.constant 0 : index
    %c0_4 = arith.constant 0 : index
    %4 = vector.load %arg7[%c0_3, %c0_4] : memref<1x8xf32, #tpu.memory_space<vmem>>, vector<1x8xf32>
    %5 = vector.broadcast %4 : vector<1x8xf32> to vector<64x8xf32>
    %6 = arith.addf %3, %5 : vector<64x8xf32>
    %cst = arith.constant 0.000000e+00 : f32
    %7 = vector.broadcast %cst : f32 to vector<64x8xf32>
    %8 = arith.maximumf %6, %7 : vector<64x8xf32>
    %9 = arith.truncf %8 : vector<64x8xf32> to vector<64x8xbf16>
    %c0_5 = arith.constant 0 : index
    %c0_6 = arith.constant 0 : index
    %10 = vector.load %arg13[%c0_5, %c0_6] : memref<64x24xbf16, #tpu.memory_space<vmem>>, vector<64x8xbf16>
    tpu.vector_store %arg13[%c0_5, %c0_6], %9 {strides = array<i32>} : memref<64x24xbf16, #tpu.memory_space<vmem>>, vector<64x8xbf16>,
    %c0_7 = arith.constant 0 : index
    %c0_8 = arith.constant 0 : index
    %11 = vector.load %arg2[%c0_7, %c0_8] : memref<64x8xbf16, #tpu.memory_space<vmem>>, vector<64x8xbf16>
    %12 = arith.extf %11 : vector<64x8xbf16> to vector<64x8xf32>
    %c0_9 = arith.constant 0 : index
    %c0_10 = arith.constant 0 : index
    %13 = vector.load %arg5[%c0_9, %c0_10] : memref<1x8xf32, #tpu.memory_space<vmem>>, vector<1x8xf32>
    %14 = vector.broadcast %13 : vector<1x8xf32> to vector<64x8xf32>
    %15 = arith.mulf %12, %14 : vector<64x8xf32>
    %c0_11 = arith.constant 0 : index
    %c0_12 = arith.constant 0 : index
    %16 = vector.load %arg8[%c0_11, %c0_12] : memref<1x8xf32, #tpu.memory_space<vmem>>, vector<1x8xf32>
    %17 = vector.broadcast %16 : vector<1x8xf32> to vector<64x8xf32>
    %18 = arith.addf %15, %17 : vector<64x8xf32>
    %cst_13 = arith.constant 0.000000e+00 : f32
    %19 = vector.broadcast %cst_13 : f32 to vector<64x8xf32>
    %20 = arith.maximumf %18, %19 : vector<64x8xf32>
    %21 = arith.truncf %20 : vector<64x8xf32> to vector<64x8xbf16>
    %c0_14 = arith.constant 0 : index
    %c8 = arith.constant 8 : index
    %22 = vector.load %arg13[%c0_14, %c8] : memref<64x24xbf16, #tpu.memory_space<vmem>>, vector<64x8xbf16>
    tpu.vector_store %arg13[%c0_14, %c8], %21 {strides = array<i32>} : memref<64x24xbf16, #tpu.memory_space<vmem>>, vector<64x8xbf16>,
    %c0_15 = arith.constant 0 : index
    %c0_16 = arith.constant 0 : index
    %23 = vector.load %arg3[%c0_15, %c0_16] : memref<64x8xbf16, #tpu.memory_space<vmem>>, vector<64x8xbf16>
    %24 = arith.extf %23 : vector<64x8xbf16> to vector<64x8xf32>
    %c0_17 = arith.constant 0 : index
    %c0_18 = arith.constant 0 : index
    %25 = vector.load %arg6[%c0_17, %c0_18] : memref<1x8xf32, #tpu.memory_space<vmem>>, vector<1x8xf32>
    %26 = vector.broadcast %25 : vector<1x8xf32> to vector<64x8xf32>
    %27 = arith.mulf %24, %26 : vector<64x8xf32>
    %c0_19 = arith.constant 0 : index
    %c0_20 = arith.constant 0 : index
    %28 = vector.load %arg9[%c0_19, %c0_20] : memref<1x8xf32, #tpu.memory_space<vmem>>, vector<1x8xf32>
    %29 = vector.broadcast %28 : vector<1x8xf32> to vector<64x8xf32>
    %30 = arith.addf %27, %29 : vector<64x8xf32>
    %cst_21 = arith.constant 0.000000e+00 : f32
    %31 = vector.broadcast %cst_21 : f32 to vector<64x8xf32>
    %32 = arith.maximumf %30, %31 : vector<64x8xf32>
    %33 = arith.truncf %32 : vector<64x8xf32> to vector<64x8xbf16>
    %c0_22 = arith.constant 0 : index
    %c16 = arith.constant 16 : index
    %34 = vector.load %arg13[%c0_22, %c16] : memref<64x24xbf16, #tpu.memory_space<vmem>>, vector<64x8xbf16>
    tpu.vector_store %arg13[%c0_22, %c16], %33 {strides = array<i32>} : memref<64x24xbf16, #tpu.memory_space<vmem>>, vector<64x8xbf16>,
    %c0_23 = arith.constant 0 : index
    %c0_24 = arith.constant 0 : index
    %35 = vector.load %arg13[%c0_23, %c0_24] : memref<64x24xbf16, #tpu.memory_space<vmem>>, vector<64x24xbf16>
    %c0_25 = arith.constant 0 : index
    %c0_26 = arith.constant 0 : index
    %36 = vector.load %arg10[%c0_25, %c0_26] : memref<24x8xbf16, #tpu.memory_space<vmem>>, vector<24x8xbf16>
    %cst_27 = arith.constant dense<0.000000e+00> : vector<64x8xf32>
    %37 = tpu.matmul %35, %36, %cst_27 {dimension_numbers = #tpu.dot_dimension_numbers<[1], [0], [0], [1], [0, 0, 1, 1], [], []>} : vector<64x24xbf16>, vector<24x8xbf16>, vector<64x8xf32> -> vector<64x8xf32>
    %38 = arith.truncf %37 : vector<64x8xf32> to vector<64x8xbf16>
    %c0_28 = arith.constant 0 : index
    %c0_29 = arith.constant 0 : index
    %39 = vector.load %arg11[%c0_28, %c0_29] : memref<64x8xbf16, #tpu.memory_space<vmem>>, vector<64x8xbf16>
    tpu.vector_store %arg11[%c0_28, %c0_29], %38 {strides = array<i32>} : memref<64x8xbf16, #tpu.memory_space<vmem>>, vector<64x8xbf16>,
    %cst_30 = arith.constant dense<0.000000e+00> : vector<8xf32>
    %40 = vector.multi_reduction <add>, %37, %cst_30 [0] : vector<64x8xf32> to vector<8xf32>
    %41 = vector.shape_cast %40 : vector<8xf32> to vector<1x8xf32>
    %42 = arith.mulf %37, %37 : vector<64x8xf32>
    %cst_31 = arith.constant dense<0.000000e+00> : vector<8xf32>
    %43 = vector.multi_reduction <add>, %42, %cst_31 [0] : vector<64x8xf32> to vector<8xf32>
    %44 = vector.shape_cast %43 : vector<8xf32> to vector<1x8xf32>
    %45 = tpu.concatenate %41, %44 in 0 : vector<1x8xf32>, vector<1x8xf32> -> vector<2x8xf32>
    %c0_32 = arith.constant 0 : index
    %c0_33 = arith.constant 0 : index
    %c0_34 = arith.constant 0 : index
    %46 = vector.load %arg12[%c0_32, %c0_33, %c0_34] : memref<1x2x8xf32, #tpu.memory_space<vmem>>, vector<1x2x8xf32>
    %47 = vector.shape_cast %46 : vector<1x2x8xf32> to vector<2x8xf32>
    %48 = vector.shape_cast %45 : vector<2x8xf32> to vector<1x2x8xf32>
    tpu.vector_store %arg12[%c0_32, %c0_33, %c0_34], %48 {strides = array<i32>} : memref<1x2x8xf32, #tpu.memory_space<vmem>>, vector<1x2x8xf32>,
    return
  }
  func.func @transform_0(%arg0: i32) -> (i32, i32) {
    %c0_i32 = arith.constant 0 : i32
    %c0_i32_0 = arith.constant 0 : i32
    return %arg0, %c0_i32 : i32, i32
  }
  func.func @transform_1(%arg0: i32) -> (i32, i32) {
    %c0_i32 = arith.constant 0 : i32
    %c0_i32_0 = arith.constant 0 : i32
    return %arg0, %c0_i32 : i32, i32
  }
  func.func @transform_2(%arg0: i32) -> (i32, i32) {
    %c0_i32 = arith.constant 0 : i32
    %c0_i32_0 = arith.constant 0 : i32
    return %arg0, %c0_i32 : i32, i32
  }
  func.func @transform_3(%arg0: i32) -> (i32, i32) {
    %c0_i32 = arith.constant 0 : i32
    %c0_i32_0 = arith.constant 0 : i32
    %c0_i32_1 = arith.constant 0 : i32
    return %c0_i32, %c0_i32_0 : i32, i32
  }
  func.func @transform_4(%arg0: i32) -> (i32, i32) {
    %c0_i32 = arith.constant 0 : i32
    %c0_i32_0 = arith.constant 0 : i32
    %c0_i32_1 = arith.constant 0 : i32
    return %c0_i32, %c0_i32_0 : i32, i32
  }
  func.func @transform_5(%arg0: i32) -> (i32, i32) {
    %c0_i32 = arith.constant 0 : i32
    %c0_i32_0 = arith.constant 0 : i32
    %c0_i32_1 = arith.constant 0 : i32
    return %c0_i32, %c0_i32_0 : i32, i32
  }
  func.func @transform_6(%arg0: i32) -> (i32, i32) {
    %c0_i32 = arith.constant 0 : i32
    %c0_i32_0 = arith.constant 0 : i32
    %c0_i32_1 = arith.constant 0 : i32
    return %c0_i32, %c0_i32_0 : i32, i32
  }
  func.func @transform_7(%arg0: i32) -> (i32, i32) {
    %c0_i32 = arith.constant 0 : i32
    %c0_i32_0 = arith.constant 0 : i32
    %c0_i32_1 = arith.constant 0 : i32
    return %c0_i32, %c0_i32_0 : i32, i32
  }
  func.func @transform_8(%arg0: i32) -> (i32, i32) {
    %c0_i32 = arith.constant 0 : i32
    %c0_i32_0 = arith.constant 0 : i32
    %c0_i32_1 = arith.constant 0 : i32
    return %c0_i32, %c0_i32_0 : i32, i32
  }
  func.func @transform_9(%arg0: i32) -> (i32, i32) {
    %c0_i32 = arith.constant 0 : i32
    %c0_i32_0 = arith.constant 0 : i32
    %c0_i32_1 = arith.constant 0 : i32
    return %c0_i32, %c0_i32_0 : i32, i32
  }
  func.func @transform_10(%arg0: i32) -> (i32, i32) {
    %c0_i32 = arith.constant 0 : i32
    %c0_i32_0 = arith.constant 0 : i32
    return %arg0, %c0_i32 : i32, i32
  }
  func.func @transform_11(%arg0: i32) -> (i32, i32, i32) {
    %c0_i32 = arith.constant 0 : i32
    %c0_i32_0 = arith.constant 0 : i32
    %c0_i32_1 = arith.constant 0 : i32
    return %arg0, %c0_i32, %c0_i32_0 : i32, i32, i32
  }
}

module attributes {stable_mosaic.version = 11 : i64} {
  func.func @kernel(%arg0: i32, %arg1: memref<1x8x8x8xbf16, #tpu.memory_space<vmem>>, %arg2: memref<1x8xf32, #tpu.memory_space<vmem>>, %arg3: memref<1x8xf32, #tpu.memory_space<vmem>>, %arg4: memref<9x8x8xbf16, #tpu.memory_space<vmem>>, %arg5: memref<1x8x8x8xbf16, #tpu.memory_space<vmem>>, %arg6: memref<1x2x8xf32, #tpu.memory_space<vmem>>, %arg7: memref<12x12x8xbf16, #tpu.memory_space<vmem>>) attributes {dimension_semantics = [#tpu.dimension_semantics<parallel>], iteration_bounds = array<i64: 2>, scalar_prefetch = 0 : i64, scratch_operands = 1 : i64, tpu.core_type = #tpu.core_type<tc>, window_params = [{transform_indices = @transform_0, window_bounds = array<i64: 1, 8, 8, 8>}, {pipeline_mode = #tpu.pipeline_mode<synchronous>, transform_indices = @transform_1, window_bounds = array<i64: 1, 8>}, {pipeline_mode = #tpu.pipeline_mode<synchronous>, transform_indices = @transform_2, window_bounds = array<i64: 1, 8>}, {pipeline_mode = #tpu.pipeline_mode<synchronous>, transform_indices = @transform_3, window_bounds = array<i64: 9, 8, 8>}, {transform_indices = @transform_4, window_bounds = array<i64: 1, 8, 8, 8>}, {transform_indices = @transform_5, window_bounds = array<i64: 1, 2, 8>}]} {
    %c0 = arith.constant 0 : index
    %c0_0 = arith.constant 0 : index
    %0 = vector.load %arg2[%c0, %c0_0] : memref<1x8xf32, #tpu.memory_space<vmem>>, vector<1x8xf32>
    %1 = vector.shape_cast %0 : vector<1x8xf32> to vector<1x1x8xf32>
    %c0_1 = arith.constant 0 : index
    %c0_2 = arith.constant 0 : index
    %2 = vector.load %arg3[%c0_1, %c0_2] : memref<1x8xf32, #tpu.memory_space<vmem>>, vector<1x8xf32>
    %3 = vector.shape_cast %2 : vector<1x8xf32> to vector<1x1x8xf32>
    %c0_3 = arith.constant 0 : index
    %c0_4 = arith.constant 0 : index
    %c0_5 = arith.constant 0 : index
    %c0_6 = arith.constant 0 : index
    %4 = vector.load %arg1[%c0_3, %c0_4, %c0_5, %c0_6] : memref<1x8x8x8xbf16, #tpu.memory_space<vmem>>, vector<1x8x8x8xbf16>
    %5 = vector.shape_cast %4 : vector<1x8x8x8xbf16> to vector<8x8x8xbf16>
    %6 = arith.extf %5 : vector<8x8x8xbf16> to vector<8x8x8xf32>
    %7 = vector.broadcast %1 : vector<1x1x8xf32> to vector<8x8x8xf32>
    %8 = arith.mulf %6, %7 : vector<8x8x8xf32>
    %9 = vector.broadcast %3 : vector<1x1x8xf32> to vector<8x8x8xf32>
    %10 = arith.addf %8, %9 : vector<8x8x8xf32>
    %cst = arith.constant 0.000000e+00 : f32
    %11 = vector.broadcast %cst : f32 to vector<8x8x8xf32>
    %12 = arith.maximumf %10, %11 : vector<8x8x8xf32>
    %cst_7 = arith.constant 0.000000e+00 : bf16
    %13 = vector.broadcast %cst_7 : bf16 to vector<2x12x8xbf16>
    %c0_8 = arith.constant 0 : index
    %c0_9 = arith.constant 0 : index
    %c0_10 = arith.constant 0 : index
    %14 = vector.load %arg7[%c0_8, %c0_9, %c0_10] : memref<12x12x8xbf16, #tpu.memory_space<vmem>>, vector<2x12x8xbf16>
    tpu.vector_store %arg7[%c0_8, %c0_9, %c0_10], %13 {strides = array<i32>} : memref<12x12x8xbf16, #tpu.memory_space<vmem>>, vector<2x12x8xbf16>,
    %cst_11 = arith.constant 0.000000e+00 : bf16
    %15 = vector.broadcast %cst_11 : bf16 to vector<2x12x8xbf16>
    %c10 = arith.constant 10 : index
    %c0_12 = arith.constant 0 : index
    %c0_13 = arith.constant 0 : index
    %16 = vector.load %arg7[%c10, %c0_12, %c0_13] : memref<12x12x8xbf16, #tpu.memory_space<vmem>>, vector<2x12x8xbf16>
    tpu.vector_store %arg7[%c10, %c0_12, %c0_13], %15 {strides = array<i32>} : memref<12x12x8xbf16, #tpu.memory_space<vmem>>, vector<2x12x8xbf16>,
    %cst_14 = arith.constant 0.000000e+00 : bf16
    %17 = vector.broadcast %cst_14 : bf16 to vector<8x2x8xbf16>
    %c2 = arith.constant 2 : index
    %c0_15 = arith.constant 0 : index
    %c0_16 = arith.constant 0 : index
    %18 = vector.load %arg7[%c2, %c0_15, %c0_16] : memref<12x12x8xbf16, #tpu.memory_space<vmem>>, vector<8x2x8xbf16>
    tpu.vector_store %arg7[%c2, %c0_15, %c0_16], %17 {strides = array<i32>} : memref<12x12x8xbf16, #tpu.memory_space<vmem>>, vector<8x2x8xbf16>,
    %cst_17 = arith.constant 0.000000e+00 : bf16
    %19 = vector.broadcast %cst_17 : bf16 to vector<8x2x8xbf16>
    %c2_18 = arith.constant 2 : index
    %c10_19 = arith.constant 10 : index
    %c0_20 = arith.constant 0 : index
    %20 = vector.load %arg7[%c2_18, %c10_19, %c0_20] : memref<12x12x8xbf16, #tpu.memory_space<vmem>>, vector<8x2x8xbf16>
    tpu.vector_store %arg7[%c2_18, %c10_19, %c0_20], %19 {strides = array<i32>} : memref<12x12x8xbf16, #tpu.memory_space<vmem>>, vector<8x2x8xbf16>,
    %21 = arith.truncf %12 : vector<8x8x8xf32> to vector<8x8x8xbf16>
    %c2_21 = arith.constant 2 : index
    %c2_22 = arith.constant 2 : index
    %c0_23 = arith.constant 0 : index
    %22 = vector.load %arg7[%c2_21, %c2_22, %c0_23] : memref<12x12x8xbf16, #tpu.memory_space<vmem>>, vector<8x8x8xbf16>
    tpu.vector_store %arg7[%c2_21, %c2_22, %c0_23], %21 {strides = array<i32>} : memref<12x12x8xbf16, #tpu.memory_space<vmem>>, vector<8x8x8xbf16>,
    %cst_24 = arith.constant 0.000000e+00 : f32
    %23 = vector.broadcast %cst_24 : f32 to vector<64x8xf32>
    %c0_25 = arith.constant 0 : index
    %c0_26 = arith.constant 0 : index
    %c0_27 = arith.constant 0 : index
    %24 = vector.load %arg7[%c0_25, %c0_26, %c0_27] : memref<12x12x8xbf16, #tpu.memory_space<vmem>>, vector<8x8x8xbf16>
    %25 = vector.shape_cast %24 : vector<8x8x8xbf16> to vector<64x8xbf16>
    %c0_28 = arith.constant 0 : index
    %c0_29 = arith.constant 0 : index
    %c0_30 = arith.constant 0 : index
    %26 = vector.load %arg4[%c0_28, %c0_29, %c0_30] : memref<9x8x8xbf16, #tpu.memory_space<vmem>>, vector<1x8x8xbf16>
    %27 = vector.shape_cast %26 : vector<1x8x8xbf16> to vector<8x8xbf16>
    %cst_31 = arith.constant dense<0.000000e+00> : vector<64x8xf32>
    %28 = tpu.matmul %25, %27, %cst_31 {dimension_numbers = #tpu.dot_dimension_numbers<[1], [0], [0], [1], [0, 0, 1, 1], [], []>} : vector<64x8xbf16>, vector<8x8xbf16>, vector<64x8xf32> -> vector<64x8xf32>
    %29 = arith.addf %23, %28 : vector<64x8xf32>
    %c0_32 = arith.constant 0 : index
    %c2_33 = arith.constant 2 : index
    %c0_34 = arith.constant 0 : index
    %30 = vector.load %arg7[%c0_32, %c2_33, %c0_34] : memref<12x12x8xbf16, #tpu.memory_space<vmem>>, vector<8x8x8xbf16>
    %31 = vector.shape_cast %30 : vector<8x8x8xbf16> to vector<64x8xbf16>
    %c1 = arith.constant 1 : index
    %c0_35 = arith.constant 0 : index
    %c0_36 = arith.constant 0 : index
    %32 = vector.load %arg4[%c1, %c0_35, %c0_36] : memref<9x8x8xbf16, #tpu.memory_space<vmem>>, vector<1x8x8xbf16>
    %33 = vector.shape_cast %32 : vector<1x8x8xbf16> to vector<8x8xbf16>
    %cst_37 = arith.constant dense<0.000000e+00> : vector<64x8xf32>
    %34 = tpu.matmul %31, %33, %cst_37 {dimension_numbers = #tpu.dot_dimension_numbers<[1], [0], [0], [1], [0, 0, 1, 1], [], []>} : vector<64x8xbf16>, vector<8x8xbf16>, vector<64x8xf32> -> vector<64x8xf32>
    %35 = arith.addf %29, %34 : vector<64x8xf32>
    %c0_38 = arith.constant 0 : index
    %c4 = arith.constant 4 : index
    %c0_39 = arith.constant 0 : index
    %36 = vector.load %arg7[%c0_38, %c4, %c0_39] : memref<12x12x8xbf16, #tpu.memory_space<vmem>>, vector<8x8x8xbf16>
    %37 = vector.shape_cast %36 : vector<8x8x8xbf16> to vector<64x8xbf16>
    %c2_40 = arith.constant 2 : index
    %c0_41 = arith.constant 0 : index
    %c0_42 = arith.constant 0 : index
    %38 = vector.load %arg4[%c2_40, %c0_41, %c0_42] : memref<9x8x8xbf16, #tpu.memory_space<vmem>>, vector<1x8x8xbf16>
    %39 = vector.shape_cast %38 : vector<1x8x8xbf16> to vector<8x8xbf16>
    %cst_43 = arith.constant dense<0.000000e+00> : vector<64x8xf32>
    %40 = tpu.matmul %37, %39, %cst_43 {dimension_numbers = #tpu.dot_dimension_numbers<[1], [0], [0], [1], [0, 0, 1, 1], [], []>} : vector<64x8xbf16>, vector<8x8xbf16>, vector<64x8xf32> -> vector<64x8xf32>
    %41 = arith.addf %35, %40 : vector<64x8xf32>
    %c2_44 = arith.constant 2 : index
    %c0_45 = arith.constant 0 : index
    %c0_46 = arith.constant 0 : index
    %42 = vector.load %arg7[%c2_44, %c0_45, %c0_46] : memref<12x12x8xbf16, #tpu.memory_space<vmem>>, vector<8x8x8xbf16>
    %43 = vector.shape_cast %42 : vector<8x8x8xbf16> to vector<64x8xbf16>
    %c3 = arith.constant 3 : index
    %c0_47 = arith.constant 0 : index
    %c0_48 = arith.constant 0 : index
    %44 = vector.load %arg4[%c3, %c0_47, %c0_48] : memref<9x8x8xbf16, #tpu.memory_space<vmem>>, vector<1x8x8xbf16>
    %45 = vector.shape_cast %44 : vector<1x8x8xbf16> to vector<8x8xbf16>
    %cst_49 = arith.constant dense<0.000000e+00> : vector<64x8xf32>
    %46 = tpu.matmul %43, %45, %cst_49 {dimension_numbers = #tpu.dot_dimension_numbers<[1], [0], [0], [1], [0, 0, 1, 1], [], []>} : vector<64x8xbf16>, vector<8x8xbf16>, vector<64x8xf32> -> vector<64x8xf32>
    %47 = arith.addf %41, %46 : vector<64x8xf32>
    %c2_50 = arith.constant 2 : index
    %c2_51 = arith.constant 2 : index
    %c0_52 = arith.constant 0 : index
    %48 = vector.load %arg7[%c2_50, %c2_51, %c0_52] : memref<12x12x8xbf16, #tpu.memory_space<vmem>>, vector<8x8x8xbf16>
    %49 = vector.shape_cast %48 : vector<8x8x8xbf16> to vector<64x8xbf16>
    %c4_53 = arith.constant 4 : index
    %c0_54 = arith.constant 0 : index
    %c0_55 = arith.constant 0 : index
    %50 = vector.load %arg4[%c4_53, %c0_54, %c0_55] : memref<9x8x8xbf16, #tpu.memory_space<vmem>>, vector<1x8x8xbf16>
    %51 = vector.shape_cast %50 : vector<1x8x8xbf16> to vector<8x8xbf16>
    %cst_56 = arith.constant dense<0.000000e+00> : vector<64x8xf32>
    %52 = tpu.matmul %49, %51, %cst_56 {dimension_numbers = #tpu.dot_dimension_numbers<[1], [0], [0], [1], [0, 0, 1, 1], [], []>} : vector<64x8xbf16>, vector<8x8xbf16>, vector<64x8xf32> -> vector<64x8xf32>
    %53 = arith.addf %47, %52 : vector<64x8xf32>
    %c2_57 = arith.constant 2 : index
    %c4_58 = arith.constant 4 : index
    %c0_59 = arith.constant 0 : index
    %54 = vector.load %arg7[%c2_57, %c4_58, %c0_59] : memref<12x12x8xbf16, #tpu.memory_space<vmem>>, vector<8x8x8xbf16>
    %55 = vector.shape_cast %54 : vector<8x8x8xbf16> to vector<64x8xbf16>
    %c5 = arith.constant 5 : index
    %c0_60 = arith.constant 0 : index
    %c0_61 = arith.constant 0 : index
    %56 = vector.load %arg4[%c5, %c0_60, %c0_61] : memref<9x8x8xbf16, #tpu.memory_space<vmem>>, vector<1x8x8xbf16>
    %57 = vector.shape_cast %56 : vector<1x8x8xbf16> to vector<8x8xbf16>
    %cst_62 = arith.constant dense<0.000000e+00> : vector<64x8xf32>
    %58 = tpu.matmul %55, %57, %cst_62 {dimension_numbers = #tpu.dot_dimension_numbers<[1], [0], [0], [1], [0, 0, 1, 1], [], []>} : vector<64x8xbf16>, vector<8x8xbf16>, vector<64x8xf32> -> vector<64x8xf32>
    %59 = arith.addf %53, %58 : vector<64x8xf32>
    %c4_63 = arith.constant 4 : index
    %c0_64 = arith.constant 0 : index
    %c0_65 = arith.constant 0 : index
    %60 = vector.load %arg7[%c4_63, %c0_64, %c0_65] : memref<12x12x8xbf16, #tpu.memory_space<vmem>>, vector<8x8x8xbf16>
    %61 = vector.shape_cast %60 : vector<8x8x8xbf16> to vector<64x8xbf16>
    %c6 = arith.constant 6 : index
    %c0_66 = arith.constant 0 : index
    %c0_67 = arith.constant 0 : index
    %62 = vector.load %arg4[%c6, %c0_66, %c0_67] : memref<9x8x8xbf16, #tpu.memory_space<vmem>>, vector<1x8x8xbf16>
    %63 = vector.shape_cast %62 : vector<1x8x8xbf16> to vector<8x8xbf16>
    %cst_68 = arith.constant dense<0.000000e+00> : vector<64x8xf32>
    %64 = tpu.matmul %61, %63, %cst_68 {dimension_numbers = #tpu.dot_dimension_numbers<[1], [0], [0], [1], [0, 0, 1, 1], [], []>} : vector<64x8xbf16>, vector<8x8xbf16>, vector<64x8xf32> -> vector<64x8xf32>
    %65 = arith.addf %59, %64 : vector<64x8xf32>
    %c4_69 = arith.constant 4 : index
    %c2_70 = arith.constant 2 : index
    %c0_71 = arith.constant 0 : index
    %66 = vector.load %arg7[%c4_69, %c2_70, %c0_71] : memref<12x12x8xbf16, #tpu.memory_space<vmem>>, vector<8x8x8xbf16>
    %67 = vector.shape_cast %66 : vector<8x8x8xbf16> to vector<64x8xbf16>
    %c7 = arith.constant 7 : index
    %c0_72 = arith.constant 0 : index
    %c0_73 = arith.constant 0 : index
    %68 = vector.load %arg4[%c7, %c0_72, %c0_73] : memref<9x8x8xbf16, #tpu.memory_space<vmem>>, vector<1x8x8xbf16>
    %69 = vector.shape_cast %68 : vector<1x8x8xbf16> to vector<8x8xbf16>
    %cst_74 = arith.constant dense<0.000000e+00> : vector<64x8xf32>
    %70 = tpu.matmul %67, %69, %cst_74 {dimension_numbers = #tpu.dot_dimension_numbers<[1], [0], [0], [1], [0, 0, 1, 1], [], []>} : vector<64x8xbf16>, vector<8x8xbf16>, vector<64x8xf32> -> vector<64x8xf32>
    %71 = arith.addf %65, %70 : vector<64x8xf32>
    %c4_75 = arith.constant 4 : index
    %c4_76 = arith.constant 4 : index
    %c0_77 = arith.constant 0 : index
    %72 = vector.load %arg7[%c4_75, %c4_76, %c0_77] : memref<12x12x8xbf16, #tpu.memory_space<vmem>>, vector<8x8x8xbf16>
    %73 = vector.shape_cast %72 : vector<8x8x8xbf16> to vector<64x8xbf16>
    %c8 = arith.constant 8 : index
    %c0_78 = arith.constant 0 : index
    %c0_79 = arith.constant 0 : index
    %74 = vector.load %arg4[%c8, %c0_78, %c0_79] : memref<9x8x8xbf16, #tpu.memory_space<vmem>>, vector<1x8x8xbf16>
    %75 = vector.shape_cast %74 : vector<1x8x8xbf16> to vector<8x8xbf16>
    %cst_80 = arith.constant dense<0.000000e+00> : vector<64x8xf32>
    %76 = tpu.matmul %73, %75, %cst_80 {dimension_numbers = #tpu.dot_dimension_numbers<[1], [0], [0], [1], [0, 0, 1, 1], [], []>} : vector<64x8xbf16>, vector<8x8xbf16>, vector<64x8xf32> -> vector<64x8xf32>
    %77 = arith.addf %71, %76 : vector<64x8xf32>
    %78 = vector.shape_cast %77 : vector<64x8xf32> to vector<8x8x8xf32>
    %79 = arith.truncf %78 : vector<8x8x8xf32> to vector<8x8x8xbf16>
    %c0_81 = arith.constant 0 : index
    %c0_82 = arith.constant 0 : index
    %c0_83 = arith.constant 0 : index
    %c0_84 = arith.constant 0 : index
    %80 = vector.load %arg5[%c0_81, %c0_82, %c0_83, %c0_84] : memref<1x8x8x8xbf16, #tpu.memory_space<vmem>>, vector<1x8x8x8xbf16>
    %81 = vector.shape_cast %80 : vector<1x8x8x8xbf16> to vector<8x8x8xbf16>
    %82 = vector.shape_cast %79 : vector<8x8x8xbf16> to vector<1x8x8x8xbf16>
    tpu.vector_store %arg5[%c0_81, %c0_82, %c0_83, %c0_84], %82 {strides = array<i32>} : memref<1x8x8x8xbf16, #tpu.memory_space<vmem>>, vector<1x8x8x8xbf16>,
    %cst_85 = arith.constant dense<0.000000e+00> : vector<8xf32>
    %83 = vector.multi_reduction <add>, %77, %cst_85 [0] : vector<64x8xf32> to vector<8xf32>
    %84 = vector.shape_cast %83 : vector<8xf32> to vector<1x8xf32>
    %85 = arith.mulf %77, %77 : vector<64x8xf32>
    %cst_86 = arith.constant dense<0.000000e+00> : vector<8xf32>
    %86 = vector.multi_reduction <add>, %85, %cst_86 [0] : vector<64x8xf32> to vector<8xf32>
    %87 = vector.shape_cast %86 : vector<8xf32> to vector<1x8xf32>
    %88 = tpu.concatenate %84, %87 in 0 : vector<1x8xf32>, vector<1x8xf32> -> vector<2x8xf32>
    %c0_87 = arith.constant 0 : index
    %c0_88 = arith.constant 0 : index
    %c0_89 = arith.constant 0 : index
    %89 = vector.load %arg6[%c0_87, %c0_88, %c0_89] : memref<1x2x8xf32, #tpu.memory_space<vmem>>, vector<1x2x8xf32>
    %90 = vector.shape_cast %89 : vector<1x2x8xf32> to vector<2x8xf32>
    %91 = vector.shape_cast %88 : vector<2x8xf32> to vector<1x2x8xf32>
    tpu.vector_store %arg6[%c0_87, %c0_88, %c0_89], %91 {strides = array<i32>} : memref<1x2x8xf32, #tpu.memory_space<vmem>>, vector<1x2x8xf32>,
    return
  }
  func.func @transform_0(%arg0: i32) -> (i32, i32, i32, i32) {
    %c0_i32 = arith.constant 0 : i32
    %c0_i32_0 = arith.constant 0 : i32
    %c0_i32_1 = arith.constant 0 : i32
    %c0_i32_2 = arith.constant 0 : i32
    return %arg0, %c0_i32, %c0_i32_0, %c0_i32_1 : i32, i32, i32, i32
  }
  func.func @transform_1(%arg0: i32) -> (i32, i32) {
    %c0_i32 = arith.constant 0 : i32
    %c0_i32_0 = arith.constant 0 : i32
    %c0_i32_1 = arith.constant 0 : i32
    return %c0_i32, %c0_i32_0 : i32, i32
  }
  func.func @transform_2(%arg0: i32) -> (i32, i32) {
    %c0_i32 = arith.constant 0 : i32
    %c0_i32_0 = arith.constant 0 : i32
    %c0_i32_1 = arith.constant 0 : i32
    return %c0_i32, %c0_i32_0 : i32, i32
  }
  func.func @transform_3(%arg0: i32) -> (i32, i32, i32) {
    %c0_i32 = arith.constant 0 : i32
    %c0_i32_0 = arith.constant 0 : i32
    %c0_i32_1 = arith.constant 0 : i32
    %c0_i32_2 = arith.constant 0 : i32
    return %c0_i32, %c0_i32_0, %c0_i32_1 : i32, i32, i32
  }
  func.func @transform_4(%arg0: i32) -> (i32, i32, i32, i32) {
    %c0_i32 = arith.constant 0 : i32
    %c0_i32_0 = arith.constant 0 : i32
    %c0_i32_1 = arith.constant 0 : i32
    %c0_i32_2 = arith.constant 0 : i32
    return %arg0, %c0_i32, %c0_i32_0, %c0_i32_1 : i32, i32, i32, i32
  }
  func.func @transform_5(%arg0: i32) -> (i32, i32, i32) {
    %c0_i32 = arith.constant 0 : i32
    %c0_i32_0 = arith.constant 0 : i32
    %c0_i32_1 = arith.constant 0 : i32
    return %arg0, %c0_i32, %c0_i32_0 : i32, i32, i32
  }
}

module attributes {stable_mosaic.version = 11 : i64} {
  func.func @kernel(%arg0: i32, %arg1: memref<64x8xbf16, #tpu.memory_space<vmem>>, %arg2: memref<64x8xbf16, #tpu.memory_space<vmem>>, %arg3: memref<1x8xf32, #tpu.memory_space<vmem>>, %arg4: memref<1x8xf32, #tpu.memory_space<vmem>>, %arg5: memref<1x8xf32, #tpu.memory_space<vmem>>, %arg6: memref<1x8xf32, #tpu.memory_space<vmem>>, %arg7: memref<16x8xbf16, #tpu.memory_space<vmem>>, %arg8: memref<64x8xbf16, #tpu.memory_space<vmem>>, %arg9: memref<1x2x8xf32, #tpu.memory_space<vmem>>, %arg10: memref<64x16xbf16, #tpu.memory_space<vmem>>) attributes {dimension_semantics = [#tpu.dimension_semantics<parallel>], iteration_bounds = array<i64: 2>, scalar_prefetch = 0 : i64, scratch_operands = 1 : i64, tpu.core_type = #tpu.core_type<tc>, window_params = [{transform_indices = @transform_0, window_bounds = array<i64: 64, 8>}, {transform_indices = @transform_1, window_bounds = array<i64: 64, 8>}, {pipeline_mode = #tpu.pipeline_mode<synchronous>, transform_indices = @transform_2, window_bounds = array<i64: 1, 8>}, {pipeline_mode = #tpu.pipeline_mode<synchronous>, transform_indices = @transform_3, window_bounds = array<i64: 1, 8>}, {pipeline_mode = #tpu.pipeline_mode<synchronous>, transform_indices = @transform_4, window_bounds = array<i64: 1, 8>}, {pipeline_mode = #tpu.pipeline_mode<synchronous>, transform_indices = @transform_5, window_bounds = array<i64: 1, 8>}, {pipeline_mode = #tpu.pipeline_mode<synchronous>, transform_indices = @transform_6, window_bounds = array<i64: 16, 8>}, {transform_indices = @transform_7, window_bounds = array<i64: 64, 8>}, {transform_indices = @transform_8, window_bounds = array<i64: 1, 2, 8>}]} {
    %c0 = arith.constant 0 : index
    %c0_0 = arith.constant 0 : index
    %0 = vector.load %arg1[%c0, %c0_0] : memref<64x8xbf16, #tpu.memory_space<vmem>>, vector<64x8xbf16>
    %1 = arith.extf %0 : vector<64x8xbf16> to vector<64x8xf32>
    %c0_1 = arith.constant 0 : index
    %c0_2 = arith.constant 0 : index
    %2 = vector.load %arg3[%c0_1, %c0_2] : memref<1x8xf32, #tpu.memory_space<vmem>>, vector<1x8xf32>
    %3 = vector.broadcast %2 : vector<1x8xf32> to vector<64x8xf32>
    %4 = arith.mulf %1, %3 : vector<64x8xf32>
    %c0_3 = arith.constant 0 : index
    %c0_4 = arith.constant 0 : index
    %5 = vector.load %arg5[%c0_3, %c0_4] : memref<1x8xf32, #tpu.memory_space<vmem>>, vector<1x8xf32>
    %6 = vector.broadcast %5 : vector<1x8xf32> to vector<64x8xf32>
    %7 = arith.addf %4, %6 : vector<64x8xf32>
    %cst = arith.constant 0.000000e+00 : f32
    %8 = vector.broadcast %cst : f32 to vector<64x8xf32>
    %9 = arith.maximumf %7, %8 : vector<64x8xf32>
    %10 = arith.truncf %9 : vector<64x8xf32> to vector<64x8xbf16>
    %c0_5 = arith.constant 0 : index
    %c0_6 = arith.constant 0 : index
    %11 = vector.load %arg10[%c0_5, %c0_6] : memref<64x16xbf16, #tpu.memory_space<vmem>>, vector<64x8xbf16>
    tpu.vector_store %arg10[%c0_5, %c0_6], %10 {strides = array<i32>} : memref<64x16xbf16, #tpu.memory_space<vmem>>, vector<64x8xbf16>,
    %c0_7 = arith.constant 0 : index
    %c0_8 = arith.constant 0 : index
    %12 = vector.load %arg2[%c0_7, %c0_8] : memref<64x8xbf16, #tpu.memory_space<vmem>>, vector<64x8xbf16>
    %13 = arith.extf %12 : vector<64x8xbf16> to vector<64x8xf32>
    %c0_9 = arith.constant 0 : index
    %c0_10 = arith.constant 0 : index
    %14 = vector.load %arg4[%c0_9, %c0_10] : memref<1x8xf32, #tpu.memory_space<vmem>>, vector<1x8xf32>
    %15 = vector.broadcast %14 : vector<1x8xf32> to vector<64x8xf32>
    %16 = arith.mulf %13, %15 : vector<64x8xf32>
    %c0_11 = arith.constant 0 : index
    %c0_12 = arith.constant 0 : index
    %17 = vector.load %arg6[%c0_11, %c0_12] : memref<1x8xf32, #tpu.memory_space<vmem>>, vector<1x8xf32>
    %18 = vector.broadcast %17 : vector<1x8xf32> to vector<64x8xf32>
    %19 = arith.addf %16, %18 : vector<64x8xf32>
    %cst_13 = arith.constant 0.000000e+00 : f32
    %20 = vector.broadcast %cst_13 : f32 to vector<64x8xf32>
    %21 = arith.maximumf %19, %20 : vector<64x8xf32>
    %22 = arith.truncf %21 : vector<64x8xf32> to vector<64x8xbf16>
    %c0_14 = arith.constant 0 : index
    %c8 = arith.constant 8 : index
    %23 = vector.load %arg10[%c0_14, %c8] : memref<64x16xbf16, #tpu.memory_space<vmem>>, vector<64x8xbf16>
    tpu.vector_store %arg10[%c0_14, %c8], %22 {strides = array<i32>} : memref<64x16xbf16, #tpu.memory_space<vmem>>, vector<64x8xbf16>,
    %c0_15 = arith.constant 0 : index
    %c0_16 = arith.constant 0 : index
    %24 = vector.load %arg10[%c0_15, %c0_16] : memref<64x16xbf16, #tpu.memory_space<vmem>>, vector<64x16xbf16>
    %c0_17 = arith.constant 0 : index
    %c0_18 = arith.constant 0 : index
    %25 = vector.load %arg7[%c0_17, %c0_18] : memref<16x8xbf16, #tpu.memory_space<vmem>>, vector<16x8xbf16>
    %cst_19 = arith.constant dense<0.000000e+00> : vector<64x8xf32>
    %26 = tpu.matmul %24, %25, %cst_19 {dimension_numbers = #tpu.dot_dimension_numbers<[1], [0], [0], [1], [0, 0, 1, 1], [], []>} : vector<64x16xbf16>, vector<16x8xbf16>, vector<64x8xf32> -> vector<64x8xf32>
    %27 = arith.truncf %26 : vector<64x8xf32> to vector<64x8xbf16>
    %c0_20 = arith.constant 0 : index
    %c0_21 = arith.constant 0 : index
    %28 = vector.load %arg8[%c0_20, %c0_21] : memref<64x8xbf16, #tpu.memory_space<vmem>>, vector<64x8xbf16>
    tpu.vector_store %arg8[%c0_20, %c0_21], %27 {strides = array<i32>} : memref<64x8xbf16, #tpu.memory_space<vmem>>, vector<64x8xbf16>,
    %cst_22 = arith.constant dense<0.000000e+00> : vector<8xf32>
    %29 = vector.multi_reduction <add>, %26, %cst_22 [0] : vector<64x8xf32> to vector<8xf32>
    %30 = vector.shape_cast %29 : vector<8xf32> to vector<1x8xf32>
    %31 = arith.mulf %26, %26 : vector<64x8xf32>
    %cst_23 = arith.constant dense<0.000000e+00> : vector<8xf32>
    %32 = vector.multi_reduction <add>, %31, %cst_23 [0] : vector<64x8xf32> to vector<8xf32>
    %33 = vector.shape_cast %32 : vector<8xf32> to vector<1x8xf32>
    %34 = tpu.concatenate %30, %33 in 0 : vector<1x8xf32>, vector<1x8xf32> -> vector<2x8xf32>
    %c0_24 = arith.constant 0 : index
    %c0_25 = arith.constant 0 : index
    %c0_26 = arith.constant 0 : index
    %35 = vector.load %arg9[%c0_24, %c0_25, %c0_26] : memref<1x2x8xf32, #tpu.memory_space<vmem>>, vector<1x2x8xf32>
    %36 = vector.shape_cast %35 : vector<1x2x8xf32> to vector<2x8xf32>
    %37 = vector.shape_cast %34 : vector<2x8xf32> to vector<1x2x8xf32>
    tpu.vector_store %arg9[%c0_24, %c0_25, %c0_26], %37 {strides = array<i32>} : memref<1x2x8xf32, #tpu.memory_space<vmem>>, vector<1x2x8xf32>,
    return
  }
  func.func @transform_0(%arg0: i32) -> (i32, i32) {
    %c0_i32 = arith.constant 0 : i32
    %c0_i32_0 = arith.constant 0 : i32
    return %arg0, %c0_i32 : i32, i32
  }
  func.func @transform_1(%arg0: i32) -> (i32, i32) {
    %c0_i32 = arith.constant 0 : i32
    %c0_i32_0 = arith.constant 0 : i32
    return %arg0, %c0_i32 : i32, i32
  }
  func.func @transform_2(%arg0: i32) -> (i32, i32) {
    %c0_i32 = arith.constant 0 : i32
    %c0_i32_0 = arith.constant 0 : i32
    %c0_i32_1 = arith.constant 0 : i32
    return %c0_i32, %c0_i32_0 : i32, i32
  }
  func.func @transform_3(%arg0: i32) -> (i32, i32) {
    %c0_i32 = arith.constant 0 : i32
    %c0_i32_0 = arith.constant 0 : i32
    %c0_i32_1 = arith.constant 0 : i32
    return %c0_i32, %c0_i32_0 : i32, i32
  }
  func.func @transform_4(%arg0: i32) -> (i32, i32) {
    %c0_i32 = arith.constant 0 : i32
    %c0_i32_0 = arith.constant 0 : i32
    %c0_i32_1 = arith.constant 0 : i32
    return %c0_i32, %c0_i32_0 : i32, i32
  }
  func.func @transform_5(%arg0: i32) -> (i32, i32) {
    %c0_i32 = arith.constant 0 : i32
    %c0_i32_0 = arith.constant 0 : i32
    %c0_i32_1 = arith.constant 0 : i32
    return %c0_i32, %c0_i32_0 : i32, i32
  }
  func.func @transform_6(%arg0: i32) -> (i32, i32) {
    %c0_i32 = arith.constant 0 : i32
    %c0_i32_0 = arith.constant 0 : i32
    %c0_i32_1 = arith.constant 0 : i32
    return %c0_i32, %c0_i32_0 : i32, i32
  }
  func.func @transform_7(%arg0: i32) -> (i32, i32) {
    %c0_i32 = arith.constant 0 : i32
    %c0_i32_0 = arith.constant 0 : i32
    return %arg0, %c0_i32 : i32, i32
  }
  func.func @transform_8(%arg0: i32) -> (i32, i32, i32) {
    %c0_i32 = arith.constant 0 : i32
    %c0_i32_0 = arith.constant 0 : i32
    %c0_i32_1 = arith.constant 0 : i32
    return %arg0, %c0_i32, %c0_i32_0 : i32, i32, i32
  }
}

</mosaic_0001>

<llo_original>
// kernel: clique_block_forward.12
$region0: #{clique_block_forward.12}
  #allocation0 [shape = 'u32[]', space=smem, size = 0x4, offset = 0x4, fixed_abs, tag = 'smem constant byte address 0x4 - core index']
  #allocation1 [shape = 'u32[144,128]{1,0:T(1,128)}', space=vmem, size = 0x12000, scoped, tag = 'internal scratch']
  #allocation2 [shape = 'bf16[64,8]{1,0:T(16,128)(2,1)}', space=vmem, size = 0x4000, scoped, tag = 'scratch operand']
  %s0 = inlined_call_operand.vmem [shape: f32[128,8], index: 0, kind: input, shape index: {}]
  %s1 = inlined_call_operand.vmem [shape: f32[1,8], index: 1, kind: input, shape index: {}]
  %s2 = inlined_call_operand.vmem [shape: f32[1,8], index: 2, kind: input, shape index: {}]
  %s3 = inlined_call_operand.vmem [shape: bf16[8,8], index: 3, kind: input, shape index: {}]
  %s4 = inlined_call_operand.vmem [shape: bf16[128,8], index: 4, kind: output, shape index: {0}]
  %s5 = inlined_call_operand.vmem [shape: f32[2,2,8], index: 5, kind: output, shape index: {1}]
  %6 = xla_tuple %s4, %s5
  %s7 = sld [smem:[#allocation0]]
  $region57: #{clique_block_forward.12} parent=0
    _
  %s9 = ssub.s32 1, %s7
  %s10 = scalar_select 0, %s9, %s7
  loop: start=0, step=1, limit=4
  $region2: #{clique_block_forward.12} parent=0 // loop_pre_header
    _
  $region3: #{clique_block_forward.12} parent=0 // loop_header
    %s12 = sphi 0, %s16
    %p13 = scmp.ge.s32.totalorder %s12, 4
    %s22 = sphi 0, %s24
    %s25 = sphi 0, %s22
    %s26 = sphi 0, %s25
    %s42 = sphi 0, %s26
    %s46 = sphi 0, %s46
    %s48 = sphi 0, %s46
    %s49 = sphi 0, %s48
    %s63 = sphi 0, %s49
    %s67 = sphi 0, %s67
    %s69 = sphi 0, %s67
    %s70 = sphi 0, %s69
    %s84 = sphi 0, %s70
    %s88 = sphi 0, %s88
    %s90 = sphi 0, %s88
    %s91 = sphi 0, %s90
    %s105 = sphi 0, %s91
    %s111 = sphi 0, %s113
    %s114 = sphi 0, %s111
    %s115 = sphi 0, %s114
    %s131 = sphi 0, %s115
    %s137 = sphi 0, %s139
    %s140 = sphi 0, %s137
    %s141 = sphi 0, %s140
    %s157 = sphi 0, %s141
  $region4: #{clique_block_forward.12} parent=0 // loop_header_branch
    %15 = sbr.rel (%p13) target = $region8
  $region5: #{clique_block_forward.12} parent=0 // loop_body
    %s17 = ssub.s32 %s12, 1
    %s18 = ssub.s32 %s12, 2
    %s19 = sadd.s32 %s12, 1
    %s20 = ssub.s32 %s12, %s19
    %p21 = scmp.eq.s32.totalorder %s20, 0
    %s23 = sadd.s32 %s22, 1
    %s24 = scalar_select %p21, %s22, %s23
    %p27 = pneg %p21
    %p28 = scmp.eq.s32.totalorder %s12, 1
    %p29 = por %p27, %p28
    %p30 = scmp.ne.s32.totalorder %s22, %s25
    %p31 = scmp.eq.s32.totalorder %s12, 0
    %p32 = por %p30, %p31
    %p33 = scmp.ne.s32.totalorder %s22, %s25
    %p34 = scmp.eq.s32.totalorder %s17, 1
    %p35 = por %p33, %p34
    %p36 = scmp.ne.s32.totalorder %s25, %s26
    %p37 = scmp.eq.s32.totalorder %s17, 0
    %p38 = por %p36, %p37
    %p39 = scmp.ne.s32.totalorder %s25, %s26
    %p40 = scmp.eq.s32.totalorder %s18, 1
    %p41 = por %p39, %p40
    %p43 = scmp.ne.s32.totalorder %s26, %s42
    %p44 = scmp.eq.s32.totalorder %s18, 0
    %p45 = por %p43, %p44
    %s47 = sadd.s32 %s46, 1
    %p50 = scmp.eq.s32.totalorder %s12, 1
    %p51 = scmp.ne.s32.totalorder %s46, %s48
    %p52 = scmp.eq.s32.totalorder %s12, 0
    %p53 = por %p51, %p52
    %p54 = scmp.ne.s32.totalorder %s46, %s48
    %p55 = scmp.eq.s32.totalorder %s17, 1
    %p56 = por %p54, %p55
    %p57 = scmp.ne.s32.totalorder %s48, %s49
    %p58 = scmp.eq.s32.totalorder %s17, 0
    %p59 = por %p57, %p58
    %p60 = scmp.ne.s32.totalorder %s48, %s49
    %p61 = scmp.eq.s32.totalorder %s18, 1
    %p62 = por %p60, %p61
    %p64 = scmp.ne.s32.totalorder %s49, %s63
    %p65 = scmp.eq.s32.totalorder %s18, 0
    %p66 = por %p64, %p65
    %s68 = sadd.s32 %s67, 1
    %p71 = scmp.eq.s32.totalorder %s12, 1
    %p72 = scmp.ne.s32.totalorder %s67, %s69
    %p73 = scmp.eq.s32.totalorder %s12, 0
    %p74 = por %p72, %p73
    %p75 = scmp.ne.s32.totalorder %s67, %s69
    %p76 = scmp.eq.s32.totalorder %s17, 1
    %p77 = por %p75, %p76
    %p78 = scmp.ne.s32.totalorder %s69, %s70
    %p79 = scmp.eq.s32.totalorder %s17, 0
    %p80 = por %p78, %p79
    %p81 = scmp.ne.s32.totalorder %s69, %s70
    %p82 = scmp.eq.s32.totalorder %s18, 1
    %p83 = por %p81, %p82
    %p85 = scmp.ne.s32.totalorder %s70, %s84
    %p86 = scmp.eq.s32.totalorder %s18, 0
    %p87 = por %p85, %p86
    %s89 = sadd.s32 %s88, 1
    %p92 = scmp.eq.s32.totalorder %s12, 1
    %p93 = scmp.ne.s32.totalorder %s88, %s90
    %p94 = scmp.eq.s32.totalorder %s12, 0
    %p95 = por %p93, %p94
    %p96 = scmp.ne.s32.totalorder %s88, %s90
    %p97 = scmp.eq.s32.totalorder %s17, 1
    %p98 = por %p96, %p97
    %p99 = scmp.ne.s32.totalorder %s90, %s91
    %p100 = scmp.eq.s32.totalorder %s17, 0
    %p101 = por %p99, %p100
    %p102 = scmp.ne.s32.totalorder %s90, %s91
    %p103 = scmp.eq.s32.totalorder %s18, 1
    %p104 = por %p102, %p103
    %p106 = scmp.ne.s32.totalorder %s91, %s105
    %p107 = scmp.eq.s32.totalorder %s18, 0
    %p108 = por %p106, %p107
    %s109 = ssub.s32 %s12, %s19
    %p110 = scmp.eq.s32.totalorder %s109, 0
    %s112 = sadd.s32 %s111, 1
    %s113 = scalar_select %p110, %s111, %s112
    %p116 = pneg %p110
    %p117 = scmp.eq.s32.totalorder %s12, 1
    %p118 = por %p116, %p117
    %p119 = scmp.ne.s32.totalorder %s111, %s114
    %p120 = scmp.eq.s32.totalorder %s12, 0
    %p121 = por %p119, %p120
    %p122 = scmp.ne.s32.totalorder %s111, %s114
    %p123 = scmp.eq.s32.totalorder %s17, 1
    %p124 = por %p122, %p123
    %p125 = scmp.ne.s32.totalorder %s114, %s115
    %p126 = scmp.eq.s32.totalorder %s17, 0
    %p127 = por %p125, %p126
    %p128 = scmp.ne.s32.totalorder %s114, %s115
    %p129 = scmp.eq.s32.totalorder %s18, 1
    %p130 = por %p128, %p129
    %p132 = scmp.ne.s32.totalorder %s115, %s131
    %p133 = scmp.eq.s32.totalorder %s18, 0
    %p134 = por %p132, %p133
    %s135 = ssub.s32 %s12, %s19
    %p136 = scmp.eq.s32.totalorder %s135, 0
    %s138 = sadd.s32 %s137, 1
    %s139 = scalar_select %p136, %s137, %s138
    %p142 = pneg %p136
    %p143 = scmp.eq.s32.totalorder %s12, 1
    %p144 = por %p142, %p143
    %p145 = scmp.ne.s32.totalorder %s137, %s140
    %p146 = scmp.eq.s32.totalorder %s12, 0
    %p147 = por %p145, %p146
    %p148 = scmp.ne.s32.totalorder %s137, %s140
    %p149 = scmp.eq.s32.totalorder %s17, 1
    %p150 = por %p148, %p149
    %p151 = scmp.ne.s32.totalorder %s140, %s141
    %p152 = scmp.eq.s32.totalorder %s17, 0
    %p153 = por %p151, %p152
    %p154 = scmp.ne.s32.totalorder %s140, %s141
    %p155 = scmp.eq.s32.totalorder %s18, 1
    %p156 = por %p154, %p155
    %p158 = scmp.ne.s32.totalorder %s141, %s157
    %p159 = scmp.eq.s32.totalorder %s18, 0
    %p160 = por %p158, %p159
    %p161 = scmp.le.s32.totalorder 1, %s12
    %p162 = scmp.lt.s32.totalorder %s12, 3
    %p163 = pnand %p161, %p162
    %p164 = pneg %p163
    // Predicated region
    $region9: #{clique_block_forward.12} parent=5 // pred_check
      _
    $region10: #{clique_block_forward.12} parent=5 // pred_check_branch
      %166 = sbr.rel (%p163) target = $region12
    $region11: #{clique_block_forward.12} parent=5 // pred_region
      %s167 = ssub.s32 %s12, 1
      // Predicated region
      $region13: #{clique_block_forward.12} parent=11 // pred_check
        %p168 = pneg %p59
      $region14: #{clique_block_forward.12} parent=11 // pred_check_branch
        %170 = sbr.rel (%p168) target = $region16
      $region15: #{clique_block_forward.12} parent=11 // pred_region
        _
      $region16: #{clique_block_forward.12} parent=11 // pred_fallthru
        _
      // Predicated region
      $region17: #{clique_block_forward.12} parent=11 // pred_check
        %p171 = pneg %p80
      $region18: #{clique_block_forward.12} parent=11 // pred_check_branch
        %173 = sbr.rel (%p171) target = $region20
      $region19: #{clique_block_forward.12} parent=11 // pred_region
        _
      $region20: #{clique_block_forward.12} parent=11 // pred_fallthru
        _
      // Predicated region
      $region21: #{clique_block_forward.12} parent=11 // pred_check
        %p174 = pneg %p101
      $region22: #{clique_block_forward.12} parent=11 // pred_check_branch
        %176 = sbr.rel (%p174) target = $region24
      $region23: #{clique_block_forward.12} parent=11 // pred_region
        _
      $region24: #{clique_block_forward.12} parent=11 // pred_fallthru
        _
    $region12: #{clique_block_forward.12} parent=5 // pred_fallthru
      _
    %p177 = scmp.lt.s32.totalorder %s12, 2
    // Predicated region
    $region25: #{clique_block_forward.12} parent=5 // pred_check
      %p178 = pneg %p177
    $region26: #{clique_block_forward.12} parent=5 // pred_check_branch
      %180 = sbr.rel (%p178) target = $region28
    $region27: #{clique_block_forward.12} parent=5 // pred_region
      // Predicated region
      $region29: #{clique_block_forward.12} parent=27 // pred_check
        %p181 = pneg %p32
      $region30: #{clique_block_forward.12} parent=27 // pred_check_branch
        %183 = sbr.rel (%p181) target = $region32
      $region31: #{clique_block_forward.12} parent=27 // pred_region
        %s184 = smul.u32 8, %s12
        %p185 = scmp.lt.s32.totalorder %s184, 15
        %s186 = scalar_select %p185, %s184, 15
        %s187 = smul.addr %s186, 8
        %s188 = scalar_lea.vmem %s0, %s187
        %s189 = smul.u32 8, %s12
      $region32: #{clique_block_forward.12} parent=27 // pred_fallthru
        _
    $region28: #{clique_block_forward.12} parent=5 // pred_fallthru
      _
    %p190 = scmp.le.s32.totalorder 1, %s12
    %p191 = scmp.lt.s32.totalorder %s12, 3
    %p192 = pnand %p190, %p191
    %p193 = pneg %p192
    // Predicated region
    $region33: #{clique_block_forward.12} parent=5 // pred_check
      _
    $region34: #{clique_block_forward.12} parent=5 // pred_check_branch
      %195 = sbr.rel (%p192) target = $region36
    $region35: #{clique_block_forward.12} parent=5 // pred_region
      %s196 = ssub.s32 %s12, 1
      %s197 = smul.u32 8, %s17
      %p198 = scmp.lt.s32.totalorder %s197, 15
      %s199 = scalar_select %p198, %s197, 15
      %s200 = smul.addr %s199, 8
      %s201 = scalar_lea.vmem %s0, %s200
      %p202 = pneg %p38
      %p203 = pneg %p35
      %p204 = pneg %p59
      %p205 = pneg %p56
      %p206 = pneg %p80
      %p207 = pneg %p77
      %p208 = pneg %p101
      %p209 = pneg %p98
      %p210 = pneg %p127
      %p211 = pneg %p124
      %s212 = smul.u32 8, %s17
      %p213 = scmp.lt.s32.totalorder %s212, 15
      %s214 = scalar_select %p213, %s212, 15
      %s215 = smul.addr %s214, 4
      %s216 = scalar_lea.vmem %s4, %s215
      %p217 = pneg %p153
      %p218 = pneg %p150
      %p219 = scmp.lt.s32.totalorder %s17, 1
      %s220 = scalar_select %p219, %s17, 1
      %s221 = smul.addr %s220, 2
      %s222 = scalar_lea.vmem %s5, %s221
      %s223 = smul.u32 8, %s17
      %p224 = scmp.lt.s32.totalorder %s223, 15
      %s225 = scalar_select %p224, %s223, 15
      %s226 = smul.addr %s225, 8
      %s227 = scalar_lea.vmem %s0, %s226
      %s228 = smul.u32 8, %s17
      %s229 = smul.u32 8, %s17
      %p230 = scmp.lt.s32.totalorder %s229, 15
      %s231 = scalar_select %p230, %s229, 15
      %s232 = smul.addr %s231, 4
      %s233 = scalar_lea.vmem %s4, %s232
      %s234 = smul.u32 8, %s17
      %p235 = scmp.lt.s32.totalorder %s17, 1
      %s236 = scalar_select %p235, %s17, 1
      %s237 = smul.addr %s236, 2
      %s238 = scalar_lea.vmem %s5, %s237
      %v240 = vld [vmem:[%s227] sm:$0xff]
      %v241 = vld [vmem:[%s227 + $0x8] sm:$0xff]
      %v242 = vld [vmem:[%s227 + $0x10] sm:$0xff]
      %v243 = vld [vmem:[%s227 + $0x18] sm:$0xff]
      %v244 = vld [vmem:[%s227 + $0x20] sm:$0xff]
      %v245 = vld [vmem:[%s227 + $0x28] sm:$0xff]
      %v246 = vld [vmem:[%s227 + $0x30] sm:$0xff]
      %v247 = vld [vmem:[%s227 + $0x38] sm:$0xff]
      %v248 = vld [vmem:[%s1] sm:$0x1]
      %v250 = vlaneseq
      %v251 = vshrl.u32 %v250, 7
      %v252 = vsub.s32 0, %v251
      %v253 = vrot.slane %v248, %v252
      %v255 = vmul.f32 %v240, %v253
      %v256 = vmul.f32 %v241, %v253
      %v257 = vmul.f32 %v242, %v253
      %v258 = vmul.f32 %v243, %v253
      %v259 = vmul.f32 %v244, %v253
      %v260 = vmul.f32 %v245, %v253
      %v261 = vmul.f32 %v246, %v253
      %v262 = vmul.f32 %v247, %v253
      %v263 = vld [vmem:[%s2] sm:$0x1]
      %v265 = vlaneseq
      %v266 = vshrl.u32 %v265, 7
      %v267 = vsub.s32 0, %v266
      %v268 = vrot.slane %v263, %v267
      %v270 = vadd.f32 %v255, %v268
      %v271 = vadd.f32 %v256, %v268
      %v272 = vadd.f32 %v257, %v268
      %v273 = vadd.f32 %v258, %v268
      %v274 = vadd.f32 %v259, %v268
      %v275 = vadd.f32 %v260, %v268
      %v276 = vadd.f32 %v261, %v268
      %v277 = vadd.f32 %v262, %v268
      %v278 = vmax.f32 %v270, 0.0
      %v279 = vmax.f32 %v271, 0.0
      %v280 = vmax.f32 %v272, 0.0
      %v281 = vmax.f32 %v273, 0.0
      %v282 = vmax.f32 %v274, 0.0
      %v283 = vmax.f32 %v275, 0.0
      %v284 = vmax.f32 %v276, 0.0
      %v285 = vmax.f32 %v277, 0.0
      %v286 = vpack.c.bf16 %v279, %v278
      %v287 = vpack.c.bf16 %v281, %v280
      %v288 = vpack.c.bf16 %v283, %v282
      %v289 = vpack.c.bf16 %v285, %v284
      %vm290 = vcmask 64512
      %291 = vst.msk [vmem:[#allocation2] sm:$0xff] %vm290, %v286
      %292 = vst.msk [vmem:[#allocation2 + $0x8] sm:$0xff] %vm290, %v287
      %293 = vst.msk [vmem:[#allocation2 + $0x10] sm:$0xff] %vm290, %v288
      %294 = vst.msk [vmem:[#allocation2 + $0x18] sm:$0xff] %vm290, %v289
      %v295 = vld [vmem:[#allocation2] sm:$0xff]
      %v296 = vld [vmem:[#allocation2 + $0x8] sm:$0xff]
      %v297 = vld [vmem:[#allocation2 + $0x10] sm:$0xff]
      %v298 = vld [vmem:[#allocation2 + $0x18] sm:$0xff]
      %v299 = vld [vmem:[%s3] sm:$0xf]
      %v301 = vsel %vm290, %v295, 0
      %v304 = vsel %vm290, %v296, 0
      %v307 = vsel %vm290, %v297, 0
      %v310 = vsel %vm290, %v298, 0
      %vm312 = vcmask 1043456
      %v314 = vsel %vm312, %v299, 0
      %316 = vmatprep.subr.bf16.mxu0 0
      %317 = vmatpush1.bf16.msra.mxu0 %v314
      %318 = vmatprep.subr.bf16.mxu0 0
      %319 = vmatpush1.bf16.msra.mxu0 0
      %320 = vmatprep.subr.bf16.mxu0 0
      %321 = vmatpush1.bf16.msra.mxu0 0
      %322 = vmatprep.subr.bf16.mxu0 0
      %323 = vmatpush1.bf16.msra.mxu0 0
      %324 = vmatprep.subr.bf16.mxu0 0
      %325 = vmatpush1.bf16.msra.mxu0 0
      %326 = vmatprep.subr.bf16.mxu0 0
      %327 = vmatpush1.bf16.msra.mxu0 0
      %328 = vmatprep.subr.bf16.mxu0 0
      %329 = vmatpush1.bf16.msra.mxu0 0
      %330 = vmatprep.subr.bf16.mxu0 0
      %331 = vmatpush1.bf16.msra.mxu0 0
      %332 = vmatprep.subr.bf16.mxu0 0
      %333 = vmatpush1.bf16.msra.mxu0 0
      %334 = vmatprep.subr.bf16.mxu0 0
      %335 = vmatpush1.bf16.msra.mxu0 0
      %336 = vmatprep.subr.bf16.mxu0 0
      %337 = vmatpush1.bf16.msra.mxu0 0
      %338 = vmatprep.subr.bf16.mxu0 0
      %339 = vmatpush1.bf16.msra.mxu0 0
      %340 = vmatprep.subr.bf16.mxu0 0
      %341 = vmatpush1.bf16.msra.mxu0 0
      %342 = vmatprep.subr.bf16.mxu0 0
      %343 = vmatpush1.bf16.msra.mxu0 0
      %344 = vmatprep.subr.bf16.mxu0 0
      %345 = vmatpush1.bf16.msra.mxu0 0
      %346 = vmatprep.subr.bf16.mxu0 0
      %347 = vmatpush1.bf16.msra.mxu0 0
      %348 = vmatprep.mubr.bf16.mxu0 0
      %349 = vmatmul.mubr.bf16.gmra.mrb[0].mxu0 %v301
      %v350 = vpop.f32.mrb[0].mxu0
      %v351 = vadd.f32 0.0, %v350
      %v352 = vpop.f32.mrb[0].mxu0
      %v353 = vpop.f32.mrb[0].mxu0
      %v354 = vadd.f32 0.0, %v353
      %v355 = vpop.f32.mrb[0].mxu0
      %356 = vmatprep.mubr.bf16.mxu0 0
      %357 = vmatmul.mubr.bf16.gmra.mrb[0].mxu0 %v304
      %v358 = vpop.f32.mrb[0].mxu0
      %v359 = vadd.f32 0.0, %v358
      %v360 = vpop.f32.mrb[0].mxu0
      %v361 = vpop.f32.mrb[0].mxu0
      %v362 = vadd.f32 0.0, %v361
      %v363 = vpop.f32.mrb[0].mxu0
      %364 = vmatprep.mubr.bf16.mxu0 0
      %365 = vmatmul.mubr.bf16.gmra.mrb[0].mxu0 %v307
      %v366 = vpop.f32.mrb[0].mxu0
      %v367 = vadd.f32 0.0, %v366
      %v368 = vpop.f32.mrb[0].mxu0
      %v369 = vpop.f32.mrb[0].mxu0
      %v370 = vadd.f32 0.0, %v369
      %v371 = vpop.f32.mrb[0].mxu0
      %372 = vmatprep.mubr.bf16.mxu0 0
      %373 = vmatmul.mubr.bf16.gmra.mrb[0].mxu0 %v310
      %v374 = vpop.f32.mrb[0].mxu0
      %v375 = vadd.f32 0.0, %v374
      %v376 = vpop.f32.mrb[0].mxu0
      %v377 = vpop.f32.mrb[0].mxu0
      %v378 = vadd.f32 0.0, %v377
      %v379 = vpop.f32.mrb[0].mxu0
      %380 = vdwg.mxu0
      %v381 = vpack.c.bf16 %v354, %v351
      %v382 = vpack.c.bf16 %v362, %v359
      %v383 = vpack.c.bf16 %v370, %v367
      %v384 = vpack.c.bf16 %v378, %v375
      %v389 = vunpack.c.l.b16 %v381
      %v390 = vunpack.c.h.b16 %v381
      %v391 = vunpack.c.l.b16 %v382
      %v392 = vunpack.c.h.b16 %v382
      %v393 = vunpack.c.l.b16 %v383
      %v394 = vunpack.c.h.b16 %v383
      %v395 = vunpack.c.l.b16 %v384
      %v396 = vunpack.c.h.b16 %v384
      %v397 = vpack.c.b16 %v389, %v389
      %v398 = vpack.c.b16 %v390, %v390
      %v399 = vpack.c.b16 %v391, %v391
      %v400 = vpack.c.b16 %v392, %v392
      %v401 = vpack.c.b16 %v393, %v393
      %v402 = vpack.c.b16 %v394, %v394
      %v403 = vpack.c.b16 %v395, %v395
      %v404 = vpack.c.b16 %v396, %v396
      %vm413 = vcmask 60416
      %414 = vst.msk [vmem:[%s233] sm:$0xf] %vm413, %v397
      %415 = vst.msk [vmem:[%s233 + $0x4] sm:$0xf] %vm413, %v398
      %416 = vst.msk [vmem:[%s233 + $0x8] sm:$0xf] %vm413, %v399
      %417 = vst.msk [vmem:[%s233 + $0xc] sm:$0xf] %vm413, %v400
      %418 = vst.msk [vmem:[%s233 + $0x10] sm:$0xf] %vm413, %v401
      %419 = vst.msk [vmem:[%s233 + $0x14] sm:$0xf] %vm413, %v402
      %420 = vst.msk [vmem:[%s233 + $0x18] sm:$0xf] %vm413, %v403
      %421 = vst.msk [vmem:[%s233 + $0x1c] sm:$0xf] %vm413, %v404
      %v422 = vsel %vm290, %v351, 0.0
      %v423 = vsel %vm290, %v354, 0.0
      %v424 = vadd.f32 %v422, %v423
      %v425 = vsel %vm290, %v359, 0.0
      %v426 = vadd.f32 %v424, %v425
      %v427 = vsel %vm290, %v362, 0.0
      %v428 = vadd.f32 %v426, %v427
      %v429 = vsel %vm290, %v367, 0.0
      %v430 = vadd.f32 %v428, %v429
      %v431 = vsel %vm290, %v370, 0.0
      %v432 = vadd.f32 %v430, %v431
      %v433 = vsel %vm290, %v375, 0.0
      %v434 = vadd.f32 %v432, %v433
      %v435 = vsel %vm290, %v378, 0.0
      %v436 = vadd.f32 %v434, %v435
      %v437 = vrot.slane %v436, 4
      %v438 = vadd.f32 %v436, %v437
      %v439 = vrot.slane %v438, 2
      %v440 = vadd.f32 %v438, %v439
      %v441 = vrot.slane %v440, 1
      %v442 = vadd.f32 %v440, %v441
      %v443 = vmul.f32 %v351, %v351
      %v444 = vmul.f32 %v354, %v354
      %v445 = vmul.f32 %v359, %v359
      %v446 = vmul.f32 %v362, %v362
      %v447 = vmul.f32 %v367, %v367
      %v448 = vmul.f32 %v370, %v370
      %v449 = vmul.f32 %v375, %v375
      %v450 = vmul.f32 %v378, %v378
      %v451 = vsel %vm290, %v443, 0.0
      %v452 = vsel %vm290, %v444, 0.0
      %v453 = vadd.f32 %v451, %v452
      %v454 = vsel %vm290, %v445, 0.0
      %v455 = vadd.f32 %v453, %v454
      %v456 = vsel %vm290, %v446, 0.0
      %v457 = vadd.f32 %v455, %v456
      %v458 = vsel %vm290, %v447, 0.0
      %v459 = vadd.f32 %v457, %v458
      %v460 = vsel %vm290, %v448, 0.0
      %v461 = vadd.f32 %v459, %v460
      %v462 = vsel %vm290, %v449, 0.0
      %v463 = vadd.f32 %v461, %v462
      %v464 = vsel %vm290, %v450, 0.0
      %v465 = vadd.f32 %v463, %v464
      %v466 = vrot.slane %v465, 4
      %v467 = vadd.f32 %v465, %v466
      %v468 = vrot.slane %v467, 2
      %v469 = vadd.f32 %v467, %v468
      %v470 = vrot.slane %v469, 1
      %v471 = vadd.f32 %v469, %v470
      %vm472 = vcmask 1040384
      %v473 = vsel %vm472, %v442, %v471
      %vm474 = vcmask 58368
      %475 = vst.msk [vmem:[%s238] sm:$0x3] %vm474, %v473
      %s476 = smul.u32 8, %s17
      %p477 = scmp.lt.s32.totalorder %s476, 15
      %s478 = scalar_select %p477, %s476, 15
      %s479 = smul.addr %s478, 4
      %s480 = scalar_lea.vmem %s4, %s479
      %p481 = scmp.lt.s32.totalorder %s17, 1
      %s482 = scalar_select %p481, %s17, 1
      %s483 = smul.addr %s482, 2
      %s484 = scalar_lea.vmem %s5, %s483
      // Predicated region
      $region37: #{clique_block_forward.12} parent=35 // pred_check
        %p485 = pneg %p124
      $region38: #{clique_block_forward.12} parent=35 // pred_check_branch
        %487 = sbr.rel (%p485) target = $region40
      $region39: #{clique_block_forward.12} parent=35 // pred_region
        %s488 = smul.u32 8, %s17
      $region40: #{clique_block_forward.12} parent=35 // pred_fallthru
        _
      // Predicated region
      $region41: #{clique_block_forward.12} parent=35 // pred_check
        %p489 = pneg %p150
      $region42: #{clique_block_forward.12} parent=35 // pred_check_branch
        %491 = sbr.rel (%p489) target = $region44
      $region43: #{clique_block_forward.12} parent=35 // pred_region
        _
      $region44: #{clique_block_forward.12} parent=35 // pred_fallthru
        _
    $region36: #{clique_block_forward.12} parent=5 // pred_fallthru
      _
    %p492 = scmp.le.s32.totalorder 2, %s12
    // Predicated region
    $region45: #{clique_block_forward.12} parent=5 // pred_check
      %p493 = pneg %p492
    $region46: #{clique_block_forward.12} parent=5 // pred_check_branch
      %495 = sbr.rel (%p493) target = $region48
    $region47: #{clique_block_forward.12} parent=5 // pred_region
      %s496 = ssub.s32 %s12, 2
      // Predicated region
      $region49: #{clique_block_forward.12} parent=47 // pred_check
        %p497 = pneg %p130
      $region50: #{clique_block_forward.12} parent=47 // pred_check_branch
        %499 = sbr.rel (%p497) target = $region52
      $region51: #{clique_block_forward.12} parent=47 // pred_region
        %s500 = smul.u32 8, %s18
        %p501 = scmp.lt.s32.totalorder %s500, 15
        %s502 = scalar_select %p501, %s500, 15
        %s503 = smul.addr %s502, 4
        %s504 = scalar_lea.vmem %s4, %s503
      $region52: #{clique_block_forward.12} parent=47 // pred_fallthru
        _
      // Predicated region
      $region53: #{clique_block_forward.12} parent=47 // pred_check
        %p505 = pneg %p156
      $region54: #{clique_block_forward.12} parent=47 // pred_check_branch
        %507 = sbr.rel (%p505) target = $region56
      $region55: #{clique_block_forward.12} parent=47 // pred_region
        %p508 = scmp.lt.s32.totalorder %s18, 1
        %s509 = scalar_select %p508, %s18, 1
        %s510 = smul.addr %s509, 2
        %s511 = scalar_lea.vmem %s5, %s510
      $region56: #{clique_block_forward.12} parent=47 // pred_fallthru
        _
    $region48: #{clique_block_forward.12} parent=5 // pred_fallthru
      _
  $region6: #{clique_block_forward.12} parent=0 // loop_footer
    %s16 = sadd.s32 1, %s12
  $region7: #{clique_block_forward.12} parent=0 // loop_footer_branch
    %11 = sbr.rel target = $region3
  $region8: #{clique_block_forward.12} parent=0 // loop_exit
    _

// kernel: clique_block_forward.14
$region0: #{clique_block_forward.14}
  #allocation0 [shape = 'u32[]', space=smem, size = 0x4, offset = 0x4, fixed_abs, tag = 'smem constant byte address 0x4 - core index']
  #allocation1 [shape = 'u32[144,128]{1,0:T(1,128)}', space=vmem, size = 0x12000, scoped, tag = 'internal scratch']
  #allocation2 [shape = 'bf16[64,16]{1,0:T(16,128)(2,1)}', space=vmem, size = 0x4000, scoped, tag = 'scratch operand']
  %s0 = inlined_call_operand.vmem [shape: f32[128,8], index: 0, kind: input, shape index: {}]
  %s1 = inlined_call_operand.vmem [shape: bf16[128,8], index: 1, kind: input, shape index: {}]
  %s2 = inlined_call_operand.vmem [shape: f32[1,8], index: 2, kind: input, shape index: {}]
  %s3 = inlined_call_operand.vmem [shape: f32[1,8], index: 3, kind: input, shape index: {}]
  %s4 = inlined_call_operand.vmem [shape: f32[1,8], index: 4, kind: input, shape index: {}]
  %s5 = inlined_call_operand.vmem [shape: f32[1,8], index: 5, kind: input, shape index: {}]
  %s6 = inlined_call_operand.vmem [shape: bf16[16,8], index: 6, kind: input, shape index: {}]
  %s7 = inlined_call_operand.vmem [shape: bf16[128,8], index: 7, kind: output, shape index: {0}]
  %s8 = inlined_call_operand.vmem [shape: f32[2,2,8], index: 8, kind: output, shape index: {1}]
  %9 = xla_tuple %s7, %s8
  %s10 = sld [smem:[#allocation0]]
  $region69: #{clique_block_forward.14} parent=0
    _
  %s12 = ssub.s32 1, %s10
  %s13 = scalar_select 0, %s12, %s10
  loop: start=0, step=1, limit=4
  $region2: #{clique_block_forward.14} parent=0 // loop_pre_header
    _
  $region3: #{clique_block_forward.14} parent=0 // loop_header
    %s15 = sphi 0, %s19
    %p16 = scmp.ge.s32.totalorder %s15, 4
    %s25 = sphi 0, %s27
    %s28 = sphi 0, %s25
    %s29 = sphi 0, %s28
    %s45 = sphi 0, %s29
    %s51 = sphi 0, %s53
    %s54 = sphi 0, %s51
    %s55 = sphi 0, %s54
    %s71 = sphi 0, %s55
    %s75 = sphi 0, %s75
    %s77 = sphi 0, %s75
    %s78 = sphi 0, %s77
    %s92 = sphi 0, %s78
    %s96 = sphi 0, %s96
    %s98 = sphi 0, %s96
    %s99 = sphi 0, %s98
    %s113 = sphi 0, %s99
    %s117 = sphi 0, %s117
    %s119 = sphi 0, %s117
    %s120 = sphi 0, %s119
    %s134 = sphi 0, %s120
    %s138 = sphi 0, %s138
    %s140 = sphi 0, %s138
    %s141 = sphi 0, %s140
    %s155 = sphi 0, %s141
    %s159 = sphi 0, %s159
    %s161 = sphi 0, %s159
    %s162 = sphi 0, %s161
    %s176 = sphi 0, %s162
    %s182 = sphi 0, %s184
    %s185 = sphi 0, %s182
    %s186 = sphi 0, %s185
    %s202 = sphi 0, %s186
    %s208 = sphi 0, %s210
    %s211 = sphi 0, %s208
    %s212 = sphi 0, %s211
    %s228 = sphi 0, %s212
  $region4: #{clique_block_forward.14} parent=0 // loop_header_branch
    %18 = sbr.rel (%p16) target = $region8
  $region5: #{clique_block_forward.14} parent=0 // loop_body
    %s20 = ssub.s32 %s15, 1
    %s21 = ssub.s32 %s15, 2
    %s22 = sadd.s32 %s15, 1
    %s23 = ssub.s32 %s15, %s22
    %p24 = scmp.eq.s32.totalorder %s23, 0
    %s26 = sadd.s32 %s25, 1
    %s27 = scalar_select %p24, %s25, %s26
    %p30 = pneg %p24
    %p31 = scmp.eq.s32.totalorder %s15, 1
    %p32 = por %p30, %p31
    %p33 = scmp.ne.s32.totalorder %s25, %s28
    %p34 = scmp.eq.s32.totalorder %s15, 0
    %p35 = por %p33, %p34
    %p36 = scmp.ne.s32.totalorder %s25, %s28
    %p37 = scmp.eq.s32.totalorder %s20, 1
    %p38 = por %p36, %p37
    %p39 = scmp.ne.s32.totalorder %s28, %s29
    %p40 = scmp.eq.s32.totalorder %s20, 0
    %p41 = por %p39, %p40
    %p42 = scmp.ne.s32.totalorder %s28, %s29
    %p43 = scmp.eq.s32.totalorder %s21, 1
    %p44 = por %p42, %p43
    %p46 = scmp.ne.s32.totalorder %s29, %s45
    %p47 = scmp.eq.s32.totalorder %s21, 0
    %p48 = por %p46, %p47
    %s49 = ssub.s32 %s15, %s22
    %p50 = scmp.eq.s32.totalorder %s49, 0
    %s52 = sadd.s32 %s51, 1
    %s53 = scalar_select %p50, %s51, %s52
    %p56 = pneg %p50
    %p57 = scmp.eq.s32.totalorder %s15, 1
    %p58 = por %p56, %p57
    %p59 = scmp.ne.s32.totalorder %s51, %s54
    %p60 = scmp.eq.s32.totalorder %s15, 0
    %p61 = por %p59, %p60
    %p62 = scmp.ne.s32.totalorder %s51, %s54
    %p63 = scmp.eq.s32.totalorder %s20, 1
    %p64 = por %p62, %p63
    %p65 = scmp.ne.s32.totalorder %s54, %s55
    %p66 = scmp.eq.s32.totalorder %s20, 0
    %p67 = por %p65, %p66
    %p68 = scmp.ne.s32.totalorder %s54, %s55
    %p69 = scmp.eq.s32.totalorder %s21, 1
    %p70 = por %p68, %p69
    %p72 = scmp.ne.s32.totalorder %s55, %s71
    %p73 = scmp.eq.s32.totalorder %s21, 0
    %p74 = por %p72, %p73
    %s76 = sadd.s32 %s75, 1
    %p79 = scmp.eq.s32.totalorder %s15, 1
    %p80 = scmp.ne.s32.totalorder %s75, %s77
    %p81 = scmp.eq.s32.totalorder %s15, 0
    %p82 = por %p80, %p81
    %p83 = scmp.ne.s32.totalorder %s75, %s77
    %p84 = scmp.eq.s32.totalorder %s20, 1
    %p85 = por %p83, %p84
    %p86 = scmp.ne.s32.totalorder %s77, %s78
    %p87 = scmp.eq.s32.totalorder %s20, 0
    %p88 = por %p86, %p87
    %p89 = scmp.ne.s32.totalorder %s77, %s78
    %p90 = scmp.eq.s32.totalorder %s21, 1
    %p91 = por %p89, %p90
    %p93 = scmp.ne.s32.totalorder %s78, %s92
    %p94 = scmp.eq.s32.totalorder %s21, 0
    %p95 = por %p93, %p94
    %s97 = sadd.s32 %s96, 1
    %p100 = scmp.eq.s32.totalorder %s15, 1
    %p101 = scmp.ne.s32.totalorder %s96, %s98
    %p102 = scmp.eq.s32.totalorder %s15, 0
    %p103 = por %p101, %p102
    %p104 = scmp.ne.s32.totalorder %s96, %s98
    %p105 = scmp.eq.s32.totalorder %s20, 1
    %p106 = por %p104, %p105
    %p107 = scmp.ne.s32.totalorder %s98, %s99
    %p108 = scmp.eq.s32.totalorder %s20, 0
    %p109 = por %p107, %p108
    %p110 = scmp.ne.s32.totalorder %s98, %s99
    %p111 = scmp.eq.s32.totalorder %s21, 1
    %p112 = por %p110, %p111
    %p114 = scmp.ne.s32.totalorder %s99, %s113
    %p115 = scmp.eq.s32.totalorder %s21, 0
    %p116 = por %p114, %p115
    %s118 = sadd.s32 %s117, 1
    %p121 = scmp.eq.s32.totalorder %s15, 1
    %p122 = scmp.ne.s32.totalorder %s117, %s119
    %p123 = scmp.eq.s32.totalorder %s15, 0
    %p124 = por %p122, %p123
    %p125 = scmp.ne.s32.totalorder %s117, %s119
    %p126 = scmp.eq.s32.totalorder %s20, 1
    %p127 = por %p125, %p126
    %p128 = scmp.ne.s32.totalorder %s119, %s120
    %p129 = scmp.eq.s32.totalorder %s20, 0
    %p130 = por %p128, %p129
    %p131 = scmp.ne.s32.totalorder %s119, %s120
    %p132 = scmp.eq.s32.totalorder %s21, 1
    %p133 = por %p131, %p132
    %p135 = scmp.ne.s32.totalorder %s120, %s134
    %p136 = scmp.eq.s32.totalorder %s21, 0
    %p137 = por %p135, %p136
    %s139 = sadd.s32 %s138, 1
    %p142 = scmp.eq.s32.totalorder %s15, 1
    %p143 = scmp.ne.s32.totalorder %s138, %s140
    %p144 = scmp.eq.s32.totalorder %s15, 0
    %p145 = por %p143, %p144
    %p146 = scmp.ne.s32.totalorder %s138, %s140
    %p147 = scmp.eq.s32.totalorder %s20, 1
    %p148 = por %p146, %p147
    %p149 = scmp.ne.s32.totalorder %s140, %s141
    %p150 = scmp.eq.s32.totalorder %s20, 0
    %p151 = por %p149, %p150
    %p152 = scmp.ne.s32.totalorder %s140, %s141
    %p153 = scmp.eq.s32.totalorder %s21, 1
    %p154 = por %p152, %p153
    %p156 = scmp.ne.s32.totalorder %s141, %s155
    %p157 = scmp.eq.s32.totalorder %s21, 0
    %p158 = por %p156, %p157
    %s160 = sadd.s32 %s159, 1
    %p163 = scmp.eq.s32.totalorder %s15, 1
    %p164 = scmp.ne.s32.totalorder %s159, %s161
    %p165 = scmp.eq.s32.totalorder %s15, 0
    %p166 = por %p164, %p165
    %p167 = scmp.ne.s32.totalorder %s159, %s161
    %p168 = scmp.eq.s32.totalorder %s20, 1
    %p169 = por %p167, %p168
    %p170 = scmp.ne.s32.totalorder %s161, %s162
    %p171 = scmp.eq.s32.totalorder %s20, 0
    %p172 = por %p170, %p171
    %p173 = scmp.ne.s32.totalorder %s161, %s162
    %p174 = scmp.eq.s32.totalorder %s21, 1
    %p175 = por %p173, %p174
    %p177 = scmp.ne.s32.totalorder %s162, %s176
    %p178 = scmp.eq.s32.totalorder %s21, 0
    %p179 = por %p177, %p178
    %s180 = ssub.s32 %s15, %s22
    %p181 = scmp.eq.s32.totalorder %s180, 0
    %s183 = sadd.s32 %s182, 1
    %s184 = scalar_select %p181, %s182, %s183
    %p187 = pneg %p181
    %p188 = scmp.eq.s32.totalorder %s15, 1
    %p189 = por %p187, %p188
    %p190 = scmp.ne.s32.totalorder %s182, %s185
    %p191 = scmp.eq.s32.totalorder %s15, 0
    %p192 = por %p190, %p191
    %p193 = scmp.ne.s32.totalorder %s182, %s185
    %p194 = scmp.eq.s32.totalorder %s20, 1
    %p195 = por %p193, %p194
    %p196 = scmp.ne.s32.totalorder %s185, %s186
    %p197 = scmp.eq.s32.totalorder %s20, 0
    %p198 = por %p196, %p197
    %p199 = scmp.ne.s32.totalorder %s185, %s186
    %p200 = scmp.eq.s32.totalorder %s21, 1
    %p201 = por %p199, %p200
    %p203 = scmp.ne.s32.totalorder %s186, %s202
    %p204 = scmp.eq.s32.totalorder %s21, 0
    %p205 = por %p203, %p204
    %s206 = ssub.s32 %s15, %s22
    %p207 = scmp.eq.s32.totalorder %s206, 0
    %s209 = sadd.s32 %s208, 1
    %s210 = scalar_select %p207, %s208, %s209
    %p213 = pneg %p207
    %p214 = scmp.eq.s32.totalorder %s15, 1
    %p215 = por %p213, %p214
    %p216 = scmp.ne.s32.totalorder %s208, %s211
    %p217 = scmp.eq.s32.totalorder %s15, 0
    %p218 = por %p216, %p217
    %p219 = scmp.ne.s32.totalorder %s208, %s211
    %p220 = scmp.eq.s32.totalorder %s20, 1
    %p221 = por %p219, %p220
    %p222 = scmp.ne.s32.totalorder %s211, %s212
    %p223 = scmp.eq.s32.totalorder %s20, 0
    %p224 = por %p222, %p223
    %p225 = scmp.ne.s32.totalorder %s211, %s212
    %p226 = scmp.eq.s32.totalorder %s21, 1
    %p227 = por %p225, %p226
    %p229 = scmp.ne.s32.totalorder %s212, %s228
    %p230 = scmp.eq.s32.totalorder %s21, 0
    %p231 = por %p229, %p230
    %p232 = scmp.le.s32.totalorder 1, %s15
    %p233 = scmp.lt.s32.totalorder %s15, 3
    %p234 = pnand %p232, %p233
    %p235 = pneg %p234
    // Predicated region
    $region9: #{clique_block_forward.14} parent=5 // pred_check
      _
    $region10: #{clique_block_forward.14} parent=5 // pred_check_branch
      %237 = sbr.rel (%p234) target = $region12
    $region11: #{clique_block_forward.14} parent=5 // pred_region
      %s238 = ssub.s32 %s15, 1
      // Predicated region
      $region13: #{clique_block_forward.14} parent=11 // pred_check
        %p239 = pneg %p88
      $region14: #{clique_block_forward.14} parent=11 // pred_check_branch
        %241 = sbr.rel (%p239) target = $region16
      $region15: #{clique_block_forward.14} parent=11 // pred_region
        _
      $region16: #{clique_block_forward.14} parent=11 // pred_fallthru
        _
      // Predicated region
      $region17: #{clique_block_forward.14} parent=11 // pred_check
        %p242 = pneg %p109
      $region18: #{clique_block_forward.14} parent=11 // pred_check_branch
        %244 = sbr.rel (%p242) target = $region20
      $region19: #{clique_block_forward.14} parent=11 // pred_region
        _
      $region20: #{clique_block_forward.14} parent=11 // pred_fallthru
        _
      // Predicated region
      $region21: #{clique_block_forward.14} parent=11 // pred_check
        %p245 = pneg %p130
      $region22: #{clique_block_forward.14} parent=11 // pred_check_branch
        %247 = sbr.rel (%p245) target = $region24
      $region23: #{clique_block_forward.14} parent=11 // pred_region
        _
      $region24: #{clique_block_forward.14} parent=11 // pred_fallthru
        _
      // Predicated region
      $region25: #{clique_block_forward.14} parent=11 // pred_check
        %p248 = pneg %p151
      $region26: #{clique_block_forward.14} parent=11 // pred_check_branch
        %250 = sbr.rel (%p248) target = $region28
      $region27: #{clique_block_forward.14} parent=11 // pred_region
        _
      $region28: #{clique_block_forward.14} parent=11 // pred_fallthru
        _
      // Predicated region
      $region29: #{clique_block_forward.14} parent=11 // pred_check
        %p251 = pneg %p172
      $region30: #{clique_block_forward.14} parent=11 // pred_check_branch
        %253 = sbr.rel (%p251) target = $region32
      $region31: #{clique_block_forward.14} parent=11 // pred_region
        _
      $region32: #{clique_block_forward.14} parent=11 // pred_fallthru
        _
    $region12: #{clique_block_forward.14} parent=5 // pred_fallthru
      _
    %p254 = scmp.lt.s32.totalorder %s15, 2
    // Predicated region
    $region33: #{clique_block_forward.14} parent=5 // pred_check
      %p255 = pneg %p254
    $region34: #{clique_block_forward.14} parent=5 // pred_check_branch
      %257 = sbr.rel (%p255) target = $region36
    $region35: #{clique_block_forward.14} parent=5 // pred_region
      // Predicated region
      $region37: #{clique_block_forward.14} parent=35 // pred_check
        %p258 = pneg %p35
      $region38: #{clique_block_forward.14} parent=35 // pred_check_branch
        %260 = sbr.rel (%p258) target = $region40
      $region39: #{clique_block_forward.14} parent=35 // pred_region
        %s261 = smul.u32 8, %s15
        %p262 = scmp.lt.s32.totalorder %s261, 15
        %s263 = scalar_select %p262, %s261, 15
        %s264 = smul.addr %s263, 8
        %s265 = scalar_lea.vmem %s0, %s264
        %s266 = smul.u32 8, %s15
      $region40: #{clique_block_forward.14} parent=35 // pred_fallthru
        _
      // Predicated region
      $region41: #{clique_block_forward.14} parent=35 // pred_check
        %p267 = pneg %p61
      $region42: #{clique_block_forward.14} parent=35 // pred_check_branch
        %269 = sbr.rel (%p267) target = $region44
      $region43: #{clique_block_forward.14} parent=35 // pred_region
        %s270 = smul.u32 8, %s15
        %p271 = scmp.lt.s32.totalorder %s270, 15
        %s272 = scalar_select %p271, %s270, 15
        %s273 = smul.addr %s272, 4
        %s274 = scalar_lea.vmem %s1, %s273
        %s275 = smul.u32 8, %s15
      $region44: #{clique_block_forward.14} parent=35 // pred_fallthru
        _
    $region36: #{clique_block_forward.14} parent=5 // pred_fallthru
      _
    %p276 = scmp.le.s32.totalorder 1, %s15
    %p277 = scmp.lt.s32.totalorder %s15, 3
    %p278 = pnand %p276, %p277
    %p279 = pneg %p278
    // Predicated region
    $region45: #{clique_block_forward.14} parent=5 // pred_check
      _
    $region46: #{clique_block_forward.14} parent=5 // pred_check_branch
      %281 = sbr.rel (%p278) target = $region48
    $region47: #{clique_block_forward.14} parent=5 // pred_region
      %s282 = ssub.s32 %s15, 1
      %s283 = smul.u32 8, %s20
      %p284 = scmp.lt.s32.totalorder %s283, 15
      %s285 = scalar_select %p284, %s283, 15
      %s286 = smul.addr %s285, 8
      %s287 = scalar_lea.vmem %s0, %s286
      %p288 = pneg %p41
      %p289 = pneg %p38
      %s290 = smul.u32 8, %s20
      %p291 = scmp.lt.s32.totalorder %s290, 15
      %s292 = scalar_select %p291, %s290, 15
      %s293 = smul.addr %s292, 4
      %s294 = scalar_lea.vmem %s1, %s293
      %p295 = pneg %p67
      %p296 = pneg %p64
      %p297 = pneg %p88
      %p298 = pneg %p85
      %p299 = pneg %p109
      %p300 = pneg %p106
      %p301 = pneg %p130
      %p302 = pneg %p127
      %p303 = pneg %p151
      %p304 = pneg %p148
      %p305 = pneg %p172
      %p306 = pneg %p169
      %p307 = pneg %p198
      %p308 = pneg %p195
      %s309 = smul.u32 8, %s20
      %p310 = scmp.lt.s32.totalorder %s309, 15
      %s311 = scalar_select %p310, %s309, 15
      %s312 = smul.addr %s311, 4
      %s313 = scalar_lea.vmem %s7, %s312
      %p314 = pneg %p224
      %p315 = pneg %p221
      %p316 = scmp.lt.s32.totalorder %s20, 1
      %s317 = scalar_select %p316, %s20, 1
      %s318 = smul.addr %s317, 2
      %s319 = scalar_lea.vmem %s8, %s318
      %s320 = smul.u32 8, %s20
      %p321 = scmp.lt.s32.totalorder %s320, 15
      %s322 = scalar_select %p321, %s320, 15
      %s323 = smul.addr %s322, 8
      %s324 = scalar_lea.vmem %s0, %s323
      %s325 = smul.u32 8, %s20
      %s326 = smul.u32 8, %s20
      %p327 = scmp.lt.s32.totalorder %s326, 15
      %s328 = scalar_select %p327, %s326, 15
      %s329 = smul.addr %s328, 4
      %s330 = scalar_lea.vmem %s1, %s329
      %s331 = smul.u32 8, %s20
      %s332 = smul.u32 8, %s20
      %p333 = scmp.lt.s32.totalorder %s332, 15
      %s334 = scalar_select %p333, %s332, 15
      %s335 = smul.addr %s334, 4
      %s336 = scalar_lea.vmem %s7, %s335
      %s337 = smul.u32 8, %s20
      %p338 = scmp.lt.s32.totalorder %s20, 1
      %s339 = scalar_select %p338, %s20, 1
      %s340 = smul.addr %s339, 2
      %s341 = scalar_lea.vmem %s8, %s340
      %v343 = vld [vmem:[%s324] sm:$0xff]
      %v344 = vld [vmem:[%s324 + $0x8] sm:$0xff]
      %v345 = vld [vmem:[%s324 + $0x10] sm:$0xff]
      %v346 = vld [vmem:[%s324 + $0x18] sm:$0xff]
      %v347 = vld [vmem:[%s324 + $0x20] sm:$0xff]
      %v348 = vld [vmem:[%s324 + $0x28] sm:$0xff]
      %v349 = vld [vmem:[%s324 + $0x30] sm:$0xff]
      %v350 = vld [vmem:[%s324 + $0x38] sm:$0xff]
      %v351 = vld [vmem:[%s2] sm:$0x1]
      %v353 = vlaneseq
      %v354 = vshrl.u32 %v353, 7
      %v355 = vsub.s32 0, %v354
      %v356 = vrot.slane %v351, %v355
      %v358 = vmul.f32 %v343, %v356
      %v359 = vmul.f32 %v344, %v356
      %v360 = vmul.f32 %v345, %v356
      %v361 = vmul.f32 %v346, %v356
      %v362 = vmul.f32 %v347, %v356
      %v363 = vmul.f32 %v348, %v356
      %v364 = vmul.f32 %v349, %v356
      %v365 = vmul.f32 %v350, %v356
      %v366 = vld [vmem:[%s4] sm:$0x1]
      %v368 = vlaneseq
      %v369 = vshrl.u32 %v368, 7
      %v370 = vsub.s32 0, %v369
      %v371 = vrot.slane %v366, %v370
      %v373 = vadd.f32 %v358, %v371
      %v374 = vadd.f32 %v359, %v371
      %v375 = vadd.f32 %v360, %v371
      %v376 = vadd.f32 %v361, %v371
      %v377 = vadd.f32 %v362, %v371
      %v378 = vadd.f32 %v363, %v371
      %v379 = vadd.f32 %v364, %v371
      %v380 = vadd.f32 %v365, %v371
      %v381 = vmax.f32 %v373, 0.0
      %v382 = vmax.f32 %v374, 0.0
      %v383 = vmax.f32 %v375, 0.0
      %v384 = vmax.f32 %v376, 0.0
      %v385 = vmax.f32 %v377, 0.0
      %v386 = vmax.f32 %v378, 0.0
      %v387 = vmax.f32 %v379, 0.0
      %v388 = vmax.f32 %v380, 0.0
      %v389 = vpack.c.bf16 %v382, %v381
      %v390 = vpack.c.bf16 %v384, %v383
      %v391 = vpack.c.bf16 %v386, %v385
      %v392 = vpack.c.bf16 %v388, %v387
      %vm393 = vcmask 64512
      %394 = vst.msk [vmem:[#allocation2] sm:$0xff] %vm393, %v389
      %395 = vst.msk [vmem:[#allocation2 + $0x8] sm:$0xff] %vm393, %v390
      %396 = vst.msk [vmem:[#allocation2 + $0x10] sm:$0xff] %vm393, %v391
      %397 = vst.msk [vmem:[#allocation2 + $0x18] sm:$0xff] %vm393, %v392
      %v398 = vld [vmem:[%s330] sm:$0xf]
      %v399 = vld [vmem:[%s330 + $0x4] sm:$0xf]
      %v400 = vld [vmem:[%s330 + $0x8] sm:$0xf]
      %v401 = vld [vmem:[%s330 + $0xc] sm:$0xf]
      %v402 = vld [vmem:[%s330 + $0x10] sm:$0xf]
      %v403 = vld [vmem:[%s330 + $0x14] sm:$0xf]
      %v404 = vld [vmem:[%s330 + $0x18] sm:$0xf]
      %v405 = vld [vmem:[%s330 + $0x1c] sm:$0xf]
      %v406 = vunpack.c.l.bf16 %v398
      %v407 = vunpack.c.l.bf16 %v399
      %v408 = vunpack.c.l.bf16 %v400
      %v409 = vunpack.c.l.bf16 %v401
      %v410 = vunpack.c.l.bf16 %v402
      %v411 = vunpack.c.l.bf16 %v403
      %v412 = vunpack.c.l.bf16 %v404
      %v413 = vunpack.c.l.bf16 %v405
      %v414 = vld [vmem:[%s3] sm:$0x1]
      %v416 = vlaneseq
      %v417 = vshrl.u32 %v416, 7
      %v418 = vsub.s32 0, %v417
      %v419 = vrot.slane %v414, %v418
      %v421 = vmul.f32 %v406, %v419
      %v422 = vmul.f32 %v407, %v419
      %v423 = vmul.f32 %v408, %v419
      %v424 = vmul.f32 %v409, %v419
      %v425 = vmul.f32 %v410, %v419
      %v426 = vmul.f32 %v411, %v419
      %v427 = vmul.f32 %v412, %v419
      %v428 = vmul.f32 %v413, %v419
      %v429 = vld [vmem:[%s5] sm:$0x1]
      %v431 = vlaneseq
      %v432 = vshrl.u32 %v431, 7
      %v433 = vsub.s32 0, %v432
      %v434 = vrot.slane %v429, %v433
      %v436 = vadd.f32 %v421, %v434
      %v437 = vadd.f32 %v422, %v434
      %v438 = vadd.f32 %v423, %v434
      %v439 = vadd.f32 %v424, %v434
      %v440 = vadd.f32 %v425, %v434
      %v441 = vadd.f32 %v426, %v434
      %v442 = vadd.f32 %v427, %v434
      %v443 = vadd.f32 %v428, %v434
      %v444 = vmax.f32 %v436, 0.0
      %v445 = vmax.f32 %v437, 0.0
      %v446 = vmax.f32 %v438, 0.0
      %v447 = vmax.f32 %v439, 0.0
      %v448 = vmax.f32 %v440, 0.0
      %v449 = vmax.f32 %v441, 0.0
      %v450 = vmax.f32 %v442, 0.0
      %v451 = vmax.f32 %v443, 0.0
      %v452 = vpack.c.bf16 %v445, %v444
      %v453 = vpack.c.bf16 %v447, %v446
      %v454 = vpack.c.bf16 %v449, %v448
      %v455 = vpack.c.bf16 %v451, %v450
      %460 = vrot.lane.b32.xlu0 %v452, 8
      %v461 = vpop.permute.xlu0 %460
      %462 = vrot.lane.b32.xlu0 %v453, 8
      %v463 = vpop.permute.xlu0 %462
      %464 = vrot.lane.b32.xlu0 %v454, 8
      %v465 = vpop.permute.xlu0 %464
      %466 = vrot.lane.b32.xlu0 %v455, 8
      %v467 = vpop.permute.xlu0 %466
      %vm472 = vcmask 130112
      %473 = vst.msk [vmem:[#allocation2] sm:$0xff] %vm472, %v461
      %474 = vst.msk [vmem:[#allocation2 + $0x8] sm:$0xff] %vm472, %v463
      %475 = vst.msk [vmem:[#allocation2 + $0x10] sm:$0xff] %vm472, %v465
      %476 = vst.msk [vmem:[#allocation2 + $0x18] sm:$0xff] %vm472, %v467
      %v477 = vld [vmem:[#allocation2] sm:$0xff]
      %v478 = vld [vmem:[#allocation2 + $0x8] sm:$0xff]
      %v479 = vld [vmem:[#allocation2 + $0x10] sm:$0xff]
      %v480 = vld [vmem:[#allocation2 + $0x18] sm:$0xff]
      %v481 = vld [vmem:[%s6] sm:$0xf]
      %v482 = vld [vmem:[%s6 + $0x4] sm:$0xf]
      %v485 = vunpack.c.l.b16 %v481
      %v486 = vunpack.c.l.b16 %v482
      %v487 = vpack.c.b16 %v486, %v485
      %vm489 = vcmask 130048
      %v491 = vsel %vm489, %v477, 0
      %v494 = vsel %vm489, %v478, 0
      %v497 = vsel %vm489, %v479, 0
      %v500 = vsel %vm489, %v480, 0
      %502 = vmatprep.subr.bf16.mxu0 0
      %503 = vmatpush1.bf16.msra.mxu0 %v487
      %504 = vmatprep.subr.bf16.mxu0 0
      %505 = vmatpush1.bf16.msra.mxu0 0
      %506 = vmatprep.subr.bf16.mxu0 0
      %507 = vmatpush1.bf16.msra.mxu0 0
      %508 = vmatprep.subr.bf16.mxu0 0
      %509 = vmatpush1.bf16.msra.mxu0 0
      %510 = vmatprep.subr.bf16.mxu0 0
      %511 = vmatpush1.bf16.msra.mxu0 0
      %512 = vmatprep.subr.bf16.mxu0 0
      %513 = vmatpush1.bf16.msra.mxu0 0
      %514 = vmatprep.subr.bf16.mxu0 0
      %515 = vmatpush1.bf16.msra.mxu0 0
      %516 = vmatprep.subr.bf16.mxu0 0
      %517 = vmatpush1.bf16.msra.mxu0 0
      %518 = vmatprep.subr.bf16.mxu0 0
      %519 = vmatpush1.bf16.msra.mxu0 0
      %520 = vmatprep.subr.bf16.mxu0 0
      %521 = vmatpush1.bf16.msra.mxu0 0
      %522 = vmatprep.subr.bf16.mxu0 0
      %523 = vmatpush1.bf16.msra.mxu0 0
      %524 = vmatprep.subr.bf16.mxu0 0
      %525 = vmatpush1.bf16.msra.mxu0 0
      %526 = vmatprep.subr.bf16.mxu0 0
      %527 = vmatpush1.bf16.msra.mxu0 0
      %528 = vmatprep.subr.bf16.mxu0 0
      %529 = vmatpush1.bf16.msra.mxu0 0
      %530 = vmatprep.subr.bf16.mxu0 0
      %531 = vmatpush1.bf16.msra.mxu0 0
      %532 = vmatprep.subr.bf16.mxu0 0
      %533 = vmatpush1.bf16.msra.mxu0 0
      %534 = vmatprep.mubr.bf16.mxu0 0
      %535 = vmatmul.mubr.bf16.gmra.mrb[0].mxu0 %v491
      %v536 = vpop.f32.mrb[0].mxu0
      %v537 = vadd.f32 0.0, %v536
      %v538 = vpop.f32.mrb[0].mxu0
      %v539 = vpop.f32.mrb[0].mxu0
      %v540 = vadd.f32 0.0, %v539
      %v541 = vpop.f32.mrb[0].mxu0
      %542 = vmatprep.mubr.bf16.mxu0 0
      %543 = vmatmul.mubr.bf16.gmra.mrb[0].mxu0 %v494
      %v544 = vpop.f32.mrb[0].mxu0
      %v545 = vadd.f32 0.0, %v544
      %v546 = vpop.f32.mrb[0].mxu0
      %v547 = vpop.f32.mrb[0].mxu0
      %v548 = vadd.f32 0.0, %v547
      %v549 = vpop.f32.mrb[0].mxu0
      %550 = vmatprep.mubr.bf16.mxu0 0
      %551 = vmatmul.mubr.bf16.gmra.mrb[0].mxu0 %v497
      %v552 = vpop.f32.mrb[0].mxu0
      %v553 = vadd.f32 0.0, %v552
      %v554 = vpop.f32.mrb[0].mxu0
      %v555 = vpop.f32.mrb[0].mxu0
      %v556 = vadd.f32 0.0, %v555
      %v557 = vpop.f32.mrb[0].mxu0
      %558 = vmatprep.mubr.bf16.mxu0 0
      %559 = vmatmul.mubr.bf16.gmra.mrb[0].mxu0 %v500
      %v560 = vpop.f32.mrb[0].mxu0
      %v561 = vadd.f32 0.0, %v560
      %v562 = vpop.f32.mrb[0].mxu0
      %v563 = vpop.f32.mrb[0].mxu0
      %v564 = vadd.f32 0.0, %v563
      %v565 = vpop.f32.mrb[0].mxu0
      %566 = vdwg.mxu0
      %v567 = vpack.c.bf16 %v540, %v537
      %v568 = vpack.c.bf16 %v548, %v545
      %v569 = vpack.c.bf16 %v556, %v553
      %v570 = vpack.c.bf16 %v564, %v561
      %v575 = vunpack.c.l.b16 %v567
      %v576 = vunpack.c.h.b16 %v567
      %v577 = vunpack.c.l.b16 %v568
      %v578 = vunpack.c.h.b16 %v568
      %v579 = vunpack.c.l.b16 %v569
      %v580 = vunpack.c.h.b16 %v569
      %v581 = vunpack.c.l.b16 %v570
      %v582 = vunpack.c.h.b16 %v570
      %v583 = vpack.c.b16 %v575, %v575
      %v584 = vpack.c.b16 %v576, %v576
      %v585 = vpack.c.b16 %v577, %v577
      %v586 = vpack.c.b16 %v578, %v578
      %v587 = vpack.c.b16 %v579, %v579
      %v588 = vpack.c.b16 %v580, %v580
      %v589 = vpack.c.b16 %v581, %v581
      %v590 = vpack.c.b16 %v582, %v582
      %vm599 = vcmask 60416
      %600 = vst.msk [vmem:[%s336] sm:$0xf] %vm599, %v583
      %601 = vst.msk [vmem:[%s336 + $0x4] sm:$0xf] %vm599, %v584
      %602 = vst.msk [vmem:[%s336 + $0x8] sm:$0xf] %vm599, %v585
      %603 = vst.msk [vmem:[%s336 + $0xc] sm:$0xf] %vm599, %v586
      %604 = vst.msk [vmem:[%s336 + $0x10] sm:$0xf] %vm599, %v587
      %605 = vst.msk [vmem:[%s336 + $0x14] sm:$0xf] %vm599, %v588
      %606 = vst.msk [vmem:[%s336 + $0x18] sm:$0xf] %vm599, %v589
      %607 = vst.msk [vmem:[%s336 + $0x1c] sm:$0xf] %vm599, %v590
      %v608 = vsel %vm393, %v537, 0.0
      %v609 = vsel %vm393, %v540, 0.0
      %v610 = vadd.f32 %v608, %v609
      %v611 = vsel %vm393, %v545, 0.0
      %v612 = vadd.f32 %v610, %v611
      %v613 = vsel %vm393, %v548, 0.0
      %v614 = vadd.f32 %v612, %v613
      %v615 = vsel %vm393, %v553, 0.0
      %v616 = vadd.f32 %v614, %v615
      %v617 = vsel %vm393, %v556, 0.0
      %v618 = vadd.f32 %v616, %v617
      %v619 = vsel %vm393, %v561, 0.0
      %v620 = vadd.f32 %v618, %v619
      %v621 = vsel %vm393, %v564, 0.0
      %v622 = vadd.f32 %v620, %v621
      %v623 = vrot.slane %v622, 4
      %v624 = vadd.f32 %v622, %v623
      %v625 = vrot.slane %v624, 2
      %v626 = vadd.f32 %v624, %v625
      %v627 = vrot.slane %v626, 1
      %v628 = vadd.f32 %v626, %v627
      %v629 = vmul.f32 %v537, %v537
      %v630 = vmul.f32 %v540, %v540
      %v631 = vmul.f32 %v545, %v545
      %v632 = vmul.f32 %v548, %v548
      %v633 = vmul.f32 %v553, %v553
      %v634 = vmul.f32 %v556, %v556
      %v635 = vmul.f32 %v561, %v561
      %v636 = vmul.f32 %v564, %v564
      %v637 = vsel %vm393, %v629, 0.0
      %v638 = vsel %vm393, %v630, 0.0
      %v639 = vadd.f32 %v637, %v638
      %v640 = vsel %vm393, %v631, 0.0
      %v641 = vadd.f32 %v639, %v640
      %v642 = vsel %vm393, %v632, 0.0
      %v643 = vadd.f32 %v641, %v642
      %v644 = vsel %vm393, %v633, 0.0
      %v645 = vadd.f32 %v643, %v644
      %v646 = vsel %vm393, %v634, 0.0
      %v647 = vadd.f32 %v645, %v646
      %v648 = vsel %vm393, %v635, 0.0
      %v649 = vadd.f32 %v647, %v648
      %v650 = vsel %vm393, %v636, 0.0
      %v651 = vadd.f32 %v649, %v650
      %v652 = vrot.slane %v651, 4
      %v653 = vadd.f32 %v651, %v652
      %v654 = vrot.slane %v653, 2
      %v655 = vadd.f32 %v653, %v654
      %v656 = vrot.slane %v655, 1
      %v657 = vadd.f32 %v655, %v656
      %vm658 = vcmask 1040384
      %v659 = vsel %vm658, %v628, %v657
      %vm660 = vcmask 58368
      %661 = vst.msk [vmem:[%s341] sm:$0x3] %vm660, %v659
      %s662 = smul.u32 8, %s20
      %p663 = scmp.lt.s32.totalorder %s662, 15
      %s664 = scalar_select %p663, %s662, 15
      %s665 = smul.addr %s664, 4
      %s666 = scalar_lea.vmem %s7, %s665
      %p667 = scmp.lt.s32.totalorder %s20, 1
      %s668 = scalar_select %p667, %s20, 1
      %s669 = smul.addr %s668, 2
      %s670 = scalar_lea.vmem %s8, %s669
      // Predicated region
      $region49: #{clique_block_forward.14} parent=47 // pred_check
        %p671 = pneg %p195
      $region50: #{clique_block_forward.14} parent=47 // pred_check_branch
        %673 = sbr.rel (%p671) target = $region52
      $region51: #{clique_block_forward.14} parent=47 // pred_region
        %s674 = smul.u32 8, %s20
      $region52: #{clique_block_forward.14} parent=47 // pred_fallthru
        _
      // Predicated region
      $region53: #{clique_block_forward.14} parent=47 // pred_check
        %p675 = pneg %p221
      $region54: #{clique_block_forward.14} parent=47 // pred_check_branch
        %677 = sbr.rel (%p675) target = $region56
      $region55: #{clique_block_forward.14} parent=47 // pred_region
        _
      $region56: #{clique_block_forward.14} parent=47 // pred_fallthru
        _
    $region48: #{clique_block_forward.14} parent=5 // pred_fallthru
      _
    %p678 = scmp.le.s32.totalorder 2, %s15
    // Predicated region
    $region57: #{clique_block_forward.14} parent=5 // pred_check
      %p679 = pneg %p678
    $region58: #{clique_block_forward.14} parent=5 // pred_check_branch
      %681 = sbr.rel (%p679) target = $region60
    $region59: #{clique_block_forward.14} parent=5 // pred_region
      %s682 = ssub.s32 %s15, 2
      // Predicated region
      $region61: #{clique_block_forward.14} parent=59 // pred_check
        %p683 = pneg %p201
      $region62: #{clique_block_forward.14} parent=59 // pred_check_branch
        %685 = sbr.rel (%p683) target = $region64
      $region63: #{clique_block_forward.14} parent=59 // pred_region
        %s686 = smul.u32 8, %s21
        %p687 = scmp.lt.s32.totalorder %s686, 15
        %s688 = scalar_select %p687, %s686, 15
        %s689 = smul.addr %s688, 4
        %s690 = scalar_lea.vmem %s7, %s689
      $region64: #{clique_block_forward.14} parent=59 // pred_fallthru
        _
      // Predicated region
      $region65: #{clique_block_forward.14} parent=59 // pred_check
        %p691 = pneg %p227
      $region66: #{clique_block_forward.14} parent=59 // pred_check_branch
        %693 = sbr.rel (%p691) target = $region68
      $region67: #{clique_block_forward.14} parent=59 // pred_region
        %p694 = scmp.lt.s32.totalorder %s21, 1
        %s695 = scalar_select %p694, %s21, 1
        %s696 = smul.addr %s695, 2
        %s697 = scalar_lea.vmem %s8, %s696
      $region68: #{clique_block_forward.14} parent=59 // pred_fallthru
        _
    $region60: #{clique_block_forward.14} parent=5 // pred_fallthru
      _
  $region6: #{clique_block_forward.14} parent=0 // loop_footer
    %s19 = sadd.s32 1, %s15
  $region7: #{clique_block_forward.14} parent=0 // loop_footer_branch
    %14 = sbr.rel target = $region3
  $region8: #{clique_block_forward.14} parent=0 // loop_exit
    _

// kernel: clique_block_forward.16
$region0: #{clique_block_forward.16}
  #allocation0 [shape = 'u32[]', space=smem, size = 0x4, offset = 0x4, fixed_abs, tag = 'smem constant byte address 0x4 - core index']
  #allocation1 [shape = 'u32[144,128]{1,0:T(1,128)}', space=vmem, size = 0x12000, scoped, tag = 'internal scratch']
  #allocation2 [shape = 'bf16[64,24]{1,0:T(16,128)(2,1)}', space=vmem, size = 0x4000, scoped, tag = 'scratch operand']
  %s0 = inlined_call_operand.vmem [shape: f32[128,8], index: 0, kind: input, shape index: {}]
  %s1 = inlined_call_operand.vmem [shape: bf16[128,8], index: 1, kind: input, shape index: {}]
  %s2 = inlined_call_operand.vmem [shape: bf16[128,8], index: 2, kind: input, shape index: {}]
  %s3 = inlined_call_operand.vmem [shape: f32[1,8], index: 3, kind: input, shape index: {}]
  %s4 = inlined_call_operand.vmem [shape: f32[1,8], index: 4, kind: input, shape index: {}]
  %s5 = inlined_call_operand.vmem [shape: f32[1,8], index: 5, kind: input, shape index: {}]
  %s6 = inlined_call_operand.vmem [shape: f32[1,8], index: 6, kind: input, shape index: {}]
  %s7 = inlined_call_operand.vmem [shape: f32[1,8], index: 7, kind: input, shape index: {}]
  %s8 = inlined_call_operand.vmem [shape: f32[1,8], index: 8, kind: input, shape index: {}]
  %s9 = inlined_call_operand.vmem [shape: bf16[24,8], index: 9, kind: input, shape index: {}]
  %s10 = inlined_call_operand.vmem [shape: bf16[128,8], index: 10, kind: output, shape index: {0}]
  %s11 = inlined_call_operand.vmem [shape: f32[2,2,8], index: 11, kind: output, shape index: {1}]
  %12 = xla_tuple %s10, %s11
  %s13 = sld [smem:[#allocation0]]
  $region81: #{clique_block_forward.16} parent=0
    _
  %s15 = ssub.s32 1, %s13
  %s16 = scalar_select 0, %s15, %s13
  loop: start=0, step=1, limit=4
  $region2: #{clique_block_forward.16} parent=0 // loop_pre_header
    _
  $region3: #{clique_block_forward.16} parent=0 // loop_header
    %s18 = sphi 0, %s22
    %p19 = scmp.ge.s32.totalorder %s18, 4
    %s28 = sphi 0, %s30
    %s31 = sphi 0, %s28
    %s32 = sphi 0, %s31
    %s48 = sphi 0, %s32
    %s54 = sphi 0, %s56
    %s57 = sphi 0, %s54
    %s58 = sphi 0, %s57
    %s74 = sphi 0, %s58
    %s80 = sphi 0, %s82
    %s83 = sphi 0, %s80
    %s84 = sphi 0, %s83
    %s100 = sphi 0, %s84
    %s104 = sphi 0, %s104
    %s106 = sphi 0, %s104
    %s107 = sphi 0, %s106
    %s121 = sphi 0, %s107
    %s125 = sphi 0, %s125
    %s127 = sphi 0, %s125
    %s128 = sphi 0, %s127
    %s142 = sphi 0, %s128
    %s146 = sphi 0, %s146
    %s148 = sphi 0, %s146
    %s149 = sphi 0, %s148
    %s163 = sphi 0, %s149
    %s167 = sphi 0, %s167
    %s169 = sphi 0, %s167
    %s170 = sphi 0, %s169
    %s184 = sphi 0, %s170
    %s188 = sphi 0, %s188
    %s190 = sphi 0, %s188
    %s191 = sphi 0, %s190
    %s205 = sphi 0, %s191
    %s209 = sphi 0, %s209
    %s211 = sphi 0, %s209
    %s212 = sphi 0, %s211
    %s226 = sphi 0, %s212
    %s230 = sphi 0, %s230
    %s232 = sphi 0, %s230
    %s233 = sphi 0, %s232
    %s247 = sphi 0, %s233
    %s253 = sphi 0, %s255
    %s256 = sphi 0, %s253
    %s257 = sphi 0, %s256
    %s273 = sphi 0, %s257
    %s279 = sphi 0, %s281
    %s282 = sphi 0, %s279
    %s283 = sphi 0, %s282
    %s299 = sphi 0, %s283
  $region4: #{clique_block_forward.16} parent=0 // loop_header_branch
    %21 = sbr.rel (%p19) target = $region8
  $region5: #{clique_block_forward.16} parent=0 // loop_body
    %s23 = ssub.s32 %s18, 1
    %s24 = ssub.s32 %s18, 2
    %s25 = sadd.s32 %s18, 1
    %s26 = ssub.s32 %s18, %s25
    %p27 = scmp.eq.s32.totalorder %s26, 0
    %s29 = sadd.s32 %s28, 1
    %s30 = scalar_select %p27, %s28, %s29
    %p33 = pneg %p27
    %p34 = scmp.eq.s32.totalorder %s18, 1
    %p35 = por %p33, %p34
    %p36 = scmp.ne.s32.totalorder %s28, %s31
    %p37 = scmp.eq.s32.totalorder %s18, 0
    %p38 = por %p36, %p37
    %p39 = scmp.ne.s32.totalorder %s28, %s31
    %p40 = scmp.eq.s32.totalorder %s23, 1
    %p41 = por %p39, %p40
    %p42 = scmp.ne.s32.totalorder %s31, %s32
    %p43 = scmp.eq.s32.totalorder %s23, 0
    %p44 = por %p42, %p43
    %p45 = scmp.ne.s32.totalorder %s31, %s32
    %p46 = scmp.eq.s32.totalorder %s24, 1
    %p47 = por %p45, %p46
    %p49 = scmp.ne.s32.totalorder %s32, %s48
    %p50 = scmp.eq.s32.totalorder %s24, 0
    %p51 = por %p49, %p50
    %s52 = ssub.s32 %s18, %s25
    %p53 = scmp.eq.s32.totalorder %s52, 0
    %s55 = sadd.s32 %s54, 1
    %s56 = scalar_select %p53, %s54, %s55
    %p59 = pneg %p53
    %p60 = scmp.eq.s32.totalorder %s18, 1
    %p61 = por %p59, %p60
    %p62 = scmp.ne.s32.totalorder %s54, %s57
    %p63 = scmp.eq.s32.totalorder %s18, 0
    %p64 = por %p62, %p63
    %p65 = scmp.ne.s32.totalorder %s54, %s57
    %p66 = scmp.eq.s32.totalorder %s23, 1
    %p67 = por %p65, %p66
    %p68 = scmp.ne.s32.totalorder %s57, %s58
    %p69 = scmp.eq.s32.totalorder %s23, 0
    %p70 = por %p68, %p69
    %p71 = scmp.ne.s32.totalorder %s57, %s58
    %p72 = scmp.eq.s32.totalorder %s24, 1
    %p73 = por %p71, %p72
    %p75 = scmp.ne.s32.totalorder %s58, %s74
    %p76 = scmp.eq.s32.totalorder %s24, 0
    %p77 = por %p75, %p76
    %s78 = ssub.s32 %s18, %s25
    %p79 = scmp.eq.s32.totalorder %s78, 0
    %s81 = sadd.s32 %s80, 1
    %s82 = scalar_select %p79, %s80, %s81
    %p85 = pneg %p79
    %p86 = scmp.eq.s32.totalorder %s18, 1
    %p87 = por %p85, %p86
    %p88 = scmp.ne.s32.totalorder %s80, %s83
    %p89 = scmp.eq.s32.totalorder %s18, 0
    %p90 = por %p88, %p89
    %p91 = scmp.ne.s32.totalorder %s80, %s83
    %p92 = scmp.eq.s32.totalorder %s23, 1
    %p93 = por %p91, %p92
    %p94 = scmp.ne.s32.totalorder %s83, %s84
    %p95 = scmp.eq.s32.totalorder %s23, 0
    %p96 = por %p94, %p95
    %p97 = scmp.ne.s32.totalorder %s83, %s84
    %p98 = scmp.eq.s32.totalorder %s24, 1
    %p99 = por %p97, %p98
    %p101 = scmp.ne.s32.totalorder %s84, %s100
    %p102 = scmp.eq.s32.totalorder %s24, 0
    %p103 = por %p101, %p102
    %s105 = sadd.s32 %s104, 1
    %p108 = scmp.eq.s32.totalorder %s18, 1
    %p109 = scmp.ne.s32.totalorder %s104, %s106
    %p110 = scmp.eq.s32.totalorder %s18, 0
    %p111 = por %p109, %p110
    %p112 = scmp.ne.s32.totalorder %s104, %s106
    %p113 = scmp.eq.s32.totalorder %s23, 1
    %p114 = por %p112, %p113
    %p115 = scmp.ne.s32.totalorder %s106, %s107
    %p116 = scmp.eq.s32.totalorder %s23, 0
    %p117 = por %p115, %p116
    %p118 = scmp.ne.s32.totalorder %s106, %s107
    %p119 = scmp.eq.s32.totalorder %s24, 1
    %p120 = por %p118, %p119
    %p122 = scmp.ne.s32.totalorder %s107, %s121
    %p123 = scmp.eq.s32.totalorder %s24, 0
    %p124 = por %p122, %p123
    %s126 = sadd.s32 %s125, 1
    %p129 = scmp.eq.s32.totalorder %s18, 1
    %p130 = scmp.ne.s32.totalorder %s125, %s127
    %p131 = scmp.eq.s32.totalorder %s18, 0
    %p132 = por %p130, %p131
    %p133 = scmp.ne.s32.totalorder %s125, %s127
    %p134 = scmp.eq.s32.totalorder %s23, 1
    %p135 = por %p133, %p134
    %p136 = scmp.ne.s32.totalorder %s127, %s128
    %p137 = scmp.eq.s32.totalorder %s23, 0
    %p138 = por %p136, %p137
    %p139 = scmp.ne.s32.totalorder %s127, %s128
    %p140 = scmp.eq.s32.totalorder %s24, 1
    %p141 = por %p139, %p140
    %p143 = scmp.ne.s32.totalorder %s128, %s142
    %p144 = scmp.eq.s32.totalorder %s24, 0
    %p145 = por %p143, %p144
    %s147 = sadd.s32 %s146, 1
    %p150 = scmp.eq.s32.totalorder %s18, 1
    %p151 = scmp.ne.s32.totalorder %s146, %s148
    %p152 = scmp.eq.s32.totalorder %s18, 0
    %p153 = por %p151, %p152
    %p154 = scmp.ne.s32.totalorder %s146, %s148
    %p155 = scmp.eq.s32.totalorder %s23, 1
    %p156 = por %p154, %p155
    %p157 = scmp.ne.s32.totalorder %s148, %s149
    %p158 = scmp.eq.s32.totalorder %s23, 0
    %p159 = por %p157, %p158
    %p160 = scmp.ne.s32.totalorder %s148, %s149
    %p161 = scmp.eq.s32.totalorder %s24, 1
    %p162 = por %p160, %p161
    %p164 = scmp.ne.s32.totalorder %s149, %s163
    %p165 = scmp.eq.s32.totalorder %s24, 0
    %p166 = por %p164, %p165
    %s168 = sadd.s32 %s167, 1
    %p171 = scmp.eq.s32.totalorder %s18, 1
    %p172 = scmp.ne.s32.totalorder %s167, %s169
    %p173 = scmp.eq.s32.totalorder %s18, 0
    %p174 = por %p172, %p173
    %p175 = scmp.ne.s32.totalorder %s167, %s169
    %p176 = scmp.eq.s32.totalorder %s23, 1
    %p177 = por %p175, %p176
    %p178 = scmp.ne.s32.totalorder %s169, %s170
    %p179 = scmp.eq.s32.totalorder %s23, 0
    %p180 = por %p178, %p179
    %p181 = scmp.ne.s32.totalorder %s169, %s170
    %p182 = scmp.eq.s32.totalorder %s24, 1
    %p183 = por %p181, %p182
    %p185 = scmp.ne.s32.totalorder %s170, %s184
    %p186 = scmp.eq.s32.totalorder %s24, 0
    %p187 = por %p185, %p186
    %s189 = sadd.s32 %s188, 1
    %p192 = scmp.eq.s32.totalorder %s18, 1
    %p193 = scmp.ne.s32.totalorder %s188, %s190
    %p194 = scmp.eq.s32.totalorder %s18, 0
    %p195 = por %p193, %p194
    %p196 = scmp.ne.s32.totalorder %s188, %s190
    %p197 = scmp.eq.s32.totalorder %s23, 1
    %p198 = por %p196, %p197
    %p199 = scmp.ne.s32.totalorder %s190, %s191
    %p200 = scmp.eq.s32.totalorder %s23, 0
    %p201 = por %p199, %p200
    %p202 = scmp.ne.s32.totalorder %s190, %s191
    %p203 = scmp.eq.s32.totalorder %s24, 1
    %p204 = por %p202, %p203
    %p206 = scmp.ne.s32.totalorder %s191, %s205
    %p207 = scmp.eq.s32.totalorder %s24, 0
    %p208 = por %p206, %p207
    %s210 = sadd.s32 %s209, 1
    %p213 = scmp.eq.s32.totalorder %s18, 1
    %p214 = scmp.ne.s32.totalorder %s209, %s211
    %p215 = scmp.eq.s32.totalorder %s18, 0
    %p216 = por %p214, %p215
    %p217 = scmp.ne.s32.totalorder %s209, %s211
    %p218 = scmp.eq.s32.totalorder %s23, 1
    %p219 = por %p217, %p218
    %p220 = scmp.ne.s32.totalorder %s211, %s212
    %p221 = scmp.eq.s32.totalorder %s23, 0
    %p222 = por %p220, %p221
    %p223 = scmp.ne.s32.totalorder %s211, %s212
    %p224 = scmp.eq.s32.totalorder %s24, 1
    %p225 = por %p223, %p224
    %p227 = scmp.ne.s32.totalorder %s212, %s226
    %p228 = scmp.eq.s32.totalorder %s24, 0
    %p229 = por %p227, %p228
    %s231 = sadd.s32 %s230, 1
    %p234 = scmp.eq.s32.totalorder %s18, 1
    %p235 = scmp.ne.s32.totalorder %s230, %s232
    %p236 = scmp.eq.s32.totalorder %s18, 0
    %p237 = por %p235, %p236
    %p238 = scmp.ne.s32.totalorder %s230, %s232
    %p239 = scmp.eq.s32.totalorder %s23, 1
    %p240 = por %p238, %p239
    %p241 = scmp.ne.s32.totalorder %s232, %s233
    %p242 = scmp.eq.s32.totalorder %s23, 0
    %p243 = por %p241, %p242
    %p244 = scmp.ne.s32.totalorder %s232, %s233
    %p245 = scmp.eq.s32.totalorder %s24, 1
    %p246 = por %p244, %p245
    %p248 = scmp.ne.s32.totalorder %s233, %s247
    %p249 = scmp.eq.s32.totalorder %s24, 0
    %p250 = por %p248, %p249
    %s251 = ssub.s32 %s18, %s25
    %p252 = scmp.eq.s32.totalorder %s251, 0
    %s254 = sadd.s32 %s253, 1
    %s255 = scalar_select %p252, %s253, %s254
    %p258 = pneg %p252
    %p259 = scmp.eq.s32.totalorder %s18, 1
    %p260 = por %p258, %p259
    %p261 = scmp.ne.s32.totalorder %s253, %s256
    %p262 = scmp.eq.s32.totalorder %s18, 0
    %p263 = por %p261, %p262
    %p264 = scmp.ne.s32.totalorder %s253, %s256
    %p265 = scmp.eq.s32.totalorder %s23, 1
    %p266 = por %p264, %p265
    %p267 = scmp.ne.s32.totalorder %s256, %s257
    %p268 = scmp.eq.s32.totalorder %s23, 0
    %p269 = por %p267, %p268
    %p270 = scmp.ne.s32.totalorder %s256, %s257
    %p271 = scmp.eq.s32.totalorder %s24, 1
    %p272 = por %p270, %p271
    %p274 = scmp.ne.s32.totalorder %s257, %s273
    %p275 = scmp.eq.s32.totalorder %s24, 0
    %p276 = por %p274, %p275
    %s277 = ssub.s32 %s18, %s25
    %p278 = scmp.eq.s32.totalorder %s277, 0
    %s280 = sadd.s32 %s279, 1
    %s281 = scalar_select %p278, %s279, %s280
    %p284 = pneg %p278
    %p285 = scmp.eq.s32.totalorder %s18, 1
    %p286 = por %p284, %p285
    %p287 = scmp.ne.s32.totalorder %s279, %s282
    %p288 = scmp.eq.s32.totalorder %s18, 0
    %p289 = por %p287, %p288
    %p290 = scmp.ne.s32.totalorder %s279, %s282
    %p291 = scmp.eq.s32.totalorder %s23, 1
    %p292 = por %p290, %p291
    %p293 = scmp.ne.s32.totalorder %s282, %s283
    %p294 = scmp.eq.s32.totalorder %s23, 0
    %p295 = por %p293, %p294
    %p296 = scmp.ne.s32.totalorder %s282, %s283
    %p297 = scmp.eq.s32.totalorder %s24, 1
    %p298 = por %p296, %p297
    %p300 = scmp.ne.s32.totalorder %s283, %s299
    %p301 = scmp.eq.s32.totalorder %s24, 0
    %p302 = por %p300, %p301
    %p303 = scmp.le.s32.totalorder 1, %s18
    %p304 = scmp.lt.s32.totalorder %s18, 3
    %p305 = pnand %p303, %p304
    %p306 = pneg %p305
    // Predicated region
    $region9: #{clique_block_forward.16} parent=5 // pred_check
      _
    $region10: #{clique_block_forward.16} parent=5 // pred_check_branch
      %308 = sbr.rel (%p305) target = $region12
    $region11: #{clique_block_forward.16} parent=5 // pred_region
      %s309 = ssub.s32 %s18, 1
      // Predicated region
      $region13: #{clique_block_forward.16} parent=11 // pred_check
        %p310 = pneg %p117
      $region14: #{clique_block_forward.16} parent=11 // pred_check_branch
        %312 = sbr.rel (%p310) target = $region16
      $region15: #{clique_block_forward.16} parent=11 // pred_region
        _
      $region16: #{clique_block_forward.16} parent=11 // pred_fallthru
        _
      // Predicated region
      $region17: #{clique_block_forward.16} parent=11 // pred_check
        %p313 = pneg %p138
      $region18: #{clique_block_forward.16} parent=11 // pred_check_branch
        %315 = sbr.rel (%p313) target = $region20
      $region19: #{clique_block_forward.16} parent=11 // pred_region
        _
      $region20: #{clique_block_forward.16} parent=11 // pred_fallthru
        _
      // Predicated region
      $region21: #{clique_block_forward.16} parent=11 // pred_check
        %p316 = pneg %p159
      $region22: #{clique_block_forward.16} parent=11 // pred_check_branch
        %318 = sbr.rel (%p316) target = $region24
      $region23: #{clique_block_forward.16} parent=11 // pred_region
        _
      $region24: #{clique_block_forward.16} parent=11 // pred_fallthru
        _
      // Predicated region
      $region25: #{clique_block_forward.16} parent=11 // pred_check
        %p319 = pneg %p180
      $region26: #{clique_block_forward.16} parent=11 // pred_check_branch
        %321 = sbr.rel (%p319) target = $region28
      $region27: #{clique_block_forward.16} parent=11 // pred_region
        _
      $region28: #{clique_block_forward.16} parent=11 // pred_fallthru
        _
      // Predicated region
      $region29: #{clique_block_forward.16} parent=11 // pred_check
        %p322 = pneg %p201
      $region30: #{clique_block_forward.16} parent=11 // pred_check_branch
        %324 = sbr.rel (%p322) target = $region32
      $region31: #{clique_block_forward.16} parent=11 // pred_region
        _
      $region32: #{clique_block_forward.16} parent=11 // pred_fallthru
        _
      // Predicated region
      $region33: #{clique_block_forward.16} parent=11 // pred_check
        %p325 = pneg %p222
      $region34: #{clique_block_forward.16} parent=11 // pred_check_branch
        %327 = sbr.rel (%p325) target = $region36
      $region35: #{clique_block_forward.16} parent=11 // pred_region
        _
      $region36: #{clique_block_forward.16} parent=11 // pred_fallthru
        _
      // Predicated region
      $region37: #{clique_block_forward.16} parent=11 // pred_check
        %p328 = pneg %p243
      $region38: #{clique_block_forward.16} parent=11 // pred_check_branch
        %330 = sbr.rel (%p328) target = $region40
      $region39: #{clique_block_forward.16} parent=11 // pred_region
        _
      $region40: #{clique_block_forward.16} parent=11 // pred_fallthru
        _
    $region12: #{clique_block_forward.16} parent=5 // pred_fallthru
      _
    %p331 = scmp.lt.s32.totalorder %s18, 2
    // Predicated region
    $region41: #{clique_block_forward.16} parent=5 // pred_check
      %p332 = pneg %p331
    $region42: #{clique_block_forward.16} parent=5 // pred_check_branch
      %334 = sbr.rel (%p332) target = $region44
    $region43: #{clique_block_forward.16} parent=5 // pred_region
      // Predicated region
      $region45: #{clique_block_forward.16} parent=43 // pred_check
        %p335 = pneg %p38
      $region46: #{clique_block_forward.16} parent=43 // pred_check_branch
        %337 = sbr.rel (%p335) target = $region48
      $region47: #{clique_block_forward.16} parent=43 // pred_region
        %s338 = smul.u32 8, %s18
        %p339 = scmp.lt.s32.totalorder %s338, 15
        %s340 = scalar_select %p339, %s338, 15
        %s341 = smul.addr %s340, 8
        %s342 = scalar_lea.vmem %s0, %s341
        %s343 = smul.u32 8, %s18
      $region48: #{clique_block_forward.16} parent=43 // pred_fallthru
        _
      // Predicated region
      $region49: #{clique_block_forward.16} parent=43 // pred_check
        %p344 = pneg %p64
      $region50: #{clique_block_forward.16} parent=43 // pred_check_branch
        %346 = sbr.rel (%p344) target = $region52
      $region51: #{clique_block_forward.16} parent=43 // pred_region
        %s347 = smul.u32 8, %s18
        %p348 = scmp.lt.s32.totalorder %s347, 15
        %s349 = scalar_select %p348, %s347, 15
        %s350 = smul.addr %s349, 4
        %s351 = scalar_lea.vmem %s1, %s350
        %s352 = smul.u32 8, %s18
      $region52: #{clique_block_forward.16} parent=43 // pred_fallthru
        _
      // Predicated region
      $region53: #{clique_block_forward.16} parent=43 // pred_check
        %p353 = pneg %p90
      $region54: #{clique_block_forward.16} parent=43 // pred_check_branch
        %355 = sbr.rel (%p353) target = $region56
      $region55: #{clique_block_forward.16} parent=43 // pred_region
        %s356 = smul.u32 8, %s18
        %p357 = scmp.lt.s32.totalorder %s356, 15
        %s358 = scalar_select %p357, %s356, 15
        %s359 = smul.addr %s358, 4
        %s360 = scalar_lea.vmem %s2, %s359
        %s361 = smul.u32 8, %s18
      $region56: #{clique_block_forward.16} parent=43 // pred_fallthru
        _
    $region44: #{clique_block_forward.16} parent=5 // pred_fallthru
      _
    %p362 = scmp.le.s32.totalorder 1, %s18
    %p363 = scmp.lt.s32.totalorder %s18, 3
    %p364 = pnand %p362, %p363
    %p365 = pneg %p364
    // Predicated region
    $region57: #{clique_block_forward.16} parent=5 // pred_check
      _
    $region58: #{clique_block_forward.16} parent=5 // pred_check_branch
      %367 = sbr.rel (%p364) target = $region60
    $region59: #{clique_block_forward.16} parent=5 // pred_region
      %s368 = ssub.s32 %s18, 1
      %s369 = smul.u32 8, %s23
      %p370 = scmp.lt.s32.totalorder %s369, 15
      %s371 = scalar_select %p370, %s369, 15
      %s372 = smul.addr %s371, 8
      %s373 = scalar_lea.vmem %s0, %s372
      %p374 = pneg %p44
      %p375 = pneg %p41
      %s376 = smul.u32 8, %s23
      %p377 = scmp.lt.s32.totalorder %s376, 15
      %s378 = scalar_select %p377, %s376, 15
      %s379 = smul.addr %s378, 4
      %s380 = scalar_lea.vmem %s1, %s379
      %p381 = pneg %p70
      %p382 = pneg %p67
      %s383 = smul.u32 8, %s23
      %p384 = scmp.lt.s32.totalorder %s383, 15
      %s385 = scalar_select %p384, %s383, 15
      %s386 = smul.addr %s385, 4
      %s387 = scalar_lea.vmem %s2, %s386
      %p388 = pneg %p96
      %p389 = pneg %p93
      %p390 = pneg %p117
      %p391 = pneg %p114
      %p392 = pneg %p138
      %p393 = pneg %p135
      %p394 = pneg %p159
      %p395 = pneg %p156
      %p396 = pneg %p180
      %p397 = pneg %p177
      %p398 = pneg %p201
      %p399 = pneg %p198
      %p400 = pneg %p222
      %p401 = pneg %p219
      %p402 = pneg %p243
      %p403 = pneg %p240
      %p404 = pneg %p269
      %p405 = pneg %p266
      %s406 = smul.u32 8, %s23
      %p407 = scmp.lt.s32.totalorder %s406, 15
      %s408 = scalar_select %p407, %s406, 15
      %s409 = smul.addr %s408, 4
      %s410 = scalar_lea.vmem %s10, %s409
      %p411 = pneg %p295
      %p412 = pneg %p292
      %p413 = scmp.lt.s32.totalorder %s23, 1
      %s414 = scalar_select %p413, %s23, 1
      %s415 = smul.addr %s414, 2
      %s416 = scalar_lea.vmem %s11, %s415
      %s417 = smul.u32 8, %s23
      %p418 = scmp.lt.s32.totalorder %s417, 15
      %s419 = scalar_select %p418, %s417, 15
      %s420 = smul.addr %s419, 8
      %s421 = scalar_lea.vmem %s0, %s420
      %s422 = smul.u32 8, %s23
      %s423 = smul.u32 8, %s23
      %p424 = scmp.lt.s32.totalorder %s423, 15
      %s425 = scalar_select %p424, %s423, 15
      %s426 = smul.addr %s425, 4
      %s427 = scalar_lea.vmem %s1, %s426
      %s428 = smul.u32 8, %s23
      %s429 = smul.u32 8, %s23
      %p430 = scmp.lt.s32.totalorder %s429, 15
      %s431 = scalar_select %p430, %s429, 15
      %s432 = smul.addr %s431, 4
      %s433 = scalar_lea.vmem %s2, %s432
      %s434 = smul.u32 8, %s23
      %s435 = smul.u32 8, %s23
      %p436 = scmp.lt.s32.totalorder %s435, 15
      %s437 = scalar_select %p436, %s435, 15
      %s438 = smul.addr %s437, 4
      %s439 = scalar_lea.vmem %s10, %s438
      %s440 = smul.u32 8, %s23
      %p441 = scmp.lt.s32.totalorder %s23, 1
      %s442 = scalar_select %p441, %s23, 1
      %s443 = smul.addr %s442, 2
      %s444 = scalar_lea.vmem %s11, %s443
      %v446 = vld [vmem:[%s421] sm:$0xff]
      %v447 = vld [vmem:[%s421 + $0x8] sm:$0xff]
      %v448 = vld [vmem:[%s421 + $0x10] sm:$0xff]
      %v449 = vld [vmem:[%s421 + $0x18] sm:$0xff]
      %v450 = vld [vmem:[%s421 + $0x20] sm:$0xff]
      %v451 = vld [vmem:[%s421 + $0x28] sm:$0xff]
      %v452 = vld [vmem:[%s421 + $0x30] sm:$0xff]
      %v453 = vld [vmem:[%s421 + $0x38] sm:$0xff]
      %v454 = vld [vmem:[%s3] sm:$0x1]
      %v456 = vlaneseq
      %v457 = vshrl.u32 %v456, 7
      %v458 = vsub.s32 0, %v457
      %v459 = vrot.slane %v454, %v458
      %v461 = vmul.f32 %v446, %v459
      %v462 = vmul.f32 %v447, %v459
      %v463 = vmul.f32 %v448, %v459
      %v464 = vmul.f32 %v449, %v459
      %v465 = vmul.f32 %v450, %v459
      %v466 = vmul.f32 %v451, %v459
      %v467 = vmul.f32 %v452, %v459
      %v468 = vmul.f32 %v453, %v459
      %v469 = vld [vmem:[%s6] sm:$0x1]
      %v471 = vlaneseq
      %v472 = vshrl.u32 %v471, 7
      %v473 = vsub.s32 0, %v472
      %v474 = vrot.slane %v469, %v473
      %v476 = vadd.f32 %v461, %v474
      %v477 = vadd.f32 %v462, %v474
      %v478 = vadd.f32 %v463, %v474
      %v479 = vadd.f32 %v464, %v474
      %v480 = vadd.f32 %v465, %v474
      %v481 = vadd.f32 %v466, %v474
      %v482 = vadd.f32 %v467, %v474
      %v483 = vadd.f32 %v468, %v474
      %v484 = vmax.f32 %v476, 0.0
      %v485 = vmax.f32 %v477, 0.0
      %v486 = vmax.f32 %v478, 0.0
      %v487 = vmax.f32 %v479, 0.0
      %v488 = vmax.f32 %v480, 0.0
      %v489 = vmax.f32 %v481, 0.0
      %v490 = vmax.f32 %v482, 0.0
      %v491 = vmax.f32 %v483, 0.0
      %v492 = vpack.c.bf16 %v485, %v484
      %v493 = vpack.c.bf16 %v487, %v486
      %v494 = vpack.c.bf16 %v489, %v488
      %v495 = vpack.c.bf16 %v491, %v490
      %vm496 = vcmask 64512
      %497 = vst.msk [vmem:[#allocation2] sm:$0xff] %vm496, %v492
      %498 = vst.msk [vmem:[#allocation2 + $0x8] sm:$0xff] %vm496, %v493
      %499 = vst.msk [vmem:[#allocation2 + $0x10] sm:$0xff] %vm496, %v494
      %500 = vst.msk [vmem:[#allocation2 + $0x18] sm:$0xff] %vm496, %v495
      %v501 = vld [vmem:[%s427] sm:$0xf]
      %v502 = vld [vmem:[%s427 + $0x4] sm:$0xf]
      %v503 = vld [vmem:[%s427 + $0x8] sm:$0xf]
      %v504 = vld [vmem:[%s427 + $0xc] sm:$0xf]
      %v505 = vld [vmem:[%s427 + $0x10] sm:$0xf]
      %v506 = vld [vmem:[%s427 + $0x14] sm:$0xf]
      %v507 = vld [vmem:[%s427 + $0x18] sm:$0xf]
      %v508 = vld [vmem:[%s427 + $0x1c] sm:$0xf]
      %v509 = vunpack.c.l.bf16 %v501
      %v510 = vunpack.c.l.bf16 %v502
      %v511 = vunpack.c.l.bf16 %v503
      %v512 = vunpack.c.l.bf16 %v504
      %v513 = vunpack.c.l.bf16 %v505
      %v514 = vunpack.c.l.bf16 %v506
      %v515 = vunpack.c.l.bf16 %v507
      %v516 = vunpack.c.l.bf16 %v508
      %v517 = vld [vmem:[%s4] sm:$0x1]
      %v519 = vlaneseq
      %v520 = vshrl.u32 %v519, 7
      %v521 = vsub.s32 0, %v520
      %v522 = vrot.slane %v517, %v521
      %v524 = vmul.f32 %v509, %v522
      %v525 = vmul.f32 %v510, %v522
      %v526 = vmul.f32 %v511, %v522
      %v527 = vmul.f32 %v512, %v522
      %v528 = vmul.f32 %v513, %v522
      %v529 = vmul.f32 %v514, %v522
      %v530 = vmul.f32 %v515, %v522
      %v531 = vmul.f32 %v516, %v522
      %v532 = vld [vmem:[%s7] sm:$0x1]
      %v534 = vlaneseq
      %v535 = vshrl.u32 %v534, 7
      %v536 = vsub.s32 0, %v535
      %v537 = vrot.slane %v532, %v536
      %v539 = vadd.f32 %v524, %v537
      %v540 = vadd.f32 %v525, %v537
      %v541 = vadd.f32 %v526, %v537
      %v542 = vadd.f32 %v527, %v537
      %v543 = vadd.f32 %v528, %v537
      %v544 = vadd.f32 %v529, %v537
      %v545 = vadd.f32 %v530, %v537
      %v546 = vadd.f32 %v531, %v537
      %v547 = vmax.f32 %v539, 0.0
      %v548 = vmax.f32 %v540, 0.0
      %v549 = vmax.f32 %v541, 0.0
      %v550 = vmax.f32 %v542, 0.0
      %v551 = vmax.f32 %v543, 0.0
      %v552 = vmax.f32 %v544, 0.0
      %v553 = vmax.f32 %v545, 0.0
      %v554 = vmax.f32 %v546, 0.0
      %v555 = vpack.c.bf16 %v548, %v547
      %v556 = vpack.c.bf16 %v550, %v549
      %v557 = vpack.c.bf16 %v552, %v551
      %v558 = vpack.c.bf16 %v554, %v553
      %563 = vrot.lane.b32.xlu0 %v555, 8
      %v564 = vpop.permute.xlu0 %563
      %565 = vrot.lane.b32.xlu0 %v556, 8
      %v566 = vpop.permute.xlu0 %565
      %567 = vrot.lane.b32.xlu0 %v557, 8
      %v568 = vpop.permute.xlu0 %567
      %569 = vrot.lane.b32.xlu0 %v558, 8
      %v570 = vpop.permute.xlu0 %569
      %vm575 = vcmask 130112
      %576 = vst.msk [vmem:[#allocation2] sm:$0xff] %vm575, %v564
      %577 = vst.msk [vmem:[#allocation2 + $0x8] sm:$0xff] %vm575, %v566
      %578 = vst.msk [vmem:[#allocation2 + $0x10] sm:$0xff] %vm575, %v568
      %579 = vst.msk [vmem:[#allocation2 + $0x18] sm:$0xff] %vm575, %v570
      %v580 = vld [vmem:[%s433] sm:$0xf]
      %v581 = vld [vmem:[%s433 + $0x4] sm:$0xf]
      %v582 = vld [vmem:[%s433 + $0x8] sm:$0xf]
      %v583 = vld [vmem:[%s433 + $0xc] sm:$0xf]
      %v584 = vld [vmem:[%s433 + $0x10] sm:$0xf]
      %v585 = vld [vmem:[%s433 + $0x14] sm:$0xf]
      %v586 = vld [vmem:[%s433 + $0x18] sm:$0xf]
      %v587 = vld [vmem:[%s433 + $0x1c] sm:$0xf]
      %v588 = vunpack.c.l.bf16 %v580
      %v589 = vunpack.c.l.bf16 %v581
      %v590 = vunpack.c.l.bf16 %v582
      %v591 = vunpack.c.l.bf16 %v583
      %v592 = vunpack.c.l.bf16 %v584
      %v593 = vunpack.c.l.bf16 %v585
      %v594 = vunpack.c.l.bf16 %v586
      %v595 = vunpack.c.l.bf16 %v587
      %v596 = vld [vmem:[%s5] sm:$0x1]
      %v598 = vlaneseq
      %v599 = vshrl.u32 %v598, 7
      %v600 = vsub.s32 0, %v599
      %v601 = vrot.slane %v596, %v600
      %v603 = vmul.f32 %v588, %v601
      %v604 = vmul.f32 %v589, %v601
      %v605 = vmul.f32 %v590, %v601
      %v606 = vmul.f32 %v591, %v601
      %v607 = vmul.f32 %v592, %v601
      %v608 = vmul.f32 %v593, %v601
      %v609 = vmul.f32 %v594, %v601
      %v610 = vmul.f32 %v595, %v601
      %v611 = vld [vmem:[%s8] sm:$0x1]
      %v613 = vlaneseq
      %v614 = vshrl.u32 %v613, 7
      %v615 = vsub.s32 0, %v614
      %v616 = vrot.slane %v611, %v615
      %v618 = vadd.f32 %v603, %v616
      %v619 = vadd.f32 %v604, %v616
      %v620 = vadd.f32 %v605, %v616
      %v621 = vadd.f32 %v606, %v616
      %v622 = vadd.f32 %v607, %v616
      %v623 = vadd.f32 %v608, %v616
      %v624 = vadd.f32 %v609, %v616
      %v625 = vadd.f32 %v610, %v616
      %v626 = vmax.f32 %v618, 0.0
      %v627 = vmax.f32 %v619, 0.0
      %v628 = vmax.f32 %v620, 0.0
      %v629 = vmax.f32 %v621, 0.0
      %v630 = vmax.f32 %v622, 0.0
      %v631 = vmax.f32 %v623, 0.0
      %v632 = vmax.f32 %v624, 0.0
      %v633 = vmax.f32 %v625, 0.0
      %v634 = vpack.c.bf16 %v627, %v626
      %v635 = vpack.c.bf16 %v629, %v628
      %v636 = vpack.c.bf16 %v631, %v630
      %v637 = vpack.c.bf16 %v633, %v632
      %642 = vrot.lane.b32.xlu0 %v634, 16
      %v643 = vpop.permute.xlu0 %642
      %644 = vrot.lane.b32.xlu0 %v635, 16
      %v645 = vpop.permute.xlu0 %644
      %646 = vrot.lane.b32.xlu0 %v636, 16
      %v647 = vpop.permute.xlu0 %646
      %648 = vrot.lane.b32.xlu0 %v637, 16
      %v649 = vpop.permute.xlu0 %648
      %vm654 = vcmask 195712
      %655 = vst.msk [vmem:[#allocation2] sm:$0xff] %vm654, %v643
      %656 = vst.msk [vmem:[#allocation2 + $0x8] sm:$0xff] %vm654, %v645
      %657 = vst.msk [vmem:[#allocation2 + $0x10] sm:$0xff] %vm654, %v647
      %658 = vst.msk [vmem:[#allocation2 + $0x18] sm:$0xff] %vm654, %v649
      %v659 = vld [vmem:[#allocation2] sm:$0xff]
      %v660 = vld [vmem:[#allocation2 + $0x8] sm:$0xff]
      %v661 = vld [vmem:[#allocation2 + $0x10] sm:$0xff]
      %v662 = vld [vmem:[#allocation2 + $0x18] sm:$0xff]
      %v663 = vld [vmem:[%s9] sm:$0xf]
      %v664 = vld [vmem:[%s9 + $0x4] sm:$0xf]
      %v665 = vld [vmem:[%s9 + $0x8] sm:$0xf]
      %v669 = vunpack.c.l.b16 %v663
      %v670 = vunpack.c.l.b16 %v664
      %v671 = vunpack.c.l.b16 %v665
      %v672 = vpack.c.b16 %v670, %v669
      %v673 = vpack.c.b16 %v671, %v671
      %vm675 = vcmask 195584
      %v677 = vsel %vm675, %v659, 0
      %v680 = vsel %vm675, %v660, 0
      %v683 = vsel %vm675, %v661, 0
      %v686 = vsel %vm675, %v662, 0
      %vm688 = vcmask 1043456
      %v690 = vsel %vm688, %v673, 0
      %692 = vmatprep.subr.bf16.mxu0 0
      %693 = vmatpush1.bf16.msra.mxu0 %v672
      %694 = vmatprep.subr.bf16.mxu0 0
      %695 = vmatpush1.bf16.msra.mxu0 %v690
      %696 = vmatprep.subr.bf16.mxu0 0
      %697 = vmatpush1.bf16.msra.mxu0 0
      %698 = vmatprep.subr.bf16.mxu0 0
      %699 = vmatpush1.bf16.msra.mxu0 0
      %700 = vmatprep.subr.bf16.mxu0 0
      %701 = vmatpush1.bf16.msra.mxu0 0
      %702 = vmatprep.subr.bf16.mxu0 0
      %703 = vmatpush1.bf16.msra.mxu0 0
      %704 = vmatprep.subr.bf16.mxu0 0
      %705 = vmatpush1.bf16.msra.mxu0 0
      %706 = vmatprep.subr.bf16.mxu0 0
      %707 = vmatpush1.bf16.msra.mxu0 0
      %708 = vmatprep.subr.bf16.mxu0 0
      %709 = vmatpush1.bf16.msra.mxu0 0
      %710 = vmatprep.subr.bf16.mxu0 0
      %711 = vmatpush1.bf16.msra.mxu0 0
      %712 = vmatprep.subr.bf16.mxu0 0
      %713 = vmatpush1.bf16.msra.mxu0 0
      %714 = vmatprep.subr.bf16.mxu0 0
      %715 = vmatpush1.bf16.msra.mxu0 0
      %716 = vmatprep.subr.bf16.mxu0 0
      %717 = vmatpush1.bf16.msra.mxu0 0
      %718 = vmatprep.subr.bf16.mxu0 0
      %719 = vmatpush1.bf16.msra.mxu0 0
      %720 = vmatprep.subr.bf16.mxu0 0
      %721 = vmatpush1.bf16.msra.mxu0 0
      %722 = vmatprep.subr.bf16.mxu0 0
      %723 = vmatpush1.bf16.msra.mxu0 0
      %724 = vmatprep.mubr.bf16.mxu0 0
      %725 = vmatmul.mubr.bf16.gmra.mrb[0].mxu0 %v677
      %v726 = vpop.f32.mrb[0].mxu0
      %v727 = vadd.f32 0.0, %v726
      %v728 = vpop.f32.mrb[0].mxu0
      %v729 = vpop.f32.mrb[0].mxu0
      %v730 = vadd.f32 0.0, %v729
      %v731 = vpop.f32.mrb[0].mxu0
      %732 = vmatprep.mubr.bf16.mxu0 0
      %733 = vmatmul.mubr.bf16.gmra.mrb[0].mxu0 %v680
      %v734 = vpop.f32.mrb[0].mxu0
      %v735 = vadd.f32 0.0, %v734
      %v736 = vpop.f32.mrb[0].mxu0
      %v737 = vpop.f32.mrb[0].mxu0
      %v738 = vadd.f32 0.0, %v737
      %v739 = vpop.f32.mrb[0].mxu0
      %740 = vmatprep.mubr.bf16.mxu0 0
      %741 = vmatmul.mubr.bf16.gmra.mrb[0].mxu0 %v683
      %v742 = vpop.f32.mrb[0].mxu0
      %v743 = vadd.f32 0.0, %v742
      %v744 = vpop.f32.mrb[0].mxu0
      %v745 = vpop.f32.mrb[0].mxu0
      %v746 = vadd.f32 0.0, %v745
      %v747 = vpop.f32.mrb[0].mxu0
      %748 = vmatprep.mubr.bf16.mxu0 0
      %749 = vmatmul.mubr.bf16.gmra.mrb[0].mxu0 %v686
      %v750 = vpop.f32.mrb[0].mxu0
      %v751 = vadd.f32 0.0, %v750
      %v752 = vpop.f32.mrb[0].mxu0
      %v753 = vpop.f32.mrb[0].mxu0
      %v754 = vadd.f32 0.0, %v753
      %v755 = vpop.f32.mrb[0].mxu0
      %756 = vdwg.mxu0
      %v757 = vpack.c.bf16 %v730, %v727
      %v758 = vpack.c.bf16 %v738, %v735
      %v759 = vpack.c.bf16 %v746, %v743
      %v760 = vpack.c.bf16 %v754, %v751
      %v765 = vunpack.c.l.b16 %v757
      %v766 = vunpack.c.h.b16 %v757
      %v767 = vunpack.c.l.b16 %v758
      %v768 = vunpack.c.h.b16 %v758
      %v769 = vunpack.c.l.b16 %v759
      %v770 = vunpack.c.h.b16 %v759
      %v771 = vunpack.c.l.b16 %v760
      %v772 = vunpack.c.h.b16 %v760
      %v773 = vpack.c.b16 %v765, %v765
      %v774 = vpack.c.b16 %v766, %v766
      %v775 = vpack.c.b16 %v767, %v767
      %v776 = vpack.c.b16 %v768, %v768
      %v777 = vpack.c.b16 %v769, %v769
      %v778 = vpack.c.b16 %v770, %v770
      %v779 = vpack.c.b16 %v771, %v771
      %v780 = vpack.c.b16 %v772, %v772
      %vm789 = vcmask 60416
      %790 = vst.msk [vmem:[%s439] sm:$0xf] %vm789, %v773
      %791 = vst.msk [vmem:[%s439 + $0x4] sm:$0xf] %vm789, %v774
      %792 = vst.msk [vmem:[%s439 + $0x8] sm:$0xf] %vm789, %v775
      %793 = vst.msk [vmem:[%s439 + $0xc] sm:$0xf] %vm789, %v776
      %794 = vst.msk [vmem:[%s439 + $0x10] sm:$0xf] %vm789, %v777
      %795 = vst.msk [vmem:[%s439 + $0x14] sm:$0xf] %vm789, %v778
      %796 = vst.msk [vmem:[%s439 + $0x18] sm:$0xf] %vm789, %v779
      %797 = vst.msk [vmem:[%s439 + $0x1c] sm:$0xf] %vm789, %v780
      %v798 = vsel %vm496, %v727, 0.0
      %v799 = vsel %vm496, %v730, 0.0
      %v800 = vadd.f32 %v798, %v799
      %v801 = vsel %vm496, %v735, 0.0
      %v802 = vadd.f32 %v800, %v801
      %v803 = vsel %vm496, %v738, 0.0
      %v804 = vadd.f32 %v802, %v803
      %v805 = vsel %vm496, %v743, 0.0
      %v806 = vadd.f32 %v804, %v805
      %v807 = vsel %vm496, %v746, 0.0
      %v808 = vadd.f32 %v806, %v807
      %v809 = vsel %vm496, %v751, 0.0
      %v810 = vadd.f32 %v808, %v809
      %v811 = vsel %vm496, %v754, 0.0
      %v812 = vadd.f32 %v810, %v811
      %v813 = vrot.slane %v812, 4
      %v814 = vadd.f32 %v812, %v813
      %v815 = vrot.slane %v814, 2
      %v816 = vadd.f32 %v814, %v815
      %v817 = vrot.slane %v816, 1
      %v818 = vadd.f32 %v816, %v817
      %v819 = vmul.f32 %v727, %v727
      %v820 = vmul.f32 %v730, %v730
      %v821 = vmul.f32 %v735, %v735
      %v822 = vmul.f32 %v738, %v738
      %v823 = vmul.f32 %v743, %v743
      %v824 = vmul.f32 %v746, %v746
      %v825 = vmul.f32 %v751, %v751
      %v826 = vmul.f32 %v754, %v754
      %v827 = vsel %vm496, %v819, 0.0
      %v828 = vsel %vm496, %v820, 0.0
      %v829 = vadd.f32 %v827, %v828
      %v830 = vsel %vm496, %v821, 0.0
      %v831 = vadd.f32 %v829, %v830
      %v832 = vsel %vm496, %v822, 0.0
      %v833 = vadd.f32 %v831, %v832
      %v834 = vsel %vm496, %v823, 0.0
      %v835 = vadd.f32 %v833, %v834
      %v836 = vsel %vm496, %v824, 0.0
      %v837 = vadd.f32 %v835, %v836
      %v838 = vsel %vm496, %v825, 0.0
      %v839 = vadd.f32 %v837, %v838
      %v840 = vsel %vm496, %v826, 0.0
      %v841 = vadd.f32 %v839, %v840
      %v842 = vrot.slane %v841, 4
      %v843 = vadd.f32 %v841, %v842
      %v844 = vrot.slane %v843, 2
      %v845 = vadd.f32 %v843, %v844
      %v846 = vrot.slane %v845, 1
      %v847 = vadd.f32 %v845, %v846
      %vm848 = vcmask 1040384
      %v849 = vsel %vm848, %v818, %v847
      %vm850 = vcmask 58368
      %851 = vst.msk [vmem:[%s444] sm:$0x3] %vm850, %v849
      %s852 = smul.u32 8, %s23
      %p853 = scmp.lt.s32.totalorder %s852, 15
      %s854 = scalar_select %p853, %s852, 15
      %s855 = smul.addr %s854, 4
      %s856 = scalar_lea.vmem %s10, %s855
      %p857 = scmp.lt.s32.totalorder %s23, 1
      %s858 = scalar_select %p857, %s23, 1
      %s859 = smul.addr %s858, 2
      %s860 = scalar_lea.vmem %s11, %s859
      // Predicated region
      $region61: #{clique_block_forward.16} parent=59 // pred_check
        %p861 = pneg %p266
      $region62: #{clique_block_forward.16} parent=59 // pred_check_branch
        %863 = sbr.rel (%p861) target = $region64
      $region63: #{clique_block_forward.16} parent=59 // pred_region
        %s864 = smul.u32 8, %s23
      $region64: #{clique_block_forward.16} parent=59 // pred_fallthru
        _
      // Predicated region
      $region65: #{clique_block_forward.16} parent=59 // pred_check
        %p865 = pneg %p292
      $region66: #{clique_block_forward.16} parent=59 // pred_check_branch
        %867 = sbr.rel (%p865) target = $region68
      $region67: #{clique_block_forward.16} parent=59 // pred_region
        _
      $region68: #{clique_block_forward.16} parent=59 // pred_fallthru
        _
    $region60: #{clique_block_forward.16} parent=5 // pred_fallthru
      _
    %p868 = scmp.le.s32.totalorder 2, %s18
    // Predicated region
    $region69: #{clique_block_forward.16} parent=5 // pred_check
      %p869 = pneg %p868
    $region70: #{clique_block_forward.16} parent=5 // pred_check_branch
      %871 = sbr.rel (%p869) target = $region72
    $region71: #{clique_block_forward.16} parent=5 // pred_region
      %s872 = ssub.s32 %s18, 2
      // Predicated region
      $region73: #{clique_block_forward.16} parent=71 // pred_check
        %p873 = pneg %p272
      $region74: #{clique_block_forward.16} parent=71 // pred_check_branch
        %875 = sbr.rel (%p873) target = $region76
      $region75: #{clique_block_forward.16} parent=71 // pred_region
        %s876 = smul.u32 8, %s24
        %p877 = scmp.lt.s32.totalorder %s876, 15
        %s878 = scalar_select %p877, %s876, 15
        %s879 = smul.addr %s878, 4
        %s880 = scalar_lea.vmem %s10, %s879
      $region76: #{clique_block_forward.16} parent=71 // pred_fallthru
        _
      // Predicated region
      $region77: #{clique_block_forward.16} parent=71 // pred_check
        %p881 = pneg %p298
      $region78: #{clique_block_forward.16} parent=71 // pred_check_branch
        %883 = sbr.rel (%p881) target = $region80
      $region79: #{clique_block_forward.16} parent=71 // pred_region
        %p884 = scmp.lt.s32.totalorder %s24, 1
        %s885 = scalar_select %p884, %s24, 1
        %s886 = smul.addr %s885, 2
        %s887 = scalar_lea.vmem %s11, %s886
      $region80: #{clique_block_forward.16} parent=71 // pred_fallthru
        _
    $region72: #{clique_block_forward.16} parent=5 // pred_fallthru
      _
  $region6: #{clique_block_forward.16} parent=0 // loop_footer
    %s22 = sadd.s32 1, %s18
  $region7: #{clique_block_forward.16} parent=0 // loop_footer_branch
    %17 = sbr.rel target = $region3
  $region8: #{clique_block_forward.16} parent=0 // loop_exit
    _

// kernel: clique_block_forward.13
$region0: #{clique_block_forward.13}
  #allocation0 [shape = 'u32[]', space=smem, size = 0x4, offset = 0x4, fixed_abs, tag = 'smem constant byte address 0x4 - core index']
  #allocation1 [shape = 'u32[144,128]{1,0:T(1,128)}', space=vmem, size = 0x12000, scoped, tag = 'internal scratch']
  #allocation2 [shape = 'bf16[12,12,8]{2,1,0:T(8,128)(2,1)}', space=vmem, size = 0xc000, scoped, tag = 'scratch operand']
  %s0 = inlined_call_operand.vmem [shape: bf16[2,8,8,8], index: 0, kind: input, shape index: {}]
  %s1 = inlined_call_operand.vmem [shape: f32[1,8], index: 1, kind: input, shape index: {}]
  %s2 = inlined_call_operand.vmem [shape: f32[1,8], index: 2, kind: input, shape index: {}]
  %s3 = inlined_call_operand.vmem [shape: bf16[9,8,8], index: 3, kind: input, shape index: {}]
  %s4 = inlined_call_operand.vmem [shape: bf16[2,8,8,8], index: 4, kind: output, shape index: {0}]
  %s5 = inlined_call_operand.vmem [shape: f32[2,2,8], index: 5, kind: output, shape index: {1}]
  %6 = xla_tuple %s4, %s5
  %s7 = sld [smem:[#allocation0]]
  $region57: #{clique_block_forward.13} parent=0
    _
  %s9 = ssub.s32 1, %s7
  %s10 = scalar_select 0, %s9, %s7
  loop: start=0, step=1, limit=4
  $region2: #{clique_block_forward.13} parent=0 // loop_pre_header
    _
  $region3: #{clique_block_forward.13} parent=0 // loop_header
    %s12 = sphi 0, %s16
    %p13 = scmp.ge.s32.totalorder %s12, 4
    %s22 = sphi 0, %s24
    %s25 = sphi 0, %s22
    %s26 = sphi 0, %s25
    %s42 = sphi 0, %s26
    %s46 = sphi 0, %s46
    %s48 = sphi 0, %s46
    %s49 = sphi 0, %s48
    %s63 = sphi 0, %s49
    %s67 = sphi 0, %s67
    %s69 = sphi 0, %s67
    %s70 = sphi 0, %s69
    %s84 = sphi 0, %s70
    %s88 = sphi 0, %s88
    %s90 = sphi 0, %s88
    %s91 = sphi 0, %s90
    %s105 = sphi 0, %s91
    %s111 = sphi 0, %s113
    %s114 = sphi 0, %s111
    %s115 = sphi 0, %s114
    %s131 = sphi 0, %s115
    %s137 = sphi 0, %s139
    %s140 = sphi 0, %s137
    %s141 = sphi 0, %s140
    %s157 = sphi 0, %s141
  $region4: #{clique_block_forward.13} parent=0 // loop_header_branch
    %15 = sbr.rel (%p13) target = $region8
  $region5: #{clique_block_forward.13} parent=0 // loop_body
    %s17 = ssub.s32 %s12, 1
    %s18 = ssub.s32 %s12, 2
    %s19 = sadd.s32 %s12, 1
    %s20 = ssub.s32 %s12, %s19
    %p21 = scmp.eq.s32.totalorder %s20, 0
    %s23 = sadd.s32 %s22, 1
    %s24 = scalar_select %p21, %s22, %s23
    %p27 = pneg %p21
    %p28 = scmp.eq.s32.totalorder %s12, 1
    %p29 = por %p27, %p28
    %p30 = scmp.ne.s32.totalorder %s22, %s25
    %p31 = scmp.eq.s32.totalorder %s12, 0
    %p32 = por %p30, %p31
    %p33 = scmp.ne.s32.totalorder %s22, %s25
    %p34 = scmp.eq.s32.totalorder %s17, 1
    %p35 = por %p33, %p34
    %p36 = scmp.ne.s32.totalorder %s25, %s26
    %p37 = scmp.eq.s32.totalorder %s17, 0
    %p38 = por %p36, %p37
    %p39 = scmp.ne.s32.totalorder %s25, %s26
    %p40 = scmp.eq.s32.totalorder %s18, 1
    %p41 = por %p39, %p40
    %p43 = scmp.ne.s32.totalorder %s26, %s42
    %p44 = scmp.eq.s32.totalorder %s18, 0
    %p45 = por %p43, %p44
    %s47 = sadd.s32 %s46, 1
    %p50 = scmp.eq.s32.totalorder %s12, 1
    %p51 = scmp.ne.s32.totalorder %s46, %s48
    %p52 = scmp.eq.s32.totalorder %s12, 0
    %p53 = por %p51, %p52
    %p54 = scmp.ne.s32.totalorder %s46, %s48
    %p55 = scmp.eq.s32.totalorder %s17, 1
    %p56 = por %p54, %p55
    %p57 = scmp.ne.s32.totalorder %s48, %s49
    %p58 = scmp.eq.s32.totalorder %s17, 0
    %p59 = por %p57, %p58
    %p60 = scmp.ne.s32.totalorder %s48, %s49
    %p61 = scmp.eq.s32.totalorder %s18, 1
    %p62 = por %p60, %p61
    %p64 = scmp.ne.s32.totalorder %s49, %s63
    %p65 = scmp.eq.s32.totalorder %s18, 0
    %p66 = por %p64, %p65
    %s68 = sadd.s32 %s67, 1
    %p71 = scmp.eq.s32.totalorder %s12, 1
    %p72 = scmp.ne.s32.totalorder %s67, %s69
    %p73 = scmp.eq.s32.totalorder %s12, 0
    %p74 = por %p72, %p73
    %p75 = scmp.ne.s32.totalorder %s67, %s69
    %p76 = scmp.eq.s32.totalorder %s17, 1
    %p77 = por %p75, %p76
    %p78 = scmp.ne.s32.totalorder %s69, %s70
    %p79 = scmp.eq.s32.totalorder %s17, 0
    %p80 = por %p78, %p79
    %p81 = scmp.ne.s32.totalorder %s69, %s70
    %p82 = scmp.eq.s32.totalorder %s18, 1
    %p83 = por %p81, %p82
    %p85 = scmp.ne.s32.totalorder %s70, %s84
    %p86 = scmp.eq.s32.totalorder %s18, 0
    %p87 = por %p85, %p86
    %s89 = sadd.s32 %s88, 1
    %p92 = scmp.eq.s32.totalorder %s12, 1
    %p93 = scmp.ne.s32.totalorder %s88, %s90
    %p94 = scmp.eq.s32.totalorder %s12, 0
    %p95 = por %p93, %p94
    %p96 = scmp.ne.s32.totalorder %s88, %s90
    %p97 = scmp.eq.s32.totalorder %s17, 1
    %p98 = por %p96, %p97
    %p99 = scmp.ne.s32.totalorder %s90, %s91
    %p100 = scmp.eq.s32.totalorder %s17, 0
    %p101 = por %p99, %p100
    %p102 = scmp.ne.s32.totalorder %s90, %s91
    %p103 = scmp.eq.s32.totalorder %s18, 1
    %p104 = por %p102, %p103
    %p106 = scmp.ne.s32.totalorder %s91, %s105
    %p107 = scmp.eq.s32.totalorder %s18, 0
    %p108 = por %p106, %p107
    %s109 = ssub.s32 %s12, %s19
    %p110 = scmp.eq.s32.totalorder %s109, 0
    %s112 = sadd.s32 %s111, 1
    %s113 = scalar_select %p110, %s111, %s112
    %p116 = pneg %p110
    %p117 = scmp.eq.s32.totalorder %s12, 1
    %p118 = por %p116, %p117
    %p119 = scmp.ne.s32.totalorder %s111, %s114
    %p120 = scmp.eq.s32.totalorder %s12, 0
    %p121 = por %p119, %p120
    %p122 = scmp.ne.s32.totalorder %s111, %s114
    %p123 = scmp.eq.s32.totalorder %s17, 1
    %p124 = por %p122, %p123
    %p125 = scmp.ne.s32.totalorder %s114, %s115
    %p126 = scmp.eq.s32.totalorder %s17, 0
    %p127 = por %p125, %p126
    %p128 = scmp.ne.s32.totalorder %s114, %s115
    %p129 = scmp.eq.s32.totalorder %s18, 1
    %p130 = por %p128, %p129
    %p132 = scmp.ne.s32.totalorder %s115, %s131
    %p133 = scmp.eq.s32.totalorder %s18, 0
    %p134 = por %p132, %p133
    %s135 = ssub.s32 %s12, %s19
    %p136 = scmp.eq.s32.totalorder %s135, 0
    %s138 = sadd.s32 %s137, 1
    %s139 = scalar_select %p136, %s137, %s138
    %p142 = pneg %p136
    %p143 = scmp.eq.s32.totalorder %s12, 1
    %p144 = por %p142, %p143
    %p145 = scmp.ne.s32.totalorder %s137, %s140
    %p146 = scmp.eq.s32.totalorder %s12, 0
    %p147 = por %p145, %p146
    %p148 = scmp.ne.s32.totalorder %s137, %s140
    %p149 = scmp.eq.s32.totalorder %s17, 1
    %p150 = por %p148, %p149
    %p151 = scmp.ne.s32.totalorder %s140, %s141
    %p152 = scmp.eq.s32.totalorder %s17, 0
    %p153 = por %p151, %p152
    %p154 = scmp.ne.s32.totalorder %s140, %s141
    %p155 = scmp.eq.s32.totalorder %s18, 1
    %p156 = por %p154, %p155
    %p158 = scmp.ne.s32.totalorder %s141, %s157
    %p159 = scmp.eq.s32.totalorder %s18, 0
    %p160 = por %p158, %p159
    %p161 = scmp.le.s32.totalorder 1, %s12
    %p162 = scmp.lt.s32.totalorder %s12, 3
    %p163 = pnand %p161, %p162
    %p164 = pneg %p163
    // Predicated region
    $region9: #{clique_block_forward.13} parent=5 // pred_check
      _
    $region10: #{clique_block_forward.13} parent=5 // pred_check_branch
      %166 = sbr.rel (%p163) target = $region12
    $region11: #{clique_block_forward.13} parent=5 // pred_region
      %s167 = ssub.s32 %s12, 1
      // Predicated region
      $region13: #{clique_block_forward.13} parent=11 // pred_check
        %p168 = pneg %p59
      $region14: #{clique_block_forward.13} parent=11 // pred_check_branch
        %170 = sbr.rel (%p168) target = $region16
      $region15: #{clique_block_forward.13} parent=11 // pred_region
        _
      $region16: #{clique_block_forward.13} parent=11 // pred_fallthru
        _
      // Predicated region
      $region17: #{clique_block_forward.13} parent=11 // pred_check
        %p171 = pneg %p80
      $region18: #{clique_block_forward.13} parent=11 // pred_check_branch
        %173 = sbr.rel (%p171) target = $region20
      $region19: #{clique_block_forward.13} parent=11 // pred_region
        _
      $region20: #{clique_block_forward.13} parent=11 // pred_fallthru
        _
      // Predicated region
      $region21: #{clique_block_forward.13} parent=11 // pred_check
        %p174 = pneg %p101
      $region22: #{clique_block_forward.13} parent=11 // pred_check_branch
        %176 = sbr.rel (%p174) target = $region24
      $region23: #{clique_block_forward.13} parent=11 // pred_region
        _
      $region24: #{clique_block_forward.13} parent=11 // pred_fallthru
        _
    $region12: #{clique_block_forward.13} parent=5 // pred_fallthru
      _
    %p177 = scmp.lt.s32.totalorder %s12, 2
    // Predicated region
    $region25: #{clique_block_forward.13} parent=5 // pred_check
      %p178 = pneg %p177
    $region26: #{clique_block_forward.13} parent=5 // pred_check_branch
      %180 = sbr.rel (%p178) target = $region28
    $region27: #{clique_block_forward.13} parent=5 // pred_region
      // Predicated region
      $region29: #{clique_block_forward.13} parent=27 // pred_check
        %p181 = pneg %p32
      $region30: #{clique_block_forward.13} parent=27 // pred_check_branch
        %183 = sbr.rel (%p181) target = $region32
      $region31: #{clique_block_forward.13} parent=27 // pred_region
        %p184 = scmp.lt.s32.totalorder %s12, 1
        %s185 = scalar_select %p184, %s12, 1
        %s186 = smul.addr %s185, 8
        %s187 = smul.addr %s186, 4
        %s188 = scalar_lea.vmem %s0, %s187
      $region32: #{clique_block_forward.13} parent=27 // pred_fallthru
        _
    $region28: #{clique_block_forward.13} parent=5 // pred_fallthru
      _
    %p189 = scmp.le.s32.totalorder 1, %s12
    %p190 = scmp.lt.s32.totalorder %s12, 3
    %p191 = pnand %p189, %p190
    %p192 = pneg %p191
    // Predicated region
    $region33: #{clique_block_forward.13} parent=5 // pred_check
      _
    $region34: #{clique_block_forward.13} parent=5 // pred_check_branch
      %194 = sbr.rel (%p191) target = $region36
    $region35: #{clique_block_forward.13} parent=5 // pred_region
      %s195 = ssub.s32 %s12, 1
      %p196 = scmp.lt.s32.totalorder %s17, 1
      %s197 = scalar_select %p196, %s17, 1
      %s198 = smul.addr %s197, 8
      %s199 = smul.addr %s198, 4
      %s200 = scalar_lea.vmem %s0, %s199
      %p201 = pneg %p38
      %p202 = pneg %p35
      %p203 = pneg %p59
      %p204 = pneg %p56
      %p205 = pneg %p80
      %p206 = pneg %p77
      %p207 = pneg %p101
      %p208 = pneg %p98
      %p209 = pneg %p127
      %p210 = pneg %p124
      %p211 = scmp.lt.s32.totalorder %s17, 1
      %s212 = scalar_select %p211, %s17, 1
      %s213 = smul.addr %s212, 8
      %s214 = smul.addr %s213, 4
      %s215 = scalar_lea.vmem %s4, %s214
      %p216 = pneg %p153
      %p217 = pneg %p150
      %p218 = scmp.lt.s32.totalorder %s17, 1
      %s219 = scalar_select %p218, %s17, 1
      %s220 = smul.addr %s219, 2
      %s221 = scalar_lea.vmem %s5, %s220
      %p222 = scmp.lt.s32.totalorder %s17, 1
      %s223 = scalar_select %p222, %s17, 1
      %s224 = smul.addr %s223, 8
      %s225 = smul.addr %s224, 4
      %s226 = scalar_lea.vmem %s0, %s225
      %p227 = scmp.lt.s32.totalorder %s17, 1
      %s228 = scalar_select %p227, %s17, 1
      %s229 = smul.addr %s228, 8
      %s230 = smul.addr %s229, 4
      %s231 = scalar_lea.vmem %s4, %s230
      %p232 = scmp.lt.s32.totalorder %s17, 1
      %s233 = scalar_select %p232, %s17, 1
      %s234 = smul.addr %s233, 2
      %s235 = scalar_lea.vmem %s5, %s234
      %v237 = vld [vmem:[%s1] sm:$0x1]
      %v238 = vld [vmem:[%s2] sm:$0x1]
      %v239 = vld [vmem:[%s226] sm:$0xf]
      %v240 = vld [vmem:[%s226 + $0x4] sm:$0xf]
      %v241 = vld [vmem:[%s226 + $0x8] sm:$0xf]
      %v242 = vld [vmem:[%s226 + $0xc] sm:$0xf]
      %v243 = vld [vmem:[%s226 + $0x10] sm:$0xf]
      %v244 = vld [vmem:[%s226 + $0x14] sm:$0xf]
      %v245 = vld [vmem:[%s226 + $0x18] sm:$0xf]
      %v246 = vld [vmem:[%s226 + $0x1c] sm:$0xf]
      %v247 = vunpack.c.l.bf16 %v239
      %v248 = vunpack.c.l.bf16 %v240
      %v249 = vunpack.c.l.bf16 %v241
      %v250 = vunpack.c.l.bf16 %v242
      %v251 = vunpack.c.l.bf16 %v243
      %v252 = vunpack.c.l.bf16 %v244
      %v253 = vunpack.c.l.bf16 %v245
      %v254 = vunpack.c.l.bf16 %v246
      %v256 = vlaneseq
      %v257 = vshrl.u32 %v256, 7
      %v258 = vsub.s32 0, %v257
      %v259 = vrot.slane %v237, %v258
      %v261 = vmul.f32 %v247, %v259
      %v262 = vmul.f32 %v248, %v259
      %v263 = vmul.f32 %v249, %v259
      %v264 = vmul.f32 %v250, %v259
      %v265 = vmul.f32 %v251, %v259
      %v266 = vmul.f32 %v252, %v259
      %v267 = vmul.f32 %v253, %v259
      %v268 = vmul.f32 %v254, %v259
      %v270 = vlaneseq
      %v271 = vshrl.u32 %v270, 7
      %v272 = vsub.s32 0, %v271
      %v273 = vrot.slane %v238, %v272
      %v275 = vadd.f32 %v261, %v273
      %v276 = vadd.f32 %v262, %v273
      %v277 = vadd.f32 %v263, %v273
      %v278 = vadd.f32 %v264, %v273
      %v279 = vadd.f32 %v265, %v273
      %v280 = vadd.f32 %v266, %v273
      %v281 = vadd.f32 %v267, %v273
      %v282 = vadd.f32 %v268, %v273
      %v283 = vmax.f32 %v275, 0.0
      %v284 = vmax.f32 %v276, 0.0
      %v285 = vmax.f32 %v277, 0.0
      %v286 = vmax.f32 %v278, 0.0
      %v287 = vmax.f32 %v279, 0.0
      %v288 = vmax.f32 %v280, 0.0
      %v289 = vmax.f32 %v281, 0.0
      %v290 = vmax.f32 %v282, 0.0
      %vm291 = vcmask 60416
      %292 = vst.msk [vmem:[#allocation2] sm:$0xf] %vm291, 0
      %vm293 = vcmask 58368
      %294 = vst.msk [vmem:[#allocation2 + $0x4] sm:$0x3] %vm293, 0
      %295 = vst.msk [vmem:[#allocation2 + $0x8] sm:$0xf] %vm291, 0
      %296 = vst.msk [vmem:[#allocation2 + $0xc] sm:$0x3] %vm293, 0
      %s297 = scalar_lea.vmem [#allocation2], 80
      %298 = vst.msk [vmem:[%s297] sm:$0xf] %vm291, 0
      %299 = vst.msk [vmem:[%s297 + $0x4] sm:$0x3] %vm293, 0
      %300 = vst.msk [vmem:[%s297 + $0x8] sm:$0xf] %vm291, 0
      %301 = vst.msk [vmem:[%s297 + $0xc] sm:$0x3] %vm293, 0
      %s302 = scalar_lea.vmem [#allocation2], 16
      %vm303 = vcmask 57344
      %304 = vst.msk [vmem:[%s302] sm:$0x1] %vm303, 0
      %305 = vst.msk [vmem:[%s302 + $0x8] sm:$0x1] %vm303, 0
      %306 = vst.msk [vmem:[%s302 + $0x10] sm:$0x1] %vm303, 0
      %307 = vst.msk [vmem:[%s302 + $0x18] sm:$0x1] %vm303, 0
      %308 = vst.msk [vmem:[%s302 + $0x20] sm:$0x1] %vm303, 0
      %309 = vst.msk [vmem:[%s302 + $0x28] sm:$0x1] %vm303, 0
      %310 = vst.msk [vmem:[%s302 + $0x30] sm:$0x1] %vm303, 0
      %311 = vst.msk [vmem:[%s302 + $0x38] sm:$0x1] %vm303, 0
      %vm312 = vcmask 58369
      %313 = vst.msk [vmem:[%s302 + $0x4] sm:$0x2] %vm312, 0
      %314 = vst.msk [vmem:[%s302 + $0xc] sm:$0x2] %vm312, 0
      %315 = vst.msk [vmem:[%s302 + $0x14] sm:$0x2] %vm312, 0
      %316 = vst.msk [vmem:[%s302 + $0x1c] sm:$0x2] %vm312, 0
      %317 = vst.msk [vmem:[%s302 + $0x24] sm:$0x2] %vm312, 0
      %318 = vst.msk [vmem:[%s302 + $0x2c] sm:$0x2] %vm312, 0
      %319 = vst.msk [vmem:[%s302 + $0x34] sm:$0x2] %vm312, 0
      %320 = vst.msk [vmem:[%s302 + $0x3c] sm:$0x2] %vm312, 0
      %v321 = vpack.c.bf16 %v283, %v283
      %v322 = vpack.c.bf16 %v284, %v284
      %v323 = vpack.c.bf16 %v285, %v285
      %v324 = vpack.c.bf16 %v286, %v286
      %v325 = vpack.c.bf16 %v287, %v287
      %v326 = vpack.c.bf16 %v288, %v288
      %v327 = vpack.c.bf16 %v289, %v289
      %v328 = vpack.c.bf16 %v290, %v290
      %v337 = vunpack.c.l.b16 %v321
      %v338 = vunpack.c.l.b16 %v322
      %v339 = vunpack.c.l.b16 %v323
      %v340 = vunpack.c.l.b16 %v324
      %v341 = vunpack.c.l.b16 %v325
      %v342 = vunpack.c.l.b16 %v326
      %v343 = vunpack.c.l.b16 %v327
      %v344 = vunpack.c.l.b16 %v328
      %v345 = vpack.c.b16 %v337, %v337
      %v346 = vpack.c.b16 %v338, %v338
      %v347 = vpack.c.b16 %v339, %v339
      %v348 = vpack.c.b16 %v340, %v340
      %v349 = vpack.c.b16 %v341, %v341
      %v350 = vpack.c.b16 %v342, %v342
      %v351 = vpack.c.b16 %v343, %v343
      %v352 = vpack.c.b16 %v344, %v344
      %v353 = vrot.slane %v345, 7
      %v354 = vrot.slane %v353, 4
      %v355 = vrot.slane %v346, 7
      %v356 = vrot.slane %v355, 4
      %v357 = vrot.slane %v347, 7
      %v358 = vrot.slane %v357, 4
      %v359 = vrot.slane %v348, 7
      %v360 = vrot.slane %v359, 4
      %v361 = vrot.slane %v349, 7
      %v362 = vrot.slane %v361, 4
      %v363 = vrot.slane %v350, 7
      %v364 = vrot.slane %v363, 4
      %v365 = vrot.slane %v351, 7
      %v366 = vrot.slane %v365, 4
      %v367 = vrot.slane %v352, 7
      %v368 = vrot.slane %v367, 4
      %vm385 = vcmask 60417
      %386 = vst.msk [vmem:[%s302] sm:$0xe] %vm385, %v353
      %387 = vst.msk [vmem:[%s302 + $0x4] sm:$0x1] %vm303, %v354
      %388 = vst.msk [vmem:[%s302 + $0x8] sm:$0xe] %vm385, %v355
      %389 = vst.msk [vmem:[%s302 + $0xc] sm:$0x1] %vm303, %v356
      %390 = vst.msk [vmem:[%s302 + $0x10] sm:$0xe] %vm385, %v357
      %391 = vst.msk [vmem:[%s302 + $0x14] sm:$0x1] %vm303, %v358
      %392 = vst.msk [vmem:[%s302 + $0x18] sm:$0xe] %vm385, %v359
      %393 = vst.msk [vmem:[%s302 + $0x1c] sm:$0x1] %vm303, %v360
      %394 = vst.msk [vmem:[%s302 + $0x20] sm:$0xe] %vm385, %v361
      %395 = vst.msk [vmem:[%s302 + $0x24] sm:$0x1] %vm303, %v362
      %396 = vst.msk [vmem:[%s302 + $0x28] sm:$0xe] %vm385, %v363
      %397 = vst.msk [vmem:[%s302 + $0x2c] sm:$0x1] %vm303, %v364
      %398 = vst.msk [vmem:[%s302 + $0x30] sm:$0xe] %vm385, %v365
      %399 = vst.msk [vmem:[%s302 + $0x34] sm:$0x1] %vm303, %v366
      %400 = vst.msk [vmem:[%s302 + $0x38] sm:$0xe] %vm385, %v367
      %401 = vst.msk [vmem:[%s302 + $0x3c] sm:$0x1] %vm303, %v368
      %v402 = vld [vmem:[#allocation2] sm:$0xf]
      %v403 = vld [vmem:[#allocation2 + $0x8] sm:$0xf]
      %v404 = vld [vmem:[#allocation2 + $0x10] sm:$0xf]
      %v405 = vld [vmem:[#allocation2 + $0x18] sm:$0xf]
      %v406 = vld [vmem:[#allocation2 + $0x20] sm:$0xf]
      %v407 = vld [vmem:[#allocation2 + $0x28] sm:$0xf]
      %v408 = vld [vmem:[#allocation2 + $0x30] sm:$0xf]
      %v409 = vld [vmem:[#allocation2 + $0x38] sm:$0xf]
      %v410 = vld [vmem:[%s3] sm:$0xf]
      %v411 = vld [vmem:[#allocation2] sm:$0xe]
      %v412 = vld [vmem:[#allocation2 + $0x4] sm:$0x1]
      %v413 = vld [vmem:[#allocation2 + $0x8] sm:$0xe]
      %v414 = vld [vmem:[#allocation2 + $0xc] sm:$0x1]
      %v415 = vld [vmem:[#allocation2 + $0x10] sm:$0xe]
      %v416 = vld [vmem:[#allocation2 + $0x14] sm:$0x1]
      %v417 = vld [vmem:[#allocation2 + $0x18] sm:$0xe]
      %v418 = vld [vmem:[#allocation2 + $0x1c] sm:$0x1]
      %v419 = vld [vmem:[#allocation2 + $0x20] sm:$0xe]
      %v420 = vld [vmem:[#allocation2 + $0x24] sm:$0x1]
      %v421 = vld [vmem:[#allocation2 + $0x28] sm:$0xe]
      %v422 = vld [vmem:[#allocation2 + $0x2c] sm:$0x1]
      %v423 = vld [vmem:[#allocation2 + $0x30] sm:$0xe]
      %v424 = vld [vmem:[#allocation2 + $0x34] sm:$0x1]
      %v425 = vld [vmem:[#allocation2 + $0x38] sm:$0xe]
      %v426 = vld [vmem:[#allocation2 + $0x3c] sm:$0x1]
      %vm443 = vcmask 1042432
      %vm444 = vcmask 1046532
      %vm445 = vmor %vm443, %vm444
      %v446 = vrot.slane %v411, 5
      %v447 = vrot.slane %v446, 4
      %v448 = vrot.slane %v412, 5
      %v449 = vsel %vm445, %v447, %v448
      %v450 = vrot.slane %v413, 5
      %v451 = vrot.slane %v450, 4
      %v452 = vrot.slane %v414, 5
      %v453 = vsel %vm445, %v451, %v452
      %v454 = vrot.slane %v415, 5
      %v455 = vrot.slane %v454, 4
      %v456 = vrot.slane %v416, 5
      %v457 = vsel %vm445, %v455, %v456
      %v458 = vrot.slane %v417, 5
      %v459 = vrot.slane %v458, 4
      %v460 = vrot.slane %v418, 5
      %v461 = vsel %vm445, %v459, %v460
      %v462 = vrot.slane %v419, 5
      %v463 = vrot.slane %v462, 4
      %v464 = vrot.slane %v420, 5
      %v465 = vsel %vm445, %v463, %v464
      %v466 = vrot.slane %v421, 5
      %v467 = vrot.slane %v466, 4
      %v468 = vrot.slane %v422, 5
      %v469 = vsel %vm445, %v467, %v468
      %v470 = vrot.slane %v423, 5
      %v471 = vrot.slane %v470, 4
      %v472 = vrot.slane %v424, 5
      %v473 = vsel %vm445, %v471, %v472
      %v474 = vrot.slane %v425, 5
      %v475 = vrot.slane %v474, 4
      %v476 = vrot.slane %v426, 5
      %v477 = vsel %vm445, %v475, %v476
      %s478 = scalar_lea.vmem %s3, 4
      %v479 = vld [vmem:[%s478] sm:$0xf]
      %v480 = vunpack.c.l.b16 %v449
      %v481 = vunpack.c.l.b16 %v453
      %v482 = vunpack.c.l.b16 %v457
      %v483 = vunpack.c.l.b16 %v461
      %v484 = vunpack.c.l.b16 %v465
      %v485 = vunpack.c.l.b16 %v469
      %v486 = vunpack.c.l.b16 %v473
      %v487 = vunpack.c.l.b16 %v477
      %v488 = vpack.c.b16 %v481, %v480
      %v489 = vpack.c.b16 %v483, %v482
      %v490 = vpack.c.b16 %v485, %v484
      %v491 = vpack.c.b16 %v487, %v486
      %vm492 = vcmask 64512
      %v494 = vsel %vm492, %v488, 0
      %v497 = vsel %vm492, %v489, 0
      %v500 = vsel %vm492, %v490, 0
      %v503 = vsel %vm492, %v491, 0
      %vm505 = vcmask 1043456
      %v507 = vsel %vm505, %v479, 0
      %509 = vmatprep.subr.bf16.mxu0 0
      %510 = vmatpush1.bf16.msra.mxu0 %v507
      %511 = vmatprep.subr.bf16.mxu0 0
      %512 = vmatpush1.bf16.msra.mxu0 0
      %513 = vmatprep.subr.bf16.mxu0 0
      %514 = vmatpush1.bf16.msra.mxu0 0
      %515 = vmatprep.subr.bf16.mxu0 0
      %516 = vmatpush1.bf16.msra.mxu0 0
      %517 = vmatprep.subr.bf16.mxu0 0
      %518 = vmatpush1.bf16.msra.mxu0 0
      %519 = vmatprep.subr.bf16.mxu0 0
      %520 = vmatpush1.bf16.msra.mxu0 0
      %521 = vmatprep.subr.bf16.mxu0 0
      %522 = vmatpush1.bf16.msra.mxu0 0
      %523 = vmatprep.subr.bf16.mxu0 0
      %524 = vmatpush1.bf16.msra.mxu0 0
      %525 = vmatprep.subr.bf16.mxu0 0
      %526 = vmatpush1.bf16.msra.mxu0 0
      %527 = vmatprep.subr.bf16.mxu0 0
      %528 = vmatpush1.bf16.msra.mxu0 0
      %529 = vmatprep.subr.bf16.mxu0 0
      %530 = vmatpush1.bf16.msra.mxu0 0
      %531 = vmatprep.subr.bf16.mxu0 0
      %532 = vmatpush1.bf16.msra.mxu0 0
      %533 = vmatprep.subr.bf16.mxu0 0
      %534 = vmatpush1.bf16.msra.mxu0 0
      %535 = vmatprep.subr.bf16.mxu0 0
      %536 = vmatpush1.bf16.msra.mxu0 0
      %537 = vmatprep.subr.bf16.mxu0 0
      %538 = vmatpush1.bf16.msra.mxu0 0
      %539 = vmatprep.subr.bf16.mxu0 0
      %540 = vmatpush1.bf16.msra.mxu0 0
      %541 = vmatprep.mubr.bf16.mxu0 0
      %542 = vmatmul.mubr.bf16.gmra.mrb[0].mxu0 %v494
      %v543 = vpop.f32.mrb[0].mxu0
      %v544 = vadd.f32 0.0, %v543
      %v545 = vpop.f32.mrb[0].mxu0
      %v546 = vpop.f32.mrb[0].mxu0
      %v547 = vadd.f32 0.0, %v546
      %v548 = vpop.f32.mrb[0].mxu0
      %549 = vmatprep.mubr.bf16.mxu0 0
      %550 = vmatmul.mubr.bf16.gmra.mrb[0].mxu0 %v497
      %v551 = vpop.f32.mrb[0].mxu0
      %v552 = vadd.f32 0.0, %v551
      %v553 = vpop.f32.mrb[0].mxu0
      %v554 = vpop.f32.mrb[0].mxu0
      %v555 = vadd.f32 0.0, %v554
      %v556 = vpop.f32.mrb[0].mxu0
      %557 = vmatprep.mubr.bf16.mxu0 0
      %558 = vmatmul.mubr.bf16.gmra.mrb[0].mxu0 %v500
      %v559 = vpop.f32.mrb[0].mxu0
      %v560 = vadd.f32 0.0, %v559
      %v561 = vpop.f32.mrb[0].mxu0
      %v562 = vpop.f32.mrb[0].mxu0
      %v563 = vadd.f32 0.0, %v562
      %v564 = vpop.f32.mrb[0].mxu0
      %565 = vmatprep.mubr.bf16.mxu0 0
      %566 = vmatmul.mubr.bf16.gmra.mrb[0].mxu0 %v503
      %v567 = vpop.f32.mrb[0].mxu0
      %v568 = vadd.f32 0.0, %v567
      %v569 = vpop.f32.mrb[0].mxu0
      %v570 = vpop.f32.mrb[0].mxu0
      %v571 = vadd.f32 0.0, %v570
      %v572 = vpop.f32.mrb[0].mxu0
      %573 = vdwg.mxu0
      %v582 = vunpack.c.l.b16 %v402
      %v583 = vunpack.c.l.b16 %v403
      %v584 = vunpack.c.l.b16 %v404
      %v585 = vunpack.c.l.b16 %v405
      %v586 = vunpack.c.l.b16 %v406
      %v587 = vunpack.c.l.b16 %v407
      %v588 = vunpack.c.l.b16 %v408
      %v589 = vunpack.c.l.b16 %v409
      %v590 = vpack.c.b16 %v583, %v582
      %v591 = vpack.c.b16 %v585, %v584
      %v592 = vpack.c.b16 %v587, %v586
      %v593 = vpack.c.b16 %v589, %v588
      %v595 = vsel %vm492, %v590, 0
      %v598 = vsel %vm492, %v591, 0
      %v601 = vsel %vm492, %v592, 0
      %v604 = vsel %vm492, %v593, 0
      %v607 = vsel %vm505, %v410, 0
      %609 = vmatprep.subr.bf16.mxu0 0
      %610 = vmatpush1.bf16.msra.mxu0 %v607
      %611 = vmatprep.subr.bf16.mxu0 0
      %612 = vmatpush1.bf16.msra.mxu0 0
      %613 = vmatprep.subr.bf16.mxu0 0
      %614 = vmatpush1.bf16.msra.mxu0 0
      %615 = vmatprep.subr.bf16.mxu0 0
      %616 = vmatpush1.bf16.msra.mxu0 0
      %617 = vmatprep.subr.bf16.mxu0 0
      %618 = vmatpush1.bf16.msra.mxu0 0
      %619 = vmatprep.subr.bf16.mxu0 0
      %620 = vmatpush1.bf16.msra.mxu0 0
      %621 = vmatprep.subr.bf16.mxu0 0
      %622 = vmatpush1.bf16.msra.mxu0 0
      %623 = vmatprep.subr.bf16.mxu0 0
      %624 = vmatpush1.bf16.msra.mxu0 0
      %625 = vmatprep.subr.bf16.mxu0 0
      %626 = vmatpush1.bf16.msra.mxu0 0
      %627 = vmatprep.subr.bf16.mxu0 0
      %628 = vmatpush1.bf16.msra.mxu0 0
      %629 = vmatprep.subr.bf16.mxu0 0
      %630 = vmatpush1.bf16.msra.mxu0 0
      %631 = vmatprep.subr.bf16.mxu0 0
      %632 = vmatpush1.bf16.msra.mxu0 0
      %633 = vmatprep.subr.bf16.mxu0 0
      %634 = vmatpush1.bf16.msra.mxu0 0
      %635 = vmatprep.subr.bf16.mxu0 0
      %636 = vmatpush1.bf16.msra.mxu0 0
      %637 = vmatprep.subr.bf16.mxu0 0
      %638 = vmatpush1.bf16.msra.mxu0 0
      %639 = vmatprep.subr.bf16.mxu0 0
      %640 = vmatpush1.bf16.msra.mxu0 0
      %641 = vmatprep.mubr.bf16.mxu0 0
      %642 = vmatmul.mubr.bf16.gmra.mrb[0].mxu0 %v595
      %v643 = vpop.f32.mrb[0].mxu0
      %v644 = vadd.f32 %v544, %v643
      %v645 = vpop.f32.mrb[0].mxu0
      %v646 = vpop.f32.mrb[0].mxu0
      %v647 = vadd.f32 %v547, %v646
      %v648 = vpop.f32.mrb[0].mxu0
      %649 = vmatprep.mubr.bf16.mxu0 0
      %650 = vmatmul.mubr.bf16.gmra.mrb[0].mxu0 %v598
      %v651 = vpop.f32.mrb[0].mxu0
      %v652 = vadd.f32 %v552, %v651
      %v653 = vpop.f32.mrb[0].mxu0
      %v654 = vpop.f32.mrb[0].mxu0
      %v655 = vadd.f32 %v555, %v654
      %v656 = vpop.f32.mrb[0].mxu0
      %657 = vmatprep.mubr.bf16.mxu0 0
      %658 = vmatmul.mubr.bf16.gmra.mrb[0].mxu0 %v601
      %v659 = vpop.f32.mrb[0].mxu0
      %v660 = vadd.f32 %v560, %v659
      %v661 = vpop.f32.mrb[0].mxu0
      %v662 = vpop.f32.mrb[0].mxu0
      %v663 = vadd.f32 %v563, %v662
      %v664 = vpop.f32.mrb[0].mxu0
      %665 = vmatprep.mubr.bf16.mxu0 0
      %666 = vmatmul.mubr.bf16.gmra.mrb[0].mxu0 %v604
      %v667 = vpop.f32.mrb[0].mxu0
      %v668 = vadd.f32 %v568, %v667
      %v669 = vpop.f32.mrb[0].mxu0
      %v670 = vpop.f32.mrb[0].mxu0
      %v671 = vadd.f32 %v571, %v670
      %v672 = vpop.f32.mrb[0].mxu0
      %673 = vdwg.mxu0
      %v674 = vld [vmem:[#allocation2] sm:$0xc]
      %v675 = vld [vmem:[#allocation2 + $0x4] sm:$0x3]
      %v676 = vld [vmem:[#allocation2 + $0x8] sm:$0xc]
      %v677 = vld [vmem:[#allocation2 + $0xc] sm:$0x3]
      %v678 = vld [vmem:[#allocation2 + $0x10] sm:$0xc]
      %v679 = vld [vmem:[#allocation2 + $0x14] sm:$0x3]
      %v680 = vld [vmem:[#allocation2 + $0x18] sm:$0xc]
      %v681 = vld [vmem:[#allocation2 + $0x1c] sm:$0x3]
      %v682 = vld [vmem:[#allocation2 + $0x20] sm:$0xc]
      %v683 = vld [vmem:[#allocation2 + $0x24] sm:$0x3]
      %v684 = vld [vmem:[#allocation2 + $0x28] sm:$0xc]
      %v685 = vld [vmem:[#allocation2 + $0x2c] sm:$0x3]
      %v686 = vld [vmem:[#allocation2 + $0x30] sm:$0xc]
      %v687 = vld [vmem:[#allocation2 + $0x34] sm:$0x3]
      %v688 = vld [vmem:[#allocation2 + $0x38] sm:$0xc]
      %v689 = vld [vmem:[#allocation2 + $0x3c] sm:$0x3]
      %vm706 = vcmask 1041408
      %vm707 = vcmask 1045508
      %vm708 = vmor %vm706, %vm707
      %v709 = vrot.slane %v674, 6
      %v710 = vrot.slane %v709, 4
      %v711 = vrot.slane %v675, 6
      %v712 = vsel %vm708, %v710, %v711
      %v713 = vrot.slane %v676, 6
      %v714 = vrot.slane %v713, 4
      %v715 = vrot.slane %v677, 6
      %v716 = vsel %vm708, %v714, %v715
      %v717 = vrot.slane %v678, 6
      %v718 = vrot.slane %v717, 4
      %v719 = vrot.slane %v679, 6
      %v720 = vsel %vm708, %v718, %v719
      %v721 = vrot.slane %v680, 6
      %v722 = vrot.slane %v721, 4
      %v723 = vrot.slane %v681, 6
      %v724 = vsel %vm708, %v722, %v723
      %v725 = vrot.slane %v682, 6
      %v726 = vrot.slane %v725, 4
      %v727 = vrot.slane %v683, 6
      %v728 = vsel %vm708, %v726, %v727
      %v729 = vrot.slane %v684, 6
      %v730 = vrot.slane %v729, 4
      %v731 = vrot.slane %v685, 6
      %v732 = vsel %vm708, %v730, %v731
      %v733 = vrot.slane %v686, 6
      %v734 = vrot.slane %v733, 4
      %v735 = vrot.slane %v687, 6
      %v736 = vsel %vm708, %v734, %v735
      %v737 = vrot.slane %v688, 6
      %v738 = vrot.slane %v737, 4
      %v739 = vrot.slane %v689, 6
      %v740 = vsel %vm708, %v738, %v739
      %s741 = scalar_lea.vmem %s3, 8
      %v742 = vld [vmem:[%s741] sm:$0xf]
      %v743 = vunpack.c.l.b16 %v712
      %v744 = vunpack.c.l.b16 %v716
      %v745 = vunpack.c.l.b16 %v720
      %v746 = vunpack.c.l.b16 %v724
      %v747 = vunpack.c.l.b16 %v728
      %v748 = vunpack.c.l.b16 %v732
      %v749 = vunpack.c.l.b16 %v736
      %v750 = vunpack.c.l.b16 %v740
      %v751 = vpack.c.b16 %v744, %v743
      %v752 = vpack.c.b16 %v746, %v745
      %v753 = vpack.c.b16 %v748, %v747
      %v754 = vpack.c.b16 %v750, %v749
      %v756 = vsel %vm492, %v751, 0
      %v759 = vsel %vm492, %v752, 0
      %v762 = vsel %vm492, %v753, 0
      %v765 = vsel %vm492, %v754, 0
      %v768 = vsel %vm505, %v742, 0
      %770 = vmatprep.subr.bf16.mxu0 0
      %771 = vmatpush1.bf16.msra.mxu0 %v768
      %772 = vmatprep.subr.bf16.mxu0 0
      %773 = vmatpush1.bf16.msra.mxu0 0
      %774 = vmatprep.subr.bf16.mxu0 0
      %775 = vmatpush1.bf16.msra.mxu0 0
      %776 = vmatprep.subr.bf16.mxu0 0
      %777 = vmatpush1.bf16.msra.mxu0 0
      %778 = vmatprep.subr.bf16.mxu0 0
      %779 = vmatpush1.bf16.msra.mxu0 0
      %780 = vmatprep.subr.bf16.mxu0 0
      %781 = vmatpush1.bf16.msra.mxu0 0
      %782 = vmatprep.subr.bf16.mxu0 0
      %783 = vmatpush1.bf16.msra.mxu0 0
      %784 = vmatprep.subr.bf16.mxu0 0
      %785 = vmatpush1.bf16.msra.mxu0 0
      %786 = vmatprep.subr.bf16.mxu0 0
      %787 = vmatpush1.bf16.msra.mxu0 0
      %788 = vmatprep.subr.bf16.mxu0 0
      %789 = vmatpush1.bf16.msra.mxu0 0
      %790 = vmatprep.subr.bf16.mxu0 0
      %791 = vmatpush1.bf16.msra.mxu0 0
      %792 = vmatprep.subr.bf16.mxu0 0
      %793 = vmatpush1.bf16.msra.mxu0 0
      %794 = vmatprep.subr.bf16.mxu0 0
      %795 = vmatpush1.bf16.msra.mxu0 0
      %796 = vmatprep.subr.bf16.mxu0 0
      %797 = vmatpush1.bf16.msra.mxu0 0
      %798 = vmatprep.subr.bf16.mxu0 0
      %799 = vmatpush1.bf16.msra.mxu0 0
      %800 = vmatprep.subr.bf16.mxu0 0
      %801 = vmatpush1.bf16.msra.mxu0 0
      %802 = vmatprep.mubr.bf16.mxu0 0
      %803 = vmatmul.mubr.bf16.gmra.mrb[0].mxu0 %v756
      %v804 = vpop.f32.mrb[0].mxu0
      %v805 = vadd.f32 0.0, %v804
      %v806 = vpop.f32.mrb[0].mxu0
      %v807 = vpop.f32.mrb[0].mxu0
      %v808 = vadd.f32 0.0, %v807
      %v809 = vpop.f32.mrb[0].mxu0
      %810 = vmatprep.mubr.bf16.mxu0 0
      %811 = vmatmul.mubr.bf16.gmra.mrb[0].mxu0 %v759
      %v812 = vpop.f32.mrb[0].mxu0
      %v813 = vadd.f32 0.0, %v812
      %v814 = vpop.f32.mrb[0].mxu0
      %v815 = vpop.f32.mrb[0].mxu0
      %v816 = vadd.f32 0.0, %v815
      %v817 = vpop.f32.mrb[0].mxu0
      %818 = vmatprep.mubr.bf16.mxu0 0
      %819 = vmatmul.mubr.bf16.gmra.mrb[0].mxu0 %v762
      %v820 = vpop.f32.mrb[0].mxu0
      %v821 = vadd.f32 0.0, %v820
      %v822 = vpop.f32.mrb[0].mxu0
      %v823 = vpop.f32.mrb[0].mxu0
      %v824 = vadd.f32 0.0, %v823
      %v825 = vpop.f32.mrb[0].mxu0
      %826 = vmatprep.mubr.bf16.mxu0 0
      %827 = vmatmul.mubr.bf16.gmra.mrb[0].mxu0 %v765
      %v828 = vpop.f32.mrb[0].mxu0
      %v829 = vadd.f32 0.0, %v828
      %v830 = vpop.f32.mrb[0].mxu0
      %v831 = vpop.f32.mrb[0].mxu0
      %v832 = vadd.f32 0.0, %v831
      %v833 = vpop.f32.mrb[0].mxu0
      %834 = vdwg.mxu0
      %v835 = vadd.f32 %v644, %v805
      %v836 = vadd.f32 %v647, %v808
      %v837 = vadd.f32 %v652, %v813
      %v838 = vadd.f32 %v655, %v816
      %v839 = vadd.f32 %v660, %v821
      %v840 = vadd.f32 %v663, %v824
      %v841 = vadd.f32 %v668, %v829
      %v842 = vadd.f32 %v671, %v832
      %v843 = vld [vmem:[%s302] sm:$0xf]
      %v844 = vld [vmem:[%s302 + $0x8] sm:$0xf]
      %v845 = vld [vmem:[%s302 + $0x10] sm:$0xf]
      %v846 = vld [vmem:[%s302 + $0x18] sm:$0xf]
      %v847 = vld [vmem:[%s302 + $0x20] sm:$0xf]
      %v848 = vld [vmem:[%s302 + $0x28] sm:$0xf]
      %v849 = vld [vmem:[%s302 + $0x30] sm:$0xf]
      %v850 = vld [vmem:[%s302 + $0x38] sm:$0xf]
      %s851 = scalar_lea.vmem %s3, 12
      %v852 = vld [vmem:[%s851] sm:$0xf]
      %v861 = vunpack.c.l.b16 %v843
      %v862 = vunpack.c.l.b16 %v844
      %v863 = vunpack.c.l.b16 %v845
      %v864 = vunpack.c.l.b16 %v846
      %v865 = vunpack.c.l.b16 %v847
      %v866 = vunpack.c.l.b16 %v848
      %v867 = vunpack.c.l.b16 %v849
      %v868 = vunpack.c.l.b16 %v850
      %v869 = vpack.c.b16 %v862, %v861
      %v870 = vpack.c.b16 %v864, %v863
      %v871 = vpack.c.b16 %v866, %v865
      %v872 = vpack.c.b16 %v868, %v867
      %v874 = vsel %vm492, %v869, 0
      %v877 = vsel %vm492, %v870, 0
      %v880 = vsel %vm492, %v871, 0
      %v883 = vsel %vm492, %v872, 0
      %v886 = vsel %vm505, %v852, 0
      %888 = vmatprep.subr.bf16.mxu0 0
      %889 = vmatpush1.bf16.msra.mxu0 %v886
      %890 = vmatprep.subr.bf16.mxu0 0
      %891 = vmatpush1.bf16.msra.mxu0 0
      %892 = vmatprep.subr.bf16.mxu0 0
      %893 = vmatpush1.bf16.msra.mxu0 0
      %894 = vmatprep.subr.bf16.mxu0 0
      %895 = vmatpush1.bf16.msra.mxu0 0
      %896 = vmatprep.subr.bf16.mxu0 0
      %897 = vmatpush1.bf16.msra.mxu0 0
      %898 = vmatprep.subr.bf16.mxu0 0
      %899 = vmatpush1.bf16.msra.mxu0 0
      %900 = vmatprep.subr.bf16.mxu0 0
      %901 = vmatpush1.bf16.msra.mxu0 0
      %902 = vmatprep.subr.bf16.mxu0 0
      %903 = vmatpush1.bf16.msra.mxu0 0
      %904 = vmatprep.subr.bf16.mxu0 0
      %905 = vmatpush1.bf16.msra.mxu0 0
      %906 = vmatprep.subr.bf16.mxu0 0
      %907 = vmatpush1.bf16.msra.mxu0 0
      %908 = vmatprep.subr.bf16.mxu0 0
      %909 = vmatpush1.bf16.msra.mxu0 0
      %910 = vmatprep.subr.bf16.mxu0 0
      %911 = vmatpush1.bf16.msra.mxu0 0
      %912 = vmatprep.subr.bf16.mxu0 0
      %913 = vmatpush1.bf16.msra.mxu0 0
      %914 = vmatprep.subr.bf16.mxu0 0
      %915 = vmatpush1.bf16.msra.mxu0 0
      %916 = vmatprep.subr.bf16.mxu0 0
      %917 = vmatpush1.bf16.msra.mxu0 0
      %918 = vmatprep.subr.bf16.mxu0 0
      %919 = vmatpush1.bf16.msra.mxu0 0
      %920 = vmatprep.mubr.bf16.mxu0 0
      %921 = vmatmul.mubr.bf16.gmra.mrb[0].mxu0 %v874
      %v922 = vpop.f32.mrb[0].mxu0
      %v923 = vadd.f32 0.0, %v922
      %v924 = vpop.f32.mrb[0].mxu0
      %v925 = vpop.f32.mrb[0].mxu0
      %v926 = vadd.f32 0.0, %v925
      %v927 = vpop.f32.mrb[0].mxu0
      %928 = vmatprep.mubr.bf16.mxu0 0
      %929 = vmatmul.mubr.bf16.gmra.mrb[0].mxu0 %v877
      %v930 = vpop.f32.mrb[0].mxu0
      %v931 = vadd.f32 0.0, %v930
      %v932 = vpop.f32.mrb[0].mxu0
      %v933 = vpop.f32.mrb[0].mxu0
      %v934 = vadd.f32 0.0, %v933
      %v935 = vpop.f32.mrb[0].mxu0
      %936 = vmatprep.mubr.bf16.mxu0 0
      %937 = vmatmul.mubr.bf16.gmra.mrb[0].mxu0 %v880
      %v938 = vpop.f32.mrb[0].mxu0
      %v939 = vadd.f32 0.0, %v938
      %v940 = vpop.f32.mrb[0].mxu0
      %v941 = vpop.f32.mrb[0].mxu0
      %v942 = vadd.f32 0.0, %v941
      %v943 = vpop.f32.mrb[0].mxu0
      %944 = vmatprep.mubr.bf16.mxu0 0
      %945 = vmatmul.mubr.bf16.gmra.mrb[0].mxu0 %v883
      %v946 = vpop.f32.mrb[0].mxu0
      %v947 = vadd.f32 0.0, %v946
      %v948 = vpop.f32.mrb[0].mxu0
      %v949 = vpop.f32.mrb[0].mxu0
      %v950 = vadd.f32 0.0, %v949
      %v951 = vpop.f32.mrb[0].mxu0
      %952 = vdwg.mxu0
      %v953 = vadd.f32 %v835, %v923
      %v954 = vadd.f32 %v836, %v926
      %v955 = vadd.f32 %v837, %v931
      %v956 = vadd.f32 %v838, %v934
      %v957 = vadd.f32 %v839, %v939
      %v958 = vadd.f32 %v840, %v942
      %v959 = vadd.f32 %v841, %v947
      %v960 = vadd.f32 %v842, %v950
      %v961 = vld [vmem:[%s302] sm:$0xe]
      %v962 = vld [vmem:[%s302 + $0x4] sm:$0x1]
      %v963 = vld [vmem:[%s302 + $0x8] sm:$0xe]
      %v964 = vld [vmem:[%s302 + $0xc] sm:$0x1]
      %v965 = vld [vmem:[%s302 + $0x10] sm:$0xe]
      %v966 = vld [vmem:[%s302 + $0x14] sm:$0x1]
      %v967 = vld [vmem:[%s302 + $0x18] sm:$0xe]
      %v968 = vld [vmem:[%s302 + $0x1c] sm:$0x1]
      %v969 = vld [vmem:[%s302 + $0x20] sm:$0xe]
      %v970 = vld [vmem:[%s302 + $0x24] sm:$0x1]
      %v971 = vld [vmem:[%s302 + $0x28] sm:$0xe]
      %v972 = vld [vmem:[%s302 + $0x2c] sm:$0x1]
      %v973 = vld [vmem:[%s302 + $0x30] sm:$0xe]
      %v974 = vld [vmem:[%s302 + $0x34] sm:$0x1]
      %v975 = vld [vmem:[%s302 + $0x38] sm:$0xe]
      %v976 = vld [vmem:[%s302 + $0x3c] sm:$0x1]
      %v993 = vrot.slane %v961, 5
      %v994 = vrot.slane %v993, 4
      %v995 = vrot.slane %v962, 5
      %v996 = vsel %vm445, %v994, %v995
      %v997 = vrot.slane %v963, 5
      %v998 = vrot.slane %v997, 4
      %v999 = vrot.slane %v964, 5
      %v1000 = vsel %vm445, %v998, %v999
      %v1001 = vrot.slane %v965, 5
      %v1002 = vrot.slane %v1001, 4
      %v1003 = vrot.slane %v966, 5
      %v1004 = vsel %vm445, %v1002, %v1003
      %v1005 = vrot.slane %v967, 5
      %v1006 = vrot.slane %v1005, 4
      %v1007 = vrot.slane %v968, 5
      %v1008 = vsel %vm445, %v1006, %v1007
      %v1009 = vrot.slane %v969, 5
      %v1010 = vrot.slane %v1009, 4
      %v1011 = vrot.slane %v970, 5
      %v1012 = vsel %vm445, %v1010, %v1011
      %v1013 = vrot.slane %v971, 5
      %v1014 = vrot.slane %v1013, 4
      %v1015 = vrot.slane %v972, 5
      %v1016 = vsel %vm445, %v1014, %v1015
      %v1017 = vrot.slane %v973, 5
      %v1018 = vrot.slane %v1017, 4
      %v1019 = vrot.slane %v974, 5
      %v1020 = vsel %vm445, %v1018, %v1019
      %v1021 = vrot.slane %v975, 5
      %v1022 = vrot.slane %v1021, 4
      %v1023 = vrot.slane %v976, 5
      %v1024 = vsel %vm445, %v1022, %v1023
      %s1025 = scalar_lea.vmem %s3, 16
      %v1026 = vld [vmem:[%s1025] sm:$0xf]
      %v1027 = vunpack.c.l.b16 %v996
      %v1028 = vunpack.c.l.b16 %v1000
      %v1029 = vunpack.c.l.b16 %v1004
      %v1030 = vunpack.c.l.b16 %v1008
      %v1031 = vunpack.c.l.b16 %v1012
      %v1032 = vunpack.c.l.b16 %v1016
      %v1033 = vunpack.c.l.b16 %v1020
      %v1034 = vunpack.c.l.b16 %v1024
      %v1035 = vpack.c.b16 %v1028, %v1027
      %v1036 = vpack.c.b16 %v1030, %v1029
      %v1037 = vpack.c.b16 %v1032, %v1031
      %v1038 = vpack.c.b16 %v1034, %v1033
      %v1040 = vsel %vm492, %v1035, 0
      %v1043 = vsel %vm492, %v1036, 0
      %v1046 = vsel %vm492, %v1037, 0
      %v1049 = vsel %vm492, %v1038, 0
      %v1052 = vsel %vm505, %v1026, 0
      %1054 = vmatprep.subr.bf16.mxu0 0
      %1055 = vmatpush1.bf16.msra.mxu0 %v1052
      %1056 = vmatprep.subr.bf16.mxu0 0
      %1057 = vmatpush1.bf16.msra.mxu0 0
      %1058 = vmatprep.subr.bf16.mxu0 0
      %1059 = vmatpush1.bf16.msra.mxu0 0
      %1060 = vmatprep.subr.bf16.mxu0 0
      %1061 = vmatpush1.bf16.msra.mxu0 0
      %1062 = vmatprep.subr.bf16.mxu0 0
      %1063 = vmatpush1.bf16.msra.mxu0 0
      %1064 = vmatprep.subr.bf16.mxu0 0
      %1065 = vmatpush1.bf16.msra.mxu0 0
      %1066 = vmatprep.subr.bf16.mxu0 0
      %1067 = vmatpush1.bf16.msra.mxu0 0
      %1068 = vmatprep.subr.bf16.mxu0 0
      %1069 = vmatpush1.bf16.msra.mxu0 0
      %1070 = vmatprep.subr.bf16.mxu0 0
      %1071 = vmatpush1.bf16.msra.mxu0 0
      %1072 = vmatprep.subr.bf16.mxu0 0
      %1073 = vmatpush1.bf16.msra.mxu0 0
      %1074 = vmatprep.subr.bf16.mxu0 0
      %1075 = vmatpush1.bf16.msra.mxu0 0
      %1076 = vmatprep.subr.bf16.mxu0 0
      %1077 = vmatpush1.bf16.msra.mxu0 0
      %1078 = vmatprep.subr.bf16.mxu0 0
      %1079 = vmatpush1.bf16.msra.mxu0 0
      %1080 = vmatprep.subr.bf16.mxu0 0
      %1081 = vmatpush1.bf16.msra.mxu0 0
      %1082 = vmatprep.subr.bf16.mxu0 0
      %1083 = vmatpush1.bf16.msra.mxu0 0
      %1084 = vmatprep.subr.bf16.mxu0 0
      %1085 = vmatpush1.bf16.msra.mxu0 0
      %1086 = vmatprep.mubr.bf16.mxu0 0
      %1087 = vmatmul.mubr.bf16.gmra.mrb[0].mxu0 %v1040
      %v1088 = vpop.f32.mrb[0].mxu0
      %v1089 = vadd.f32 0.0, %v1088
      %v1090 = vpop.f32.mrb[0].mxu0
      %v1091 = vpop.f32.mrb[0].mxu0
      %v1092 = vadd.f32 0.0, %v1091
      %v1093 = vpop.f32.mrb[0].mxu0
      %1094 = vmatprep.mubr.bf16.mxu0 0
      %1095 = vmatmul.mubr.bf16.gmra.mrb[0].mxu0 %v1043
      %v1096 = vpop.f32.mrb[0].mxu0
      %v1097 = vadd.f32 0.0, %v1096
      %v1098 = vpop.f32.mrb[0].mxu0
      %v1099 = vpop.f32.mrb[0].mxu0
      %v1100 = vadd.f32 0.0, %v1099
      %v1101 = vpop.f32.mrb[0].mxu0
      %1102 = vmatprep.mubr.bf16.mxu0 0
      %1103 = vmatmul.mubr.bf16.gmra.mrb[0].mxu0 %v1046
      %v1104 = vpop.f32.mrb[0].mxu0
      %v1105 = vadd.f32 0.0, %v1104
      %v1106 = vpop.f32.mrb[0].mxu0
      %v1107 = vpop.f32.mrb[0].mxu0
      %v1108 = vadd.f32 0.0, %v1107
      %v1109 = vpop.f32.mrb[0].mxu0
      %1110 = vmatprep.mubr.bf16.mxu0 0
      %1111 = vmatmul.mubr.bf16.gmra.mrb[0].mxu0 %v1049
      %v1112 = vpop.f32.mrb[0].mxu0
      %v1113 = vadd.f32 0.0, %v1112
      %v1114 = vpop.f32.mrb[0].mxu0
      %v1115 = vpop.f32.mrb[0].mxu0
      %v1116 = vadd.f32 0.0, %v1115
      %v1117 = vpop.f32.mrb[0].mxu0
      %1118 = vdwg.mxu0
      %v1119 = vadd.f32 %v953, %v1089
      %v1120 = vadd.f32 %v954, %v1092
      %v1121 = vadd.f32 %v955, %v1097
      %v1122 = vadd.f32 %v956, %v1100
      %v1123 = vadd.f32 %v957, %v1105
      %v1124 = vadd.f32 %v958, %v1108
      %v1125 = vadd.f32 %v959, %v1113
      %v1126 = vadd.f32 %v960, %v1116
      %v1127 = vld [vmem:[%s302] sm:$0xc]
      %v1128 = vld [vmem:[%s302 + $0x4] sm:$0x3]
      %v1129 = vld [vmem:[%s302 + $0x8] sm:$0xc]
      %v1130 = vld [vmem:[%s302 + $0xc] sm:$0x3]
      %v1131 = vld [vmem:[%s302 + $0x10] sm:$0xc]
      %v1132 = vld [vmem:[%s302 + $0x14] sm:$0x3]
      %v1133 = vld [vmem:[%s302 + $0x18] sm:$0xc]
      %v1134 = vld [vmem:[%s302 + $0x1c] sm:$0x3]
      %v1135 = vld [vmem:[%s302 + $0x20] sm:$0xc]
      %v1136 = vld [vmem:[%s302 + $0x24] sm:$0x3]
      %v1137 = vld [vmem:[%s302 + $0x28] sm:$0xc]
      %v1138 = vld [vmem:[%s302 + $0x2c] sm:$0x3]
      %v1139 = vld [vmem:[%s302 + $0x30] sm:$0xc]
      %v1140 = vld [vmem:[%s302 + $0x34] sm:$0x3]
      %v1141 = vld [vmem:[%s302 + $0x38] sm:$0xc]
      %v1142 = vld [vmem:[%s302 + $0x3c] sm:$0x3]
      %v1159 = vrot.slane %v1127, 6
      %v1160 = vrot.slane %v1159, 4
      %v1161 = vrot.slane %v1128, 6
      %v1162 = vsel %vm708, %v1160, %v1161
      %v1163 = vrot.slane %v1129, 6
      %v1164 = vrot.slane %v1163, 4
      %v1165 = vrot.slane %v1130, 6
      %v1166 = vsel %vm708, %v1164, %v1165
      %v1167 = vrot.slane %v1131, 6
      %v1168 = vrot.slane %v1167, 4
      %v1169 = vrot.slane %v1132, 6
      %v1170 = vsel %vm708, %v1168, %v1169
      %v1171 = vrot.slane %v1133, 6
      %v1172 = vrot.slane %v1171, 4
      %v1173 = vrot.slane %v1134, 6
      %v1174 = vsel %vm708, %v1172, %v1173
      %v1175 = vrot.slane %v1135, 6
      %v1176 = vrot.slane %v1175, 4
      %v1177 = vrot.slane %v1136, 6
      %v1178 = vsel %vm708, %v1176, %v1177
      %v1179 = vrot.slane %v1137, 6
      %v1180 = vrot.slane %v1179, 4
      %v1181 = vrot.slane %v1138, 6
      %v1182 = vsel %vm708, %v1180, %v1181
      %v1183 = vrot.slane %v1139, 6
      %v1184 = vrot.slane %v1183, 4
      %v1185 = vrot.slane %v1140, 6
      %v1186 = vsel %vm708, %v1184, %v1185
      %v1187 = vrot.slane %v1141, 6
      %v1188 = vrot.slane %v1187, 4
      %v1189 = vrot.slane %v1142, 6
      %v1190 = vsel %vm708, %v1188, %v1189
      %s1191 = scalar_lea.vmem %s3, 20
      %v1192 = vld [vmem:[%s1191] sm:$0xf]
      %v1193 = vunpack.c.l.b16 %v1162
      %v1194 = vunpack.c.l.b16 %v1166
      %v1195 = vunpack.c.l.b16 %v1170
      %v1196 = vunpack.c.l.b16 %v1174
      %v1197 = vunpack.c.l.b16 %v1178
      %v1198 = vunpack.c.l.b16 %v1182
      %v1199 = vunpack.c.l.b16 %v1186
      %v1200 = vunpack.c.l.b16 %v1190
      %v1201 = vpack.c.b16 %v1194, %v1193
      %v1202 = vpack.c.b16 %v1196, %v1195
      %v1203 = vpack.c.b16 %v1198, %v1197
      %v1204 = vpack.c.b16 %v1200, %v1199
      %v1206 = vsel %vm492, %v1201, 0
      %v1209 = vsel %vm492, %v1202, 0
      %v1212 = vsel %vm492, %v1203, 0
      %v1215 = vsel %vm492, %v1204, 0
      %v1218 = vsel %vm505, %v1192, 0
      %1220 = vmatprep.subr.bf16.mxu0 0
      %1221 = vmatpush1.bf16.msra.mxu0 %v1218
      %1222 = vmatprep.subr.bf16.mxu0 0
      %1223 = vmatpush1.bf16.msra.mxu0 0
      %1224 = vmatprep.subr.bf16.mxu0 0
      %1225 = vmatpush1.bf16.msra.mxu0 0
      %1226 = vmatprep.subr.bf16.mxu0 0
      %1227 = vmatpush1.bf16.msra.mxu0 0
      %1228 = vmatprep.subr.bf16.mxu0 0
      %1229 = vmatpush1.bf16.msra.mxu0 0
      %1230 = vmatprep.subr.bf16.mxu0 0
      %1231 = vmatpush1.bf16.msra.mxu0 0
      %1232 = vmatprep.subr.bf16.mxu0 0
      %1233 = vmatpush1.bf16.msra.mxu0 0
      %1234 = vmatprep.subr.bf16.mxu0 0
      %1235 = vmatpush1.bf16.msra.mxu0 0
      %1236 = vmatprep.subr.bf16.mxu0 0
      %1237 = vmatpush1.bf16.msra.mxu0 0
      %1238 = vmatprep.subr.bf16.mxu0 0
      %1239 = vmatpush1.bf16.msra.mxu0 0
      %1240 = vmatprep.subr.bf16.mxu0 0
      %1241 = vmatpush1.bf16.msra.mxu0 0
      %1242 = vmatprep.subr.bf16.mxu0 0
      %1243 = vmatpush1.bf16.msra.mxu0 0
      %1244 = vmatprep.subr.bf16.mxu0 0
      %1245 = vmatpush1.bf16.msra.mxu0 0
      %1246 = vmatprep.subr.bf16.mxu0 0
      %1247 = vmatpush1.bf16.msra.mxu0 0
      %1248 = vmatprep.subr.bf16.mxu0 0
      %1249 = vmatpush1.bf16.msra.mxu0 0
      %1250 = vmatprep.subr.bf16.mxu0 0
      %1251 = vmatpush1.bf16.msra.mxu0 0
      %1252 = vmatprep.mubr.bf16.mxu0 0
      %1253 = vmatmul.mubr.bf16.gmra.mrb[0].mxu0 %v1206
      %v1254 = vpop.f32.mrb[0].mxu0
      %v1255 = vadd.f32 0.0, %v1254
      %v1256 = vpop.f32.mrb[0].mxu0
      %v1257 = vpop.f32.mrb[0].mxu0
      %v1258 = vadd.f32 0.0, %v1257
      %v1259 = vpop.f32.mrb[0].mxu0
      %1260 = vmatprep.mubr.bf16.mxu0 0
      %1261 = vmatmul.mubr.bf16.gmra.mrb[0].mxu0 %v1209
      %v1262 = vpop.f32.mrb[0].mxu0
      %v1263 = vadd.f32 0.0, %v1262
      %v1264 = vpop.f32.mrb[0].mxu0
      %v1265 = vpop.f32.mrb[0].mxu0
      %v1266 = vadd.f32 0.0, %v1265
      %v1267 = vpop.f32.mrb[0].mxu0
      %1268 = vmatprep.mubr.bf16.mxu0 0
      %1269 = vmatmul.mubr.bf16.gmra.mrb[0].mxu0 %v1212
      %v1270 = vpop.f32.mrb[0].mxu0
      %v1271 = vadd.f32 0.0, %v1270
      %v1272 = vpop.f32.mrb[0].mxu0
      %v1273 = vpop.f32.mrb[0].mxu0
      %v1274 = vadd.f32 0.0, %v1273
      %v1275 = vpop.f32.mrb[0].mxu0
      %1276 = vmatprep.mubr.bf16.mxu0 0
      %1277 = vmatmul.mubr.bf16.gmra.mrb[0].mxu0 %v1215
      %v1278 = vpop.f32.mrb[0].mxu0
      %v1279 = vadd.f32 0.0, %v1278
      %v1280 = vpop.f32.mrb[0].mxu0
      %v1281 = vpop.f32.mrb[0].mxu0
      %v1282 = vadd.f32 0.0, %v1281
      %v1283 = vpop.f32.mrb[0].mxu0
      %1284 = vdwg.mxu0
      %v1285 = vadd.f32 %v1119, %v1255
      %v1286 = vadd.f32 %v1120, %v1258
      %v1287 = vadd.f32 %v1121, %v1263
      %v1288 = vadd.f32 %v1122, %v1266
      %v1289 = vadd.f32 %v1123, %v1271
      %v1290 = vadd.f32 %v1124, %v1274
      %v1291 = vadd.f32 %v1125, %v1279
      %v1292 = vadd.f32 %v1126, %v1282
      %s1293 = scalar_lea.vmem [#allocation2], 32
      %v1294 = vld [vmem:[%s1293] sm:$0xf]
      %v1295 = vld [vmem:[%s1293 + $0x8] sm:$0xf]
      %v1296 = vld [vmem:[%s1293 + $0x10] sm:$0xf]
      %v1297 = vld [vmem:[%s1293 + $0x18] sm:$0xf]
      %v1298 = vld [vmem:[%s1293 + $0x20] sm:$0xf]
      %v1299 = vld [vmem:[%s1293 + $0x28] sm:$0xf]
      %v1300 = vld [vmem:[%s1293 + $0x30] sm:$0xf]
      %v1301 = vld [vmem:[%s1293 + $0x38] sm:$0xf]
      %s1302 = scalar_lea.vmem %s3, 24
      %v1303 = vld [vmem:[%s1302] sm:$0xf]
      %v1312 = vunpack.c.l.b16 %v1294
      %v1313 = vunpack.c.l.b16 %v1295
      %v1314 = vunpack.c.l.b16 %v1296
      %v1315 = vunpack.c.l.b16 %v1297
      %v1316 = vunpack.c.l.b16 %v1298
      %v1317 = vunpack.c.l.b16 %v1299
      %v1318 = vunpack.c.l.b16 %v1300
      %v1319 = vunpack.c.l.b16 %v1301
      %v1320 = vpack.c.b16 %v1313, %v1312
      %v1321 = vpack.c.b16 %v1315, %v1314
      %v1322 = vpack.c.b16 %v1317, %v1316
      %v1323 = vpack.c.b16 %v1319, %v1318
      %v1325 = vsel %vm492, %v1320, 0
      %v1328 = vsel %vm492, %v1321, 0
      %v1331 = vsel %vm492, %v1322, 0
      %v1334 = vsel %vm492, %v1323, 0
      %v1337 = vsel %vm505, %v1303, 0
      %1339 = vmatprep.subr.bf16.mxu0 0
      %1340 = vmatpush1.bf16.msra.mxu0 %v1337
      %1341 = vmatprep.subr.bf16.mxu0 0
      %1342 = vmatpush1.bf16.msra.mxu0 0
      %1343 = vmatprep.subr.bf16.mxu0 0
      %1344 = vmatpush1.bf16.msra.mxu0 0
      %1345 = vmatprep.subr.bf16.mxu0 0
      %1346 = vmatpush1.bf16.msra.mxu0 0
      %1347 = vmatprep.subr.bf16.mxu0 0
      %1348 = vmatpush1.bf16.msra.mxu0 0
      %1349 = vmatprep.subr.bf16.mxu0 0
      %1350 = vmatpush1.bf16.msra.mxu0 0
      %1351 = vmatprep.subr.bf16.mxu0 0
      %1352 = vmatpush1.bf16.msra.mxu0 0
      %1353 = vmatprep.subr.bf16.mxu0 0
      %1354 = vmatpush1.bf16.msra.mxu0 0
      %1355 = vmatprep.subr.bf16.mxu0 0
      %1356 = vmatpush1.bf16.msra.mxu0 0
      %1357 = vmatprep.subr.bf16.mxu0 0
      %1358 = vmatpush1.bf16.msra.mxu0 0
      %1359 = vmatprep.subr.bf16.mxu0 0
      %1360 = vmatpush1.bf16.msra.mxu0 0
      %1361 = vmatprep.subr.bf16.mxu0 0
      %1362 = vmatpush1.bf16.msra.mxu0 0
      %1363 = vmatprep.subr.bf16.mxu0 0
      %1364 = vmatpush1.bf16.msra.mxu0 0
      %1365 = vmatprep.subr.bf16.mxu0 0
      %1366 = vmatpush1.bf16.msra.mxu0 0
      %1367 = vmatprep.subr.bf16.mxu0 0
      %1368 = vmatpush1.bf16.msra.mxu0 0
      %1369 = vmatprep.subr.bf16.mxu0 0
      %1370 = vmatpush1.bf16.msra.mxu0 0
      %1371 = vmatprep.mubr.bf16.mxu0 0
      %1372 = vmatmul.mubr.bf16.gmra.mrb[0].mxu0 %v1325
      %v1373 = vpop.f32.mrb[0].mxu0
      %v1374 = vadd.f32 0.0, %v1373
      %v1375 = vpop.f32.mrb[0].mxu0
      %v1376 = vpop.f32.mrb[0].mxu0
      %v1377 = vadd.f32 0.0, %v1376
      %v1378 = vpop.f32.mrb[0].mxu0
      %1379 = vmatprep.mubr.bf16.mxu0 0
      %1380 = vmatmul.mubr.bf16.gmra.mrb[0].mxu0 %v1328
      %v1381 = vpop.f32.mrb[0].mxu0
      %v1382 = vadd.f32 0.0, %v1381
      %v1383 = vpop.f32.mrb[0].mxu0
      %v1384 = vpop.f32.mrb[0].mxu0
      %v1385 = vadd.f32 0.0, %v1384
      %v1386 = vpop.f32.mrb[0].mxu0
      %1387 = vmatprep.mubr.bf16.mxu0 0
      %1388 = vmatmul.mubr.bf16.gmra.mrb[0].mxu0 %v1331
      %v1389 = vpop.f32.mrb[0].mxu0
      %v1390 = vadd.f32 0.0, %v1389
      %v1391 = vpop.f32.mrb[0].mxu0
      %v1392 = vpop.f32.mrb[0].mxu0
      %v1393 = vadd.f32 0.0, %v1392
      %v1394 = vpop.f32.mrb[0].mxu0
      %1395 = vmatprep.mubr.bf16.mxu0 0
      %1396 = vmatmul.mubr.bf16.gmra.mrb[0].mxu0 %v1334
      %v1397 = vpop.f32.mrb[0].mxu0
      %v1398 = vadd.f32 0.0, %v1397
      %v1399 = vpop.f32.mrb[0].mxu0
      %v1400 = vpop.f32.mrb[0].mxu0
      %v1401 = vadd.f32 0.0, %v1400
      %v1402 = vpop.f32.mrb[0].mxu0
      %1403 = vdwg.mxu0
      %v1404 = vadd.f32 %v1285, %v1374
      %v1405 = vadd.f32 %v1286, %v1377
      %v1406 = vadd.f32 %v1287, %v1382
      %v1407 = vadd.f32 %v1288, %v1385
      %v1408 = vadd.f32 %v1289, %v1390
      %v1409 = vadd.f32 %v1290, %v1393
      %v1410 = vadd.f32 %v1291, %v1398
      %v1411 = vadd.f32 %v1292, %v1401
      %v1412 = vld [vmem:[%s1293] sm:$0xe]
      %v1413 = vld [vmem:[%s1293 + $0x4] sm:$0x1]
      %v1414 = vld [vmem:[%s1293 + $0x8] sm:$0xe]
      %v1415 = vld [vmem:[%s1293 + $0xc] sm:$0x1]
      %v1416 = vld [vmem:[%s1293 + $0x10] sm:$0xe]
      %v1417 = vld [vmem:[%s1293 + $0x14] sm:$0x1]
      %v1418 = vld [vmem:[%s1293 + $0x18] sm:$0xe]
      %v1419 = vld [vmem:[%s1293 + $0x1c] sm:$0x1]
      %v1420 = vld [vmem:[%s1293 + $0x20] sm:$0xe]
      %v1421 = vld [vmem:[%s1293 + $0x24] sm:$0x1]
      %v1422 = vld [vmem:[%s1293 + $0x28] sm:$0xe]
      %v1423 = vld [vmem:[%s1293 + $0x2c] sm:$0x1]
      %v1424 = vld [vmem:[%s1293 + $0x30] sm:$0xe]
      %v1425 = vld [vmem:[%s1293 + $0x34] sm:$0x1]
      %v1426 = vld [vmem:[%s1293 + $0x38] sm:$0xe]
      %v1427 = vld [vmem:[%s1293 + $0x3c] sm:$0x1]
      %v1444 = vrot.slane %v1412, 5
      %v1445 = vrot.slane %v1444, 4
      %v1446 = vrot.slane %v1413, 5
      %v1447 = vsel %vm445, %v1445, %v1446
      %v1448 = vrot.slane %v1414, 5
      %v1449 = vrot.slane %v1448, 4
      %v1450 = vrot.slane %v1415, 5
      %v1451 = vsel %vm445, %v1449, %v1450
      %v1452 = vrot.slane %v1416, 5
      %v1453 = vrot.slane %v1452, 4
      %v1454 = vrot.slane %v1417, 5
      %v1455 = vsel %vm445, %v1453, %v1454
      %v1456 = vrot.slane %v1418, 5
      %v1457 = vrot.slane %v1456, 4
      %v1458 = vrot.slane %v1419, 5
      %v1459 = vsel %vm445, %v1457, %v1458
      %v1460 = vrot.slane %v1420, 5
      %v1461 = vrot.slane %v1460, 4
      %v1462 = vrot.slane %v1421, 5
      %v1463 = vsel %vm445, %v1461, %v1462
      %v1464 = vrot.slane %v1422, 5
      %v1465 = vrot.slane %v1464, 4
      %v1466 = vrot.slane %v1423, 5
      %v1467 = vsel %vm445, %v1465, %v1466
      %v1468 = vrot.slane %v1424, 5
      %v1469 = vrot.slane %v1468, 4
      %v1470 = vrot.slane %v1425, 5
      %v1471 = vsel %vm445, %v1469, %v1470
      %v1472 = vrot.slane %v1426, 5
      %v1473 = vrot.slane %v1472, 4
      %v1474 = vrot.slane %v1427, 5
      %v1475 = vsel %vm445, %v1473, %v1474
      %s1476 = scalar_lea.vmem %s3, 28
      %v1477 = vld [vmem:[%s1476] sm:$0xf]
      %v1478 = vunpack.c.l.b16 %v1447
      %v1479 = vunpack.c.l.b16 %v1451
      %v1480 = vunpack.c.l.b16 %v1455
      %v1481 = vunpack.c.l.b16 %v1459
      %v1482 = vunpack.c.l.b16 %v1463
      %v1483 = vunpack.c.l.b16 %v1467
      %v1484 = vunpack.c.l.b16 %v1471
      %v1485 = vunpack.c.l.b16 %v1475
      %v1486 = vpack.c.b16 %v1479, %v1478
      %v1487 = vpack.c.b16 %v1481, %v1480
      %v1488 = vpack.c.b16 %v1483, %v1482
      %v1489 = vpack.c.b16 %v1485, %v1484
      %v1491 = vsel %vm492, %v1486, 0
      %v1494 = vsel %vm492, %v1487, 0
      %v1497 = vsel %vm492, %v1488, 0
      %v1500 = vsel %vm492, %v1489, 0
      %v1503 = vsel %vm505, %v1477, 0
      %1505 = vmatprep.subr.bf16.mxu0 0
      %1506 = vmatpush1.bf16.msra.mxu0 %v1503
      %1507 = vmatprep.subr.bf16.mxu0 0
      %1508 = vmatpush1.bf16.msra.mxu0 0
      %1509 = vmatprep.subr.bf16.mxu0 0
      %1510 = vmatpush1.bf16.msra.mxu0 0
      %1511 = vmatprep.subr.bf16.mxu0 0
      %1512 = vmatpush1.bf16.msra.mxu0 0
      %1513 = vmatprep.subr.bf16.mxu0 0
      %1514 = vmatpush1.bf16.msra.mxu0 0
      %1515 = vmatprep.subr.bf16.mxu0 0
      %1516 = vmatpush1.bf16.msra.mxu0 0
      %1517 = vmatprep.subr.bf16.mxu0 0
      %1518 = vmatpush1.bf16.msra.mxu0 0
      %1519 = vmatprep.subr.bf16.mxu0 0
      %1520 = vmatpush1.bf16.msra.mxu0 0
      %1521 = vmatprep.subr.bf16.mxu0 0
      %1522 = vmatpush1.bf16.msra.mxu0 0
      %1523 = vmatprep.subr.bf16.mxu0 0
      %1524 = vmatpush1.bf16.msra.mxu0 0
      %1525 = vmatprep.subr.bf16.mxu0 0
      %1526 = vmatpush1.bf16.msra.mxu0 0
      %1527 = vmatprep.subr.bf16.mxu0 0
      %1528 = vmatpush1.bf16.msra.mxu0 0
      %1529 = vmatprep.subr.bf16.mxu0 0
      %1530 = vmatpush1.bf16.msra.mxu0 0
      %1531 = vmatprep.subr.bf16.mxu0 0
      %1532 = vmatpush1.bf16.msra.mxu0 0
      %1533 = vmatprep.subr.bf16.mxu0 0
      %1534 = vmatpush1.bf16.msra.mxu0 0
      %1535 = vmatprep.subr.bf16.mxu0 0
      %1536 = vmatpush1.bf16.msra.mxu0 0
      %1537 = vmatprep.mubr.bf16.mxu0 0
      %1538 = vmatmul.mubr.bf16.gmra.mrb[0].mxu0 %v1491
      %v1539 = vpop.f32.mrb[0].mxu0
      %v1540 = vadd.f32 0.0, %v1539
      %v1541 = vpop.f32.mrb[0].mxu0
      %v1542 = vpop.f32.mrb[0].mxu0
      %v1543 = vadd.f32 0.0, %v1542
      %v1544 = vpop.f32.mrb[0].mxu0
      %1545 = vmatprep.mubr.bf16.mxu0 0
      %1546 = vmatmul.mubr.bf16.gmra.mrb[0].mxu0 %v1494
      %v1547 = vpop.f32.mrb[0].mxu0
      %v1548 = vadd.f32 0.0, %v1547
      %v1549 = vpop.f32.mrb[0].mxu0
      %v1550 = vpop.f32.mrb[0].mxu0
      %v1551 = vadd.f32 0.0, %v1550
      %v1552 = vpop.f32.mrb[0].mxu0
      %1553 = vmatprep.mubr.bf16.mxu0 0
      %1554 = vmatmul.mubr.bf16.gmra.mrb[0].mxu0 %v1497
      %v1555 = vpop.f32.mrb[0].mxu0
      %v1556 = vadd.f32 0.0, %v1555
      %v1557 = vpop.f32.mrb[0].mxu0
      %v1558 = vpop.f32.mrb[0].mxu0
      %v1559 = vadd.f32 0.0, %v1558
      %v1560 = vpop.f32.mrb[0].mxu0
      %1561 = vmatprep.mubr.bf16.mxu0 0
      %1562 = vmatmul.mubr.bf16.gmra.mrb[0].mxu0 %v1500
      %v1563 = vpop.f32.mrb[0].mxu0
      %v1564 = vadd.f32 0.0, %v1563
      %v1565 = vpop.f32.mrb[0].mxu0
      %v1566 = vpop.f32.mrb[0].mxu0
      %v1567 = vadd.f32 0.0, %v1566
      %v1568 = vpop.f32.mrb[0].mxu0
      %1569 = vdwg.mxu0
      %v1570 = vadd.f32 %v1404, %v1540
      %v1571 = vadd.f32 %v1405, %v1543
      %v1572 = vadd.f32 %v1406, %v1548
      %v1573 = vadd.f32 %v1407, %v1551
      %v1574 = vadd.f32 %v1408, %v1556
      %v1575 = vadd.f32 %v1409, %v1559
      %v1576 = vadd.f32 %v1410, %v1564
      %v1577 = vadd.f32 %v1411, %v1567
      %v1578 = vld [vmem:[%s1293] sm:$0xc]
      %v1579 = vld [vmem:[%s1293 + $0x4] sm:$0x3]
      %v1580 = vld [vmem:[%s1293 + $0x8] sm:$0xc]
      %v1581 = vld [vmem:[%s1293 + $0xc] sm:$0x3]
      %v1582 = vld [vmem:[%s1293 + $0x10] sm:$0xc]
      %v1583 = vld [vmem:[%s1293 + $0x14] sm:$0x3]
      %v1584 = vld [vmem:[%s1293 + $0x18] sm:$0xc]
      %v1585 = vld [vmem:[%s1293 + $0x1c] sm:$0x3]
      %v1586 = vld [vmem:[%s1293 + $0x20] sm:$0xc]
      %v1587 = vld [vmem:[%s1293 + $0x24] sm:$0x3]
      %v1588 = vld [vmem:[%s1293 + $0x28] sm:$0xc]
      %v1589 = vld [vmem:[%s1293 + $0x2c] sm:$0x3]
      %v1590 = vld [vmem:[%s1293 + $0x30] sm:$0xc]
      %v1591 = vld [vmem:[%s1293 + $0x34] sm:$0x3]
      %v1592 = vld [vmem:[%s1293 + $0x38] sm:$0xc]
      %v1593 = vld [vmem:[%s1293 + $0x3c] sm:$0x3]
      %v1610 = vrot.slane %v1578, 6
      %v1611 = vrot.slane %v1610, 4
      %v1612 = vrot.slane %v1579, 6
      %v1613 = vsel %vm708, %v1611, %v1612
      %v1614 = vrot.slane %v1580, 6
      %v1615 = vrot.slane %v1614, 4
      %v1616 = vrot.slane %v1581, 6
      %v1617 = vsel %vm708, %v1615, %v1616
      %v1618 = vrot.slane %v1582, 6
      %v1619 = vrot.slane %v1618, 4
      %v1620 = vrot.slane %v1583, 6
      %v1621 = vsel %vm708, %v1619, %v1620
      %v1622 = vrot.slane %v1584, 6
      %v1623 = vrot.slane %v1622, 4
      %v1624 = vrot.slane %v1585, 6
      %v1625 = vsel %vm708, %v1623, %v1624
      %v1626 = vrot.slane %v1586, 6
      %v1627 = vrot.slane %v1626, 4
      %v1628 = vrot.slane %v1587, 6
      %v1629 = vsel %vm708, %v1627, %v1628
      %v1630 = vrot.slane %v1588, 6
      %v1631 = vrot.slane %v1630, 4
      %v1632 = vrot.slane %v1589, 6
      %v1633 = vsel %vm708, %v1631, %v1632
      %v1634 = vrot.slane %v1590, 6
      %v1635 = vrot.slane %v1634, 4
      %v1636 = vrot.slane %v1591, 6
      %v1637 = vsel %vm708, %v1635, %v1636
      %v1638 = vrot.slane %v1592, 6
      %v1639 = vrot.slane %v1638, 4
      %v1640 = vrot.slane %v1593, 6
      %v1641 = vsel %vm708, %v1639, %v1640
      %s1642 = scalar_lea.vmem %s3, 32
      %v1643 = vld [vmem:[%s1642] sm:$0xf]
      %v1644 = vunpack.c.l.b16 %v1613
      %v1645 = vunpack.c.l.b16 %v1617
      %v1646 = vunpack.c.l.b16 %v1621
      %v1647 = vunpack.c.l.b16 %v1625
      %v1648 = vunpack.c.l.b16 %v1629
      %v1649 = vunpack.c.l.b16 %v1633
      %v1650 = vunpack.c.l.b16 %v1637
      %v1651 = vunpack.c.l.b16 %v1641
      %v1652 = vpack.c.b16 %v1645, %v1644
      %v1653 = vpack.c.b16 %v1647, %v1646
      %v1654 = vpack.c.b16 %v1649, %v1648
      %v1655 = vpack.c.b16 %v1651, %v1650
      %v1657 = vsel %vm492, %v1652, 0
      %v1660 = vsel %vm492, %v1653, 0
      %v1663 = vsel %vm492, %v1654, 0
      %v1666 = vsel %vm492, %v1655, 0
      %v1669 = vsel %vm505, %v1643, 0
      %1671 = vmatprep.subr.bf16.mxu0 0
      %1672 = vmatpush1.bf16.msra.mxu0 %v1669
      %1673 = vmatprep.subr.bf16.mxu0 0
      %1674 = vmatpush1.bf16.msra.mxu0 0
      %1675 = vmatprep.subr.bf16.mxu0 0
      %1676 = vmatpush1.bf16.msra.mxu0 0
      %1677 = vmatprep.subr.bf16.mxu0 0
      %1678 = vmatpush1.bf16.msra.mxu0 0
      %1679 = vmatprep.subr.bf16.mxu0 0
      %1680 = vmatpush1.bf16.msra.mxu0 0
      %1681 = vmatprep.subr.bf16.mxu0 0
      %1682 = vmatpush1.bf16.msra.mxu0 0
      %1683 = vmatprep.subr.bf16.mxu0 0
      %1684 = vmatpush1.bf16.msra.mxu0 0
      %1685 = vmatprep.subr.bf16.mxu0 0
      %1686 = vmatpush1.bf16.msra.mxu0 0
      %1687 = vmatprep.subr.bf16.mxu0 0
      %1688 = vmatpush1.bf16.msra.mxu0 0
      %1689 = vmatprep.subr.bf16.mxu0 0
      %1690 = vmatpush1.bf16.msra.mxu0 0
      %1691 = vmatprep.subr.bf16.mxu0 0
      %1692 = vmatpush1.bf16.msra.mxu0 0
      %1693 = vmatprep.subr.bf16.mxu0 0
      %1694 = vmatpush1.bf16.msra.mxu0 0
      %1695 = vmatprep.subr.bf16.mxu0 0
      %1696 = vmatpush1.bf16.msra.mxu0 0
      %1697 = vmatprep.subr.bf16.mxu0 0
      %1698 = vmatpush1.bf16.msra.mxu0 0
      %1699 = vmatprep.subr.bf16.mxu0 0
      %1700 = vmatpush1.bf16.msra.mxu0 0
      %1701 = vmatprep.subr.bf16.mxu0 0
      %1702 = vmatpush1.bf16.msra.mxu0 0
      %1703 = vmatprep.mubr.bf16.mxu0 0
      %1704 = vmatmul.mubr.bf16.gmra.mrb[0].mxu0 %v1657
      %v1705 = vpop.f32.mrb[0].mxu0
      %v1706 = vadd.f32 0.0, %v1705
      %v1707 = vpop.f32.mrb[0].mxu0
      %v1708 = vpop.f32.mrb[0].mxu0
      %v1709 = vadd.f32 0.0, %v1708
      %v1710 = vpop.f32.mrb[0].mxu0
      %1711 = vmatprep.mubr.bf16.mxu0 0
      %1712 = vmatmul.mubr.bf16.gmra.mrb[0].mxu0 %v1660
      %v1713 = vpop.f32.mrb[0].mxu0
      %v1714 = vadd.f32 0.0, %v1713
      %v1715 = vpop.f32.mrb[0].mxu0
      %v1716 = vpop.f32.mrb[0].mxu0
      %v1717 = vadd.f32 0.0, %v1716
      %v1718 = vpop.f32.mrb[0].mxu0
      %1719 = vmatprep.mubr.bf16.mxu0 0
      %1720 = vmatmul.mubr.bf16.gmra.mrb[0].mxu0 %v1663
      %v1721 = vpop.f32.mrb[0].mxu0
      %v1722 = vadd.f32 0.0, %v1721
      %v1723 = vpop.f32.mrb[0].mxu0
      %v1724 = vpop.f32.mrb[0].mxu0
      %v1725 = vadd.f32 0.0, %v1724
      %v1726 = vpop.f32.mrb[0].mxu0
      %1727 = vmatprep.mubr.bf16.mxu0 0
      %1728 = vmatmul.mubr.bf16.gmra.mrb[0].mxu0 %v1666
      %v1729 = vpop.f32.mrb[0].mxu0
      %v1730 = vadd.f32 0.0, %v1729
      %v1731 = vpop.f32.mrb[0].mxu0
      %v1732 = vpop.f32.mrb[0].mxu0
      %v1733 = vadd.f32 0.0, %v1732
      %v1734 = vpop.f32.mrb[0].mxu0
      %1735 = vdwg.mxu0
      %v1736 = vadd.f32 %v1570, %v1706
      %v1737 = vadd.f32 %v1571, %v1709
      %v1738 = vadd.f32 %v1572, %v1714
      %v1739 = vadd.f32 %v1573, %v1717
      %v1740 = vadd.f32 %v1574, %v1722
      %v1741 = vadd.f32 %v1575, %v1725
      %v1742 = vadd.f32 %v1576, %v1730
      %v1743 = vadd.f32 %v1577, %v1733
      %v1744 = vpack.c.bf16 %v1736, %v1736
      %v1745 = vpack.c.bf16 %v1737, %v1737
      %v1746 = vpack.c.bf16 %v1738, %v1738
      %v1747 = vpack.c.bf16 %v1739, %v1739
      %v1748 = vpack.c.bf16 %v1740, %v1740
      %v1749 = vpack.c.bf16 %v1741, %v1741
      %v1750 = vpack.c.bf16 %v1742, %v1742
      %v1751 = vpack.c.bf16 %v1743, %v1743
      %1752 = vst.msk [vmem:[%s231] sm:$0xf] %vm291, %v1744
      %1753 = vst.msk [vmem:[%s231 + $0x4] sm:$0xf] %vm291, %v1745
      %1754 = vst.msk [vmem:[%s231 + $0x8] sm:$0xf] %vm291, %v1746
      %1755 = vst.msk [vmem:[%s231 + $0xc] sm:$0xf] %vm291, %v1747
      %1756 = vst.msk [vmem:[%s231 + $0x10] sm:$0xf] %vm291, %v1748
      %1757 = vst.msk [vmem:[%s231 + $0x14] sm:$0xf] %vm291, %v1749
      %1758 = vst.msk [vmem:[%s231 + $0x18] sm:$0xf] %vm291, %v1750
      %1759 = vst.msk [vmem:[%s231 + $0x1c] sm:$0xf] %vm291, %v1751
      %v1760 = vsel %vm492, %v1736, 0.0
      %v1761 = vsel %vm492, %v1737, 0.0
      %v1762 = vadd.f32 %v1760, %v1761
      %v1763 = vsel %vm492, %v1738, 0.0
      %v1764 = vadd.f32 %v1762, %v1763
      %v1765 = vsel %vm492, %v1739, 0.0
      %v1766 = vadd.f32 %v1764, %v1765
      %v1767 = vsel %vm492, %v1740, 0.0
      %v1768 = vadd.f32 %v1766, %v1767
      %v1769 = vsel %vm492, %v1741, 0.0
      %v1770 = vadd.f32 %v1768, %v1769
      %v1771 = vsel %vm492, %v1742, 0.0
      %v1772 = vadd.f32 %v1770, %v1771
      %v1773 = vsel %vm492, %v1743, 0.0
      %v1774 = vadd.f32 %v1772, %v1773
      %v1775 = vrot.slane %v1774, 4
      %v1776 = vadd.f32 %v1774, %v1775
      %v1777 = vrot.slane %v1776, 2
      %v1778 = vadd.f32 %v1776, %v1777
      %v1779 = vrot.slane %v1778, 1
      %v1780 = vadd.f32 %v1778, %v1779
      %v1781 = vmul.f32 %v1736, %v1736
      %v1782 = vmul.f32 %v1737, %v1737
      %v1783 = vmul.f32 %v1738, %v1738
      %v1784 = vmul.f32 %v1739, %v1739
      %v1785 = vmul.f32 %v1740, %v1740
      %v1786 = vmul.f32 %v1741, %v1741
      %v1787 = vmul.f32 %v1742, %v1742
      %v1788 = vmul.f32 %v1743, %v1743
      %v1789 = vsel %vm492, %v1781, 0.0
      %v1790 = vsel %vm492, %v1782, 0.0
      %v1791 = vadd.f32 %v1789, %v1790
      %v1792 = vsel %vm492, %v1783, 0.0
      %v1793 = vadd.f32 %v1791, %v1792
      %v1794 = vsel %vm492, %v1784, 0.0
      %v1795 = vadd.f32 %v1793, %v1794
      %v1796 = vsel %vm492, %v1785, 0.0
      %v1797 = vadd.f32 %v1795, %v1796
      %v1798 = vsel %vm492, %v1786, 0.0
      %v1799 = vadd.f32 %v1797, %v1798
      %v1800 = vsel %vm492, %v1787, 0.0
      %v1801 = vadd.f32 %v1799, %v1800
      %v1802 = vsel %vm492, %v1788, 0.0
      %v1803 = vadd.f32 %v1801, %v1802
      %v1804 = vrot.slane %v1803, 4
      %v1805 = vadd.f32 %v1803, %v1804
      %v1806 = vrot.slane %v1805, 2
      %v1807 = vadd.f32 %v1805, %v1806
      %v1808 = vrot.slane %v1807, 1
      %v1809 = vadd.f32 %v1807, %v1808
      %vm1810 = vcmask 1040384
      %v1811 = vsel %vm1810, %v1780, %v1809
      %1812 = vst.msk [vmem:[%s235] sm:$0x3] %vm293, %v1811
      %p1813 = scmp.lt.s32.totalorder %s17, 1
      %s1814 = scalar_select %p1813, %s17, 1
      %s1815 = smul.addr %s1814, 8
      %s1816 = smul.addr %s1815, 4
      %s1817 = scalar_lea.vmem %s4, %s1816
      %p1818 = scmp.lt.s32.totalorder %s17, 1
      %s1819 = scalar_select %p1818, %s17, 1
      %s1820 = smul.addr %s1819, 2
      %s1821 = scalar_lea.vmem %s5, %s1820
      // Predicated region
      $region37: #{clique_block_forward.13} parent=35 // pred_check
        %p1822 = pneg %p124
      $region38: #{clique_block_forward.13} parent=35 // pred_check_branch
        %1824 = sbr.rel (%p1822) target = $region40
      $region39: #{clique_block_forward.13} parent=35 // pred_region
        _
      $region40: #{clique_block_forward.13} parent=35 // pred_fallthru
        _
      // Predicated region
      $region41: #{clique_block_forward.13} parent=35 // pred_check
        %p1825 = pneg %p150
      $region42: #{clique_block_forward.13} parent=35 // pred_check_branch
        %1827 = sbr.rel (%p1825) target = $region44
      $region43: #{clique_block_forward.13} parent=35 // pred_region
        _
      $region44: #{clique_block_forward.13} parent=35 // pred_fallthru
        _
    $region36: #{clique_block_forward.13} parent=5 // pred_fallthru
      _
    %p1828 = scmp.le.s32.totalorder 2, %s12
    // Predicated region
    $region45: #{clique_block_forward.13} parent=5 // pred_check
      %p1829 = pneg %p1828
    $region46: #{clique_block_forward.13} parent=5 // pred_check_branch
      %1831 = sbr.rel (%p1829) target = $region48
    $region47: #{clique_block_forward.13} parent=5 // pred_region
      %s1832 = ssub.s32 %s12, 2
      // Predicated region
      $region49: #{clique_block_forward.13} parent=47 // pred_check
        %p1833 = pneg %p130
      $region50: #{clique_block_forward.13} parent=47 // pred_check_branch
        %1835 = sbr.rel (%p1833) target = $region52
      $region51: #{clique_block_forward.13} parent=47 // pred_region
        %p1836 = scmp.lt.s32.totalorder %s18, 1
        %s1837 = scalar_select %p1836, %s18, 1
        %s1838 = smul.addr %s1837, 8
        %s1839 = smul.addr %s1838, 4
        %s1840 = scalar_lea.vmem %s4, %s1839
      $region52: #{clique_block_forward.13} parent=47 // pred_fallthru
        _
      // Predicated region
      $region53: #{clique_block_forward.13} parent=47 // pred_check
        %p1841 = pneg %p156
      $region54: #{clique_block_forward.13} parent=47 // pred_check_branch
        %1843 = sbr.rel (%p1841) target = $region56
      $region55: #{clique_block_forward.13} parent=47 // pred_region
        %p1844 = scmp.lt.s32.totalorder %s18, 1
        %s1845 = scalar_select %p1844, %s18, 1
        %s1846 = smul.addr %s1845, 2
        %s1847 = scalar_lea.vmem %s5, %s1846
      $region56: #{clique_block_forward.13} parent=47 // pred_fallthru
        _
    $region48: #{clique_block_forward.13} parent=5 // pred_fallthru
      _
  $region6: #{clique_block_forward.13} parent=0 // loop_footer
    %s16 = sadd.s32 1, %s12
  $region7: #{clique_block_forward.13} parent=0 // loop_footer_branch
    %11 = sbr.rel target = $region3
  $region8: #{clique_block_forward.13} parent=0 // loop_exit
    _

// kernel: clique_block_forward.18
$region0: #{clique_block_forward.18}
  #allocation0 [shape = 'u32[]', space=smem, size = 0x4, offset = 0x4, fixed_abs, tag = 'smem constant byte address 0x4 - core index']
  #allocation1 [shape = 'u32[144,128]{1,0:T(1,128)}', space=vmem, size = 0x12000, scoped, tag = 'internal scratch']
  #allocation2 [shape = 'bf16[64,16]{1,0:T(16,128)(2,1)}', space=vmem, size = 0x4000, scoped, tag = 'scratch operand']
  %s0 = inlined_call_operand.vmem [shape: bf16[128,8], index: 0, kind: input, shape index: {}]
  %s1 = inlined_call_operand.vmem [shape: bf16[128,8], index: 1, kind: input, shape index: {}]
  %s2 = inlined_call_operand.vmem [shape: f32[1,8], index: 2, kind: input, shape index: {}]
  %s3 = inlined_call_operand.vmem [shape: f32[1,8], index: 3, kind: input, shape index: {}]
  %s4 = inlined_call_operand.vmem [shape: f32[1,8], index: 4, kind: input, shape index: {}]
  %s5 = inlined_call_operand.vmem [shape: f32[1,8], index: 5, kind: input, shape index: {}]
  %s6 = inlined_call_operand.vmem [shape: bf16[16,8], index: 6, kind: input, shape index: {}]
  %s7 = inlined_call_operand.vmem [shape: bf16[128,8], index: 7, kind: output, shape index: {0}]
  %s8 = inlined_call_operand.vmem [shape: f32[2,2,8], index: 8, kind: output, shape index: {1}]
  %9 = xla_tuple %s7, %s8
  %s10 = sld [smem:[#allocation0]]
  $region69: #{clique_block_forward.18} parent=0
    _
  %s12 = ssub.s32 1, %s10
  %s13 = scalar_select 0, %s12, %s10
  loop: start=0, step=1, limit=4
  $region2: #{clique_block_forward.18} parent=0 // loop_pre_header
    _
  $region3: #{clique_block_forward.18} parent=0 // loop_header
    %s15 = sphi 0, %s19
    %p16 = scmp.ge.s32.totalorder %s15, 4
    %s25 = sphi 0, %s27
    %s28 = sphi 0, %s25
    %s29 = sphi 0, %s28
    %s45 = sphi 0, %s29
    %s51 = sphi 0, %s53
    %s54 = sphi 0, %s51
    %s55 = sphi 0, %s54
    %s71 = sphi 0, %s55
    %s75 = sphi 0, %s75
    %s77 = sphi 0, %s75
    %s78 = sphi 0, %s77
    %s92 = sphi 0, %s78
    %s96 = sphi 0, %s96
    %s98 = sphi 0, %s96
    %s99 = sphi 0, %s98
    %s113 = sphi 0, %s99
    %s117 = sphi 0, %s117
    %s119 = sphi 0, %s117
    %s120 = sphi 0, %s119
    %s134 = sphi 0, %s120
    %s138 = sphi 0, %s138
    %s140 = sphi 0, %s138
    %s141 = sphi 0, %s140
    %s155 = sphi 0, %s141
    %s159 = sphi 0, %s159
    %s161 = sphi 0, %s159
    %s162 = sphi 0, %s161
    %s176 = sphi 0, %s162
    %s182 = sphi 0, %s184
    %s185 = sphi 0, %s182
    %s186 = sphi 0, %s185
    %s202 = sphi 0, %s186
    %s208 = sphi 0, %s210
    %s211 = sphi 0, %s208
    %s212 = sphi 0, %s211
    %s228 = sphi 0, %s212
  $region4: #{clique_block_forward.18} parent=0 // loop_header_branch
    %18 = sbr.rel (%p16) target = $region8
  $region5: #{clique_block_forward.18} parent=0 // loop_body
    %s20 = ssub.s32 %s15, 1
    %s21 = ssub.s32 %s15, 2
    %s22 = sadd.s32 %s15, 1
    %s23 = ssub.s32 %s15, %s22
    %p24 = scmp.eq.s32.totalorder %s23, 0
    %s26 = sadd.s32 %s25, 1
    %s27 = scalar_select %p24, %s25, %s26
    %p30 = pneg %p24
    %p31 = scmp.eq.s32.totalorder %s15, 1
    %p32 = por %p30, %p31
    %p33 = scmp.ne.s32.totalorder %s25, %s28
    %p34 = scmp.eq.s32.totalorder %s15, 0
    %p35 = por %p33, %p34
    %p36 = scmp.ne.s32.totalorder %s25, %s28
    %p37 = scmp.eq.s32.totalorder %s20, 1
    %p38 = por %p36, %p37
    %p39 = scmp.ne.s32.totalorder %s28, %s29
    %p40 = scmp.eq.s32.totalorder %s20, 0
    %p41 = por %p39, %p40
    %p42 = scmp.ne.s32.totalorder %s28, %s29
    %p43 = scmp.eq.s32.totalorder %s21, 1
    %p44 = por %p42, %p43
    %p46 = scmp.ne.s32.totalorder %s29, %s45
    %p47 = scmp.eq.s32.totalorder %s21, 0
    %p48 = por %p46, %p47
    %s49 = ssub.s32 %s15, %s22
    %p50 = scmp.eq.s32.totalorder %s49, 0
    %s52 = sadd.s32 %s51, 1
    %s53 = scalar_select %p50, %s51, %s52
    %p56 = pneg %p50
    %p57 = scmp.eq.s32.totalorder %s15, 1
    %p58 = por %p56, %p57
    %p59 = scmp.ne.s32.totalorder %s51, %s54
    %p60 = scmp.eq.s32.totalorder %s15, 0
    %p61 = por %p59, %p60
    %p62 = scmp.ne.s32.totalorder %s51, %s54
    %p63 = scmp.eq.s32.totalorder %s20, 1
    %p64 = por %p62, %p63
    %p65 = scmp.ne.s32.totalorder %s54, %s55
    %p66 = scmp.eq.s32.totalorder %s20, 0
    %p67 = por %p65, %p66
    %p68 = scmp.ne.s32.totalorder %s54, %s55
    %p69 = scmp.eq.s32.totalorder %s21, 1
    %p70 = por %p68, %p69
    %p72 = scmp.ne.s32.totalorder %s55, %s71
    %p73 = scmp.eq.s32.totalorder %s21, 0
    %p74 = por %p72, %p73
    %s76 = sadd.s32 %s75, 1
    %p79 = scmp.eq.s32.totalorder %s15, 1
    %p80 = scmp.ne.s32.totalorder %s75, %s77
    %p81 = scmp.eq.s32.totalorder %s15, 0
    %p82 = por %p80, %p81
    %p83 = scmp.ne.s32.totalorder %s75, %s77
    %p84 = scmp.eq.s32.totalorder %s20, 1
    %p85 = por %p83, %p84
    %p86 = scmp.ne.s32.totalorder %s77, %s78
    %p87 = scmp.eq.s32.totalorder %s20, 0
    %p88 = por %p86, %p87
    %p89 = scmp.ne.s32.totalorder %s77, %s78
    %p90 = scmp.eq.s32.totalorder %s21, 1
    %p91 = por %p89, %p90
    %p93 = scmp.ne.s32.totalorder %s78, %s92
    %p94 = scmp.eq.s32.totalorder %s21, 0
    %p95 = por %p93, %p94
    %s97 = sadd.s32 %s96, 1
    %p100 = scmp.eq.s32.totalorder %s15, 1
    %p101 = scmp.ne.s32.totalorder %s96, %s98
    %p102 = scmp.eq.s32.totalorder %s15, 0
    %p103 = por %p101, %p102
    %p104 = scmp.ne.s32.totalorder %s96, %s98
    %p105 = scmp.eq.s32.totalorder %s20, 1
    %p106 = por %p104, %p105
    %p107 = scmp.ne.s32.totalorder %s98, %s99
    %p108 = scmp.eq.s32.totalorder %s20, 0
    %p109 = por %p107, %p108
    %p110 = scmp.ne.s32.totalorder %s98, %s99
    %p111 = scmp.eq.s32.totalorder %s21, 1
    %p112 = por %p110, %p111
    %p114 = scmp.ne.s32.totalorder %s99, %s113
    %p115 = scmp.eq.s32.totalorder %s21, 0
    %p116 = por %p114, %p115
    %s118 = sadd.s32 %s117, 1
    %p121 = scmp.eq.s32.totalorder %s15, 1
    %p122 = scmp.ne.s32.totalorder %s117, %s119
    %p123 = scmp.eq.s32.totalorder %s15, 0
    %p124 = por %p122, %p123
    %p125 = scmp.ne.s32.totalorder %s117, %s119
    %p126 = scmp.eq.s32.totalorder %s20, 1
    %p127 = por %p125, %p126
    %p128 = scmp.ne.s32.totalorder %s119, %s120
    %p129 = scmp.eq.s32.totalorder %s20, 0
    %p130 = por %p128, %p129
    %p131 = scmp.ne.s32.totalorder %s119, %s120
    %p132 = scmp.eq.s32.totalorder %s21, 1
    %p133 = por %p131, %p132
    %p135 = scmp.ne.s32.totalorder %s120, %s134
    %p136 = scmp.eq.s32.totalorder %s21, 0
    %p137 = por %p135, %p136
    %s139 = sadd.s32 %s138, 1
    %p142 = scmp.eq.s32.totalorder %s15, 1
    %p143 = scmp.ne.s32.totalorder %s138, %s140
    %p144 = scmp.eq.s32.totalorder %s15, 0
    %p145 = por %p143, %p144
    %p146 = scmp.ne.s32.totalorder %s138, %s140
    %p147 = scmp.eq.s32.totalorder %s20, 1
    %p148 = por %p146, %p147
    %p149 = scmp.ne.s32.totalorder %s140, %s141
    %p150 = scmp.eq.s32.totalorder %s20, 0
    %p151 = por %p149, %p150
    %p152 = scmp.ne.s32.totalorder %s140, %s141
    %p153 = scmp.eq.s32.totalorder %s21, 1
    %p154 = por %p152, %p153
    %p156 = scmp.ne.s32.totalorder %s141, %s155
    %p157 = scmp.eq.s32.totalorder %s21, 0
    %p158 = por %p156, %p157
    %s160 = sadd.s32 %s159, 1
    %p163 = scmp.eq.s32.totalorder %s15, 1
    %p164 = scmp.ne.s32.totalorder %s159, %s161
    %p165 = scmp.eq.s32.totalorder %s15, 0
    %p166 = por %p164, %p165
    %p167 = scmp.ne.s32.totalorder %s159, %s161
    %p168 = scmp.eq.s32.totalorder %s20, 1
    %p169 = por %p167, %p168
    %p170 = scmp.ne.s32.totalorder %s161, %s162
    %p171 = scmp.eq.s32.totalorder %s20, 0
    %p172 = por %p170, %p171
    %p173 = scmp.ne.s32.totalorder %s161, %s162
    %p174 = scmp.eq.s32.totalorder %s21, 1
    %p175 = por %p173, %p174
    %p177 = scmp.ne.s32.totalorder %s162, %s176
    %p178 = scmp.eq.s32.totalorder %s21, 0
    %p179 = por %p177, %p178
    %s180 = ssub.s32 %s15, %s22
    %p181 = scmp.eq.s32.totalorder %s180, 0
    %s183 = sadd.s32 %s182, 1
    %s184 = scalar_select %p181, %s182, %s183
    %p187 = pneg %p181
    %p188 = scmp.eq.s32.totalorder %s15, 1
    %p189 = por %p187, %p188
    %p190 = scmp.ne.s32.totalorder %s182, %s185
    %p191 = scmp.eq.s32.totalorder %s15, 0
    %p192 = por %p190, %p191
    %p193 = scmp.ne.s32.totalorder %s182, %s185
    %p194 = scmp.eq.s32.totalorder %s20, 1
    %p195 = por %p193, %p194
    %p196 = scmp.ne.s32.totalorder %s185, %s186
    %p197 = scmp.eq.s32.totalorder %s20, 0
    %p198 = por %p196, %p197
    %p199 = scmp.ne.s32.totalorder %s185, %s186
    %p200 = scmp.eq.s32.totalorder %s21, 1
    %p201 = por %p199, %p200
    %p203 = scmp.ne.s32.totalorder %s186, %s202
    %p204 = scmp.eq.s32.totalorder %s21, 0
    %p205 = por %p203, %p204
    %s206 = ssub.s32 %s15, %s22
    %p207 = scmp.eq.s32.totalorder %s206, 0
    %s209 = sadd.s32 %s208, 1
    %s210 = scalar_select %p207, %s208, %s209
    %p213 = pneg %p207
    %p214 = scmp.eq.s32.totalorder %s15, 1
    %p215 = por %p213, %p214
    %p216 = scmp.ne.s32.totalorder %s208, %s211
    %p217 = scmp.eq.s32.totalorder %s15, 0
    %p218 = por %p216, %p217
    %p219 = scmp.ne.s32.totalorder %s208, %s211
    %p220 = scmp.eq.s32.totalorder %s20, 1
    %p221 = por %p219, %p220
    %p222 = scmp.ne.s32.totalorder %s211, %s212
    %p223 = scmp.eq.s32.totalorder %s20, 0
    %p224 = por %p222, %p223
    %p225 = scmp.ne.s32.totalorder %s211, %s212
    %p226 = scmp.eq.s32.totalorder %s21, 1
    %p227 = por %p225, %p226
    %p229 = scmp.ne.s32.totalorder %s212, %s228
    %p230 = scmp.eq.s32.totalorder %s21, 0
    %p231 = por %p229, %p230
    %p232 = scmp.le.s32.totalorder 1, %s15
    %p233 = scmp.lt.s32.totalorder %s15, 3
    %p234 = pnand %p232, %p233
    %p235 = pneg %p234
    // Predicated region
    $region9: #{clique_block_forward.18} parent=5 // pred_check
      _
    $region10: #{clique_block_forward.18} parent=5 // pred_check_branch
      %237 = sbr.rel (%p234) target = $region12
    $region11: #{clique_block_forward.18} parent=5 // pred_region
      %s238 = ssub.s32 %s15, 1
      // Predicated region
      $region13: #{clique_block_forward.18} parent=11 // pred_check
        %p239 = pneg %p88
      $region14: #{clique_block_forward.18} parent=11 // pred_check_branch
        %241 = sbr.rel (%p239) target = $region16
      $region15: #{clique_block_forward.18} parent=11 // pred_region
        _
      $region16: #{clique_block_forward.18} parent=11 // pred_fallthru
        _
      // Predicated region
      $region17: #{clique_block_forward.18} parent=11 // pred_check
        %p242 = pneg %p109
      $region18: #{clique_block_forward.18} parent=11 // pred_check_branch
        %244 = sbr.rel (%p242) target = $region20
      $region19: #{clique_block_forward.18} parent=11 // pred_region
        _
      $region20: #{clique_block_forward.18} parent=11 // pred_fallthru
        _
      // Predicated region
      $region21: #{clique_block_forward.18} parent=11 // pred_check
        %p245 = pneg %p130
      $region22: #{clique_block_forward.18} parent=11 // pred_check_branch
        %247 = sbr.rel (%p245) target = $region24
      $region23: #{clique_block_forward.18} parent=11 // pred_region
        _
      $region24: #{clique_block_forward.18} parent=11 // pred_fallthru
        _
      // Predicated region
      $region25: #{clique_block_forward.18} parent=11 // pred_check
        %p248 = pneg %p151
      $region26: #{clique_block_forward.18} parent=11 // pred_check_branch
        %250 = sbr.rel (%p248) target = $region28
      $region27: #{clique_block_forward.18} parent=11 // pred_region
        _
      $region28: #{clique_block_forward.18} parent=11 // pred_fallthru
        _
      // Predicated region
      $region29: #{clique_block_forward.18} parent=11 // pred_check
        %p251 = pneg %p172
      $region30: #{clique_block_forward.18} parent=11 // pred_check_branch
        %253 = sbr.rel (%p251) target = $region32
      $region31: #{clique_block_forward.18} parent=11 // pred_region
        _
      $region32: #{clique_block_forward.18} parent=11 // pred_fallthru
        _
    $region12: #{clique_block_forward.18} parent=5 // pred_fallthru
      _
    %p254 = scmp.lt.s32.totalorder %s15, 2
    // Predicated region
    $region33: #{clique_block_forward.18} parent=5 // pred_check
      %p255 = pneg %p254
    $region34: #{clique_block_forward.18} parent=5 // pred_check_branch
      %257 = sbr.rel (%p255) target = $region36
    $region35: #{clique_block_forward.18} parent=5 // pred_region
      // Predicated region
      $region37: #{clique_block_forward.18} parent=35 // pred_check
        %p258 = pneg %p35
      $region38: #{clique_block_forward.18} parent=35 // pred_check_branch
        %260 = sbr.rel (%p258) target = $region40
      $region39: #{clique_block_forward.18} parent=35 // pred_region
        %s261 = smul.u32 8, %s15
        %p262 = scmp.lt.s32.totalorder %s261, 15
        %s263 = scalar_select %p262, %s261, 15
        %s264 = smul.addr %s263, 4
        %s265 = scalar_lea.vmem %s0, %s264
        %s266 = smul.u32 8, %s15
      $region40: #{clique_block_forward.18} parent=35 // pred_fallthru
        _
      // Predicated region
      $region41: #{clique_block_forward.18} parent=35 // pred_check
        %p267 = pneg %p61
      $region42: #{clique_block_forward.18} parent=35 // pred_check_branch
        %269 = sbr.rel (%p267) target = $region44
      $region43: #{clique_block_forward.18} parent=35 // pred_region
        %s270 = smul.u32 8, %s15
        %p271 = scmp.lt.s32.totalorder %s270, 15
        %s272 = scalar_select %p271, %s270, 15
        %s273 = smul.addr %s272, 4
        %s274 = scalar_lea.vmem %s1, %s273
        %s275 = smul.u32 8, %s15
      $region44: #{clique_block_forward.18} parent=35 // pred_fallthru
        _
    $region36: #{clique_block_forward.18} parent=5 // pred_fallthru
      _
    %p276 = scmp.le.s32.totalorder 1, %s15
    %p277 = scmp.lt.s32.totalorder %s15, 3
    %p278 = pnand %p276, %p277
    %p279 = pneg %p278
    // Predicated region
    $region45: #{clique_block_forward.18} parent=5 // pred_check
      _
    $region46: #{clique_block_forward.18} parent=5 // pred_check_branch
      %281 = sbr.rel (%p278) target = $region48
    $region47: #{clique_block_forward.18} parent=5 // pred_region
      %s282 = ssub.s32 %s15, 1
      %s283 = smul.u32 8, %s20
      %p284 = scmp.lt.s32.totalorder %s283, 15
      %s285 = scalar_select %p284, %s283, 15
      %s286 = smul.addr %s285, 4
      %s287 = scalar_lea.vmem %s0, %s286
      %p288 = pneg %p41
      %p289 = pneg %p38
      %s290 = smul.u32 8, %s20
      %p291 = scmp.lt.s32.totalorder %s290, 15
      %s292 = scalar_select %p291, %s290, 15
      %s293 = smul.addr %s292, 4
      %s294 = scalar_lea.vmem %s1, %s293
      %p295 = pneg %p67
      %p296 = pneg %p64
      %p297 = pneg %p88
      %p298 = pneg %p85
      %p299 = pneg %p109
      %p300 = pneg %p106
      %p301 = pneg %p130
      %p302 = pneg %p127
      %p303 = pneg %p151
      %p304 = pneg %p148
      %p305 = pneg %p172
      %p306 = pneg %p169
      %p307 = pneg %p198
      %p308 = pneg %p195
      %s309 = smul.u32 8, %s20
      %p310 = scmp.lt.s32.totalorder %s309, 15
      %s311 = scalar_select %p310, %s309, 15
      %s312 = smul.addr %s311, 4
      %s313 = scalar_lea.vmem %s7, %s312
      %p314 = pneg %p224
      %p315 = pneg %p221
      %p316 = scmp.lt.s32.totalorder %s20, 1
      %s317 = scalar_select %p316, %s20, 1
      %s318 = smul.addr %s317, 2
      %s319 = scalar_lea.vmem %s8, %s318
      %s320 = smul.u32 8, %s20
      %p321 = scmp.lt.s32.totalorder %s320, 15
      %s322 = scalar_select %p321, %s320, 15
      %s323 = smul.addr %s322, 4
      %s324 = scalar_lea.vmem %s0, %s323
      %s325 = smul.u32 8, %s20
      %s326 = smul.u32 8, %s20
      %p327 = scmp.lt.s32.totalorder %s326, 15
      %s328 = scalar_select %p327, %s326, 15
      %s329 = smul.addr %s328, 4
      %s330 = scalar_lea.vmem %s1, %s329
      %s331 = smul.u32 8, %s20
      %s332 = smul.u32 8, %s20
      %p333 = scmp.lt.s32.totalorder %s332, 15
      %s334 = scalar_select %p333, %s332, 15
      %s335 = smul.addr %s334, 4
      %s336 = scalar_lea.vmem %s7, %s335
      %s337 = smul.u32 8, %s20
      %p338 = scmp.lt.s32.totalorder %s20, 1
      %s339 = scalar_select %p338, %s20, 1
      %s340 = smul.addr %s339, 2
      %s341 = scalar_lea.vmem %s8, %s340
      %v343 = vld [vmem:[%s324] sm:$0xf]
      %v344 = vld [vmem:[%s324 + $0x4] sm:$0xf]
      %v345 = vld [vmem:[%s324 + $0x8] sm:$0xf]
      %v346 = vld [vmem:[%s324 + $0xc] sm:$0xf]
      %v347 = vld [vmem:[%s324 + $0x10] sm:$0xf]
      %v348 = vld [vmem:[%s324 + $0x14] sm:$0xf]
      %v349 = vld [vmem:[%s324 + $0x18] sm:$0xf]
      %v350 = vld [vmem:[%s324 + $0x1c] sm:$0xf]
      %v351 = vunpack.c.l.bf16 %v343
      %v352 = vunpack.c.l.bf16 %v344
      %v353 = vunpack.c.l.bf16 %v345
      %v354 = vunpack.c.l.bf16 %v346
      %v355 = vunpack.c.l.bf16 %v347
      %v356 = vunpack.c.l.bf16 %v348
      %v357 = vunpack.c.l.bf16 %v349
      %v358 = vunpack.c.l.bf16 %v350
      %v359 = vld [vmem:[%s2] sm:$0x1]
      %v361 = vlaneseq
      %v362 = vshrl.u32 %v361, 7
      %v363 = vsub.s32 0, %v362
      %v364 = vrot.slane %v359, %v363
      %v366 = vmul.f32 %v351, %v364
      %v367 = vmul.f32 %v352, %v364
      %v368 = vmul.f32 %v353, %v364
      %v369 = vmul.f32 %v354, %v364
      %v370 = vmul.f32 %v355, %v364
      %v371 = vmul.f32 %v356, %v364
      %v372 = vmul.f32 %v357, %v364
      %v373 = vmul.f32 %v358, %v364
      %v374 = vld [vmem:[%s4] sm:$0x1]
      %v376 = vlaneseq
      %v377 = vshrl.u32 %v376, 7
      %v378 = vsub.s32 0, %v377
      %v379 = vrot.slane %v374, %v378
      %v381 = vadd.f32 %v366, %v379
      %v382 = vadd.f32 %v367, %v379
      %v383 = vadd.f32 %v368, %v379
      %v384 = vadd.f32 %v369, %v379
      %v385 = vadd.f32 %v370, %v379
      %v386 = vadd.f32 %v371, %v379
      %v387 = vadd.f32 %v372, %v379
      %v388 = vadd.f32 %v373, %v379
      %v389 = vmax.f32 %v381, 0.0
      %v390 = vmax.f32 %v382, 0.0
      %v391 = vmax.f32 %v383, 0.0
      %v392 = vmax.f32 %v384, 0.0
      %v393 = vmax.f32 %v385, 0.0
      %v394 = vmax.f32 %v386, 0.0
      %v395 = vmax.f32 %v387, 0.0
      %v396 = vmax.f32 %v388, 0.0
      %v397 = vpack.c.bf16 %v390, %v389
      %v398 = vpack.c.bf16 %v392, %v391
      %v399 = vpack.c.bf16 %v394, %v393
      %v400 = vpack.c.bf16 %v396, %v395
      %vm401 = vcmask 64512
      %402 = vst.msk [vmem:[#allocation2] sm:$0xff] %vm401, %v397
      %403 = vst.msk [vmem:[#allocation2 + $0x8] sm:$0xff] %vm401, %v398
      %404 = vst.msk [vmem:[#allocation2 + $0x10] sm:$0xff] %vm401, %v399
      %405 = vst.msk [vmem:[#allocation2 + $0x18] sm:$0xff] %vm401, %v400
      %v406 = vld [vmem:[%s330] sm:$0xf]
      %v407 = vld [vmem:[%s330 + $0x4] sm:$0xf]
      %v408 = vld [vmem:[%s330 + $0x8] sm:$0xf]
      %v409 = vld [vmem:[%s330 + $0xc] sm:$0xf]
      %v410 = vld [vmem:[%s330 + $0x10] sm:$0xf]
      %v411 = vld [vmem:[%s330 + $0x14] sm:$0xf]
      %v412 = vld [vmem:[%s330 + $0x18] sm:$0xf]
      %v413 = vld [vmem:[%s330 + $0x1c] sm:$0xf]
      %v414 = vunpack.c.l.bf16 %v406
      %v415 = vunpack.c.l.bf16 %v407
      %v416 = vunpack.c.l.bf16 %v408
      %v417 = vunpack.c.l.bf16 %v409
      %v418 = vunpack.c.l.bf16 %v410
      %v419 = vunpack.c.l.bf16 %v411
      %v420 = vunpack.c.l.bf16 %v412
      %v421 = vunpack.c.l.bf16 %v413
      %v422 = vld [vmem:[%s3] sm:$0x1]
      %v424 = vlaneseq
      %v425 = vshrl.u32 %v424, 7
      %v426 = vsub.s32 0, %v425
      %v427 = vrot.slane %v422, %v426
      %v429 = vmul.f32 %v414, %v427
      %v430 = vmul.f32 %v415, %v427
      %v431 = vmul.f32 %v416, %v427
      %v432 = vmul.f32 %v417, %v427
      %v433 = vmul.f32 %v418, %v427
      %v434 = vmul.f32 %v419, %v427
      %v435 = vmul.f32 %v420, %v427
      %v436 = vmul.f32 %v421, %v427
      %v437 = vld [vmem:[%s5] sm:$0x1]
      %v439 = vlaneseq
      %v440 = vshrl.u32 %v439, 7
      %v441 = vsub.s32 0, %v440
      %v442 = vrot.slane %v437, %v441
      %v444 = vadd.f32 %v429, %v442
      %v445 = vadd.f32 %v430, %v442
      %v446 = vadd.f32 %v431, %v442
      %v447 = vadd.f32 %v432, %v442
      %v448 = vadd.f32 %v433, %v442
      %v449 = vadd.f32 %v434, %v442
      %v450 = vadd.f32 %v435, %v442
      %v451 = vadd.f32 %v436, %v442
      %v452 = vmax.f32 %v444, 0.0
      %v453 = vmax.f32 %v445, 0.0
      %v454 = vmax.f32 %v446, 0.0
      %v455 = vmax.f32 %v447, 0.0
      %v456 = vmax.f32 %v448, 0.0
      %v457 = vmax.f32 %v449, 0.0
      %v458 = vmax.f32 %v450, 0.0
      %v459 = vmax.f32 %v451, 0.0
      %v460 = vpack.c.bf16 %v453, %v452
      %v461 = vpack.c.bf16 %v455, %v454
      %v462 = vpack.c.bf16 %v457, %v456
      %v463 = vpack.c.bf16 %v459, %v458
      %468 = vrot.lane.b32.xlu0 %v460, 8
      %v469 = vpop.permute.xlu0 %468
      %470 = vrot.lane.b32.xlu0 %v461, 8
      %v471 = vpop.permute.xlu0 %470
      %472 = vrot.lane.b32.xlu0 %v462, 8
      %v473 = vpop.permute.xlu0 %472
      %474 = vrot.lane.b32.xlu0 %v463, 8
      %v475 = vpop.permute.xlu0 %474
      %vm480 = vcmask 130112
      %481 = vst.msk [vmem:[#allocation2] sm:$0xff] %vm480, %v469
      %482 = vst.msk [vmem:[#allocation2 + $0x8] sm:$0xff] %vm480, %v471
      %483 = vst.msk [vmem:[#allocation2 + $0x10] sm:$0xff] %vm480, %v473
      %484 = vst.msk [vmem:[#allocation2 + $0x18] sm:$0xff] %vm480, %v475
      %v485 = vld [vmem:[#allocation2] sm:$0xff]
      %v486 = vld [vmem:[#allocation2 + $0x8] sm:$0xff]
      %v487 = vld [vmem:[#allocation2 + $0x10] sm:$0xff]
      %v488 = vld [vmem:[#allocation2 + $0x18] sm:$0xff]
      %v489 = vld [vmem:[%s6] sm:$0xf]
      %v490 = vld [vmem:[%s6 + $0x4] sm:$0xf]
      %v493 = vunpack.c.l.b16 %v489
      %v494 = vunpack.c.l.b16 %v490
      %v495 = vpack.c.b16 %v494, %v493
      %vm497 = vcmask 130048
      %v499 = vsel %vm497, %v485, 0
      %v502 = vsel %vm497, %v486, 0
      %v505 = vsel %vm497, %v487, 0
      %v508 = vsel %vm497, %v488, 0
      %510 = vmatprep.subr.bf16.mxu0 0
      %511 = vmatpush1.bf16.msra.mxu0 %v495
      %512 = vmatprep.subr.bf16.mxu0 0
      %513 = vmatpush1.bf16.msra.mxu0 0
      %514 = vmatprep.subr.bf16.mxu0 0
      %515 = vmatpush1.bf16.msra.mxu0 0
      %516 = vmatprep.subr.bf16.mxu0 0
      %517 = vmatpush1.bf16.msra.mxu0 0
      %518 = vmatprep.subr.bf16.mxu0 0
      %519 = vmatpush1.bf16.msra.mxu0 0
      %520 = vmatprep.subr.bf16.mxu0 0
      %521 = vmatpush1.bf16.msra.mxu0 0
      %522 = vmatprep.subr.bf16.mxu0 0
      %523 = vmatpush1.bf16.msra.mxu0 0
      %524 = vmatprep.subr.bf16.mxu0 0
      %525 = vmatpush1.bf16.msra.mxu0 0
      %526 = vmatprep.subr.bf16.mxu0 0
      %527 = vmatpush1.bf16.msra.mxu0 0
      %528 = vmatprep.subr.bf16.mxu0 0
      %529 = vmatpush1.bf16.msra.mxu0 0
      %530 = vmatprep.subr.bf16.mxu0 0
      %531 = vmatpush1.bf16.msra.mxu0 0
      %532 = vmatprep.subr.bf16.mxu0 0
      %533 = vmatpush1.bf16.msra.mxu0 0
      %534 = vmatprep.subr.bf16.mxu0 0
      %535 = vmatpush1.bf16.msra.mxu0 0
      %536 = vmatprep.subr.bf16.mxu0 0
      %537 = vmatpush1.bf16.msra.mxu0 0
      %538 = vmatprep.subr.bf16.mxu0 0
      %539 = vmatpush1.bf16.msra.mxu0 0
      %540 = vmatprep.subr.bf16.mxu0 0
      %541 = vmatpush1.bf16.msra.mxu0 0
      %542 = vmatprep.mubr.bf16.mxu0 0
      %543 = vmatmul.mubr.bf16.gmra.mrb[0].mxu0 %v499
      %v544 = vpop.f32.mrb[0].mxu0
      %v545 = vadd.f32 0.0, %v544
      %v546 = vpop.f32.mrb[0].mxu0
      %v547 = vpop.f32.mrb[0].mxu0
      %v548 = vadd.f32 0.0, %v547
      %v549 = vpop.f32.mrb[0].mxu0
      %550 = vmatprep.mubr.bf16.mxu0 0
      %551 = vmatmul.mubr.bf16.gmra.mrb[0].mxu0 %v502
      %v552 = vpop.f32.mrb[0].mxu0
      %v553 = vadd.f32 0.0, %v552
      %v554 = vpop.f32.mrb[0].mxu0
      %v555 = vpop.f32.mrb[0].mxu0
      %v556 = vadd.f32 0.0, %v555
      %v557 = vpop.f32.mrb[0].mxu0
      %558 = vmatprep.mubr.bf16.mxu0 0
      %559 = vmatmul.mubr.bf16.gmra.mrb[0].mxu0 %v505
      %v560 = vpop.f32.mrb[0].mxu0
      %v561 = vadd.f32 0.0, %v560
      %v562 = vpop.f32.mrb[0].mxu0
      %v563 = vpop.f32.mrb[0].mxu0
      %v564 = vadd.f32 0.0, %v563
      %v565 = vpop.f32.mrb[0].mxu0
      %566 = vmatprep.mubr.bf16.mxu0 0
      %567 = vmatmul.mubr.bf16.gmra.mrb[0].mxu0 %v508
      %v568 = vpop.f32.mrb[0].mxu0
      %v569 = vadd.f32 0.0, %v568
      %v570 = vpop.f32.mrb[0].mxu0
      %v571 = vpop.f32.mrb[0].mxu0
      %v572 = vadd.f32 0.0, %v571
      %v573 = vpop.f32.mrb[0].mxu0
      %574 = vdwg.mxu0
      %v575 = vpack.c.bf16 %v548, %v545
      %v576 = vpack.c.bf16 %v556, %v553
      %v577 = vpack.c.bf16 %v564, %v561
      %v578 = vpack.c.bf16 %v572, %v569
      %v583 = vunpack.c.l.b16 %v575
      %v584 = vunpack.c.h.b16 %v575
      %v585 = vunpack.c.l.b16 %v576
      %v586 = vunpack.c.h.b16 %v576
      %v587 = vunpack.c.l.b16 %v577
      %v588 = vunpack.c.h.b16 %v577
      %v589 = vunpack.c.l.b16 %v578
      %v590 = vunpack.c.h.b16 %v578
      %v591 = vpack.c.b16 %v583, %v583
      %v592 = vpack.c.b16 %v584, %v584
      %v593 = vpack.c.b16 %v585, %v585
      %v594 = vpack.c.b16 %v586, %v586
      %v595 = vpack.c.b16 %v587, %v587
      %v596 = vpack.c.b16 %v588, %v588
      %v597 = vpack.c.b16 %v589, %v589
      %v598 = vpack.c.b16 %v590, %v590
      %vm607 = vcmask 60416
      %608 = vst.msk [vmem:[%s336] sm:$0xf] %vm607, %v591
      %609 = vst.msk [vmem:[%s336 + $0x4] sm:$0xf] %vm607, %v592
      %610 = vst.msk [vmem:[%s336 + $0x8] sm:$0xf] %vm607, %v593
      %611 = vst.msk [vmem:[%s336 + $0xc] sm:$0xf] %vm607, %v594
      %612 = vst.msk [vmem:[%s336 + $0x10] sm:$0xf] %vm607, %v595
      %613 = vst.msk [vmem:[%s336 + $0x14] sm:$0xf] %vm607, %v596
      %614 = vst.msk [vmem:[%s336 + $0x18] sm:$0xf] %vm607, %v597
      %615 = vst.msk [vmem:[%s336 + $0x1c] sm:$0xf] %vm607, %v598
      %v616 = vsel %vm401, %v545, 0.0
      %v617 = vsel %vm401, %v548, 0.0
      %v618 = vadd.f32 %v616, %v617
      %v619 = vsel %vm401, %v553, 0.0
      %v620 = vadd.f32 %v618, %v619
      %v621 = vsel %vm401, %v556, 0.0
      %v622 = vadd.f32 %v620, %v621
      %v623 = vsel %vm401, %v561, 0.0
      %v624 = vadd.f32 %v622, %v623
      %v625 = vsel %vm401, %v564, 0.0
      %v626 = vadd.f32 %v624, %v625
      %v627 = vsel %vm401, %v569, 0.0
      %v628 = vadd.f32 %v626, %v627
      %v629 = vsel %vm401, %v572, 0.0
      %v630 = vadd.f32 %v628, %v629
      %v631 = vrot.slane %v630, 4
      %v632 = vadd.f32 %v630, %v631
      %v633 = vrot.slane %v632, 2
      %v634 = vadd.f32 %v632, %v633
      %v635 = vrot.slane %v634, 1
      %v636 = vadd.f32 %v634, %v635
      %v637 = vmul.f32 %v545, %v545
      %v638 = vmul.f32 %v548, %v548
      %v639 = vmul.f32 %v553, %v553
      %v640 = vmul.f32 %v556, %v556
      %v641 = vmul.f32 %v561, %v561
      %v642 = vmul.f32 %v564, %v564
      %v643 = vmul.f32 %v569, %v569
      %v644 = vmul.f32 %v572, %v572
      %v645 = vsel %vm401, %v637, 0.0
      %v646 = vsel %vm401, %v638, 0.0
      %v647 = vadd.f32 %v645, %v646
      %v648 = vsel %vm401, %v639, 0.0
      %v649 = vadd.f32 %v647, %v648
      %v650 = vsel %vm401, %v640, 0.0
      %v651 = vadd.f32 %v649, %v650
      %v652 = vsel %vm401, %v641, 0.0
      %v653 = vadd.f32 %v651, %v652
      %v654 = vsel %vm401, %v642, 0.0
      %v655 = vadd.f32 %v653, %v654
      %v656 = vsel %vm401, %v643, 0.0
      %v657 = vadd.f32 %v655, %v656
      %v658 = vsel %vm401, %v644, 0.0
      %v659 = vadd.f32 %v657, %v658
      %v660 = vrot.slane %v659, 4
      %v661 = vadd.f32 %v659, %v660
      %v662 = vrot.slane %v661, 2
      %v663 = vadd.f32 %v661, %v662
      %v664 = vrot.slane %v663, 1
      %v665 = vadd.f32 %v663, %v664
      %vm666 = vcmask 1040384
      %v667 = vsel %vm666, %v636, %v665
      %vm668 = vcmask 58368
      %669 = vst.msk [vmem:[%s341] sm:$0x3] %vm668, %v667
      %s670 = smul.u32 8, %s20
      %p671 = scmp.lt.s32.totalorder %s670, 15
      %s672 = scalar_select %p671, %s670, 15
      %s673 = smul.addr %s672, 4
      %s674 = scalar_lea.vmem %s7, %s673
      %p675 = scmp.lt.s32.totalorder %s20, 1
      %s676 = scalar_select %p675, %s20, 1
      %s677 = smul.addr %s676, 2
      %s678 = scalar_lea.vmem %s8, %s677
      // Predicated region
      $region49: #{clique_block_forward.18} parent=47 // pred_check
        %p679 = pneg %p195
      $region50: #{clique_block_forward.18} parent=47 // pred_check_branch
        %681 = sbr.rel (%p679) target = $region52
      $region51: #{clique_block_forward.18} parent=47 // pred_region
        %s682 = smul.u32 8, %s20
      $region52: #{clique_block_forward.18} parent=47 // pred_fallthru
        _
      // Predicated region
      $region53: #{clique_block_forward.18} parent=47 // pred_check
        %p683 = pneg %p221
      $region54: #{clique_block_forward.18} parent=47 // pred_check_branch
        %685 = sbr.rel (%p683) target = $region56
      $region55: #{clique_block_forward.18} parent=47 // pred_region
        _
      $region56: #{clique_block_forward.18} parent=47 // pred_fallthru
        _
    $region48: #{clique_block_forward.18} parent=5 // pred_fallthru
      _
    %p686 = scmp.le.s32.totalorder 2, %s15
    // Predicated region
    $region57: #{clique_block_forward.18} parent=5 // pred_check
      %p687 = pneg %p686
    $region58: #{clique_block_forward.18} parent=5 // pred_check_branch
      %689 = sbr.rel (%p687) target = $region60
    $region59: #{clique_block_forward.18} parent=5 // pred_region
      %s690 = ssub.s32 %s15, 2
      // Predicated region
      $region61: #{clique_block_forward.18} parent=59 // pred_check
        %p691 = pneg %p201
      $region62: #{clique_block_forward.18} parent=59 // pred_check_branch
        %693 = sbr.rel (%p691) target = $region64
      $region63: #{clique_block_forward.18} parent=59 // pred_region
        %s694 = smul.u32 8, %s21
        %p695 = scmp.lt.s32.totalorder %s694, 15
        %s696 = scalar_select %p695, %s694, 15
        %s697 = smul.addr %s696, 4
        %s698 = scalar_lea.vmem %s7, %s697
      $region64: #{clique_block_forward.18} parent=59 // pred_fallthru
        _
      // Predicated region
      $region65: #{clique_block_forward.18} parent=59 // pred_check
        %p699 = pneg %p227
      $region66: #{clique_block_forward.18} parent=59 // pred_check_branch
        %701 = sbr.rel (%p699) target = $region68
      $region67: #{clique_block_forward.18} parent=59 // pred_region
        %p702 = scmp.lt.s32.totalorder %s21, 1
        %s703 = scalar_select %p702, %s21, 1
        %s704 = smul.addr %s703, 2
        %s705 = scalar_lea.vmem %s8, %s704
      $region68: #{clique_block_forward.18} parent=59 // pred_fallthru
        _
    $region60: #{clique_block_forward.18} parent=5 // pred_fallthru
      _
  $region6: #{clique_block_forward.18} parent=0 // loop_footer
    %s19 = sadd.s32 1, %s15
  $region7: #{clique_block_forward.18} parent=0 // loop_footer_branch
    %14 = sbr.rel target = $region3
  $region8: #{clique_block_forward.18} parent=0 // loop_exit
    _

// kernel: clique_block_forward.23
$region0: #{clique_block_forward.23}
  #allocation0 [shape = 'u32[]', space=smem, size = 0x4, offset = 0x4, fixed_abs, tag = 'smem constant byte address 0x4 - core index']
  #allocation1 [shape = 'u32[144,128]{1,0:T(1,128)}', space=vmem, size = 0x12000, scoped, tag = 'internal scratch']
  #allocation2 [shape = 'bf16[12,12,8]{2,1,0:T(8,128)(2,1)}', space=vmem, size = 0xc000, scoped, tag = 'scratch operand']
  %s0 = inlined_call_operand.vmem [shape: bf16[2,8,8,8], index: 0, kind: input, shape index: {}]
  %s1 = inlined_call_operand.vmem [shape: f32[1,8], index: 1, kind: input, shape index: {}]
  %s2 = inlined_call_operand.vmem [shape: f32[1,8], index: 2, kind: input, shape index: {}]
  %s3 = inlined_call_operand.vmem [shape: bf16[9,8,8], index: 3, kind: input, shape index: {}]
  %s4 = inlined_call_operand.vmem [shape: bf16[2,8,8,8], index: 4, kind: output, shape index: {0}]
  %s5 = inlined_call_operand.hbm [shape: f32[2,2,8], index: 5, kind: output, shape index: {1}]
  %6 = xla_tuple %s4, %s5
  %s7 = sld [smem:[#allocation0]]
  $region57: #{clique_block_forward.23} parent=0
    _
  %s9 = ssub.s32 1, %s7
  %s10 = scalar_select 0, %s9, %s7
  $region1: #{clique_block_forward.23} parent=0
    #allocation3 [shape = 'u8[2048]{0}', space=vmem, size = 0x800, scoped, tag = 'output window, operand 1']
    #allocation4 [shape = 's32[2]{0}', space=sflag, size = 0x8, scoped, tag = 'scoped memory for clique_block_forward.23']
    %11 = vsyncpa [#allocation4], 0
    %s12 = scalar_lea.sflag [#allocation4], 1
    %13 = vsyncpa %s12, 0
    loop: start=0, step=1, limit=4
    $region2: #{clique_block_forward.23} parent=1 // loop_pre_header
      _
    $region3: #{clique_block_forward.23} parent=1 // loop_header
      %s15 = sphi 0, %s19
      %p16 = scmp.ge.s32.totalorder %s15, 4
      %s25 = sphi 0, %s27
      %s28 = sphi 0, %s25
      %s29 = sphi 0, %s28
      %s45 = sphi 0, %s29
      %s49 = sphi 0, %s49
      %s51 = sphi 0, %s49
      %s52 = sphi 0, %s51
      %s66 = sphi 0, %s52
      %s70 = sphi 0, %s70
      %s72 = sphi 0, %s70
      %s73 = sphi 0, %s72
      %s87 = sphi 0, %s73
      %s91 = sphi 0, %s91
      %s93 = sphi 0, %s91
      %s94 = sphi 0, %s93
      %s108 = sphi 0, %s94
      %s114 = sphi 0, %s116
      %s117 = sphi 0, %s114
      %s118 = sphi 0, %s117
      %s134 = sphi 0, %s118
      %s140 = sphi 0, %s142
      %s143 = sphi 0, %s140
      %s144 = sphi 0, %s143
      %s160 = sphi 0, %s144
    $region4: #{clique_block_forward.23} parent=1 // loop_header_branch
      %18 = sbr.rel (%p16) target = $region8
    $region5: #{clique_block_forward.23} parent=1 // loop_body
      %s20 = ssub.s32 %s15, 1
      %s21 = ssub.s32 %s15, 2
      %s22 = sadd.s32 %s15, 1
      %s23 = ssub.s32 %s15, %s22
      %p24 = scmp.eq.s32.totalorder %s23, 0
      %s26 = sadd.s32 %s25, 1
      %s27 = scalar_select %p24, %s25, %s26
      %p30 = pneg %p24
      %p31 = scmp.eq.s32.totalorder %s15, 1
      %p32 = por %p30, %p31
      %p33 = scmp.ne.s32.totalorder %s25, %s28
      %p34 = scmp.eq.s32.totalorder %s15, 0
      %p35 = por %p33, %p34
      %p36 = scmp.ne.s32.totalorder %s25, %s28
      %p37 = scmp.eq.s32.totalorder %s20, 1
      %p38 = por %p36, %p37
      %p39 = scmp.ne.s32.totalorder %s28, %s29
      %p40 = scmp.eq.s32.totalorder %s20, 0
      %p41 = por %p39, %p40
      %p42 = scmp.ne.s32.totalorder %s28, %s29
      %p43 = scmp.eq.s32.totalorder %s21, 1
      %p44 = por %p42, %p43
      %p46 = scmp.ne.s32.totalorder %s29, %s45
      %p47 = scmp.eq.s32.totalorder %s21, 0
      %p48 = por %p46, %p47
      %s50 = sadd.s32 %s49, 1
      %p53 = scmp.eq.s32.totalorder %s15, 1
      %p54 = scmp.ne.s32.totalorder %s49, %s51
      %p55 = scmp.eq.s32.totalorder %s15, 0
      %p56 = por %p54, %p55
      %p57 = scmp.ne.s32.totalorder %s49, %s51
      %p58 = scmp.eq.s32.totalorder %s20, 1
      %p59 = por %p57, %p58
      %p60 = scmp.ne.s32.totalorder %s51, %s52
      %p61 = scmp.eq.s32.totalorder %s20, 0
      %p62 = por %p60, %p61
      %p63 = scmp.ne.s32.totalorder %s51, %s52
      %p64 = scmp.eq.s32.totalorder %s21, 1
      %p65 = por %p63, %p64
      %p67 = scmp.ne.s32.totalorder %s52, %s66
      %p68 = scmp.eq.s32.totalorder %s21, 0
      %p69 = por %p67, %p68
      %s71 = sadd.s32 %s70, 1
      %p74 = scmp.eq.s32.totalorder %s15, 1
      %p75 = scmp.ne.s32.totalorder %s70, %s72
      %p76 = scmp.eq.s32.totalorder %s15, 0
      %p77 = por %p75, %p76
      %p78 = scmp.ne.s32.totalorder %s70, %s72
      %p79 = scmp.eq.s32.totalorder %s20, 1
      %p80 = por %p78, %p79
      %p81 = scmp.ne.s32.totalorder %s72, %s73
      %p82 = scmp.eq.s32.totalorder %s20, 0
      %p83 = por %p81, %p82
      %p84 = scmp.ne.s32.totalorder %s72, %s73
      %p85 = scmp.eq.s32.totalorder %s21, 1
      %p86 = por %p84, %p85
      %p88 = scmp.ne.s32.totalorder %s73, %s87
      %p89 = scmp.eq.s32.totalorder %s21, 0
      %p90 = por %p88, %p89
      %s92 = sadd.s32 %s91, 1
      %p95 = scmp.eq.s32.totalorder %s15, 1
      %p96 = scmp.ne.s32.totalorder %s91, %s93
      %p97 = scmp.eq.s32.totalorder %s15, 0
      %p98 = por %p96, %p97
      %p99 = scmp.ne.s32.totalorder %s91, %s93
      %p100 = scmp.eq.s32.totalorder %s20, 1
      %p101 = por %p99, %p100
      %p102 = scmp.ne.s32.totalorder %s93, %s94
      %p103 = scmp.eq.s32.totalorder %s20, 0
      %p104 = por %p102, %p103
      %p105 = scmp.ne.s32.totalorder %s93, %s94
      %p106 = scmp.eq.s32.totalorder %s21, 1
      %p107 = por %p105, %p106
      %p109 = scmp.ne.s32.totalorder %s94, %s108
      %p110 = scmp.eq.s32.totalorder %s21, 0
      %p111 = por %p109, %p110
      %s112 = ssub.s32 %s15, %s22
      %p113 = scmp.eq.s32.totalorder %s112, 0
      %s115 = sadd.s32 %s114, 1
      %s116 = scalar_select %p113, %s114, %s115
      %p119 = pneg %p113
      %p120 = scmp.eq.s32.totalorder %s15, 1
      %p121 = por %p119, %p120
      %p122 = scmp.ne.s32.totalorder %s114, %s117
      %p123 = scmp.eq.s32.totalorder %s15, 0
      %p124 = por %p122, %p123
      %p125 = scmp.ne.s32.totalorder %s114, %s117
      %p126 = scmp.eq.s32.totalorder %s20, 1
      %p127 = por %p125, %p126
      %p128 = scmp.ne.s32.totalorder %s117, %s118
      %p129 = scmp.eq.s32.totalorder %s20, 0
      %p130 = por %p128, %p129
      %p131 = scmp.ne.s32.totalorder %s117, %s118
      %p132 = scmp.eq.s32.totalorder %s21, 1
      %p133 = por %p131, %p132
      %p135 = scmp.ne.s32.totalorder %s118, %s134
      %p136 = scmp.eq.s32.totalorder %s21, 0
      %p137 = por %p135, %p136
      %s138 = ssub.s32 %s15, %s22
      %p139 = scmp.eq.s32.totalorder %s138, 0
      %s141 = sadd.s32 %s140, 1
      %s142 = scalar_select %p139, %s140, %s141
      %p145 = pneg %p139
      %p146 = scmp.eq.s32.totalorder %s15, 1
      %p147 = por %p145, %p146
      %p148 = scmp.ne.s32.totalorder %s140, %s143
      %p149 = scmp.eq.s32.totalorder %s15, 0
      %p150 = por %p148, %p149
      %p151 = scmp.ne.s32.totalorder %s140, %s143
      %p152 = scmp.eq.s32.totalorder %s20, 1
      %p153 = por %p151, %p152
      %p154 = scmp.ne.s32.totalorder %s143, %s144
      %p155 = scmp.eq.s32.totalorder %s20, 0
      %p156 = por %p154, %p155
      %p157 = scmp.ne.s32.totalorder %s143, %s144
      %p158 = scmp.eq.s32.totalorder %s21, 1
      %p159 = por %p157, %p158
      %p161 = scmp.ne.s32.totalorder %s144, %s160
      %p162 = scmp.eq.s32.totalorder %s21, 0
      %p163 = por %p161, %p162
      %p164 = scmp.le.s32.totalorder 1, %s15
      %p165 = scmp.lt.s32.totalorder %s15, 3
      %p166 = pnand %p164, %p165
      %p167 = pneg %p166
      // Predicated region
      $region9: #{clique_block_forward.23} parent=5 // pred_check
        _
      $region10: #{clique_block_forward.23} parent=5 // pred_check_branch
        %169 = sbr.rel (%p166) target = $region12
      $region11: #{clique_block_forward.23} parent=5 // pred_region
        %s170 = ssub.s32 %s15, 1
        // Predicated region
        $region13: #{clique_block_forward.23} parent=11 // pred_check
          %p171 = pneg %p62
        $region14: #{clique_block_forward.23} parent=11 // pred_check_branch
          %173 = sbr.rel (%p171) target = $region16
        $region15: #{clique_block_forward.23} parent=11 // pred_region
          _
        $region16: #{clique_block_forward.23} parent=11 // pred_fallthru
          _
        // Predicated region
        $region17: #{clique_block_forward.23} parent=11 // pred_check
          %p174 = pneg %p83
        $region18: #{clique_block_forward.23} parent=11 // pred_check_branch
          %176 = sbr.rel (%p174) target = $region20
        $region19: #{clique_block_forward.23} parent=11 // pred_region
          _
        $region20: #{clique_block_forward.23} parent=11 // pred_fallthru
          _
        // Predicated region
        $region21: #{clique_block_forward.23} parent=11 // pred_check
          %p177 = pneg %p104
        $region22: #{clique_block_forward.23} parent=11 // pred_check_branch
          %179 = sbr.rel (%p177) target = $region24
        $region23: #{clique_block_forward.23} parent=11 // pred_region
          _
        $region24: #{clique_block_forward.23} parent=11 // pred_fallthru
          _
      $region12: #{clique_block_forward.23} parent=5 // pred_fallthru
        _
      %p180 = scmp.lt.s32.totalorder %s15, 2
      // Predicated region
      $region25: #{clique_block_forward.23} parent=5 // pred_check
        %p181 = pneg %p180
      $region26: #{clique_block_forward.23} parent=5 // pred_check_branch
        %183 = sbr.rel (%p181) target = $region28
      $region27: #{clique_block_forward.23} parent=5 // pred_region
        // Predicated region
        $region29: #{clique_block_forward.23} parent=27 // pred_check
          %p184 = pneg %p35
        $region30: #{clique_block_forward.23} parent=27 // pred_check_branch
          %186 = sbr.rel (%p184) target = $region32
        $region31: #{clique_block_forward.23} parent=27 // pred_region
          %p187 = scmp.lt.s32.totalorder %s15, 1
          %s188 = scalar_select %p187, %s15, 1
          %s189 = smul.addr %s188, 8
          %s190 = smul.addr %s189, 4
          %s191 = scalar_lea.vmem %s0, %s190
        $region32: #{clique_block_forward.23} parent=27 // pred_fallthru
          _
      $region28: #{clique_block_forward.23} parent=5 // pred_fallthru
        _
      %p192 = scmp.le.s32.totalorder 1, %s15
      %p193 = scmp.lt.s32.totalorder %s15, 3
      %p194 = pnand %p192, %p193
      %p195 = pneg %p194
      // Predicated region
      $region33: #{clique_block_forward.23} parent=5 // pred_check
        _
      $region34: #{clique_block_forward.23} parent=5 // pred_check_branch
        %197 = sbr.rel (%p194) target = $region36
      $region35: #{clique_block_forward.23} parent=5 // pred_region
        %s198 = ssub.s32 %s15, 1
        %p199 = scmp.lt.s32.totalorder %s20, 1
        %s200 = scalar_select %p199, %s20, 1
        %s201 = smul.addr %s200, 8
        %s202 = smul.addr %s201, 4
        %s203 = scalar_lea.vmem %s0, %s202
        %p204 = pneg %p41
        %p205 = pneg %p38
        %p206 = pneg %p62
        %p207 = pneg %p59
        %p208 = pneg %p83
        %p209 = pneg %p80
        %p210 = pneg %p104
        %p211 = pneg %p101
        %p212 = pneg %p130
        %p213 = pneg %p127
        %p214 = scmp.lt.s32.totalorder %s20, 1
        %s215 = scalar_select %p214, %s20, 1
        %s216 = smul.addr %s215, 8
        %s217 = smul.addr %s216, 4
        %s218 = scalar_lea.vmem %s4, %s217
        %p219 = pneg %p156
        %p220 = pneg %p153
        %s221 = sand.u32 %s143, 1
        %s222 = scalar_lea.sflag [#allocation4], %s221
        %s223 = sand.u32 %s143, 1
        %s224 = smul.addr %s223, 2
        %s225 = scalar_lea.vmem [#allocation3], %s224
        %p226 = scmp.lt.s32.totalorder %s20, 1
        %s227 = scalar_select %p226, %s20, 1
        %s228 = smul.addr %s227, 8
        %s229 = smul.addr %s228, 4
        %s230 = scalar_lea.vmem %s0, %s229
        %p231 = scmp.lt.s32.totalorder %s20, 1
        %s232 = scalar_select %p231, %s20, 1
        %s233 = smul.addr %s232, 8
        %s234 = smul.addr %s233, 4
        %s235 = scalar_lea.vmem %s4, %s234
        %v237 = vld [vmem:[%s1] sm:$0x1]
        %v238 = vld [vmem:[%s2] sm:$0x1]
        %v239 = vld [vmem:[%s230] sm:$0xf]
        %v240 = vld [vmem:[%s230 + $0x4] sm:$0xf]
        %v241 = vld [vmem:[%s230 + $0x8] sm:$0xf]
        %v242 = vld [vmem:[%s230 + $0xc] sm:$0xf]
        %v243 = vld [vmem:[%s230 + $0x10] sm:$0xf]
        %v244 = vld [vmem:[%s230 + $0x14] sm:$0xf]
        %v245 = vld [vmem:[%s230 + $0x18] sm:$0xf]
        %v246 = vld [vmem:[%s230 + $0x1c] sm:$0xf]
        %v247 = vunpack.c.l.bf16 %v239
        %v248 = vunpack.c.l.bf16 %v240
        %v249 = vunpack.c.l.bf16 %v241
        %v250 = vunpack.c.l.bf16 %v242
        %v251 = vunpack.c.l.bf16 %v243
        %v252 = vunpack.c.l.bf16 %v244
        %v253 = vunpack.c.l.bf16 %v245
        %v254 = vunpack.c.l.bf16 %v246
        %v256 = vlaneseq
        %v257 = vshrl.u32 %v256, 7
        %v258 = vsub.s32 0, %v257
        %v259 = vrot.slane %v237, %v258
        %v261 = vmul.f32 %v247, %v259
        %v262 = vmul.f32 %v248, %v259
        %v263 = vmul.f32 %v249, %v259
        %v264 = vmul.f32 %v250, %v259
        %v265 = vmul.f32 %v251, %v259
        %v266 = vmul.f32 %v252, %v259
        %v267 = vmul.f32 %v253, %v259
        %v268 = vmul.f32 %v254, %v259
        %v270 = vlaneseq
        %v271 = vshrl.u32 %v270, 7
        %v272 = vsub.s32 0, %v271
        %v273 = vrot.slane %v238, %v272
        %v275 = vadd.f32 %v261, %v273
        %v276 = vadd.f32 %v262, %v273
        %v277 = vadd.f32 %v263, %v273
        %v278 = vadd.f32 %v264, %v273
        %v279 = vadd.f32 %v265, %v273
        %v280 = vadd.f32 %v266, %v273
        %v281 = vadd.f32 %v267, %v273
        %v282 = vadd.f32 %v268, %v273
        %v283 = vmax.f32 %v275, 0.0
        %v284 = vmax.f32 %v276, 0.0
        %v285 = vmax.f32 %v277, 0.0
        %v286 = vmax.f32 %v278, 0.0
        %v287 = vmax.f32 %v279, 0.0
        %v288 = vmax.f32 %v280, 0.0
        %v289 = vmax.f32 %v281, 0.0
        %v290 = vmax.f32 %v282, 0.0
        %vm291 = vcmask 60416
        %292 = vst.msk [vmem:[#allocation2] sm:$0xf] %vm291, 0
        %vm293 = vcmask 58368
        %294 = vst.msk [vmem:[#allocation2 + $0x4] sm:$0x3] %vm293, 0
        %295 = vst.msk [vmem:[#allocation2 + $0x8] sm:$0xf] %vm291, 0
        %296 = vst.msk [vmem:[#allocation2 + $0xc] sm:$0x3] %vm293, 0
        %s297 = scalar_lea.vmem [#allocation2], 80
        %298 = vst.msk [vmem:[%s297] sm:$0xf] %vm291, 0
        %299 = vst.msk [vmem:[%s297 + $0x4] sm:$0x3] %vm293, 0
        %300 = vst.msk [vmem:[%s297 + $0x8] sm:$0xf] %vm291, 0
        %301 = vst.msk [vmem:[%s297 + $0xc] sm:$0x3] %vm293, 0
        %s302 = scalar_lea.vmem [#allocation2], 16
        %vm303 = vcmask 57344
        %304 = vst.msk [vmem:[%s302] sm:$0x1] %vm303, 0
        %305 = vst.msk [vmem:[%s302 + $0x8] sm:$0x1] %vm303, 0
        %306 = vst.msk [vmem:[%s302 + $0x10] sm:$0x1] %vm303, 0
        %307 = vst.msk [vmem:[%s302 + $0x18] sm:$0x1] %vm303, 0
        %308 = vst.msk [vmem:[%s302 + $0x20] sm:$0x1] %vm303, 0
        %309 = vst.msk [vmem:[%s302 + $0x28] sm:$0x1] %vm303, 0
        %310 = vst.msk [vmem:[%s302 + $0x30] sm:$0x1] %vm303, 0
        %311 = vst.msk [vmem:[%s302 + $0x38] sm:$0x1] %vm303, 0
        %vm312 = vcmask 58369
        %313 = vst.msk [vmem:[%s302 + $0x4] sm:$0x2] %vm312, 0
        %314 = vst.msk [vmem:[%s302 + $0xc] sm:$0x2] %vm312, 0
        %315 = vst.msk [vmem:[%s302 + $0x14] sm:$0x2] %vm312, 0
        %316 = vst.msk [vmem:[%s302 + $0x1c] sm:$0x2] %vm312, 0
        %317 = vst.msk [vmem:[%s302 + $0x24] sm:$0x2] %vm312, 0
        %318 = vst.msk [vmem:[%s302 + $0x2c] sm:$0x2] %vm312, 0
        %319 = vst.msk [vmem:[%s302 + $0x34] sm:$0x2] %vm312, 0
        %320 = vst.msk [vmem:[%s302 + $0x3c] sm:$0x2] %vm312, 0
        %v321 = vpack.c.bf16 %v283, %v283
        %v322 = vpack.c.bf16 %v284, %v284
        %v323 = vpack.c.bf16 %v285, %v285
        %v324 = vpack.c.bf16 %v286, %v286
        %v325 = vpack.c.bf16 %v287, %v287
        %v326 = vpack.c.bf16 %v288, %v288
        %v327 = vpack.c.bf16 %v289, %v289
        %v328 = vpack.c.bf16 %v290, %v290
        %v337 = vunpack.c.l.b16 %v321
        %v338 = vunpack.c.l.b16 %v322
        %v339 = vunpack.c.l.b16 %v323
        %v340 = vunpack.c.l.b16 %v324
        %v341 = vunpack.c.l.b16 %v325
        %v342 = vunpack.c.l.b16 %v326
        %v343 = vunpack.c.l.b16 %v327
        %v344 = vunpack.c.l.b16 %v328
        %v345 = vpack.c.b16 %v337, %v337
        %v346 = vpack.c.b16 %v338, %v338
        %v347 = vpack.c.b16 %v339, %v339
        %v348 = vpack.c.b16 %v340, %v340
        %v349 = vpack.c.b16 %v341, %v341
        %v350 = vpack.c.b16 %v342, %v342
        %v351 = vpack.c.b16 %v343, %v343
        %v352 = vpack.c.b16 %v344, %v344
        %v353 = vrot.slane %v345, 7
        %v354 = vrot.slane %v353, 4
        %v355 = vrot.slane %v346, 7
        %v356 = vrot.slane %v355, 4
        %v357 = vrot.slane %v347, 7
        %v358 = vrot.slane %v357, 4
        %v359 = vrot.slane %v348, 7
        %v360 = vrot.slane %v359, 4
        %v361 = vrot.slane %v349, 7
        %v362 = vrot.slane %v361, 4
        %v363 = vrot.slane %v350, 7
        %v364 = vrot.slane %v363, 4
        %v365 = vrot.slane %v351, 7
        %v366 = vrot.slane %v365, 4
        %v367 = vrot.slane %v352, 7
        %v368 = vrot.slane %v367, 4
        %vm385 = vcmask 60417
        %386 = vst.msk [vmem:[%s302] sm:$0xe] %vm385, %v353
        %387 = vst.msk [vmem:[%s302 + $0x4] sm:$0x1] %vm303, %v354
        %388 = vst.msk [vmem:[%s302 + $0x8] sm:$0xe] %vm385, %v355
        %389 = vst.msk [vmem:[%s302 + $0xc] sm:$0x1] %vm303, %v356
        %390 = vst.msk [vmem:[%s302 + $0x10] sm:$0xe] %vm385, %v357
        %391 = vst.msk [vmem:[%s302 + $0x14] sm:$0x1] %vm303, %v358
        %392 = vst.msk [vmem:[%s302 + $0x18] sm:$0xe] %vm385, %v359
        %393 = vst.msk [vmem:[%s302 + $0x1c] sm:$0x1] %vm303, %v360
        %394 = vst.msk [vmem:[%s302 + $0x20] sm:$0xe] %vm385, %v361
        %395 = vst.msk [vmem:[%s302 + $0x24] sm:$0x1] %vm303, %v362
        %396 = vst.msk [vmem:[%s302 + $0x28] sm:$0xe] %vm385, %v363
        %397 = vst.msk [vmem:[%s302 + $0x2c] sm:$0x1] %vm303, %v364
        %398 = vst.msk [vmem:[%s302 + $0x30] sm:$0xe] %vm385, %v365
        %399 = vst.msk [vmem:[%s302 + $0x34] sm:$0x1] %vm303, %v366
        %400 = vst.msk [vmem:[%s302 + $0x38] sm:$0xe] %vm385, %v367
        %401 = vst.msk [vmem:[%s302 + $0x3c] sm:$0x1] %vm303, %v368
        %v402 = vld [vmem:[#allocation2] sm:$0xf]
        %v403 = vld [vmem:[#allocation2 + $0x8] sm:$0xf]
        %v404 = vld [vmem:[#allocation2 + $0x10] sm:$0xf]
        %v405 = vld [vmem:[#allocation2 + $0x18] sm:$0xf]
        %v406 = vld [vmem:[#allocation2 + $0x20] sm:$0xf]
        %v407 = vld [vmem:[#allocation2 + $0x28] sm:$0xf]
        %v408 = vld [vmem:[#allocation2 + $0x30] sm:$0xf]
        %v409 = vld [vmem:[#allocation2 + $0x38] sm:$0xf]
        %v410 = vld [vmem:[%s3] sm:$0xf]
        %v411 = vld [vmem:[#allocation2] sm:$0xe]
        %v412 = vld [vmem:[#allocation2 + $0x4] sm:$0x1]
        %v413 = vld [vmem:[#allocation2 + $0x8] sm:$0xe]
        %v414 = vld [vmem:[#allocation2 + $0xc] sm:$0x1]
        %v415 = vld [vmem:[#allocation2 + $0x10] sm:$0xe]
        %v416 = vld [vmem:[#allocation2 + $0x14] sm:$0x1]
        %v417 = vld [vmem:[#allocation2 + $0x18] sm:$0xe]
        %v418 = vld [vmem:[#allocation2 + $0x1c] sm:$0x1]
        %v419 = vld [vmem:[#allocation2 + $0x20] sm:$0xe]
        %v420 = vld [vmem:[#allocation2 + $0x24] sm:$0x1]
        %v421 = vld [vmem:[#allocation2 + $0x28] sm:$0xe]
        %v422 = vld [vmem:[#allocation2 + $0x2c] sm:$0x1]
        %v423 = vld [vmem:[#allocation2 + $0x30] sm:$0xe]
        %v424 = vld [vmem:[#allocation2 + $0x34] sm:$0x1]
        %v425 = vld [vmem:[#allocation2 + $0x38] sm:$0xe]
        %v426 = vld [vmem:[#allocation2 + $0x3c] sm:$0x1]
        %vm443 = vcmask 1042432
        %vm444 = vcmask 1046532
        %vm445 = vmor %vm443, %vm444
        %v446 = vrot.slane %v411, 5
        %v447 = vrot.slane %v446, 4
        %v448 = vrot.slane %v412, 5
        %v449 = vsel %vm445, %v447, %v448
        %v450 = vrot.slane %v413, 5
        %v451 = vrot.slane %v450, 4
        %v452 = vrot.slane %v414, 5
        %v453 = vsel %vm445, %v451, %v452
        %v454 = vrot.slane %v415, 5
        %v455 = vrot.slane %v454, 4
        %v456 = vrot.slane %v416, 5
        %v457 = vsel %vm445, %v455, %v456
        %v458 = vrot.slane %v417, 5
        %v459 = vrot.slane %v458, 4
        %v460 = vrot.slane %v418, 5
        %v461 = vsel %vm445, %v459, %v460
        %v462 = vrot.slane %v419, 5
        %v463 = vrot.slane %v462, 4
        %v464 = vrot.slane %v420, 5
        %v465 = vsel %vm445, %v463, %v464
        %v466 = vrot.slane %v421, 5
        %v467 = vrot.slane %v466, 4
        %v468 = vrot.slane %v422, 5
        %v469 = vsel %vm445, %v467, %v468
        %v470 = vrot.slane %v423, 5
        %v471 = vrot.slane %v470, 4
        %v472 = vrot.slane %v424, 5
        %v473 = vsel %vm445, %v471, %v472
        %v474 = vrot.slane %v425, 5
        %v475 = vrot.slane %v474, 4
        %v476 = vrot.slane %v426, 5
        %v477 = vsel %vm445, %v475, %v476
        %s478 = scalar_lea.vmem %s3, 4
        %v479 = vld [vmem:[%s478] sm:$0xf]
        %v480 = vunpack.c.l.b16 %v449
        %v481 = vunpack.c.l.b16 %v453
        %v482 = vunpack.c.l.b16 %v457
        %v483 = vunpack.c.l.b16 %v461
        %v484 = vunpack.c.l.b16 %v465
        %v485 = vunpack.c.l.b16 %v469
        %v486 = vunpack.c.l.b16 %v473
        %v487 = vunpack.c.l.b16 %v477
        %v488 = vpack.c.b16 %v481, %v480
        %v489 = vpack.c.b16 %v483, %v482
        %v490 = vpack.c.b16 %v485, %v484
        %v491 = vpack.c.b16 %v487, %v486
        %vm492 = vcmask 64512
        %v494 = vsel %vm492, %v488, 0
        %v497 = vsel %vm492, %v489, 0
        %v500 = vsel %vm492, %v490, 0
        %v503 = vsel %vm492, %v491, 0
        %vm505 = vcmask 1043456
        %v507 = vsel %vm505, %v479, 0
        %509 = vmatprep.subr.bf16.mxu0 0
        %510 = vmatpush1.bf16.msra.mxu0 %v507
        %511 = vmatprep.subr.bf16.mxu0 0
        %512 = vmatpush1.bf16.msra.mxu0 0
        %513 = vmatprep.subr.bf16.mxu0 0
        %514 = vmatpush1.bf16.msra.mxu0 0
        %515 = vmatprep.subr.bf16.mxu0 0
        %516 = vmatpush1.bf16.msra.mxu0 0
        %517 = vmatprep.subr.bf16.mxu0 0
        %518 = vmatpush1.bf16.msra.mxu0 0
        %519 = vmatprep.subr.bf16.mxu0 0
        %520 = vmatpush1.bf16.msra.mxu0 0
        %521 = vmatprep.subr.bf16.mxu0 0
        %522 = vmatpush1.bf16.msra.mxu0 0
        %523 = vmatprep.subr.bf16.mxu0 0
        %524 = vmatpush1.bf16.msra.mxu0 0
        %525 = vmatprep.subr.bf16.mxu0 0
        %526 = vmatpush1.bf16.msra.mxu0 0
        %527 = vmatprep.subr.bf16.mxu0 0
        %528 = vmatpush1.bf16.msra.mxu0 0
        %529 = vmatprep.subr.bf16.mxu0 0
        %530 = vmatpush1.bf16.msra.mxu0 0
        %531 = vmatprep.subr.bf16.mxu0 0
        %532 = vmatpush1.bf16.msra.mxu0 0
        %533 = vmatprep.subr.bf16.mxu0 0
        %534 = vmatpush1.bf16.msra.mxu0 0
        %535 = vmatprep.subr.bf16.mxu0 0
        %536 = vmatpush1.bf16.msra.mxu0 0
        %537 = vmatprep.subr.bf16.mxu0 0
        %538 = vmatpush1.bf16.msra.mxu0 0
        %539 = vmatprep.subr.bf16.mxu0 0
        %540 = vmatpush1.bf16.msra.mxu0 0
        %541 = vmatprep.mubr.bf16.mxu0 0
        %542 = vmatmul.mubr.bf16.gmra.mrb[0].mxu0 %v494
        %v543 = vpop.f32.mrb[0].mxu0
        %v544 = vadd.f32 0.0, %v543
        %v545 = vpop.f32.mrb[0].mxu0
        %v546 = vpop.f32.mrb[0].mxu0
        %v547 = vadd.f32 0.0, %v546
        %v548 = vpop.f32.mrb[0].mxu0
        %549 = vmatprep.mubr.bf16.mxu0 0
        %550 = vmatmul.mubr.bf16.gmra.mrb[0].mxu0 %v497
        %v551 = vpop.f32.mrb[0].mxu0
        %v552 = vadd.f32 0.0, %v551
        %v553 = vpop.f32.mrb[0].mxu0
        %v554 = vpop.f32.mrb[0].mxu0
        %v555 = vadd.f32 0.0, %v554
        %v556 = vpop.f32.mrb[0].mxu0
        %557 = vmatprep.mubr.bf16.mxu0 0
        %558 = vmatmul.mubr.bf16.gmra.mrb[0].mxu0 %v500
        %v559 = vpop.f32.mrb[0].mxu0
        %v560 = vadd.f32 0.0, %v559
        %v561 = vpop.f32.mrb[0].mxu0
        %v562 = vpop.f32.mrb[0].mxu0
        %v563 = vadd.f32 0.0, %v562
        %v564 = vpop.f32.mrb[0].mxu0
        %565 = vmatprep.mubr.bf16.mxu0 0
        %566 = vmatmul.mubr.bf16.gmra.mrb[0].mxu0 %v503
        %v567 = vpop.f32.mrb[0].mxu0
        %v568 = vadd.f32 0.0, %v567
        %v569 = vpop.f32.mrb[0].mxu0
        %v570 = vpop.f32.mrb[0].mxu0
        %v571 = vadd.f32 0.0, %v570
        %v572 = vpop.f32.mrb[0].mxu0
        %573 = vdwg.mxu0
        %v582 = vunpack.c.l.b16 %v402
        %v583 = vunpack.c.l.b16 %v403
        %v584 = vunpack.c.l.b16 %v404
        %v585 = vunpack.c.l.b16 %v405
        %v586 = vunpack.c.l.b16 %v406
        %v587 = vunpack.c.l.b16 %v407
        %v588 = vunpack.c.l.b16 %v408
        %v589 = vunpack.c.l.b16 %v409
        %v590 = vpack.c.b16 %v583, %v582
        %v591 = vpack.c.b16 %v585, %v584
        %v592 = vpack.c.b16 %v587, %v586
        %v593 = vpack.c.b16 %v589, %v588
        %v595 = vsel %vm492, %v590, 0
        %v598 = vsel %vm492, %v591, 0
        %v601 = vsel %vm492, %v592, 0
        %v604 = vsel %vm492, %v593, 0
        %v607 = vsel %vm505, %v410, 0
        %609 = vmatprep.subr.bf16.mxu0 0
        %610 = vmatpush1.bf16.msra.mxu0 %v607
        %611 = vmatprep.subr.bf16.mxu0 0
        %612 = vmatpush1.bf16.msra.mxu0 0
        %613 = vmatprep.subr.bf16.mxu0 0
        %614 = vmatpush1.bf16.msra.mxu0 0
        %615 = vmatprep.subr.bf16.mxu0 0
        %616 = vmatpush1.bf16.msra.mxu0 0
        %617 = vmatprep.subr.bf16.mxu0 0
        %618 = vmatpush1.bf16.msra.mxu0 0
        %619 = vmatprep.subr.bf16.mxu0 0
        %620 = vmatpush1.bf16.msra.mxu0 0
        %621 = vmatprep.subr.bf16.mxu0 0
        %622 = vmatpush1.bf16.msra.mxu0 0
        %623 = vmatprep.subr.bf16.mxu0 0
        %624 = vmatpush1.bf16.msra.mxu0 0
        %625 = vmatprep.subr.bf16.mxu0 0
        %626 = vmatpush1.bf16.msra.mxu0 0
        %627 = vmatprep.subr.bf16.mxu0 0
        %628 = vmatpush1.bf16.msra.mxu0 0
        %629 = vmatprep.subr.bf16.mxu0 0
        %630 = vmatpush1.bf16.msra.mxu0 0
        %631 = vmatprep.subr.bf16.mxu0 0
        %632 = vmatpush1.bf16.msra.mxu0 0
        %633 = vmatprep.subr.bf16.mxu0 0
        %634 = vmatpush1.bf16.msra.mxu0 0
        %635 = vmatprep.subr.bf16.mxu0 0
        %636 = vmatpush1.bf16.msra.mxu0 0
        %637 = vmatprep.subr.bf16.mxu0 0
        %638 = vmatpush1.bf16.msra.mxu0 0
        %639 = vmatprep.subr.bf16.mxu0 0
        %640 = vmatpush1.bf16.msra.mxu0 0
        %641 = vmatprep.mubr.bf16.mxu0 0
        %642 = vmatmul.mubr.bf16.gmra.mrb[0].mxu0 %v595
        %v643 = vpop.f32.mrb[0].mxu0
        %v644 = vadd.f32 %v544, %v643
        %v645 = vpop.f32.mrb[0].mxu0
        %v646 = vpop.f32.mrb[0].mxu0
        %v647 = vadd.f32 %v547, %v646
        %v648 = vpop.f32.mrb[0].mxu0
        %649 = vmatprep.mubr.bf16.mxu0 0
        %650 = vmatmul.mubr.bf16.gmra.mrb[0].mxu0 %v598
        %v651 = vpop.f32.mrb[0].mxu0
        %v652 = vadd.f32 %v552, %v651
        %v653 = vpop.f32.mrb[0].mxu0
        %v654 = vpop.f32.mrb[0].mxu0
        %v655 = vadd.f32 %v555, %v654
        %v656 = vpop.f32.mrb[0].mxu0
        %657 = vmatprep.mubr.bf16.mxu0 0
        %658 = vmatmul.mubr.bf16.gmra.mrb[0].mxu0 %v601
        %v659 = vpop.f32.mrb[0].mxu0
        %v660 = vadd.f32 %v560, %v659
        %v661 = vpop.f32.mrb[0].mxu0
        %v662 = vpop.f32.mrb[0].mxu0
        %v663 = vadd.f32 %v563, %v662
        %v664 = vpop.f32.mrb[0].mxu0
        %665 = vmatprep.mubr.bf16.mxu0 0
        %666 = vmatmul.mubr.bf16.gmra.mrb[0].mxu0 %v604
        %v667 = vpop.f32.mrb[0].mxu0
        %v668 = vadd.f32 %v568, %v667
        %v669 = vpop.f32.mrb[0].mxu0
        %v670 = vpop.f32.mrb[0].mxu0
        %v671 = vadd.f32 %v571, %v670
        %v672 = vpop.f32.mrb[0].mxu0
        %673 = vdwg.mxu0
        %v674 = vld [vmem:[#allocation2] sm:$0xc]
        %v675 = vld [vmem:[#allocation2 + $0x4] sm:$0x3]
        %v676 = vld [vmem:[#allocation2 + $0x8] sm:$0xc]
        %v677 = vld [vmem:[#allocation2 + $0xc] sm:$0x3]
        %v678 = vld [vmem:[#allocation2 + $0x10] sm:$0xc]
        %v679 = vld [vmem:[#allocation2 + $0x14] sm:$0x3]
        %v680 = vld [vmem:[#allocation2 + $0x18] sm:$0xc]
        %v681 = vld [vmem:[#allocation2 + $0x1c] sm:$0x3]
        %v682 = vld [vmem:[#allocation2 + $0x20] sm:$0xc]
        %v683 = vld [vmem:[#allocation2 + $0x24] sm:$0x3]
        %v684 = vld [vmem:[#allocation2 + $0x28] sm:$0xc]
        %v685 = vld [vmem:[#allocation2 + $0x2c] sm:$0x3]
        %v686 = vld [vmem:[#allocation2 + $0x30] sm:$0xc]
        %v687 = vld [vmem:[#allocation2 + $0x34] sm:$0x3]
        %v688 = vld [vmem:[#allocation2 + $0x38] sm:$0xc]
        %v689 = vld [vmem:[#allocation2 + $0x3c] sm:$0x3]
        %vm706 = vcmask 1041408
        %vm707 = vcmask 1045508
        %vm708 = vmor %vm706, %vm707
        %v709 = vrot.slane %v674, 6
        %v710 = vrot.slane %v709, 4
        %v711 = vrot.slane %v675, 6
        %v712 = vsel %vm708, %v710, %v711
        %v713 = vrot.slane %v676, 6
        %v714 = vrot.slane %v713, 4
        %v715 = vrot.slane %v677, 6
        %v716 = vsel %vm708, %v714, %v715
        %v717 = vrot.slane %v678, 6
        %v718 = vrot.slane %v717, 4
        %v719 = vrot.slane %v679, 6
        %v720 = vsel %vm708, %v718, %v719
        %v721 = vrot.slane %v680, 6
        %v722 = vrot.slane %v721, 4
        %v723 = vrot.slane %v681, 6
        %v724 = vsel %vm708, %v722, %v723
        %v725 = vrot.slane %v682, 6
        %v726 = vrot.slane %v725, 4
        %v727 = vrot.slane %v683, 6
        %v728 = vsel %vm708, %v726, %v727
        %v729 = vrot.slane %v684, 6
        %v730 = vrot.slane %v729, 4
        %v731 = vrot.slane %v685, 6
        %v732 = vsel %vm708, %v730, %v731
        %v733 = vrot.slane %v686, 6
        %v734 = vrot.slane %v733, 4
        %v735 = vrot.slane %v687, 6
        %v736 = vsel %vm708, %v734, %v735
        %v737 = vrot.slane %v688, 6
        %v738 = vrot.slane %v737, 4
        %v739 = vrot.slane %v689, 6
        %v740 = vsel %vm708, %v738, %v739
        %s741 = scalar_lea.vmem %s3, 8
        %v742 = vld [vmem:[%s741] sm:$0xf]
        %v743 = vunpack.c.l.b16 %v712
        %v744 = vunpack.c.l.b16 %v716
        %v745 = vunpack.c.l.b16 %v720
        %v746 = vunpack.c.l.b16 %v724
        %v747 = vunpack.c.l.b16 %v728
        %v748 = vunpack.c.l.b16 %v732
        %v749 = vunpack.c.l.b16 %v736
        %v750 = vunpack.c.l.b16 %v740
        %v751 = vpack.c.b16 %v744, %v743
        %v752 = vpack.c.b16 %v746, %v745
        %v753 = vpack.c.b16 %v748, %v747
        %v754 = vpack.c.b16 %v750, %v749
        %v756 = vsel %vm492, %v751, 0
        %v759 = vsel %vm492, %v752, 0
        %v762 = vsel %vm492, %v753, 0
        %v765 = vsel %vm492, %v754, 0
        %v768 = vsel %vm505, %v742, 0
        %770 = vmatprep.subr.bf16.mxu0 0
        %771 = vmatpush1.bf16.msra.mxu0 %v768
        %772 = vmatprep.subr.bf16.mxu0 0
        %773 = vmatpush1.bf16.msra.mxu0 0
        %774 = vmatprep.subr.bf16.mxu0 0
        %775 = vmatpush1.bf16.msra.mxu0 0
        %776 = vmatprep.subr.bf16.mxu0 0
        %777 = vmatpush1.bf16.msra.mxu0 0
        %778 = vmatprep.subr.bf16.mxu0 0
        %779 = vmatpush1.bf16.msra.mxu0 0
        %780 = vmatprep.subr.bf16.mxu0 0
        %781 = vmatpush1.bf16.msra.mxu0 0
        %782 = vmatprep.subr.bf16.mxu0 0
        %783 = vmatpush1.bf16.msra.mxu0 0
        %784 = vmatprep.subr.bf16.mxu0 0
        %785 = vmatpush1.bf16.msra.mxu0 0
        %786 = vmatprep.subr.bf16.mxu0 0
        %787 = vmatpush1.bf16.msra.mxu0 0
        %788 = vmatprep.subr.bf16.mxu0 0
        %789 = vmatpush1.bf16.msra.mxu0 0
        %790 = vmatprep.subr.bf16.mxu0 0
        %791 = vmatpush1.bf16.msra.mxu0 0
        %792 = vmatprep.subr.bf16.mxu0 0
        %793 = vmatpush1.bf16.msra.mxu0 0
        %794 = vmatprep.subr.bf16.mxu0 0
        %795 = vmatpush1.bf16.msra.mxu0 0
        %796 = vmatprep.subr.bf16.mxu0 0
        %797 = vmatpush1.bf16.msra.mxu0 0
        %798 = vmatprep.subr.bf16.mxu0 0
        %799 = vmatpush1.bf16.msra.mxu0 0
        %800 = vmatprep.subr.bf16.mxu0 0
        %801 = vmatpush1.bf16.msra.mxu0 0
        %802 = vmatprep.mubr.bf16.mxu0 0
        %803 = vmatmul.mubr.bf16.gmra.mrb[0].mxu0 %v756
        %v804 = vpop.f32.mrb[0].mxu0
        %v805 = vadd.f32 0.0, %v804
        %v806 = vpop.f32.mrb[0].mxu0
        %v807 = vpop.f32.mrb[0].mxu0
        %v808 = vadd.f32 0.0, %v807
        %v809 = vpop.f32.mrb[0].mxu0
        %810 = vmatprep.mubr.bf16.mxu0 0
        %811 = vmatmul.mubr.bf16.gmra.mrb[0].mxu0 %v759
        %v812 = vpop.f32.mrb[0].mxu0
        %v813 = vadd.f32 0.0, %v812
        %v814 = vpop.f32.mrb[0].mxu0
        %v815 = vpop.f32.mrb[0].mxu0
        %v816 = vadd.f32 0.0, %v815
        %v817 = vpop.f32.mrb[0].mxu0
        %818 = vmatprep.mubr.bf16.mxu0 0
        %819 = vmatmul.mubr.bf16.gmra.mrb[0].mxu0 %v762
        %v820 = vpop.f32.mrb[0].mxu0
        %v821 = vadd.f32 0.0, %v820
        %v822 = vpop.f32.mrb[0].mxu0
        %v823 = vpop.f32.mrb[0].mxu0
        %v824 = vadd.f32 0.0, %v823
        %v825 = vpop.f32.mrb[0].mxu0
        %826 = vmatprep.mubr.bf16.mxu0 0
        %827 = vmatmul.mubr.bf16.gmra.mrb[0].mxu0 %v765
        %v828 = vpop.f32.mrb[0].mxu0
        %v829 = vadd.f32 0.0, %v828
        %v830 = vpop.f32.mrb[0].mxu0
        %v831 = vpop.f32.mrb[0].mxu0
        %v832 = vadd.f32 0.0, %v831
        %v833 = vpop.f32.mrb[0].mxu0
        %834 = vdwg.mxu0
        %v835 = vadd.f32 %v644, %v805
        %v836 = vadd.f32 %v647, %v808
        %v837 = vadd.f32 %v652, %v813
        %v838 = vadd.f32 %v655, %v816
        %v839 = vadd.f32 %v660, %v821
        %v840 = vadd.f32 %v663, %v824
        %v841 = vadd.f32 %v668, %v829
        %v842 = vadd.f32 %v671, %v832
        %v843 = vld [vmem:[%s302] sm:$0xf]
        %v844 = vld [vmem:[%s302 + $0x8] sm:$0xf]
        %v845 = vld [vmem:[%s302 + $0x10] sm:$0xf]
        %v846 = vld [vmem:[%s302 + $0x18] sm:$0xf]
        %v847 = vld [vmem:[%s302 + $0x20] sm:$0xf]
        %v848 = vld [vmem:[%s302 + $0x28] sm:$0xf]
        %v849 = vld [vmem:[%s302 + $0x30] sm:$0xf]
        %v850 = vld [vmem:[%s302 + $0x38] sm:$0xf]
        %s851 = scalar_lea.vmem %s3, 12
        %v852 = vld [vmem:[%s851] sm:$0xf]
        %v861 = vunpack.c.l.b16 %v843
        %v862 = vunpack.c.l.b16 %v844
        %v863 = vunpack.c.l.b16 %v845
        %v864 = vunpack.c.l.b16 %v846
        %v865 = vunpack.c.l.b16 %v847
        %v866 = vunpack.c.l.b16 %v848
        %v867 = vunpack.c.l.b16 %v849
        %v868 = vunpack.c.l.b16 %v850
        %v869 = vpack.c.b16 %v862, %v861
        %v870 = vpack.c.b16 %v864, %v863
        %v871 = vpack.c.b16 %v866, %v865
        %v872 = vpack.c.b16 %v868, %v867
        %v874 = vsel %vm492, %v869, 0
        %v877 = vsel %vm492, %v870, 0
        %v880 = vsel %vm492, %v871, 0
        %v883 = vsel %vm492, %v872, 0
        %v886 = vsel %vm505, %v852, 0
        %888 = vmatprep.subr.bf16.mxu0 0
        %889 = vmatpush1.bf16.msra.mxu0 %v886
        %890 = vmatprep.subr.bf16.mxu0 0
        %891 = vmatpush1.bf16.msra.mxu0 0
        %892 = vmatprep.subr.bf16.mxu0 0
        %893 = vmatpush1.bf16.msra.mxu0 0
        %894 = vmatprep.subr.bf16.mxu0 0
        %895 = vmatpush1.bf16.msra.mxu0 0
        %896 = vmatprep.subr.bf16.mxu0 0
        %897 = vmatpush1.bf16.msra.mxu0 0
        %898 = vmatprep.subr.bf16.mxu0 0
        %899 = vmatpush1.bf16.msra.mxu0 0
        %900 = vmatprep.subr.bf16.mxu0 0
        %901 = vmatpush1.bf16.msra.mxu0 0
        %902 = vmatprep.subr.bf16.mxu0 0
        %903 = vmatpush1.bf16.msra.mxu0 0
        %904 = vmatprep.subr.bf16.mxu0 0
        %905 = vmatpush1.bf16.msra.mxu0 0
        %906 = vmatprep.subr.bf16.mxu0 0
        %907 = vmatpush1.bf16.msra.mxu0 0
        %908 = vmatprep.subr.bf16.mxu0 0
        %909 = vmatpush1.bf16.msra.mxu0 0
        %910 = vmatprep.subr.bf16.mxu0 0
        %911 = vmatpush1.bf16.msra.mxu0 0
        %912 = vmatprep.subr.bf16.mxu0 0
        %913 = vmatpush1.bf16.msra.mxu0 0
        %914 = vmatprep.subr.bf16.mxu0 0
        %915 = vmatpush1.bf16.msra.mxu0 0
        %916 = vmatprep.subr.bf16.mxu0 0
        %917 = vmatpush1.bf16.msra.mxu0 0
        %918 = vmatprep.subr.bf16.mxu0 0
        %919 = vmatpush1.bf16.msra.mxu0 0
        %920 = vmatprep.mubr.bf16.mxu0 0
        %921 = vmatmul.mubr.bf16.gmra.mrb[0].mxu0 %v874
        %v922 = vpop.f32.mrb[0].mxu0
        %v923 = vadd.f32 0.0, %v922
        %v924 = vpop.f32.mrb[0].mxu0
        %v925 = vpop.f32.mrb[0].mxu0
        %v926 = vadd.f32 0.0, %v925
        %v927 = vpop.f32.mrb[0].mxu0
        %928 = vmatprep.mubr.bf16.mxu0 0
        %929 = vmatmul.mubr.bf16.gmra.mrb[0].mxu0 %v877
        %v930 = vpop.f32.mrb[0].mxu0
        %v931 = vadd.f32 0.0, %v930
        %v932 = vpop.f32.mrb[0].mxu0
        %v933 = vpop.f32.mrb[0].mxu0
        %v934 = vadd.f32 0.0, %v933
        %v935 = vpop.f32.mrb[0].mxu0
        %936 = vmatprep.mubr.bf16.mxu0 0
        %937 = vmatmul.mubr.bf16.gmra.mrb[0].mxu0 %v880
        %v938 = vpop.f32.mrb[0].mxu0
        %v939 = vadd.f32 0.0, %v938
        %v940 = vpop.f32.mrb[0].mxu0
        %v941 = vpop.f32.mrb[0].mxu0
        %v942 = vadd.f32 0.0, %v941
        %v943 = vpop.f32.mrb[0].mxu0
        %944 = vmatprep.mubr.bf16.mxu0 0
        %945 = vmatmul.mubr.bf16.gmra.mrb[0].mxu0 %v883
        %v946 = vpop.f32.mrb[0].mxu0
        %v947 = vadd.f32 0.0, %v946
        %v948 = vpop.f32.mrb[0].mxu0
        %v949 = vpop.f32.mrb[0].mxu0
        %v950 = vadd.f32 0.0, %v949
        %v951 = vpop.f32.mrb[0].mxu0
        %952 = vdwg.mxu0
        %v953 = vadd.f32 %v835, %v923
        %v954 = vadd.f32 %v836, %v926
        %v955 = vadd.f32 %v837, %v931
        %v956 = vadd.f32 %v838, %v934
        %v957 = vadd.f32 %v839, %v939
        %v958 = vadd.f32 %v840, %v942
        %v959 = vadd.f32 %v841, %v947
        %v960 = vadd.f32 %v842, %v950
        %v961 = vld [vmem:[%s302] sm:$0xe]
        %v962 = vld [vmem:[%s302 + $0x4] sm:$0x1]
        %v963 = vld [vmem:[%s302 + $0x8] sm:$0xe]
        %v964 = vld [vmem:[%s302 + $0xc] sm:$0x1]
        %v965 = vld [vmem:[%s302 + $0x10] sm:$0xe]
        %v966 = vld [vmem:[%s302 + $0x14] sm:$0x1]
        %v967 = vld [vmem:[%s302 + $0x18] sm:$0xe]
        %v968 = vld [vmem:[%s302 + $0x1c] sm:$0x1]
        %v969 = vld [vmem:[%s302 + $0x20] sm:$0xe]
        %v970 = vld [vmem:[%s302 + $0x24] sm:$0x1]
        %v971 = vld [vmem:[%s302 + $0x28] sm:$0xe]
        %v972 = vld [vmem:[%s302 + $0x2c] sm:$0x1]
        %v973 = vld [vmem:[%s302 + $0x30] sm:$0xe]
        %v974 = vld [vmem:[%s302 + $0x34] sm:$0x1]
        %v975 = vld [vmem:[%s302 + $0x38] sm:$0xe]
        %v976 = vld [vmem:[%s302 + $0x3c] sm:$0x1]
        %v993 = vrot.slane %v961, 5
        %v994 = vrot.slane %v993, 4
        %v995 = vrot.slane %v962, 5
        %v996 = vsel %vm445, %v994, %v995
        %v997 = vrot.slane %v963, 5
        %v998 = vrot.slane %v997, 4
        %v999 = vrot.slane %v964, 5
        %v1000 = vsel %vm445, %v998, %v999
        %v1001 = vrot.slane %v965, 5
        %v1002 = vrot.slane %v1001, 4
        %v1003 = vrot.slane %v966, 5
        %v1004 = vsel %vm445, %v1002, %v1003
        %v1005 = vrot.slane %v967, 5
        %v1006 = vrot.slane %v1005, 4
        %v1007 = vrot.slane %v968, 5
        %v1008 = vsel %vm445, %v1006, %v1007
        %v1009 = vrot.slane %v969, 5
        %v1010 = vrot.slane %v1009, 4
        %v1011 = vrot.slane %v970, 5
        %v1012 = vsel %vm445, %v1010, %v1011
        %v1013 = vrot.slane %v971, 5
        %v1014 = vrot.slane %v1013, 4
        %v1015 = vrot.slane %v972, 5
        %v1016 = vsel %vm445, %v1014, %v1015
        %v1017 = vrot.slane %v973, 5
        %v1018 = vrot.slane %v1017, 4
        %v1019 = vrot.slane %v974, 5
        %v1020 = vsel %vm445, %v1018, %v1019
        %v1021 = vrot.slane %v975, 5
        %v1022 = vrot.slane %v1021, 4
        %v1023 = vrot.slane %v976, 5
        %v1024 = vsel %vm445, %v1022, %v1023
        %s1025 = scalar_lea.vmem %s3, 16
        %v1026 = vld [vmem:[%s1025] sm:$0xf]
        %v1027 = vunpack.c.l.b16 %v996
        %v1028 = vunpack.c.l.b16 %v1000
        %v1029 = vunpack.c.l.b16 %v1004
        %v1030 = vunpack.c.l.b16 %v1008
        %v1031 = vunpack.c.l.b16 %v1012
        %v1032 = vunpack.c.l.b16 %v1016
        %v1033 = vunpack.c.l.b16 %v1020
        %v1034 = vunpack.c.l.b16 %v1024
        %v1035 = vpack.c.b16 %v1028, %v1027
        %v1036 = vpack.c.b16 %v1030, %v1029
        %v1037 = vpack.c.b16 %v1032, %v1031
        %v1038 = vpack.c.b16 %v1034, %v1033
        %v1040 = vsel %vm492, %v1035, 0
        %v1043 = vsel %vm492, %v1036, 0
        %v1046 = vsel %vm492, %v1037, 0
        %v1049 = vsel %vm492, %v1038, 0
        %v1052 = vsel %vm505, %v1026, 0
        %1054 = vmatprep.subr.bf16.mxu0 0
        %1055 = vmatpush1.bf16.msra.mxu0 %v1052
        %1056 = vmatprep.subr.bf16.mxu0 0
        %1057 = vmatpush1.bf16.msra.mxu0 0
        %1058 = vmatprep.subr.bf16.mxu0 0
        %1059 = vmatpush1.bf16.msra.mxu0 0
        %1060 = vmatprep.subr.bf16.mxu0 0
        %1061 = vmatpush1.bf16.msra.mxu0 0
        %1062 = vmatprep.subr.bf16.mxu0 0
        %1063 = vmatpush1.bf16.msra.mxu0 0
        %1064 = vmatprep.subr.bf16.mxu0 0
        %1065 = vmatpush1.bf16.msra.mxu0 0
        %1066 = vmatprep.subr.bf16.mxu0 0
        %1067 = vmatpush1.bf16.msra.mxu0 0
        %1068 = vmatprep.subr.bf16.mxu0 0
        %1069 = vmatpush1.bf16.msra.mxu0 0
        %1070 = vmatprep.subr.bf16.mxu0 0
        %1071 = vmatpush1.bf16.msra.mxu0 0
        %1072 = vmatprep.subr.bf16.mxu0 0
        %1073 = vmatpush1.bf16.msra.mxu0 0
        %1074 = vmatprep.subr.bf16.mxu0 0
        %1075 = vmatpush1.bf16.msra.mxu0 0
        %1076 = vmatprep.subr.bf16.mxu0 0
        %1077 = vmatpush1.bf16.msra.mxu0 0
        %1078 = vmatprep.subr.bf16.mxu0 0
        %1079 = vmatpush1.bf16.msra.mxu0 0
        %1080 = vmatprep.subr.bf16.mxu0 0
        %1081 = vmatpush1.bf16.msra.mxu0 0
        %1082 = vmatprep.subr.bf16.mxu0 0
        %1083 = vmatpush1.bf16.msra.mxu0 0
        %1084 = vmatprep.subr.bf16.mxu0 0
        %1085 = vmatpush1.bf16.msra.mxu0 0
        %1086 = vmatprep.mubr.bf16.mxu0 0
        %1087 = vmatmul.mubr.bf16.gmra.mrb[0].mxu0 %v1040
        %v1088 = vpop.f32.mrb[0].mxu0
        %v1089 = vadd.f32 0.0, %v1088
        %v1090 = vpop.f32.mrb[0].mxu0
        %v1091 = vpop.f32.mrb[0].mxu0
        %v1092 = vadd.f32 0.0, %v1091
        %v1093 = vpop.f32.mrb[0].mxu0
        %1094 = vmatprep.mubr.bf16.mxu0 0
        %1095 = vmatmul.mubr.bf16.gmra.mrb[0].mxu0 %v1043
        %v1096 = vpop.f32.mrb[0].mxu0
        %v1097 = vadd.f32 0.0, %v1096
        %v1098 = vpop.f32.mrb[0].mxu0
        %v1099 = vpop.f32.mrb[0].mxu0
        %v1100 = vadd.f32 0.0, %v1099
        %v1101 = vpop.f32.mrb[0].mxu0
        %1102 = vmatprep.mubr.bf16.mxu0 0
        %1103 = vmatmul.mubr.bf16.gmra.mrb[0].mxu0 %v1046
        %v1104 = vpop.f32.mrb[0].mxu0
        %v1105 = vadd.f32 0.0, %v1104
        %v1106 = vpop.f32.mrb[0].mxu0
        %v1107 = vpop.f32.mrb[0].mxu0
        %v1108 = vadd.f32 0.0, %v1107
        %v1109 = vpop.f32.mrb[0].mxu0
        %1110 = vmatprep.mubr.bf16.mxu0 0
        %1111 = vmatmul.mubr.bf16.gmra.mrb[0].mxu0 %v1049
        %v1112 = vpop.f32.mrb[0].mxu0
        %v1113 = vadd.f32 0.0, %v1112
        %v1114 = vpop.f32.mrb[0].mxu0
        %v1115 = vpop.f32.mrb[0].mxu0
        %v1116 = vadd.f32 0.0, %v1115
        %v1117 = vpop.f32.mrb[0].mxu0
        %1118 = vdwg.mxu0
        %v1119 = vadd.f32 %v953, %v1089
        %v1120 = vadd.f32 %v954, %v1092
        %v1121 = vadd.f32 %v955, %v1097
        %v1122 = vadd.f32 %v956, %v1100
        %v1123 = vadd.f32 %v957, %v1105
        %v1124 = vadd.f32 %v958, %v1108
        %v1125 = vadd.f32 %v959, %v1113
        %v1126 = vadd.f32 %v960, %v1116
        %v1127 = vld [vmem:[%s302] sm:$0xc]
        %v1128 = vld [vmem:[%s302 + $0x4] sm:$0x3]
        %v1129 = vld [vmem:[%s302 + $0x8] sm:$0xc]
        %v1130 = vld [vmem:[%s302 + $0xc] sm:$0x3]
        %v1131 = vld [vmem:[%s302 + $0x10] sm:$0xc]
        %v1132 = vld [vmem:[%s302 + $0x14] sm:$0x3]
        %v1133 = vld [vmem:[%s302 + $0x18] sm:$0xc]
        %v1134 = vld [vmem:[%s302 + $0x1c] sm:$0x3]
        %v1135 = vld [vmem:[%s302 + $0x20] sm:$0xc]
        %v1136 = vld [vmem:[%s302 + $0x24] sm:$0x3]
        %v1137 = vld [vmem:[%s302 + $0x28] sm:$0xc]
        %v1138 = vld [vmem:[%s302 + $0x2c] sm:$0x3]
        %v1139 = vld [vmem:[%s302 + $0x30] sm:$0xc]
        %v1140 = vld [vmem:[%s302 + $0x34] sm:$0x3]
        %v1141 = vld [vmem:[%s302 + $0x38] sm:$0xc]
        %v1142 = vld [vmem:[%s302 + $0x3c] sm:$0x3]
        %v1159 = vrot.slane %v1127, 6
        %v1160 = vrot.slane %v1159, 4
        %v1161 = vrot.slane %v1128, 6
        %v1162 = vsel %vm708, %v1160, %v1161
        %v1163 = vrot.slane %v1129, 6
        %v1164 = vrot.slane %v1163, 4
        %v1165 = vrot.slane %v1130, 6
        %v1166 = vsel %vm708, %v1164, %v1165
        %v1167 = vrot.slane %v1131, 6
        %v1168 = vrot.slane %v1167, 4
        %v1169 = vrot.slane %v1132, 6
        %v1170 = vsel %vm708, %v1168, %v1169
        %v1171 = vrot.slane %v1133, 6
        %v1172 = vrot.slane %v1171, 4
        %v1173 = vrot.slane %v1134, 6
        %v1174 = vsel %vm708, %v1172, %v1173
        %v1175 = vrot.slane %v1135, 6
        %v1176 = vrot.slane %v1175, 4
        %v1177 = vrot.slane %v1136, 6
        %v1178 = vsel %vm708, %v1176, %v1177
        %v1179 = vrot.slane %v1137, 6
        %v1180 = vrot.slane %v1179, 4
        %v1181 = vrot.slane %v1138, 6
        %v1182 = vsel %vm708, %v1180, %v1181
        %v1183 = vrot.slane %v1139, 6
        %v1184 = vrot.slane %v1183, 4
        %v1185 = vrot.slane %v1140, 6
        %v1186 = vsel %vm708, %v1184, %v1185
        %v1187 = vrot.slane %v1141, 6
        %v1188 = vrot.slane %v1187, 4
        %v1189 = vrot.slane %v1142, 6
        %v1190 = vsel %vm708, %v1188, %v1189
        %s1191 = scalar_lea.vmem %s3, 20
        %v1192 = vld [vmem:[%s1191] sm:$0xf]
        %v1193 = vunpack.c.l.b16 %v1162
        %v1194 = vunpack.c.l.b16 %v1166
        %v1195 = vunpack.c.l.b16 %v1170
        %v1196 = vunpack.c.l.b16 %v1174
        %v1197 = vunpack.c.l.b16 %v1178
        %v1198 = vunpack.c.l.b16 %v1182
        %v1199 = vunpack.c.l.b16 %v1186
        %v1200 = vunpack.c.l.b16 %v1190
        %v1201 = vpack.c.b16 %v1194, %v1193
        %v1202 = vpack.c.b16 %v1196, %v1195
        %v1203 = vpack.c.b16 %v1198, %v1197
        %v1204 = vpack.c.b16 %v1200, %v1199
        %v1206 = vsel %vm492, %v1201, 0
        %v1209 = vsel %vm492, %v1202, 0
        %v1212 = vsel %vm492, %v1203, 0
        %v1215 = vsel %vm492, %v1204, 0
        %v1218 = vsel %vm505, %v1192, 0
        %1220 = vmatprep.subr.bf16.mxu0 0
        %1221 = vmatpush1.bf16.msra.mxu0 %v1218
        %1222 = vmatprep.subr.bf16.mxu0 0
        %1223 = vmatpush1.bf16.msra.mxu0 0
        %1224 = vmatprep.subr.bf16.mxu0 0
        %1225 = vmatpush1.bf16.msra.mxu0 0
        %1226 = vmatprep.subr.bf16.mxu0 0
        %1227 = vmatpush1.bf16.msra.mxu0 0
        %1228 = vmatprep.subr.bf16.mxu0 0
        %1229 = vmatpush1.bf16.msra.mxu0 0
        %1230 = vmatprep.subr.bf16.mxu0 0
        %1231 = vmatpush1.bf16.msra.mxu0 0
        %1232 = vmatprep.subr.bf16.mxu0 0
        %1233 = vmatpush1.bf16.msra.mxu0 0
        %1234 = vmatprep.subr.bf16.mxu0 0
        %1235 = vmatpush1.bf16.msra.mxu0 0
        %1236 = vmatprep.subr.bf16.mxu0 0
        %1237 = vmatpush1.bf16.msra.mxu0 0
        %1238 = vmatprep.subr.bf16.mxu0 0
        %1239 = vmatpush1.bf16.msra.mxu0 0
        %1240 = vmatprep.subr.bf16.mxu0 0
        %1241 = vmatpush1.bf16.msra.mxu0 0
        %1242 = vmatprep.subr.bf16.mxu0 0
        %1243 = vmatpush1.bf16.msra.mxu0 0
        %1244 = vmatprep.subr.bf16.mxu0 0
        %1245 = vmatpush1.bf16.msra.mxu0 0
        %1246 = vmatprep.subr.bf16.mxu0 0
        %1247 = vmatpush1.bf16.msra.mxu0 0
        %1248 = vmatprep.subr.bf16.mxu0 0
        %1249 = vmatpush1.bf16.msra.mxu0 0
        %1250 = vmatprep.subr.bf16.mxu0 0
        %1251 = vmatpush1.bf16.msra.mxu0 0
        %1252 = vmatprep.mubr.bf16.mxu0 0
        %1253 = vmatmul.mubr.bf16.gmra.mrb[0].mxu0 %v1206
        %v1254 = vpop.f32.mrb[0].mxu0
        %v1255 = vadd.f32 0.0, %v1254
        %v1256 = vpop.f32.mrb[0].mxu0
        %v1257 = vpop.f32.mrb[0].mxu0
        %v1258 = vadd.f32 0.0, %v1257
        %v1259 = vpop.f32.mrb[0].mxu0
        %1260 = vmatprep.mubr.bf16.mxu0 0
        %1261 = vmatmul.mubr.bf16.gmra.mrb[0].mxu0 %v1209
        %v1262 = vpop.f32.mrb[0].mxu0
        %v1263 = vadd.f32 0.0, %v1262
        %v1264 = vpop.f32.mrb[0].mxu0
        %v1265 = vpop.f32.mrb[0].mxu0
        %v1266 = vadd.f32 0.0, %v1265
        %v1267 = vpop.f32.mrb[0].mxu0
        %1268 = vmatprep.mubr.bf16.mxu0 0
        %1269 = vmatmul.mubr.bf16.gmra.mrb[0].mxu0 %v1212
        %v1270 = vpop.f32.mrb[0].mxu0
        %v1271 = vadd.f32 0.0, %v1270
        %v1272 = vpop.f32.mrb[0].mxu0
        %v1273 = vpop.f32.mrb[0].mxu0
        %v1274 = vadd.f32 0.0, %v1273
        %v1275 = vpop.f32.mrb[0].mxu0
        %1276 = vmatprep.mubr.bf16.mxu0 0
        %1277 = vmatmul.mubr.bf16.gmra.mrb[0].mxu0 %v1215
        %v1278 = vpop.f32.mrb[0].mxu0
        %v1279 = vadd.f32 0.0, %v1278
        %v1280 = vpop.f32.mrb[0].mxu0
        %v1281 = vpop.f32.mrb[0].mxu0
        %v1282 = vadd.f32 0.0, %v1281
        %v1283 = vpop.f32.mrb[0].mxu0
        %1284 = vdwg.mxu0
        %v1285 = vadd.f32 %v1119, %v1255
        %v1286 = vadd.f32 %v1120, %v1258
        %v1287 = vadd.f32 %v1121, %v1263
        %v1288 = vadd.f32 %v1122, %v1266
        %v1289 = vadd.f32 %v1123, %v1271
        %v1290 = vadd.f32 %v1124, %v1274
        %v1291 = vadd.f32 %v1125, %v1279
        %v1292 = vadd.f32 %v1126, %v1282
        %s1293 = scalar_lea.vmem [#allocation2], 32
        %v1294 = vld [vmem:[%s1293] sm:$0xf]
        %v1295 = vld [vmem:[%s1293 + $0x8] sm:$0xf]
        %v1296 = vld [vmem:[%s1293 + $0x10] sm:$0xf]
        %v1297 = vld [vmem:[%s1293 + $0x18] sm:$0xf]
        %v1298 = vld [vmem:[%s1293 + $0x20] sm:$0xf]
        %v1299 = vld [vmem:[%s1293 + $0x28] sm:$0xf]
        %v1300 = vld [vmem:[%s1293 + $0x30] sm:$0xf]
        %v1301 = vld [vmem:[%s1293 + $0x38] sm:$0xf]
        %s1302 = scalar_lea.vmem %s3, 24
        %v1303 = vld [vmem:[%s1302] sm:$0xf]
        %v1312 = vunpack.c.l.b16 %v1294
        %v1313 = vunpack.c.l.b16 %v1295
        %v1314 = vunpack.c.l.b16 %v1296
        %v1315 = vunpack.c.l.b16 %v1297
        %v1316 = vunpack.c.l.b16 %v1298
        %v1317 = vunpack.c.l.b16 %v1299
        %v1318 = vunpack.c.l.b16 %v1300
        %v1319 = vunpack.c.l.b16 %v1301
        %v1320 = vpack.c.b16 %v1313, %v1312
        %v1321 = vpack.c.b16 %v1315, %v1314
        %v1322 = vpack.c.b16 %v1317, %v1316
        %v1323 = vpack.c.b16 %v1319, %v1318
        %v1325 = vsel %vm492, %v1320, 0
        %v1328 = vsel %vm492, %v1321, 0
        %v1331 = vsel %vm492, %v1322, 0
        %v1334 = vsel %vm492, %v1323, 0
        %v1337 = vsel %vm505, %v1303, 0
        %1339 = vmatprep.subr.bf16.mxu0 0
        %1340 = vmatpush1.bf16.msra.mxu0 %v1337
        %1341 = vmatprep.subr.bf16.mxu0 0
        %1342 = vmatpush1.bf16.msra.mxu0 0
        %1343 = vmatprep.subr.bf16.mxu0 0
        %1344 = vmatpush1.bf16.msra.mxu0 0
        %1345 = vmatprep.subr.bf16.mxu0 0
        %1346 = vmatpush1.bf16.msra.mxu0 0
        %1347 = vmatprep.subr.bf16.mxu0 0
        %1348 = vmatpush1.bf16.msra.mxu0 0
        %1349 = vmatprep.subr.bf16.mxu0 0
        %1350 = vmatpush1.bf16.msra.mxu0 0
        %1351 = vmatprep.subr.bf16.mxu0 0
        %1352 = vmatpush1.bf16.msra.mxu0 0
        %1353 = vmatprep.subr.bf16.mxu0 0
        %1354 = vmatpush1.bf16.msra.mxu0 0
        %1355 = vmatprep.subr.bf16.mxu0 0
        %1356 = vmatpush1.bf16.msra.mxu0 0
        %1357 = vmatprep.subr.bf16.mxu0 0
        %1358 = vmatpush1.bf16.msra.mxu0 0
        %1359 = vmatprep.subr.bf16.mxu0 0
        %1360 = vmatpush1.bf16.msra.mxu0 0
        %1361 = vmatprep.subr.bf16.mxu0 0
        %1362 = vmatpush1.bf16.msra.mxu0 0
        %1363 = vmatprep.subr.bf16.mxu0 0
        %1364 = vmatpush1.bf16.msra.mxu0 0
        %1365 = vmatprep.subr.bf16.mxu0 0
        %1366 = vmatpush1.bf16.msra.mxu0 0
        %1367 = vmatprep.subr.bf16.mxu0 0
        %1368 = vmatpush1.bf16.msra.mxu0 0
        %1369 = vmatprep.subr.bf16.mxu0 0
        %1370 = vmatpush1.bf16.msra.mxu0 0
        %1371 = vmatprep.mubr.bf16.mxu0 0
        %1372 = vmatmul.mubr.bf16.gmra.mrb[0].mxu0 %v1325
        %v1373 = vpop.f32.mrb[0].mxu0
        %v1374 = vadd.f32 0.0, %v1373
        %v1375 = vpop.f32.mrb[0].mxu0
        %v1376 = vpop.f32.mrb[0].mxu0
        %v1377 = vadd.f32 0.0, %v1376
        %v1378 = vpop.f32.mrb[0].mxu0
        %1379 = vmatprep.mubr.bf16.mxu0 0
        %1380 = vmatmul.mubr.bf16.gmra.mrb[0].mxu0 %v1328
        %v1381 = vpop.f32.mrb[0].mxu0
        %v1382 = vadd.f32 0.0, %v1381
        %v1383 = vpop.f32.mrb[0].mxu0
        %v1384 = vpop.f32.mrb[0].mxu0
        %v1385 = vadd.f32 0.0, %v1384
        %v1386 = vpop.f32.mrb[0].mxu0
        %1387 = vmatprep.mubr.bf16.mxu0 0
        %1388 = vmatmul.mubr.bf16.gmra.mrb[0].mxu0 %v1331
        %v1389 = vpop.f32.mrb[0].mxu0
        %v1390 = vadd.f32 0.0, %v1389
        %v1391 = vpop.f32.mrb[0].mxu0
        %v1392 = vpop.f32.mrb[0].mxu0
        %v1393 = vadd.f32 0.0, %v1392
        %v1394 = vpop.f32.mrb[0].mxu0
        %1395 = vmatprep.mubr.bf16.mxu0 0
        %1396 = vmatmul.mubr.bf16.gmra.mrb[0].mxu0 %v1334
        %v1397 = vpop.f32.mrb[0].mxu0
        %v1398 = vadd.f32 0.0, %v1397
        %v1399 = vpop.f32.mrb[0].mxu0
        %v1400 = vpop.f32.mrb[0].mxu0
        %v1401 = vadd.f32 0.0, %v1400
        %v1402 = vpop.f32.mrb[0].mxu0
        %1403 = vdwg.mxu0
        %v1404 = vadd.f32 %v1285, %v1374
        %v1405 = vadd.f32 %v1286, %v1377
        %v1406 = vadd.f32 %v1287, %v1382
        %v1407 = vadd.f32 %v1288, %v1385
        %v1408 = vadd.f32 %v1289, %v1390
        %v1409 = vadd.f32 %v1290, %v1393
        %v1410 = vadd.f32 %v1291, %v1398
        %v1411 = vadd.f32 %v1292, %v1401
        %v1412 = vld [vmem:[%s1293] sm:$0xe]
        %v1413 = vld [vmem:[%s1293 + $0x4] sm:$0x1]
        %v1414 = vld [vmem:[%s1293 + $0x8] sm:$0xe]
        %v1415 = vld [vmem:[%s1293 + $0xc] sm:$0x1]
        %v1416 = vld [vmem:[%s1293 + $0x10] sm:$0xe]
        %v1417 = vld [vmem:[%s1293 + $0x14] sm:$0x1]
        %v1418 = vld [vmem:[%s1293 + $0x18] sm:$0xe]
        %v1419 = vld [vmem:[%s1293 + $0x1c] sm:$0x1]
        %v1420 = vld [vmem:[%s1293 + $0x20] sm:$0xe]
        %v1421 = vld [vmem:[%s1293 + $0x24] sm:$0x1]
        %v1422 = vld [vmem:[%s1293 + $0x28] sm:$0xe]
        %v1423 = vld [vmem:[%s1293 + $0x2c] sm:$0x1]
        %v1424 = vld [vmem:[%s1293 + $0x30] sm:$0xe]
        %v1425 = vld [vmem:[%s1293 + $0x34] sm:$0x1]
        %v1426 = vld [vmem:[%s1293 + $0x38] sm:$0xe]
        %v1427 = vld [vmem:[%s1293 + $0x3c] sm:$0x1]
        %v1444 = vrot.slane %v1412, 5
        %v1445 = vrot.slane %v1444, 4
        %v1446 = vrot.slane %v1413, 5
        %v1447 = vsel %vm445, %v1445, %v1446
        %v1448 = vrot.slane %v1414, 5
        %v1449 = vrot.slane %v1448, 4
        %v1450 = vrot.slane %v1415, 5
        %v1451 = vsel %vm445, %v1449, %v1450
        %v1452 = vrot.slane %v1416, 5
        %v1453 = vrot.slane %v1452, 4
        %v1454 = vrot.slane %v1417, 5
        %v1455 = vsel %vm445, %v1453, %v1454
        %v1456 = vrot.slane %v1418, 5
        %v1457 = vrot.slane %v1456, 4
        %v1458 = vrot.slane %v1419, 5
        %v1459 = vsel %vm445, %v1457, %v1458
        %v1460 = vrot.slane %v1420, 5
        %v1461 = vrot.slane %v1460, 4
        %v1462 = vrot.slane %v1421, 5
        %v1463 = vsel %vm445, %v1461, %v1462
        %v1464 = vrot.slane %v1422, 5
        %v1465 = vrot.slane %v1464, 4
        %v1466 = vrot.slane %v1423, 5
        %v1467 = vsel %vm445, %v1465, %v1466
        %v1468 = vrot.slane %v1424, 5
        %v1469 = vrot.slane %v1468, 4
        %v1470 = vrot.slane %v1425, 5
        %v1471 = vsel %vm445, %v1469, %v1470
        %v1472 = vrot.slane %v1426, 5
        %v1473 = vrot.slane %v1472, 4
        %v1474 = vrot.slane %v1427, 5
        %v1475 = vsel %vm445, %v1473, %v1474
        %s1476 = scalar_lea.vmem %s3, 28
        %v1477 = vld [vmem:[%s1476] sm:$0xf]
        %v1478 = vunpack.c.l.b16 %v1447
        %v1479 = vunpack.c.l.b16 %v1451
        %v1480 = vunpack.c.l.b16 %v1455
        %v1481 = vunpack.c.l.b16 %v1459
        %v1482 = vunpack.c.l.b16 %v1463
        %v1483 = vunpack.c.l.b16 %v1467
        %v1484 = vunpack.c.l.b16 %v1471
        %v1485 = vunpack.c.l.b16 %v1475
        %v1486 = vpack.c.b16 %v1479, %v1478
        %v1487 = vpack.c.b16 %v1481, %v1480
        %v1488 = vpack.c.b16 %v1483, %v1482
        %v1489 = vpack.c.b16 %v1485, %v1484
        %v1491 = vsel %vm492, %v1486, 0
        %v1494 = vsel %vm492, %v1487, 0
        %v1497 = vsel %vm492, %v1488, 0
        %v1500 = vsel %vm492, %v1489, 0
        %v1503 = vsel %vm505, %v1477, 0
        %1505 = vmatprep.subr.bf16.mxu0 0
        %1506 = vmatpush1.bf16.msra.mxu0 %v1503
        %1507 = vmatprep.subr.bf16.mxu0 0
        %1508 = vmatpush1.bf16.msra.mxu0 0
        %1509 = vmatprep.subr.bf16.mxu0 0
        %1510 = vmatpush1.bf16.msra.mxu0 0
        %1511 = vmatprep.subr.bf16.mxu0 0
        %1512 = vmatpush1.bf16.msra.mxu0 0
        %1513 = vmatprep.subr.bf16.mxu0 0
        %1514 = vmatpush1.bf16.msra.mxu0 0
        %1515 = vmatprep.subr.bf16.mxu0 0
        %1516 = vmatpush1.bf16.msra.mxu0 0
        %1517 = vmatprep.subr.bf16.mxu0 0
        %1518 = vmatpush1.bf16.msra.mxu0 0
        %1519 = vmatprep.subr.bf16.mxu0 0
        %1520 = vmatpush1.bf16.msra.mxu0 0
        %1521 = vmatprep.subr.bf16.mxu0 0
        %1522 = vmatpush1.bf16.msra.mxu0 0
        %1523 = vmatprep.subr.bf16.mxu0 0
        %1524 = vmatpush1.bf16.msra.mxu0 0
        %1525 = vmatprep.subr.bf16.mxu0 0
        %1526 = vmatpush1.bf16.msra.mxu0 0
        %1527 = vmatprep.subr.bf16.mxu0 0
        %1528 = vmatpush1.bf16.msra.mxu0 0
        %1529 = vmatprep.subr.bf16.mxu0 0
        %1530 = vmatpush1.bf16.msra.mxu0 0
        %1531 = vmatprep.subr.bf16.mxu0 0
        %1532 = vmatpush1.bf16.msra.mxu0 0
        %1533 = vmatprep.subr.bf16.mxu0 0
        %1534 = vmatpush1.bf16.msra.mxu0 0
        %1535 = vmatprep.subr.bf16.mxu0 0
        %1536 = vmatpush1.bf16.msra.mxu0 0
        %1537 = vmatprep.mubr.bf16.mxu0 0
        %1538 = vmatmul.mubr.bf16.gmra.mrb[0].mxu0 %v1491
        %v1539 = vpop.f32.mrb[0].mxu0
        %v1540 = vadd.f32 0.0, %v1539
        %v1541 = vpop.f32.mrb[0].mxu0
        %v1542 = vpop.f32.mrb[0].mxu0
        %v1543 = vadd.f32 0.0, %v1542
        %v1544 = vpop.f32.mrb[0].mxu0
        %1545 = vmatprep.mubr.bf16.mxu0 0
        %1546 = vmatmul.mubr.bf16.gmra.mrb[0].mxu0 %v1494
        %v1547 = vpop.f32.mrb[0].mxu0
        %v1548 = vadd.f32 0.0, %v1547
        %v1549 = vpop.f32.mrb[0].mxu0
        %v1550 = vpop.f32.mrb[0].mxu0
        %v1551 = vadd.f32 0.0, %v1550
        %v1552 = vpop.f32.mrb[0].mxu0
        %1553 = vmatprep.mubr.bf16.mxu0 0
        %1554 = vmatmul.mubr.bf16.gmra.mrb[0].mxu0 %v1497
        %v1555 = vpop.f32.mrb[0].mxu0
        %v1556 = vadd.f32 0.0, %v1555
        %v1557 = vpop.f32.mrb[0].mxu0
        %v1558 = vpop.f32.mrb[0].mxu0
        %v1559 = vadd.f32 0.0, %v1558
        %v1560 = vpop.f32.mrb[0].mxu0
        %1561 = vmatprep.mubr.bf16.mxu0 0
        %1562 = vmatmul.mubr.bf16.gmra.mrb[0].mxu0 %v1500
        %v1563 = vpop.f32.mrb[0].mxu0
        %v1564 = vadd.f32 0.0, %v1563
        %v1565 = vpop.f32.mrb[0].mxu0
        %v1566 = vpop.f32.mrb[0].mxu0
        %v1567 = vadd.f32 0.0, %v1566
        %v1568 = vpop.f32.mrb[0].mxu0
        %1569 = vdwg.mxu0
        %v1570 = vadd.f32 %v1404, %v1540
        %v1571 = vadd.f32 %v1405, %v1543
        %v1572 = vadd.f32 %v1406, %v1548
        %v1573 = vadd.f32 %v1407, %v1551
        %v1574 = vadd.f32 %v1408, %v1556
        %v1575 = vadd.f32 %v1409, %v1559
        %v1576 = vadd.f32 %v1410, %v1564
        %v1577 = vadd.f32 %v1411, %v1567
        %v1578 = vld [vmem:[%s1293] sm:$0xc]
        %v1579 = vld [vmem:[%s1293 + $0x4] sm:$0x3]
        %v1580 = vld [vmem:[%s1293 + $0x8] sm:$0xc]
        %v1581 = vld [vmem:[%s1293 + $0xc] sm:$0x3]
        %v1582 = vld [vmem:[%s1293 + $0x10] sm:$0xc]
        %v1583 = vld [vmem:[%s1293 + $0x14] sm:$0x3]
        %v1584 = vld [vmem:[%s1293 + $0x18] sm:$0xc]
        %v1585 = vld [vmem:[%s1293 + $0x1c] sm:$0x3]
        %v1586 = vld [vmem:[%s1293 + $0x20] sm:$0xc]
        %v1587 = vld [vmem:[%s1293 + $0x24] sm:$0x3]
        %v1588 = vld [vmem:[%s1293 + $0x28] sm:$0xc]
        %v1589 = vld [vmem:[%s1293 + $0x2c] sm:$0x3]
        %v1590 = vld [vmem:[%s1293 + $0x30] sm:$0xc]
        %v1591 = vld [vmem:[%s1293 + $0x34] sm:$0x3]
        %v1592 = vld [vmem:[%s1293 + $0x38] sm:$0xc]
        %v1593 = vld [vmem:[%s1293 + $0x3c] sm:$0x3]
        %v1610 = vrot.slane %v1578, 6
        %v1611 = vrot.slane %v1610, 4
        %v1612 = vrot.slane %v1579, 6
        %v1613 = vsel %vm708, %v1611, %v1612
        %v1614 = vrot.slane %v1580, 6
        %v1615 = vrot.slane %v1614, 4
        %v1616 = vrot.slane %v1581, 6
        %v1617 = vsel %vm708, %v1615, %v1616
        %v1618 = vrot.slane %v1582, 6
        %v1619 = vrot.slane %v1618, 4
        %v1620 = vrot.slane %v1583, 6
        %v1621 = vsel %vm708, %v1619, %v1620
        %v1622 = vrot.slane %v1584, 6
        %v1623 = vrot.slane %v1622, 4
        %v1624 = vrot.slane %v1585, 6
        %v1625 = vsel %vm708, %v1623, %v1624
        %v1626 = vrot.slane %v1586, 6
        %v1627 = vrot.slane %v1626, 4
        %v1628 = vrot.slane %v1587, 6
        %v1629 = vsel %vm708, %v1627, %v1628
        %v1630 = vrot.slane %v1588, 6
        %v1631 = vrot.slane %v1630, 4
        %v1632 = vrot.slane %v1589, 6
        %v1633 = vsel %vm708, %v1631, %v1632
        %v1634 = vrot.slane %v1590, 6
        %v1635 = vrot.slane %v1634, 4
        %v1636 = vrot.slane %v1591, 6
        %v1637 = vsel %vm708, %v1635, %v1636
        %v1638 = vrot.slane %v1592, 6
        %v1639 = vrot.slane %v1638, 4
        %v1640 = vrot.slane %v1593, 6
        %v1641 = vsel %vm708, %v1639, %v1640
        %s1642 = scalar_lea.vmem %s3, 32
        %v1643 = vld [vmem:[%s1642] sm:$0xf]
        %v1644 = vunpack.c.l.b16 %v1613
        %v1645 = vunpack.c.l.b16 %v1617
        %v1646 = vunpack.c.l.b16 %v1621
        %v1647 = vunpack.c.l.b16 %v1625
        %v1648 = vunpack.c.l.b16 %v1629
        %v1649 = vunpack.c.l.b16 %v1633
        %v1650 = vunpack.c.l.b16 %v1637
        %v1651 = vunpack.c.l.b16 %v1641
        %v1652 = vpack.c.b16 %v1645, %v1644
        %v1653 = vpack.c.b16 %v1647, %v1646
        %v1654 = vpack.c.b16 %v1649, %v1648
        %v1655 = vpack.c.b16 %v1651, %v1650
        %v1657 = vsel %vm492, %v1652, 0
        %v1660 = vsel %vm492, %v1653, 0
        %v1663 = vsel %vm492, %v1654, 0
        %v1666 = vsel %vm492, %v1655, 0
        %v1669 = vsel %vm505, %v1643, 0
        %1671 = vmatprep.subr.bf16.mxu0 0
        %1672 = vmatpush1.bf16.msra.mxu0 %v1669
        %1673 = vmatprep.subr.bf16.mxu0 0
        %1674 = vmatpush1.bf16.msra.mxu0 0
        %1675 = vmatprep.subr.bf16.mxu0 0
        %1676 = vmatpush1.bf16.msra.mxu0 0
        %1677 = vmatprep.subr.bf16.mxu0 0
        %1678 = vmatpush1.bf16.msra.mxu0 0
        %1679 = vmatprep.subr.bf16.mxu0 0
        %1680 = vmatpush1.bf16.msra.mxu0 0
        %1681 = vmatprep.subr.bf16.mxu0 0
        %1682 = vmatpush1.bf16.msra.mxu0 0
        %1683 = vmatprep.subr.bf16.mxu0 0
        %1684 = vmatpush1.bf16.msra.mxu0 0
        %1685 = vmatprep.subr.bf16.mxu0 0
        %1686 = vmatpush1.bf16.msra.mxu0 0
        %1687 = vmatprep.subr.bf16.mxu0 0
        %1688 = vmatpush1.bf16.msra.mxu0 0
        %1689 = vmatprep.subr.bf16.mxu0 0
        %1690 = vmatpush1.bf16.msra.mxu0 0
        %1691 = vmatprep.subr.bf16.mxu0 0
        %1692 = vmatpush1.bf16.msra.mxu0 0
        %1693 = vmatprep.subr.bf16.mxu0 0
        %1694 = vmatpush1.bf16.msra.mxu0 0
        %1695 = vmatprep.subr.bf16.mxu0 0
        %1696 = vmatpush1.bf16.msra.mxu0 0
        %1697 = vmatprep.subr.bf16.mxu0 0
        %1698 = vmatpush1.bf16.msra.mxu0 0
        %1699 = vmatprep.subr.bf16.mxu0 0
        %1700 = vmatpush1.bf16.msra.mxu0 0
        %1701 = vmatprep.subr.bf16.mxu0 0
        %1702 = vmatpush1.bf16.msra.mxu0 0
        %1703 = vmatprep.mubr.bf16.mxu0 0
        %1704 = vmatmul.mubr.bf16.gmra.mrb[0].mxu0 %v1657
        %v1705 = vpop.f32.mrb[0].mxu0
        %v1706 = vadd.f32 0.0, %v1705
        %v1707 = vpop.f32.mrb[0].mxu0
        %v1708 = vpop.f32.mrb[0].mxu0
        %v1709 = vadd.f32 0.0, %v1708
        %v1710 = vpop.f32.mrb[0].mxu0
        %1711 = vmatprep.mubr.bf16.mxu0 0
        %1712 = vmatmul.mubr.bf16.gmra.mrb[0].mxu0 %v1660
        %v1713 = vpop.f32.mrb[0].mxu0
        %v1714 = vadd.f32 0.0, %v1713
        %v1715 = vpop.f32.mrb[0].mxu0
        %v1716 = vpop.f32.mrb[0].mxu0
        %v1717 = vadd.f32 0.0, %v1716
        %v1718 = vpop.f32.mrb[0].mxu0
        %1719 = vmatprep.mubr.bf16.mxu0 0
        %1720 = vmatmul.mubr.bf16.gmra.mrb[0].mxu0 %v1663
        %v1721 = vpop.f32.mrb[0].mxu0
        %v1722 = vadd.f32 0.0, %v1721
        %v1723 = vpop.f32.mrb[0].mxu0
        %v1724 = vpop.f32.mrb[0].mxu0
        %v1725 = vadd.f32 0.0, %v1724
        %v1726 = vpop.f32.mrb[0].mxu0
        %1727 = vmatprep.mubr.bf16.mxu0 0
        %1728 = vmatmul.mubr.bf16.gmra.mrb[0].mxu0 %v1666
        %v1729 = vpop.f32.mrb[0].mxu0
        %v1730 = vadd.f32 0.0, %v1729
        %v1731 = vpop.f32.mrb[0].mxu0
        %v1732 = vpop.f32.mrb[0].mxu0
        %v1733 = vadd.f32 0.0, %v1732
        %v1734 = vpop.f32.mrb[0].mxu0
        %1735 = vdwg.mxu0
        %v1736 = vadd.f32 %v1570, %v1706
        %v1737 = vadd.f32 %v1571, %v1709
        %v1738 = vadd.f32 %v1572, %v1714
        %v1739 = vadd.f32 %v1573, %v1717
        %v1740 = vadd.f32 %v1574, %v1722
        %v1741 = vadd.f32 %v1575, %v1725
        %v1742 = vadd.f32 %v1576, %v1730
        %v1743 = vadd.f32 %v1577, %v1733
        %v1744 = vpack.c.bf16 %v1736, %v1736
        %v1745 = vpack.c.bf16 %v1737, %v1737
        %v1746 = vpack.c.bf16 %v1738, %v1738
        %v1747 = vpack.c.bf16 %v1739, %v1739
        %v1748 = vpack.c.bf16 %v1740, %v1740
        %v1749 = vpack.c.bf16 %v1741, %v1741
        %v1750 = vpack.c.bf16 %v1742, %v1742
        %v1751 = vpack.c.bf16 %v1743, %v1743
        %1752 = vst.msk [vmem:[%s235] sm:$0xf] %vm291, %v1744
        %1753 = vst.msk [vmem:[%s235 + $0x4] sm:$0xf] %vm291, %v1745
        %1754 = vst.msk [vmem:[%s235 + $0x8] sm:$0xf] %vm291, %v1746
        %1755 = vst.msk [vmem:[%s235 + $0xc] sm:$0xf] %vm291, %v1747
        %1756 = vst.msk [vmem:[%s235 + $0x10] sm:$0xf] %vm291, %v1748
        %1757 = vst.msk [vmem:[%s235 + $0x14] sm:$0xf] %vm291, %v1749
        %1758 = vst.msk [vmem:[%s235 + $0x18] sm:$0xf] %vm291, %v1750
        %1759 = vst.msk [vmem:[%s235 + $0x1c] sm:$0xf] %vm291, %v1751
        %v1760 = vsel %vm492, %v1736, 0.0
        %v1761 = vsel %vm492, %v1737, 0.0
        %v1762 = vadd.f32 %v1760, %v1761
        %v1763 = vsel %vm492, %v1738, 0.0
        %v1764 = vadd.f32 %v1762, %v1763
        %v1765 = vsel %vm492, %v1739, 0.0
        %v1766 = vadd.f32 %v1764, %v1765
        %v1767 = vsel %vm492, %v1740, 0.0
        %v1768 = vadd.f32 %v1766, %v1767
        %v1769 = vsel %vm492, %v1741, 0.0
        %v1770 = vadd.f32 %v1768, %v1769
        %v1771 = vsel %vm492, %v1742, 0.0
        %v1772 = vadd.f32 %v1770, %v1771
        %v1773 = vsel %vm492, %v1743, 0.0
        %v1774 = vadd.f32 %v1772, %v1773
        %v1775 = vrot.slane %v1774, 4
        %v1776 = vadd.f32 %v1774, %v1775
        %v1777 = vrot.slane %v1776, 2
        %v1778 = vadd.f32 %v1776, %v1777
        %v1779 = vrot.slane %v1778, 1
        %v1780 = vadd.f32 %v1778, %v1779
        %v1781 = vmul.f32 %v1736, %v1736
        %v1782 = vmul.f32 %v1737, %v1737
        %v1783 = vmul.f32 %v1738, %v1738
        %v1784 = vmul.f32 %v1739, %v1739
        %v1785 = vmul.f32 %v1740, %v1740
        %v1786 = vmul.f32 %v1741, %v1741
        %v1787 = vmul.f32 %v1742, %v1742
        %v1788 = vmul.f32 %v1743, %v1743
        %v1789 = vsel %vm492, %v1781, 0.0
        %v1790 = vsel %vm492, %v1782, 0.0
        %v1791 = vadd.f32 %v1789, %v1790
        %v1792 = vsel %vm492, %v1783, 0.0
        %v1793 = vadd.f32 %v1791, %v1792
        %v1794 = vsel %vm492, %v1784, 0.0
        %v1795 = vadd.f32 %v1793, %v1794
        %v1796 = vsel %vm492, %v1785, 0.0
        %v1797 = vadd.f32 %v1795, %v1796
        %v1798 = vsel %vm492, %v1786, 0.0
        %v1799 = vadd.f32 %v1797, %v1798
        %v1800 = vsel %vm492, %v1787, 0.0
        %v1801 = vadd.f32 %v1799, %v1800
        %v1802 = vsel %vm492, %v1788, 0.0
        %v1803 = vadd.f32 %v1801, %v1802
        %v1804 = vrot.slane %v1803, 4
        %v1805 = vadd.f32 %v1803, %v1804
        %v1806 = vrot.slane %v1805, 2
        %v1807 = vadd.f32 %v1805, %v1806
        %v1808 = vrot.slane %v1807, 1
        %v1809 = vadd.f32 %v1807, %v1808
        %vm1810 = vcmask 1040384
        %v1811 = vsel %vm1810, %v1780, %v1809
        %1812 = vst.msk [vmem:[%s225] sm:$0x3] %vm293, %v1811
        %p1813 = scmp.lt.s32.totalorder %s20, 1
        %s1814 = scalar_select %p1813, %s20, 1
        %s1815 = smul.addr %s1814, 8
        %s1816 = smul.addr %s1815, 4
        %s1817 = scalar_lea.vmem %s4, %s1816
        %s1818 = sand.u32 %s143, 1
        %s1819 = scalar_lea.sflag [#allocation4], %s1818
        %s1820 = sand.u32 %s143, 1
        %s1821 = smul.addr %s1820, 2
        %s1822 = scalar_lea.vmem [#allocation3], %s1821
        // Predicated region
        $region37: #{clique_block_forward.23} parent=35 // pred_check
          %p1823 = pneg %p127
        $region38: #{clique_block_forward.23} parent=35 // pred_check_branch
          %1825 = sbr.rel (%p1823) target = $region40
        $region39: #{clique_block_forward.23} parent=35 // pred_region
          _
        $region40: #{clique_block_forward.23} parent=35 // pred_fallthru
          _
        // Predicated region
        $region41: #{clique_block_forward.23} parent=35 // pred_check
          %p1826 = pneg %p153
        $region42: #{clique_block_forward.23} parent=35 // pred_check_branch
          %1828 = sbr.rel (%p1826) target = $region44
        $region43: #{clique_block_forward.23} parent=35 // pred_region
          %s1830 = ssub.s32 32, 32
          %1831 = vsyncadd %s1819, %s1830
          %s1832 = smul.addr %s20, 32
          %s1833 = scalar_lea.hbm %s5, %s1832
          %s1835 = sshll.u32 %s1822, 4
          %s1836 = int_to_ptr.vmem [resolvable:$true] %s1835
          %1838 = dma.vmem_to_hbm [thread:$0]  %s1836, 32, %s1833, %s1819
        $region44: #{clique_block_forward.23} parent=35 // pred_fallthru
          _
      $region36: #{clique_block_forward.23} parent=5 // pred_fallthru
        _
      %p1839 = scmp.le.s32.totalorder 2, %s15
      // Predicated region
      $region45: #{clique_block_forward.23} parent=5 // pred_check
        %p1840 = pneg %p1839
      $region46: #{clique_block_forward.23} parent=5 // pred_check_branch
        %1842 = sbr.rel (%p1840) target = $region48
      $region47: #{clique_block_forward.23} parent=5 // pred_region
        %s1843 = ssub.s32 %s15, 2
        // Predicated region
        $region49: #{clique_block_forward.23} parent=47 // pred_check
          %p1844 = pneg %p133
        $region50: #{clique_block_forward.23} parent=47 // pred_check_branch
          %1846 = sbr.rel (%p1844) target = $region52
        $region51: #{clique_block_forward.23} parent=47 // pred_region
          %p1847 = scmp.lt.s32.totalorder %s21, 1
          %s1848 = scalar_select %p1847, %s21, 1
          %s1849 = smul.addr %s1848, 8
          %s1850 = smul.addr %s1849, 4
          %s1851 = scalar_lea.vmem %s4, %s1850
        $region52: #{clique_block_forward.23} parent=47 // pred_fallthru
          _
        // Predicated region
        $region53: #{clique_block_forward.23} parent=47 // pred_check
          %p1852 = pneg %p159
        $region54: #{clique_block_forward.23} parent=47 // pred_check_branch
          %1854 = sbr.rel (%p1852) target = $region56
        $region55: #{clique_block_forward.23} parent=47 // pred_region
          %s1855 = sand.u32 %s144, 1
          %s1856 = scalar_lea.sflag [#allocation4], %s1855
          %s1857 = sand.u32 %s144, 1
          %s1858 = smul.addr %s1857, 2
          %s1859 = scalar_lea.vmem [#allocation3], %s1858
          %1860 = dma.done %s1856, 32
        $region56: #{clique_block_forward.23} parent=47 // pred_fallthru
          _
      $region48: #{clique_block_forward.23} parent=5 // pred_fallthru
        _
    $region6: #{clique_block_forward.23} parent=1 // loop_footer
      %s19 = sadd.s32 1, %s15
    $region7: #{clique_block_forward.23} parent=1 // loop_footer_branch
      %14 = sbr.rel target = $region3
    $region8: #{clique_block_forward.23} parent=1 // loop_exit
      _
    %1861 = vsyncpa [#allocation4], 1
    %s1862 = scalar_lea.sflag [#allocation4], 1
    %1863 = vsyncpa %s1862, 1

</llo_original>
